<compile_context>
chip_gen: v5e
topology: v5e:2x2
jax: 0.10.0
libtpu: 0.0.40
codegen_flags: <defaults>
</compile_context>

<pallas_src>
import math

import jax
import jax.numpy as jnp
import numpy as np
from jax.experimental import pallas as pl
from jax.experimental.pallas import tpu as pltpu

# ----------------------------- config (mirrors __C) -------------------------
HIDDEN_SIZE = 32
MULTI_HEAD = 4
HIDDEN_SIZE_HEAD = HIDDEN_SIZE // MULTI_HEAD
FF_SIZE = 64
LAYER = 2
LN_EPS = 1e-6  # MCAN LayerNorm eps

H = HIDDEN_SIZE
FF = FF_SIZE
DH = HIDDEN_SIZE_HEAD
NH = MULTI_HEAD
LANE = 128  # lane width of the packed weight slabs

# --- SA slab per-layer row offsets (each row block starts at lane 0, 128-wide) ---
SA_WQKV = 0                 # H rows   : [wq*scale | wk | wv]  (width 3H, zero-padded)
SA_WM = SA_WQKV + H         # H rows   : wm
SA_W1 = SA_WM + H           # H rows   : w1
SA_W2 = SA_W1 + H           # FF rows  : w2
SA_VEC = SA_W2 + FF         # 8 rows   : bqkv, bm, b1, b2, g1, be1, g2, be2
SA_ROWS = SA_VEC + 8        # 168

# --- MCA slab per-layer row offsets ---
MC_AWQKV = 0                # H rows
MC_AWM = MC_AWQKV + H       # H rows
MC_CWQKV = MC_AWM + H       # H rows
MC_CWM = MC_CWQKV + H       # H rows
MC_W1 = MC_CWM + H          # H rows
MC_W2 = MC_W1 + H           # FF rows
MC_VEC = MC_W2 + FF         # 12 rows  : a_bqkv, a_bm, c_bqkv, c_bm, b1, b2, g1..be3
MC_ROWS = ((MC_VEC + 12 + 7) // 8) * 8   # 240 (padded to a multiple of 8 rows)


# ----------------------------- in-kernel math helpers ------------------------

def _layer_norm_k(x, gamma, beta):
    # a_2 * (x - mean) / (std + eps) + b_2, torch.std default (unbiased, n-1).
    mean = jnp.mean(x, axis=-1, keepdims=True)
    var = jnp.sum((x - mean) ** 2, axis=-1, keepdims=True) * (1.0 / (x.shape[-1] - 1))
    inv = 1.0 / (jnp.sqrt(var) + LN_EPS)          # exact (matches torch eps placement)
    return gamma * (x - mean) * inv + beta


def _ffn_k(x, w1, b1, w2, b2):
    h = jnp.maximum(jnp.dot(x, w1, preferred_element_type=jnp.float32) + b1, 0.0)
    return jnp.dot(h, w2, preferred_element_type=jnp.float32) + b2


def _mh_core(q, k, v, bias2d, wm, bm):
    # q: (Sq, H); k, v: (Sk, H); bias2d: (Sq, Sk) additive (-1e9 at pads, 0 else).
    # Scale 1/sqrt(DH) already folded into the q projection at pack time.
    acc = None
    for h in range(NH):
        sl = slice(h * DH, (h + 1) * DH)
        # q_h @ k_h^T without materializing a transpose.
        s = jax.lax.dot_general(q[:, sl], k[:, sl], (((1,), (1,)), ((), ())),
                                preferred_element_type=jnp.float32) + bias2d
        s = s - jnp.max(s, axis=-1, keepdims=True)
        e = jnp.exp(s)
        p = e * (1.0 / jnp.sum(e, axis=-1, keepdims=True))     # exact reciprocal
        ctx = jnp.dot(p, v[:, sl], preferred_element_type=jnp.float32)        # (Sq, DH)
        contrib = jnp.dot(ctx, wm[sl, :], preferred_element_type=jnp.float32)  # (Sq, H)
        acc = contrib if acc is None else acc + contrib
    return acc + bm


def _self_attention_k(x, bias2d, wqkv, bqkv, wm, bm):
    # q_in == kv_in: single fused (S,H)@(H,128) projection (review item 2).
    qkv = jnp.dot(x, wqkv, preferred_element_type=jnp.float32) + bqkv   # (S, 128)
    return _mh_core(qkv[:, :H], qkv[:, H:2 * H], qkv[:, 2 * H:3 * H], bias2d, wm, bm)


def _cross_attention_k(s, mem, bias2d, wqkv, bqkv, wm, bm):
    q = jnp.dot(s, wqkv[:, :H], preferred_element_type=jnp.float32) + bqkv[:, :H]
    kv = jnp.dot(mem, wqkv[:, H:3 * H], preferred_element_type=jnp.float32) + bqkv[:, H:3 * H]
    return _mh_core(q, kv[:, :H], kv[:, H:], bias2d, wm, bm)


def _sa_block_k(x, bias2d, slab, base):
    wqkv = slab[base + SA_WQKV: base + SA_WQKV + H, :]        # (H, 128) lane-dense
    wm = slab[base + SA_WM: base + SA_WM + H, :H]
    w1 = slab[base + SA_W1: base + SA_W1 + H, :FF]
    w2 = slab[base + SA_W2: base + SA_W2 + FF, :H]
    v0 = base + SA_VEC
    bqkv = slab[v0 + 0: v0 + 1, :]
    bm = slab[v0 + 1: v0 + 2, :H]
    b1 = slab[v0 + 2: v0 + 3, :FF]
    b2 = slab[v0 + 3: v0 + 4, :H]
    g1 = slab[v0 + 4: v0 + 5, :H]
    be1 = slab[v0 + 5: v0 + 6, :H]
    g2 = slab[v0 + 6: v0 + 7, :H]
    be2 = slab[v0 + 7: v0 + 8, :H]
    x = _layer_norm_k(x + _self_attention_k(x, bias2d, wqkv, bqkv, wm, bm), g1, be1)
    x = _layer_norm_k(x + _ffn_k(x, w1, b1, w2, b2), g2, be2)
    return x


def _mca_block_k(s, mem, s_bias2d, mem_bias2d, slab, base):
    a_wqkv = slab[base + MC_AWQKV: base + MC_AWQKV + H, :]
    a_wm = slab[base + MC_AWM: base + MC_AWM + H, :H]
    c_wqkv = slab[base + MC_CWQKV: base + MC_CWQKV + H, :]
    c_wm = slab[base + MC_CWM: base + MC_CWM + H, :H]
    w1 = slab[base + MC_W1: base + MC_W1 + H, :FF]
    w2 = slab[base + MC_W2: base + MC_W2 + FF, :H]
    v0 = base + MC_VEC
    a_bqkv = slab[v0 + 0: v0 + 1, :]
    a_bm = slab[v0 + 1: v0 + 2, :H]
    c_bqkv = slab[v0 + 2: v0 + 3, :]
    c_bm = slab[v0 + 3: v0 + 4, :H]
    b1 = slab[v0 + 4: v0 + 5, :FF]
    b2 = slab[v0 + 5: v0 + 6, :H]
    g1, be1 = slab[v0 + 6: v0 + 7, :H], slab[v0 + 7: v0 + 8, :H]
    g2, be2 = slab[v0 + 8: v0 + 9, :H], slab[v0 + 9: v0 + 10, :H]
    g3, be3 = slab[v0 + 10: v0 + 11, :H], slab[v0 + 11: v0 + 12, :H]
    s = _layer_norm_k(s + _self_attention_k(s, s_bias2d, a_wqkv, a_bqkv, a_wm, a_bm),
                      g1, be1)
    s = _layer_norm_k(s + _cross_attention_k(s, mem, mem_bias2d, c_wqkv, c_bqkv, c_wm, c_bm),
                      g2, be2)
    s = _layer_norm_k(s + _ffn_k(s, w1, b1, w2, b2), g3, be3)
    return s


# ----------------------------- fused Pallas kernel ----------------------------

def mcan_kernel(x_ref, y_ref, xb_ref, yb_ref, sa_ref, mca_ref, xo_ref, yo_ref):
    x = x_ref[0]      # (Sx, H)
    y = y_ref[0]      # (Sy, H)
    Sx = x.shape[0]
    Sy = y.shape[0]
    xb = xb_ref[0]    # (1, Sx) additive mask bias
    yb = yb_ref[0]    # (1, Sy)

    # Hoisted mask-bias broadcasts: 3 broadcasts total, reused by all 8 attentions.
    xb_sa = jnp.broadcast_to(xb, (Sx, Sx))        # encoder self-attention
    yb_sa = jnp.broadcast_to(yb, (Sy, Sy))        # decoder self-attention
    xb_cross = jnp.broadcast_to(xb, (Sy, Sx))     # decoder cross-attention

    # Encoder stack: x = SA_l(x)
    for l in range(LAYER):
        x = _sa_block_k(x, xb_sa, sa_ref, l * SA_ROWS)
    xo_ref[0] = x

    # Decoder stack: y = MCA_l(y, x_final)
    for l in range(LAYER):
        y = _mca_block_k(y, x, yb_sa, xb_cross, mca_ref, l * MC_ROWS)
    yo_ref[0] = y


# ----------------------------- weight packing ---------------------------------

def _pad_lane(a):
    return jnp.pad(a, ((0, 0), (0, LANE - a.shape[1])))


def pack_params(enc_params, dec_params):
    """Pack all layers into two lane-dense (rows, 128) f32 slabs."""
    scale = 1.0 / math.sqrt(HIDDEN_SIZE_HEAD)

    sa_rows = []
    for p in enc_params:
        wqkv = jnp.concatenate([p["wq"] * scale, p["wk"], p["wv"]], axis=1)   # (H, 3H)
        bqkv = jnp.concatenate([p["bq"] * scale, p["bk"], p["bv"]], axis=1)   # (1, 3H)
        sa_rows += [wqkv, p["wm"], p["w1"], p["w2"],
                    bqkv, p["bm"], p["b1"], p["b2"],
                    p["g1"], p["be1"], p["g2"], p["be2"]]
    sa_slab = jnp.concatenate([_pad_lane(r) for r in sa_rows], axis=0)

    mc_rows = []
    pad_rows = MC_ROWS - (MC_VEC + 12)
    for p in dec_params:
        a_wqkv = jnp.concatenate([p["a_wq"] * scale, p["a_wk"], p["a_wv"]], axis=1)
        a_bqkv = jnp.concatenate([p["a_bq"] * scale, p["a_bk"], p["a_bv"]], axis=1)
        c_wqkv = jnp.concatenate([p["c_wq"] * scale, p["c_wk"], p["c_wv"]], axis=1)
        c_bqkv = jnp.concatenate([p["c_bq"] * scale, p["c_bk"], p["c_bv"]], axis=1)
        mc_rows += [_pad_lane(m) for m in
                    [a_wqkv, p["a_wm"], c_wqkv, p["c_wm"], p["w1"], p["w2"],
                     a_bqkv, p["a_bm"], c_bqkv, p["c_bm"], p["b1"], p["b2"],
                     p["g1"], p["be1"], p["g2"], p["be2"], p["g3"], p["be3"]]]
        if pad_rows:
            mc_rows.append(jnp.zeros((pad_rows, LANE), jnp.float32))
    mca_slab = jnp.concatenate(mc_rows, axis=0)

    assert sa_slab.shape == (LAYER * SA_ROWS, LANE)
    assert mca_slab.shape == (LAYER * MC_ROWS, LANE)
    return sa_slab.astype(jnp.float32), mca_slab.astype(jnp.float32)


# ----------------------------- pallas_call wrapper -----------------------------

def mcan_forward(x, y, x_mask_f, y_mask_f, enc_params, dec_params):
    # x: (B, Sx, H); y: (B, Sy, H); masks: (B, 1, S) float, 1.0 = padded position.
    B, Sx, _ = x.shape
    Sy = y.shape[1]

    # Additive attention bias (replaces per-head masked_fill in the kernel).
    x_bias = jnp.where(x_mask_f > 0.5, -1e9, 0.0).astype(jnp.float32)   # (B, 1, Sx)
    y_bias = jnp.where(y_mask_f > 0.5, -1e9, 0.0).astype(jnp.float32)   # (B, 1, Sy)

    sa_slab, mca_slab = pack_params(enc_params, dec_params)

    def seq_spec(S):
        return pl.BlockSpec((1, S, H), lambda b: (b, 0, 0))

    def bias_spec(S):
        return pl.BlockSpec((1, 1, S), lambda b: (b, 0, 0))

    def slab_spec(shape):
        # Constant block index across the grid -> fetched once, stays resident.
        return pl.BlockSpec(shape, lambda b: (0, 0))

    in_specs = [seq_spec(Sx), seq_spec(Sy), bias_spec(Sx), bias_spec(Sy),
                slab_spec(sa_slab.shape), slab_spec(mca_slab.shape)]
    out_specs = (seq_spec(Sx), seq_spec(Sy))
    out_shape = (jax.ShapeDtypeStruct((B, Sx, H), jnp.float32),
                 jax.ShapeDtypeStruct((B, Sy, H), jnp.float32))

    x_out, y_out = pl.pallas_call(
        mcan_kernel,
        out_shape=out_shape,
        grid=(B,),
        in_specs=in_specs,
        out_specs=out_specs,
        compiler_params=pltpu.CompilerParams(dimension_semantics=("parallel",)),
    )(x, y, x_bias, y_bias, sa_slab, mca_slab)
    return x_out, y_out


# ----------------------------- parameter init ----------------------------------

def init_linear(key, din, dout):
    k1, k2 = jax.random.split(key)
    w = jax.random.normal(k1, (din, dout), jnp.float32) * 0.05
    b = jax.random.normal(k2, (1, dout), jnp.float32) * 0.05
    return w, b


def init_mhatt(key, prefix=""):
    keys = jax.random.split(key, 4)
    p = {}
    for name, k in zip(["q", "k", "v", "m"], keys):
        w, b = init_linear(k, HIDDEN_SIZE, HIDDEN_SIZE)
        p[prefix + "w" + name] = w
        p[prefix + "b" + name] = b
    return p


def init_sa(key):
    k1, k2, k3 = jax.random.split(key, 3)
    p = init_mhatt(k1)
    w1, b1 = init_linear(k2, HIDDEN_SIZE, FF_SIZE)
    w2, b2 = init_linear(k3, FF_SIZE, HIDDEN_SIZE)
    p.update(dict(w1=w1, b1=b1, w2=w2, b2=b2))
    for i in (1, 2):
        p[f"g{i}"] = jnp.ones((1, HIDDEN_SIZE), jnp.float32)
        p[f"be{i}"] = jnp.zeros((1, HIDDEN_SIZE), jnp.float32)
    return p


def init_mca(key):
    k1, k2, k3, k4 = jax.random.split(key, 4)
    p = {}
    p.update(init_mhatt(k1, "a_"))
    p.update(init_mhatt(k2, "c_"))
    w1, b1 = init_linear(k3, HIDDEN_SIZE, FF_SIZE)
    w2, b2 = init_linear(k4, FF_SIZE, HIDDEN_SIZE)
    p.update(dict(w1=w1, b1=b1, w2=w2, b2=b2))
    for i in (1, 2, 3):
        p[f"g{i}"] = jnp.ones((1, HIDDEN_SIZE), jnp.float32)
        p[f"be{i}"] = jnp.zeros((1, HIDDEN_SIZE), jnp.float32)
    return p


# ----------------------------- pure-JAX reference (exact torch math) -----------

def _ref_layer_norm(x, gamma, beta):
    mean = jnp.mean(x, axis=-1, keepdims=True)
    var = jnp.sum((x - mean) ** 2, axis=-1, keepdims=True) / (x.shape[-1] - 1)
    return gamma * (x - mean) / (jnp.sqrt(var) + LN_EPS) + beta


def _ref_mhatt(v_in, k_in, q_in, mask, wv, bv, wk, bk, wq, bq, wm, bm):
    v = jnp.dot(v_in, wv) + bv
    k = jnp.dot(k_in, wk) + bk
    q = jnp.dot(q_in, wq) + bq
    scale = 1.0 / math.sqrt(HIDDEN_SIZE_HEAD)
    outs = []
    for h in range(MULTI_HEAD):
        sl = slice(h * DH, (h + 1) * DH)
        scores = jnp.dot(q[:, sl], k[:, sl].T) * scale
        scores = jnp.where(mask > 0.5, -1e9, scores)
        scores = scores - jnp.max(scores, axis=-1, keepdims=True)
        p = jnp.exp(scores)
        p = p / jnp.sum(p, axis=-1, keepdims=True)
        outs.append(jnp.dot(p, v[:, sl]))
    atted = jnp.concatenate(outs, axis=-1)
    return jnp.dot(atted, wm) + bm


def _ref_ffn(x, w1, b1, w2, b2):
    h = jnp.maximum(jnp.dot(x, w1) + b1, 0.0)
    return jnp.dot(h, w2) + b2


def ref_mcan(x, y, x_mask_f, y_mask_f, enc_params, dec_params):
    B = x.shape[0]

    def sa_ref(xb, mb, p):
        att = _ref_mhatt(xb, xb, xb, mb, p["wv"], p["bv"], p["wk"], p["bk"],
                         p["wq"], p["bq"], p["wm"], p["bm"])
        xb = _ref_layer_norm(xb + att, p["g1"], p["be1"])
        return _ref_layer_norm(xb + _ref_ffn(xb, p["w1"], p["b1"], p["w2"], p["b2"]),
                               p["g2"], p["be2"])

    def mca_ref(sb, memb, smb, memmb, p):
        sb = _ref_layer_norm(
            sb + _ref_mhatt(sb, sb, sb, smb, p["a_wv"], p["a_bv"], p["a_wk"], p["a_bk"],
                            p["a_wq"], p["a_bq"], p["a_wm"], p["a_bm"]),
            p["g1"], p["be1"])
        sb = _ref_layer_norm(
            sb + _ref_mhatt(memb, memb, sb, memmb, p["c_wv"], p["c_bv"], p["c_wk"], p["c_bk"],
                            p["c_wq"], p["c_bq"], p["c_wm"], p["c_bm"]),
            p["g2"], p["be2"])
        return _ref_layer_norm(sb + _ref_ffn(sb, p["w1"], p["b1"], p["w2"], p["b2"]),
                               p["g3"], p["be3"])

    x_out, y_out = [], []
    for b in range(B):
        xb = x[b]
        for p in enc_params:
            xb = sa_ref(xb, x_mask_f[b], p)
        x_out.append(xb)
    for b in range(B):
        yb = y[b]
        for p in dec_params:
            yb = mca_ref(yb, x_out[b], y_mask_f[b], x_mask_f[b], p)
        y_out.append(yb)
    return jnp.stack(x_out), jnp.stack(y_out)


# ----------------------------- main --------------------------------------------

if __name__ == "__main__":
    B, SX, SY = 2, 16, 8  # batch, x-sequence (e.g. image regions), y-sequence

    key = jax.random.PRNGKey(0)
    kx, ky, kp = jax.random.split(key, 3)
    x = jax.random.normal(kx, (B, SX, HIDDEN_SIZE), jnp.float32)
    y = jax.random.normal(ky, (B, SY, HIDDEN_SIZE), jnp.float32)

    # PyTorch masks would be (B, 1, 1, S) bool, True = pad; wrapper takes float (B, 1, S).
    x_lens = jnp.array([16, 12])
    y_lens = jnp.array([8, 5])
    x_mask = (jnp.arange(SX)[None, :] >= x_lens[:, None]).astype(jnp.float32).reshape(B, 1, SX)
    y_mask = (jnp.arange(SY)[None, :] >= y_lens[:, None]).astype(jnp.float32).reshape(B, 1, SY)

    keys = jax.random.split(kp, 2 * LAYER)
    enc_params = [init_sa(keys[i]) for i in range(LAYER)]
    dec_params = [init_mca(keys[LAYER + i]) for i in range(LAYER)]

    x_out, y_out = mcan_forward(x, y, x_mask, y_mask, enc_params, dec_params)
    jax.block_until_ready((x_out, y_out))

    x_ref, y_ref = ref_mcan(x, y, x_mask, y_mask, enc_params, dec_params)
    assert np.allclose(np.asarray(x_out), np.asarray(x_ref), atol=2e-3, rtol=2e-3)
    assert np.allclose(np.asarray(y_out), np.asarray(y_ref), atol=2e-3, rtol=2e-3)

    print("KERNEL_OK")
</pallas_src>

<mosaic_0001>
module attributes {stable_mosaic.version = 11 : i64} {
  func.func @mcan_kernel(%arg0: i32, %arg1: memref<1x16x32xf32, #tpu.memory_space<vmem>>, %arg2: memref<1x8x32xf32, #tpu.memory_space<vmem>>, %arg3: memref<1x1x16xf32, #tpu.memory_space<vmem>>, %arg4: memref<1x1x8xf32, #tpu.memory_space<vmem>>, %arg5: memref<336x128xf32, #tpu.memory_space<vmem>>, %arg6: memref<480x128xf32, #tpu.memory_space<vmem>>, %arg7: memref<1x16x32xf32, #tpu.memory_space<vmem>>, %arg8: memref<1x8x32xf32, #tpu.memory_space<vmem>>) attributes {dimension_semantics = [#tpu.dimension_semantics<parallel>], iteration_bounds = array<i64: 2>, scalar_prefetch = 0 : i64, scratch_operands = 0 : i64, tpu.core_type = #tpu.core_type<tc>, window_params = [{transform_indices = @transform_0, window_bounds = array<i64: 1, 16, 32>}, {transform_indices = @transform_1, window_bounds = array<i64: 1, 8, 32>}, {transform_indices = @transform_2, window_bounds = array<i64: 1, 1, 16>}, {transform_indices = @transform_3, window_bounds = array<i64: 1, 1, 8>}, {pipeline_mode = #tpu.pipeline_mode<synchronous>, transform_indices = @transform_4, window_bounds = array<i64: 336, 128>}, {pipeline_mode = #tpu.pipeline_mode<synchronous>, transform_indices = @transform_5, window_bounds = array<i64: 480, 128>}, {transform_indices = @transform_6, window_bounds = array<i64: 1, 16, 32>}, {transform_indices = @transform_7, window_bounds = array<i64: 1, 8, 32>}]} {
    %c0 = arith.constant 0 : index
    %c0_0 = arith.constant 0 : index
    %c0_1 = arith.constant 0 : index
    %0 = vector.load %arg1[%c0, %c0_0, %c0_1] : memref<1x16x32xf32, #tpu.memory_space<vmem>>, vector<1x16x32xf32>
    %1 = vector.shape_cast %0 : vector<1x16x32xf32> to vector<16x32xf32>
    %c0_2 = arith.constant 0 : index
    %c0_3 = arith.constant 0 : index
    %c0_4 = arith.constant 0 : index
    %2 = vector.load %arg2[%c0_2, %c0_3, %c0_4] : memref<1x8x32xf32, #tpu.memory_space<vmem>>, vector<1x8x32xf32>
    %3 = vector.shape_cast %2 : vector<1x8x32xf32> to vector<8x32xf32>
    %c0_5 = arith.constant 0 : index
    %c0_6 = arith.constant 0 : index
    %c0_7 = arith.constant 0 : index
    %4 = vector.load %arg3[%c0_5, %c0_6, %c0_7] : memref<1x1x16xf32, #tpu.memory_space<vmem>>, vector<1x1x16xf32>
    %5 = vector.shape_cast %4 : vector<1x1x16xf32> to vector<1x16xf32>
    %c0_8 = arith.constant 0 : index
    %c0_9 = arith.constant 0 : index
    %c0_10 = arith.constant 0 : index
    %6 = vector.load %arg4[%c0_8, %c0_9, %c0_10] : memref<1x1x8xf32, #tpu.memory_space<vmem>>, vector<1x1x8xf32>
    %7 = vector.shape_cast %6 : vector<1x1x8xf32> to vector<1x8xf32>
    %8 = vector.shape_cast %5 : vector<1x16xf32> to vector<1x16xf32>
    %9 = vector.broadcast %8 : vector<1x16xf32> to vector<16x16xf32>
    %10 = vector.shape_cast %7 : vector<1x8xf32> to vector<1x8xf32>
    %11 = vector.broadcast %10 : vector<1x8xf32> to vector<8x8xf32>
    %12 = vector.shape_cast %5 : vector<1x16xf32> to vector<1x16xf32>
    %13 = vector.broadcast %12 : vector<1x16xf32> to vector<8x16xf32>
    %c0_11 = arith.constant 0 : index
    %c0_12 = arith.constant 0 : index
    %14 = vector.load %arg5[%c0_11, %c0_12] : memref<336x128xf32, #tpu.memory_space<vmem>>, vector<32x128xf32>
    %c32 = arith.constant 32 : index
    %c0_13 = arith.constant 0 : index
    %15 = vector.load %arg5[%c32, %c0_13] : memref<336x128xf32, #tpu.memory_space<vmem>>, vector<32x32xf32>
    %c64 = arith.constant 64 : index
    %c0_14 = arith.constant 0 : index
    %16 = vector.load %arg5[%c64, %c0_14] : memref<336x128xf32, #tpu.memory_space<vmem>>, vector<32x64xf32>
    %c96 = arith.constant 96 : index
    %c0_15 = arith.constant 0 : index
    %17 = vector.load %arg5[%c96, %c0_15] : memref<336x128xf32, #tpu.memory_space<vmem>>, vector<64x32xf32>
    %c160 = arith.constant 160 : index
    %c0_16 = arith.constant 0 : index
    %18 = vector.load %arg5[%c160, %c0_16] : memref<336x128xf32, #tpu.memory_space<vmem>>, vector<1x128xf32>
    %c161 = arith.constant 161 : index
    %c0_17 = arith.constant 0 : index
    %19 = vector.load %arg5[%c161, %c0_17] : memref<336x128xf32, #tpu.memory_space<vmem>>, vector<1x32xf32>
    %c162 = arith.constant 162 : index
    %c0_18 = arith.constant 0 : index
    %20 = vector.load %arg5[%c162, %c0_18] : memref<336x128xf32, #tpu.memory_space<vmem>>, vector<1x64xf32>
    %c163 = arith.constant 163 : index
    %c0_19 = arith.constant 0 : index
    %21 = vector.load %arg5[%c163, %c0_19] : memref<336x128xf32, #tpu.memory_space<vmem>>, vector<1x32xf32>
    %c164 = arith.constant 164 : index
    %c0_20 = arith.constant 0 : index
    %22 = vector.load %arg5[%c164, %c0_20] : memref<336x128xf32, #tpu.memory_space<vmem>>, vector<1x32xf32>
    %c165 = arith.constant 165 : index
    %c0_21 = arith.constant 0 : index
    %23 = vector.load %arg5[%c165, %c0_21] : memref<336x128xf32, #tpu.memory_space<vmem>>, vector<1x32xf32>
    %c166 = arith.constant 166 : index
    %c0_22 = arith.constant 0 : index
    %24 = vector.load %arg5[%c166, %c0_22] : memref<336x128xf32, #tpu.memory_space<vmem>>, vector<1x32xf32>
    %c167 = arith.constant 167 : index
    %c0_23 = arith.constant 0 : index
    %25 = vector.load %arg5[%c167, %c0_23] : memref<336x128xf32, #tpu.memory_space<vmem>>, vector<1x32xf32>
    %cst = arith.constant dense<0.000000e+00> : vector<16x128xf32>
    %26 = tpu.matmul %1, %14, %cst {dimension_numbers = #tpu.dot_dimension_numbers<[1], [0], [0], [1], [0, 0, 1, 1], [], []>} : vector<16x32xf32>, vector<32x128xf32>, vector<16x128xf32> -> vector<16x128xf32>
    %27 = vector.broadcast %18 : vector<1x128xf32> to vector<16x128xf32>
    %28 = arith.addf %26, %27 : vector<16x128xf32>
    %29 = vector.extract_strided_slice %28 {offsets = [0, 0], sizes = [16, 32], strides = [1, 1]} : vector<16x128xf32> to vector<16x32xf32>
    %30 = vector.extract_strided_slice %28 {offsets = [0, 32], sizes = [16, 32], strides = [1, 1]} : vector<16x128xf32> to vector<16x32xf32>
    %31 = vector.extract_strided_slice %28 {offsets = [0, 64], sizes = [16, 32], strides = [1, 1]} : vector<16x128xf32> to vector<16x32xf32>
    %32 = vector.extract_strided_slice %29 {offsets = [0, 0], sizes = [16, 8], strides = [1, 1]} : vector<16x32xf32> to vector<16x8xf32>
    %33 = vector.extract_strided_slice %30 {offsets = [0, 0], sizes = [16, 8], strides = [1, 1]} : vector<16x32xf32> to vector<16x8xf32>
    %cst_24 = arith.constant dense<0.000000e+00> : vector<16x16xf32>
    %34 = tpu.matmul %32, %33, %cst_24 {dimension_numbers = #tpu.dot_dimension_numbers<[1], [1], [0], [0], [0, 0, 1, 0], [], []>} : vector<16x8xf32>, vector<16x8xf32>, vector<16x16xf32> -> vector<16x16xf32>
    %35 = arith.addf %34, %9 : vector<16x16xf32>
    %cst_25 = arith.constant dense<0xFF800000> : vector<16xf32>
    %36 = vector.multi_reduction <maximumf>, %35, %cst_25 [1] : vector<16x16xf32> to vector<16xf32>
    %37 = vector.shape_cast %36 : vector<16xf32> to vector<16x1xf32>
    %38 = vector.broadcast %37 : vector<16x1xf32> to vector<16x16xf32>
    %39 = arith.subf %35, %38 : vector<16x16xf32>
    %40 = math.exp %39 : vector<16x16xf32>
    %cst_26 = arith.constant dense<0.000000e+00> : vector<16xf32>
    %41 = vector.multi_reduction <add>, %40, %cst_26 [1] : vector<16x16xf32> to vector<16xf32>
    %42 = vector.shape_cast %41 : vector<16xf32> to vector<16x1xf32>
    %cst_27 = arith.constant 1.000000e+00 : f32
    %43 = vector.broadcast %cst_27 : f32 to vector<16x1xf32>
    %44 = arith.divf %43, %42 : vector<16x1xf32>
    %45 = vector.broadcast %44 : vector<16x1xf32> to vector<16x16xf32>
    %46 = arith.mulf %40, %45 : vector<16x16xf32>
    %47 = vector.extract_strided_slice %31 {offsets = [0, 0], sizes = [16, 8], strides = [1, 1]} : vector<16x32xf32> to vector<16x8xf32>
    %cst_28 = arith.constant dense<0.000000e+00> : vector<16x8xf32>
    %48 = tpu.matmul %46, %47, %cst_28 {dimension_numbers = #tpu.dot_dimension_numbers<[1], [0], [0], [1], [0, 0, 1, 1], [], []>} : vector<16x16xf32>, vector<16x8xf32>, vector<16x8xf32> -> vector<16x8xf32>
    %49 = vector.extract_strided_slice %15 {offsets = [0, 0], sizes = [8, 32], strides = [1, 1]} : vector<32x32xf32> to vector<8x32xf32>
    %cst_29 = arith.constant dense<0.000000e+00> : vector<16x32xf32>
    %50 = tpu.matmul %48, %49, %cst_29 {dimension_numbers = #tpu.dot_dimension_numbers<[1], [0], [0], [1], [0, 0, 1, 1], [], []>} : vector<16x8xf32>, vector<8x32xf32>, vector<16x32xf32> -> vector<16x32xf32>
    %51 = vector.extract_strided_slice %29 {offsets = [0, 8], sizes = [16, 8], strides = [1, 1]} : vector<16x32xf32> to vector<16x8xf32>
    %52 = vector.extract_strided_slice %30 {offsets = [0, 8], sizes = [16, 8], strides = [1, 1]} : vector<16x32xf32> to vector<16x8xf32>
    %cst_30 = arith.constant dense<0.000000e+00> : vector<16x16xf32>
    %53 = tpu.matmul %51, %52, %cst_30 {dimension_numbers = #tpu.dot_dimension_numbers<[1], [1], [0], [0], [0, 0, 1, 0], [], []>} : vector<16x8xf32>, vector<16x8xf32>, vector<16x16xf32> -> vector<16x16xf32>
    %54 = arith.addf %53, %9 : vector<16x16xf32>
    %cst_31 = arith.constant dense<0xFF800000> : vector<16xf32>
    %55 = vector.multi_reduction <maximumf>, %54, %cst_31 [1] : vector<16x16xf32> to vector<16xf32>
    %56 = vector.shape_cast %55 : vector<16xf32> to vector<16x1xf32>
    %57 = vector.broadcast %56 : vector<16x1xf32> to vector<16x16xf32>
    %58 = arith.subf %54, %57 : vector<16x16xf32>
    %59 = math.exp %58 : vector<16x16xf32>
    %cst_32 = arith.constant dense<0.000000e+00> : vector<16xf32>
    %60 = vector.multi_reduction <add>, %59, %cst_32 [1] : vector<16x16xf32> to vector<16xf32>
    %61 = vector.shape_cast %60 : vector<16xf32> to vector<16x1xf32>
    %cst_33 = arith.constant 1.000000e+00 : f32
    %62 = vector.broadcast %cst_33 : f32 to vector<16x1xf32>
    %63 = arith.divf %62, %61 : vector<16x1xf32>
    %64 = vector.broadcast %63 : vector<16x1xf32> to vector<16x16xf32>
    %65 = arith.mulf %59, %64 : vector<16x16xf32>
    %66 = vector.extract_strided_slice %31 {offsets = [0, 8], sizes = [16, 8], strides = [1, 1]} : vector<16x32xf32> to vector<16x8xf32>
    %cst_34 = arith.constant dense<0.000000e+00> : vector<16x8xf32>
    %67 = tpu.matmul %65, %66, %cst_34 {dimension_numbers = #tpu.dot_dimension_numbers<[1], [0], [0], [1], [0, 0, 1, 1], [], []>} : vector<16x16xf32>, vector<16x8xf32>, vector<16x8xf32> -> vector<16x8xf32>
    %68 = vector.extract_strided_slice %15 {offsets = [8, 0], sizes = [8, 32], strides = [1, 1]} : vector<32x32xf32> to vector<8x32xf32>
    %cst_35 = arith.constant dense<0.000000e+00> : vector<16x32xf32>
    %69 = tpu.matmul %67, %68, %cst_35 {dimension_numbers = #tpu.dot_dimension_numbers<[1], [0], [0], [1], [0, 0, 1, 1], [], []>} : vector<16x8xf32>, vector<8x32xf32>, vector<16x32xf32> -> vector<16x32xf32>
    %70 = arith.addf %50, %69 : vector<16x32xf32>
    %71 = vector.extract_strided_slice %29 {offsets = [0, 16], sizes = [16, 8], strides = [1, 1]} : vector<16x32xf32> to vector<16x8xf32>
    %72 = vector.extract_strided_slice %30 {offsets = [0, 16], sizes = [16, 8], strides = [1, 1]} : vector<16x32xf32> to vector<16x8xf32>
    %cst_36 = arith.constant dense<0.000000e+00> : vector<16x16xf32>
    %73 = tpu.matmul %71, %72, %cst_36 {dimension_numbers = #tpu.dot_dimension_numbers<[1], [1], [0], [0], [0, 0, 1, 0], [], []>} : vector<16x8xf32>, vector<16x8xf32>, vector<16x16xf32> -> vector<16x16xf32>
    %74 = arith.addf %73, %9 : vector<16x16xf32>
    %cst_37 = arith.constant dense<0xFF800000> : vector<16xf32>
    %75 = vector.multi_reduction <maximumf>, %74, %cst_37 [1] : vector<16x16xf32> to vector<16xf32>
    %76 = vector.shape_cast %75 : vector<16xf32> to vector<16x1xf32>
    %77 = vector.broadcast %76 : vector<16x1xf32> to vector<16x16xf32>
    %78 = arith.subf %74, %77 : vector<16x16xf32>
    %79 = math.exp %78 : vector<16x16xf32>
    %cst_38 = arith.constant dense<0.000000e+00> : vector<16xf32>
    %80 = vector.multi_reduction <add>, %79, %cst_38 [1] : vector<16x16xf32> to vector<16xf32>
    %81 = vector.shape_cast %80 : vector<16xf32> to vector<16x1xf32>
    %cst_39 = arith.constant 1.000000e+00 : f32
    %82 = vector.broadcast %cst_39 : f32 to vector<16x1xf32>
    %83 = arith.divf %82, %81 : vector<16x1xf32>
    %84 = vector.broadcast %83 : vector<16x1xf32> to vector<16x16xf32>
    %85 = arith.mulf %79, %84 : vector<16x16xf32>
    %86 = vector.extract_strided_slice %31 {offsets = [0, 16], sizes = [16, 8], strides = [1, 1]} : vector<16x32xf32> to vector<16x8xf32>
    %cst_40 = arith.constant dense<0.000000e+00> : vector<16x8xf32>
    %87 = tpu.matmul %85, %86, %cst_40 {dimension_numbers = #tpu.dot_dimension_numbers<[1], [0], [0], [1], [0, 0, 1, 1], [], []>} : vector<16x16xf32>, vector<16x8xf32>, vector<16x8xf32> -> vector<16x8xf32>
    %88 = vector.extract_strided_slice %15 {offsets = [16, 0], sizes = [8, 32], strides = [1, 1]} : vector<32x32xf32> to vector<8x32xf32>
    %cst_41 = arith.constant dense<0.000000e+00> : vector<16x32xf32>
    %89 = tpu.matmul %87, %88, %cst_41 {dimension_numbers = #tpu.dot_dimension_numbers<[1], [0], [0], [1], [0, 0, 1, 1], [], []>} : vector<16x8xf32>, vector<8x32xf32>, vector<16x32xf32> -> vector<16x32xf32>
    %90 = arith.addf %70, %89 : vector<16x32xf32>
    %91 = vector.extract_strided_slice %29 {offsets = [0, 24], sizes = [16, 8], strides = [1, 1]} : vector<16x32xf32> to vector<16x8xf32>
    %92 = vector.extract_strided_slice %30 {offsets = [0, 24], sizes = [16, 8], strides = [1, 1]} : vector<16x32xf32> to vector<16x8xf32>
    %cst_42 = arith.constant dense<0.000000e+00> : vector<16x16xf32>
    %93 = tpu.matmul %91, %92, %cst_42 {dimension_numbers = #tpu.dot_dimension_numbers<[1], [1], [0], [0], [0, 0, 1, 0], [], []>} : vector<16x8xf32>, vector<16x8xf32>, vector<16x16xf32> -> vector<16x16xf32>
    %94 = arith.addf %93, %9 : vector<16x16xf32>
    %cst_43 = arith.constant dense<0xFF800000> : vector<16xf32>
    %95 = vector.multi_reduction <maximumf>, %94, %cst_43 [1] : vector<16x16xf32> to vector<16xf32>
    %96 = vector.shape_cast %95 : vector<16xf32> to vector<16x1xf32>
    %97 = vector.broadcast %96 : vector<16x1xf32> to vector<16x16xf32>
    %98 = arith.subf %94, %97 : vector<16x16xf32>
    %99 = math.exp %98 : vector<16x16xf32>
    %cst_44 = arith.constant dense<0.000000e+00> : vector<16xf32>
    %100 = vector.multi_reduction <add>, %99, %cst_44 [1] : vector<16x16xf32> to vector<16xf32>
    %101 = vector.shape_cast %100 : vector<16xf32> to vector<16x1xf32>
    %cst_45 = arith.constant 1.000000e+00 : f32
    %102 = vector.broadcast %cst_45 : f32 to vector<16x1xf32>
    %103 = arith.divf %102, %101 : vector<16x1xf32>
    %104 = vector.broadcast %103 : vector<16x1xf32> to vector<16x16xf32>
    %105 = arith.mulf %99, %104 : vector<16x16xf32>
    %106 = vector.extract_strided_slice %31 {offsets = [0, 24], sizes = [16, 8], strides = [1, 1]} : vector<16x32xf32> to vector<16x8xf32>
    %cst_46 = arith.constant dense<0.000000e+00> : vector<16x8xf32>
    %107 = tpu.matmul %105, %106, %cst_46 {dimension_numbers = #tpu.dot_dimension_numbers<[1], [0], [0], [1], [0, 0, 1, 1], [], []>} : vector<16x16xf32>, vector<16x8xf32>, vector<16x8xf32> -> vector<16x8xf32>
    %108 = vector.extract_strided_slice %15 {offsets = [24, 0], sizes = [8, 32], strides = [1, 1]} : vector<32x32xf32> to vector<8x32xf32>
    %cst_47 = arith.constant dense<0.000000e+00> : vector<16x32xf32>
    %109 = tpu.matmul %107, %108, %cst_47 {dimension_numbers = #tpu.dot_dimension_numbers<[1], [0], [0], [1], [0, 0, 1, 1], [], []>} : vector<16x8xf32>, vector<8x32xf32>, vector<16x32xf32> -> vector<16x32xf32>
    %110 = arith.addf %90, %109 : vector<16x32xf32>
    %111 = vector.broadcast %19 : vector<1x32xf32> to vector<16x32xf32>
    %112 = arith.addf %110, %111 : vector<16x32xf32>
    %113 = arith.addf %1, %112 : vector<16x32xf32>
    %cst_48 = arith.constant dense<0.000000e+00> : vector<16xf32>
    %114 = vector.multi_reduction <add>, %113, %cst_48 [1] : vector<16x32xf32> to vector<16xf32>
    %115 = vector.shape_cast %114 : vector<16xf32> to vector<16x1xf32>
    %cst_49 = arith.constant 3.200000e+01 : f32
    %116 = vector.broadcast %cst_49 : f32 to vector<16x1xf32>
    %117 = arith.divf %115, %116 : vector<16x1xf32>
    %118 = vector.broadcast %117 : vector<16x1xf32> to vector<16x32xf32>
    %119 = arith.subf %113, %118 : vector<16x32xf32>
    %120 = arith.mulf %119, %119 : vector<16x32xf32>
    %cst_50 = arith.constant dense<0.000000e+00> : vector<16xf32>
    %121 = vector.multi_reduction <add>, %120, %cst_50 [1] : vector<16x32xf32> to vector<16xf32>
    %122 = vector.shape_cast %121 : vector<16xf32> to vector<16x1xf32>
    %cst_51 = arith.constant 0.0322580636 : f32
    %123 = vector.broadcast %cst_51 : f32 to vector<16x1xf32>
    %124 = arith.mulf %122, %123 : vector<16x1xf32>
    %125 = math.sqrt %124 : vector<16x1xf32>
    %cst_52 = arith.constant 9.99999997E-7 : f32
    %126 = vector.broadcast %cst_52 : f32 to vector<16x1xf32>
    %127 = arith.addf %125, %126 : vector<16x1xf32>
    %cst_53 = arith.constant 1.000000e+00 : f32
    %128 = vector.broadcast %cst_53 : f32 to vector<16x1xf32>
    %129 = arith.divf %128, %127 : vector<16x1xf32>
    %130 = vector.broadcast %117 : vector<16x1xf32> to vector<16x32xf32>
    %131 = arith.subf %113, %130 : vector<16x32xf32>
    %132 = vector.broadcast %22 : vector<1x32xf32> to vector<16x32xf32>
    %133 = arith.mulf %132, %131 : vector<16x32xf32>
    %134 = vector.broadcast %129 : vector<16x1xf32> to vector<16x32xf32>
    %135 = arith.mulf %133, %134 : vector<16x32xf32>
    %136 = vector.broadcast %23 : vector<1x32xf32> to vector<16x32xf32>
    %137 = arith.addf %135, %136 : vector<16x32xf32>
    %cst_54 = arith.constant dense<0.000000e+00> : vector<16x64xf32>
    %138 = tpu.matmul %137, %16, %cst_54 {dimension_numbers = #tpu.dot_dimension_numbers<[1], [0], [0], [1], [0, 0, 1, 1], [], []>} : vector<16x32xf32>, vector<32x64xf32>, vector<16x64xf32> -> vector<16x64xf32>
    %139 = vector.broadcast %20 : vector<1x64xf32> to vector<16x64xf32>
    %140 = arith.addf %138, %139 : vector<16x64xf32>
    %cst_55 = arith.constant 0.000000e+00 : f32
    %141 = vector.broadcast %cst_55 : f32 to vector<16x64xf32>
    %142 = arith.maximumf %140, %141 : vector<16x64xf32>
    %cst_56 = arith.constant dense<0.000000e+00> : vector<16x32xf32>
    %143 = tpu.matmul %142, %17, %cst_56 {dimension_numbers = #tpu.dot_dimension_numbers<[1], [0], [0], [1], [0, 0, 1, 1], [], []>} : vector<16x64xf32>, vector<64x32xf32>, vector<16x32xf32> -> vector<16x32xf32>
    %144 = vector.broadcast %21 : vector<1x32xf32> to vector<16x32xf32>
    %145 = arith.addf %143, %144 : vector<16x32xf32>
    %146 = arith.addf %137, %145 : vector<16x32xf32>
    %cst_57 = arith.constant dense<0.000000e+00> : vector<16xf32>
    %147 = vector.multi_reduction <add>, %146, %cst_57 [1] : vector<16x32xf32> to vector<16xf32>
    %148 = vector.shape_cast %147 : vector<16xf32> to vector<16x1xf32>
    %cst_58 = arith.constant 3.200000e+01 : f32
    %149 = vector.broadcast %cst_58 : f32 to vector<16x1xf32>
    %150 = arith.divf %148, %149 : vector<16x1xf32>
    %151 = vector.broadcast %150 : vector<16x1xf32> to vector<16x32xf32>
    %152 = arith.subf %146, %151 : vector<16x32xf32>
    %153 = arith.mulf %152, %152 : vector<16x32xf32>
    %cst_59 = arith.constant dense<0.000000e+00> : vector<16xf32>
    %154 = vector.multi_reduction <add>, %153, %cst_59 [1] : vector<16x32xf32> to vector<16xf32>
    %155 = vector.shape_cast %154 : vector<16xf32> to vector<16x1xf32>
    %cst_60 = arith.constant 0.0322580636 : f32
    %156 = vector.broadcast %cst_60 : f32 to vector<16x1xf32>
    %157 = arith.mulf %155, %156 : vector<16x1xf32>
    %158 = math.sqrt %157 : vector<16x1xf32>
    %cst_61 = arith.constant 9.99999997E-7 : f32
    %159 = vector.broadcast %cst_61 : f32 to vector<16x1xf32>
    %160 = arith.addf %158, %159 : vector<16x1xf32>
    %cst_62 = arith.constant 1.000000e+00 : f32
    %161 = vector.broadcast %cst_62 : f32 to vector<16x1xf32>
    %162 = arith.divf %161, %160 : vector<16x1xf32>
    %163 = vector.broadcast %150 : vector<16x1xf32> to vector<16x32xf32>
    %164 = arith.subf %146, %163 : vector<16x32xf32>
    %165 = vector.broadcast %24 : vector<1x32xf32> to vector<16x32xf32>
    %166 = arith.mulf %165, %164 : vector<16x32xf32>
    %167 = vector.broadcast %162 : vector<16x1xf32> to vector<16x32xf32>
    %168 = arith.mulf %166, %167 : vector<16x32xf32>
    %169 = vector.broadcast %25 : vector<1x32xf32> to vector<16x32xf32>
    %170 = arith.addf %168, %169 : vector<16x32xf32>
    %c168 = arith.constant 168 : index
    %c0_63 = arith.constant 0 : index
    %171 = vector.load %arg5[%c168, %c0_63] : memref<336x128xf32, #tpu.memory_space<vmem>>, vector<32x128xf32>
    %c200 = arith.constant 200 : index
    %c0_64 = arith.constant 0 : index
    %172 = vector.load %arg5[%c200, %c0_64] : memref<336x128xf32, #tpu.memory_space<vmem>>, vector<32x32xf32>
    %c232 = arith.constant 232 : index
    %c0_65 = arith.constant 0 : index
    %173 = vector.load %arg5[%c232, %c0_65] : memref<336x128xf32, #tpu.memory_space<vmem>>, vector<32x64xf32>
    %c264 = arith.constant 264 : index
    %c0_66 = arith.constant 0 : index
    %174 = vector.load %arg5[%c264, %c0_66] : memref<336x128xf32, #tpu.memory_space<vmem>>, vector<64x32xf32>
    %c328 = arith.constant 328 : index
    %c0_67 = arith.constant 0 : index
    %175 = vector.load %arg5[%c328, %c0_67] : memref<336x128xf32, #tpu.memory_space<vmem>>, vector<1x128xf32>
    %c329 = arith.constant 329 : index
    %c0_68 = arith.constant 0 : index
    %176 = vector.load %arg5[%c329, %c0_68] : memref<336x128xf32, #tpu.memory_space<vmem>>, vector<1x32xf32>
    %c330 = arith.constant 330 : index
    %c0_69 = arith.constant 0 : index
    %177 = vector.load %arg5[%c330, %c0_69] : memref<336x128xf32, #tpu.memory_space<vmem>>, vector<1x64xf32>
    %c331 = arith.constant 331 : index
    %c0_70 = arith.constant 0 : index
    %178 = vector.load %arg5[%c331, %c0_70] : memref<336x128xf32, #tpu.memory_space<vmem>>, vector<1x32xf32>
    %c332 = arith.constant 332 : index
    %c0_71 = arith.constant 0 : index
    %179 = vector.load %arg5[%c332, %c0_71] : memref<336x128xf32, #tpu.memory_space<vmem>>, vector<1x32xf32>
    %c333 = arith.constant 333 : index
    %c0_72 = arith.constant 0 : index
    %180 = vector.load %arg5[%c333, %c0_72] : memref<336x128xf32, #tpu.memory_space<vmem>>, vector<1x32xf32>
    %c334 = arith.constant 334 : index
    %c0_73 = arith.constant 0 : index
    %181 = vector.load %arg5[%c334, %c0_73] : memref<336x128xf32, #tpu.memory_space<vmem>>, vector<1x32xf32>
    %c335 = arith.constant 335 : index
    %c0_74 = arith.constant 0 : index
    %182 = vector.load %arg5[%c335, %c0_74] : memref<336x128xf32, #tpu.memory_space<vmem>>, vector<1x32xf32>
    %cst_75 = arith.constant dense<0.000000e+00> : vector<16x128xf32>
    %183 = tpu.matmul %170, %171, %cst_75 {dimension_numbers = #tpu.dot_dimension_numbers<[1], [0], [0], [1], [0, 0, 1, 1], [], []>} : vector<16x32xf32>, vector<32x128xf32>, vector<16x128xf32> -> vector<16x128xf32>
    %184 = vector.broadcast %175 : vector<1x128xf32> to vector<16x128xf32>
    %185 = arith.addf %183, %184 : vector<16x128xf32>
    %186 = vector.extract_strided_slice %185 {offsets = [0, 0], sizes = [16, 32], strides = [1, 1]} : vector<16x128xf32> to vector<16x32xf32>
    %187 = vector.extract_strided_slice %185 {offsets = [0, 32], sizes = [16, 32], strides = [1, 1]} : vector<16x128xf32> to vector<16x32xf32>
    %188 = vector.extract_strided_slice %185 {offsets = [0, 64], sizes = [16, 32], strides = [1, 1]} : vector<16x128xf32> to vector<16x32xf32>
    %189 = vector.extract_strided_slice %186 {offsets = [0, 0], sizes = [16, 8], strides = [1, 1]} : vector<16x32xf32> to vector<16x8xf32>
    %190 = vector.extract_strided_slice %187 {offsets = [0, 0], sizes = [16, 8], strides = [1, 1]} : vector<16x32xf32> to vector<16x8xf32>
    %cst_76 = arith.constant dense<0.000000e+00> : vector<16x16xf32>
    %191 = tpu.matmul %189, %190, %cst_76 {dimension_numbers = #tpu.dot_dimension_numbers<[1], [1], [0], [0], [0, 0, 1, 0], [], []>} : vector<16x8xf32>, vector<16x8xf32>, vector<16x16xf32> -> vector<16x16xf32>
    %192 = arith.addf %191, %9 : vector<16x16xf32>
    %cst_77 = arith.constant dense<0xFF800000> : vector<16xf32>
    %193 = vector.multi_reduction <maximumf>, %192, %cst_77 [1] : vector<16x16xf32> to vector<16xf32>
    %194 = vector.shape_cast %193 : vector<16xf32> to vector<16x1xf32>
    %195 = vector.broadcast %194 : vector<16x1xf32> to vector<16x16xf32>
    %196 = arith.subf %192, %195 : vector<16x16xf32>
    %197 = math.exp %196 : vector<16x16xf32>
    %cst_78 = arith.constant dense<0.000000e+00> : vector<16xf32>
    %198 = vector.multi_reduction <add>, %197, %cst_78 [1] : vector<16x16xf32> to vector<16xf32>
    %199 = vector.shape_cast %198 : vector<16xf32> to vector<16x1xf32>
    %cst_79 = arith.constant 1.000000e+00 : f32
    %200 = vector.broadcast %cst_79 : f32 to vector<16x1xf32>
    %201 = arith.divf %200, %199 : vector<16x1xf32>
    %202 = vector.broadcast %201 : vector<16x1xf32> to vector<16x16xf32>
    %203 = arith.mulf %197, %202 : vector<16x16xf32>
    %204 = vector.extract_strided_slice %188 {offsets = [0, 0], sizes = [16, 8], strides = [1, 1]} : vector<16x32xf32> to vector<16x8xf32>
    %cst_80 = arith.constant dense<0.000000e+00> : vector<16x8xf32>
    %205 = tpu.matmul %203, %204, %cst_80 {dimension_numbers = #tpu.dot_dimension_numbers<[1], [0], [0], [1], [0, 0, 1, 1], [], []>} : vector<16x16xf32>, vector<16x8xf32>, vector<16x8xf32> -> vector<16x8xf32>
    %206 = vector.extract_strided_slice %172 {offsets = [0, 0], sizes = [8, 32], strides = [1, 1]} : vector<32x32xf32> to vector<8x32xf32>
    %cst_81 = arith.constant dense<0.000000e+00> : vector<16x32xf32>
    %207 = tpu.matmul %205, %206, %cst_81 {dimension_numbers = #tpu.dot_dimension_numbers<[1], [0], [0], [1], [0, 0, 1, 1], [], []>} : vector<16x8xf32>, vector<8x32xf32>, vector<16x32xf32> -> vector<16x32xf32>
    %208 = vector.extract_strided_slice %186 {offsets = [0, 8], sizes = [16, 8], strides = [1, 1]} : vector<16x32xf32> to vector<16x8xf32>
    %209 = vector.extract_strided_slice %187 {offsets = [0, 8], sizes = [16, 8], strides = [1, 1]} : vector<16x32xf32> to vector<16x8xf32>
    %cst_82 = arith.constant dense<0.000000e+00> : vector<16x16xf32>
    %210 = tpu.matmul %208, %209, %cst_82 {dimension_numbers = #tpu.dot_dimension_numbers<[1], [1], [0], [0], [0, 0, 1, 0], [], []>} : vector<16x8xf32>, vector<16x8xf32>, vector<16x16xf32> -> vector<16x16xf32>
    %211 = arith.addf %210, %9 : vector<16x16xf32>
    %cst_83 = arith.constant dense<0xFF800000> : vector<16xf32>
    %212 = vector.multi_reduction <maximumf>, %211, %cst_83 [1] : vector<16x16xf32> to vector<16xf32>
    %213 = vector.shape_cast %212 : vector<16xf32> to vector<16x1xf32>
    %214 = vector.broadcast %213 : vector<16x1xf32> to vector<16x16xf32>
    %215 = arith.subf %211, %214 : vector<16x16xf32>
    %216 = math.exp %215 : vector<16x16xf32>
    %cst_84 = arith.constant dense<0.000000e+00> : vector<16xf32>
    %217 = vector.multi_reduction <add>, %216, %cst_84 [1] : vector<16x16xf32> to vector<16xf32>
    %218 = vector.shape_cast %217 : vector<16xf32> to vector<16x1xf32>
    %cst_85 = arith.constant 1.000000e+00 : f32
    %219 = vector.broadcast %cst_85 : f32 to vector<16x1xf32>
    %220 = arith.divf %219, %218 : vector<16x1xf32>
    %221 = vector.broadcast %220 : vector<16x1xf32> to vector<16x16xf32>
    %222 = arith.mulf %216, %221 : vector<16x16xf32>
    %223 = vector.extract_strided_slice %188 {offsets = [0, 8], sizes = [16, 8], strides = [1, 1]} : vector<16x32xf32> to vector<16x8xf32>
    %cst_86 = arith.constant dense<0.000000e+00> : vector<16x8xf32>
    %224 = tpu.matmul %222, %223, %cst_86 {dimension_numbers = #tpu.dot_dimension_numbers<[1], [0], [0], [1], [0, 0, 1, 1], [], []>} : vector<16x16xf32>, vector<16x8xf32>, vector<16x8xf32> -> vector<16x8xf32>
    %225 = vector.extract_strided_slice %172 {offsets = [8, 0], sizes = [8, 32], strides = [1, 1]} : vector<32x32xf32> to vector<8x32xf32>
    %cst_87 = arith.constant dense<0.000000e+00> : vector<16x32xf32>
    %226 = tpu.matmul %224, %225, %cst_87 {dimension_numbers = #tpu.dot_dimension_numbers<[1], [0], [0], [1], [0, 0, 1, 1], [], []>} : vector<16x8xf32>, vector<8x32xf32>, vector<16x32xf32> -> vector<16x32xf32>
    %227 = arith.addf %207, %226 : vector<16x32xf32>
    %228 = vector.extract_strided_slice %186 {offsets = [0, 16], sizes = [16, 8], strides = [1, 1]} : vector<16x32xf32> to vector<16x8xf32>
    %229 = vector.extract_strided_slice %187 {offsets = [0, 16], sizes = [16, 8], strides = [1, 1]} : vector<16x32xf32> to vector<16x8xf32>
    %cst_88 = arith.constant dense<0.000000e+00> : vector<16x16xf32>
    %230 = tpu.matmul %228, %229, %cst_88 {dimension_numbers = #tpu.dot_dimension_numbers<[1], [1], [0], [0], [0, 0, 1, 0], [], []>} : vector<16x8xf32>, vector<16x8xf32>, vector<16x16xf32> -> vector<16x16xf32>
    %231 = arith.addf %230, %9 : vector<16x16xf32>
    %cst_89 = arith.constant dense<0xFF800000> : vector<16xf32>
    %232 = vector.multi_reduction <maximumf>, %231, %cst_89 [1] : vector<16x16xf32> to vector<16xf32>
    %233 = vector.shape_cast %232 : vector<16xf32> to vector<16x1xf32>
    %234 = vector.broadcast %233 : vector<16x1xf32> to vector<16x16xf32>
    %235 = arith.subf %231, %234 : vector<16x16xf32>
    %236 = math.exp %235 : vector<16x16xf32>
    %cst_90 = arith.constant dense<0.000000e+00> : vector<16xf32>
    %237 = vector.multi_reduction <add>, %236, %cst_90 [1] : vector<16x16xf32> to vector<16xf32>
    %238 = vector.shape_cast %237 : vector<16xf32> to vector<16x1xf32>
    %cst_91 = arith.constant 1.000000e+00 : f32
    %239 = vector.broadcast %cst_91 : f32 to vector<16x1xf32>
    %240 = arith.divf %239, %238 : vector<16x1xf32>
    %241 = vector.broadcast %240 : vector<16x1xf32> to vector<16x16xf32>
    %242 = arith.mulf %236, %241 : vector<16x16xf32>
    %243 = vector.extract_strided_slice %188 {offsets = [0, 16], sizes = [16, 8], strides = [1, 1]} : vector<16x32xf32> to vector<16x8xf32>
    %cst_92 = arith.constant dense<0.000000e+00> : vector<16x8xf32>
    %244 = tpu.matmul %242, %243, %cst_92 {dimension_numbers = #tpu.dot_dimension_numbers<[1], [0], [0], [1], [0, 0, 1, 1], [], []>} : vector<16x16xf32>, vector<16x8xf32>, vector<16x8xf32> -> vector<16x8xf32>
    %245 = vector.extract_strided_slice %172 {offsets = [16, 0], sizes = [8, 32], strides = [1, 1]} : vector<32x32xf32> to vector<8x32xf32>
    %cst_93 = arith.constant dense<0.000000e+00> : vector<16x32xf32>
    %246 = tpu.matmul %244, %245, %cst_93 {dimension_numbers = #tpu.dot_dimension_numbers<[1], [0], [0], [1], [0, 0, 1, 1], [], []>} : vector<16x8xf32>, vector<8x32xf32>, vector<16x32xf32> -> vector<16x32xf32>
    %247 = arith.addf %227, %246 : vector<16x32xf32>
    %248 = vector.extract_strided_slice %186 {offsets = [0, 24], sizes = [16, 8], strides = [1, 1]} : vector<16x32xf32> to vector<16x8xf32>
    %249 = vector.extract_strided_slice %187 {offsets = [0, 24], sizes = [16, 8], strides = [1, 1]} : vector<16x32xf32> to vector<16x8xf32>
    %cst_94 = arith.constant dense<0.000000e+00> : vector<16x16xf32>
    %250 = tpu.matmul %248, %249, %cst_94 {dimension_numbers = #tpu.dot_dimension_numbers<[1], [1], [0], [0], [0, 0, 1, 0], [], []>} : vector<16x8xf32>, vector<16x8xf32>, vector<16x16xf32> -> vector<16x16xf32>
    %251 = arith.addf %250, %9 : vector<16x16xf32>
    %cst_95 = arith.constant dense<0xFF800000> : vector<16xf32>
    %252 = vector.multi_reduction <maximumf>, %251, %cst_95 [1] : vector<16x16xf32> to vector<16xf32>
    %253 = vector.shape_cast %252 : vector<16xf32> to vector<16x1xf32>
    %254 = vector.broadcast %253 : vector<16x1xf32> to vector<16x16xf32>
    %255 = arith.subf %251, %254 : vector<16x16xf32>
    %256 = math.exp %255 : vector<16x16xf32>
    %cst_96 = arith.constant dense<0.000000e+00> : vector<16xf32>
    %257 = vector.multi_reduction <add>, %256, %cst_96 [1] : vector<16x16xf32> to vector<16xf32>
    %258 = vector.shape_cast %257 : vector<16xf32> to vector<16x1xf32>
    %cst_97 = arith.constant 1.000000e+00 : f32
    %259 = vector.broadcast %cst_97 : f32 to vector<16x1xf32>
    %260 = arith.divf %259, %258 : vector<16x1xf32>
    %261 = vector.broadcast %260 : vector<16x1xf32> to vector<16x16xf32>
    %262 = arith.mulf %256, %261 : vector<16x16xf32>
    %263 = vector.extract_strided_slice %188 {offsets = [0, 24], sizes = [16, 8], strides = [1, 1]} : vector<16x32xf32> to vector<16x8xf32>
    %cst_98 = arith.constant dense<0.000000e+00> : vector<16x8xf32>
    %264 = tpu.matmul %262, %263, %cst_98 {dimension_numbers = #tpu.dot_dimension_numbers<[1], [0], [0], [1], [0, 0, 1, 1], [], []>} : vector<16x16xf32>, vector<16x8xf32>, vector<16x8xf32> -> vector<16x8xf32>
    %265 = vector.extract_strided_slice %172 {offsets = [24, 0], sizes = [8, 32], strides = [1, 1]} : vector<32x32xf32> to vector<8x32xf32>
    %cst_99 = arith.constant dense<0.000000e+00> : vector<16x32xf32>
    %266 = tpu.matmul %264, %265, %cst_99 {dimension_numbers = #tpu.dot_dimension_numbers<[1], [0], [0], [1], [0, 0, 1, 1], [], []>} : vector<16x8xf32>, vector<8x32xf32>, vector<16x32xf32> -> vector<16x32xf32>
    %267 = arith.addf %247, %266 : vector<16x32xf32>
    %268 = vector.broadcast %176 : vector<1x32xf32> to vector<16x32xf32>
    %269 = arith.addf %267, %268 : vector<16x32xf32>
    %270 = arith.addf %170, %269 : vector<16x32xf32>
    %cst_100 = arith.constant dense<0.000000e+00> : vector<16xf32>
    %271 = vector.multi_reduction <add>, %270, %cst_100 [1] : vector<16x32xf32> to vector<16xf32>
    %272 = vector.shape_cast %271 : vector<16xf32> to vector<16x1xf32>
    %cst_101 = arith.constant 3.200000e+01 : f32
    %273 = vector.broadcast %cst_101 : f32 to vector<16x1xf32>
    %274 = arith.divf %272, %273 : vector<16x1xf32>
    %275 = vector.broadcast %274 : vector<16x1xf32> to vector<16x32xf32>
    %276 = arith.subf %270, %275 : vector<16x32xf32>
    %277 = arith.mulf %276, %276 : vector<16x32xf32>
    %cst_102 = arith.constant dense<0.000000e+00> : vector<16xf32>
    %278 = vector.multi_reduction <add>, %277, %cst_102 [1] : vector<16x32xf32> to vector<16xf32>
    %279 = vector.shape_cast %278 : vector<16xf32> to vector<16x1xf32>
    %cst_103 = arith.constant 0.0322580636 : f32
    %280 = vector.broadcast %cst_103 : f32 to vector<16x1xf32>
    %281 = arith.mulf %279, %280 : vector<16x1xf32>
    %282 = math.sqrt %281 : vector<16x1xf32>
    %cst_104 = arith.constant 9.99999997E-7 : f32
    %283 = vector.broadcast %cst_104 : f32 to vector<16x1xf32>
    %284 = arith.addf %282, %283 : vector<16x1xf32>
    %cst_105 = arith.constant 1.000000e+00 : f32
    %285 = vector.broadcast %cst_105 : f32 to vector<16x1xf32>
    %286 = arith.divf %285, %284 : vector<16x1xf32>
    %287 = vector.broadcast %274 : vector<16x1xf32> to vector<16x32xf32>
    %288 = arith.subf %270, %287 : vector<16x32xf32>
    %289 = vector.broadcast %179 : vector<1x32xf32> to vector<16x32xf32>
    %290 = arith.mulf %289, %288 : vector<16x32xf32>
    %291 = vector.broadcast %286 : vector<16x1xf32> to vector<16x32xf32>
    %292 = arith.mulf %290, %291 : vector<16x32xf32>
    %293 = vector.broadcast %180 : vector<1x32xf32> to vector<16x32xf32>
    %294 = arith.addf %292, %293 : vector<16x32xf32>
    %cst_106 = arith.constant dense<0.000000e+00> : vector<16x64xf32>
    %295 = tpu.matmul %294, %173, %cst_106 {dimension_numbers = #tpu.dot_dimension_numbers<[1], [0], [0], [1], [0, 0, 1, 1], [], []>} : vector<16x32xf32>, vector<32x64xf32>, vector<16x64xf32> -> vector<16x64xf32>
    %296 = vector.broadcast %177 : vector<1x64xf32> to vector<16x64xf32>
    %297 = arith.addf %295, %296 : vector<16x64xf32>
    %cst_107 = arith.constant 0.000000e+00 : f32
    %298 = vector.broadcast %cst_107 : f32 to vector<16x64xf32>
    %299 = arith.maximumf %297, %298 : vector<16x64xf32>
    %cst_108 = arith.constant dense<0.000000e+00> : vector<16x32xf32>
    %300 = tpu.matmul %299, %174, %cst_108 {dimension_numbers = #tpu.dot_dimension_numbers<[1], [0], [0], [1], [0, 0, 1, 1], [], []>} : vector<16x64xf32>, vector<64x32xf32>, vector<16x32xf32> -> vector<16x32xf32>
    %301 = vector.broadcast %178 : vector<1x32xf32> to vector<16x32xf32>
    %302 = arith.addf %300, %301 : vector<16x32xf32>
    %303 = arith.addf %294, %302 : vector<16x32xf32>
    %cst_109 = arith.constant dense<0.000000e+00> : vector<16xf32>
    %304 = vector.multi_reduction <add>, %303, %cst_109 [1] : vector<16x32xf32> to vector<16xf32>
    %305 = vector.shape_cast %304 : vector<16xf32> to vector<16x1xf32>
    %cst_110 = arith.constant 3.200000e+01 : f32
    %306 = vector.broadcast %cst_110 : f32 to vector<16x1xf32>
    %307 = arith.divf %305, %306 : vector<16x1xf32>
    %308 = vector.broadcast %307 : vector<16x1xf32> to vector<16x32xf32>
    %309 = arith.subf %303, %308 : vector<16x32xf32>
    %310 = arith.mulf %309, %309 : vector<16x32xf32>
    %cst_111 = arith.constant dense<0.000000e+00> : vector<16xf32>
    %311 = vector.multi_reduction <add>, %310, %cst_111 [1] : vector<16x32xf32> to vector<16xf32>
    %312 = vector.shape_cast %311 : vector<16xf32> to vector<16x1xf32>
    %cst_112 = arith.constant 0.0322580636 : f32
    %313 = vector.broadcast %cst_112 : f32 to vector<16x1xf32>
    %314 = arith.mulf %312, %313 : vector<16x1xf32>
    %315 = math.sqrt %314 : vector<16x1xf32>
    %cst_113 = arith.constant 9.99999997E-7 : f32
    %316 = vector.broadcast %cst_113 : f32 to vector<16x1xf32>
    %317 = arith.addf %315, %316 : vector<16x1xf32>
    %cst_114 = arith.constant 1.000000e+00 : f32
    %318 = vector.broadcast %cst_114 : f32 to vector<16x1xf32>
    %319 = arith.divf %318, %317 : vector<16x1xf32>
    %320 = vector.broadcast %307 : vector<16x1xf32> to vector<16x32xf32>
    %321 = arith.subf %303, %320 : vector<16x32xf32>
    %322 = vector.broadcast %181 : vector<1x32xf32> to vector<16x32xf32>
    %323 = arith.mulf %322, %321 : vector<16x32xf32>
    %324 = vector.broadcast %319 : vector<16x1xf32> to vector<16x32xf32>
    %325 = arith.mulf %323, %324 : vector<16x32xf32>
    %326 = vector.broadcast %182 : vector<1x32xf32> to vector<16x32xf32>
    %327 = arith.addf %325, %326 : vector<16x32xf32>
    %c0_115 = arith.constant 0 : index
    %c0_116 = arith.constant 0 : index
    %c0_117 = arith.constant 0 : index
    %328 = vector.load %arg7[%c0_115, %c0_116, %c0_117] : memref<1x16x32xf32, #tpu.memory_space<vmem>>, vector<1x16x32xf32>
    %329 = vector.shape_cast %328 : vector<1x16x32xf32> to vector<16x32xf32>
    %330 = vector.shape_cast %327 : vector<16x32xf32> to vector<1x16x32xf32>
    tpu.vector_store %arg7[%c0_115, %c0_116, %c0_117], %330 {strides = array<i32>} : memref<1x16x32xf32, #tpu.memory_space<vmem>>, vector<1x16x32xf32>,
    %c0_118 = arith.constant 0 : index
    %c0_119 = arith.constant 0 : index
    %331 = vector.load %arg6[%c0_118, %c0_119] : memref<480x128xf32, #tpu.memory_space<vmem>>, vector<32x128xf32>
    %c32_120 = arith.constant 32 : index
    %c0_121 = arith.constant 0 : index
    %332 = vector.load %arg6[%c32_120, %c0_121] : memref<480x128xf32, #tpu.memory_space<vmem>>, vector<32x32xf32>
    %c64_122 = arith.constant 64 : index
    %c0_123 = arith.constant 0 : index
    %333 = vector.load %arg6[%c64_122, %c0_123] : memref<480x128xf32, #tpu.memory_space<vmem>>, vector<32x128xf32>
    %c96_124 = arith.constant 96 : index
    %c0_125 = arith.constant 0 : index
    %334 = vector.load %arg6[%c96_124, %c0_125] : memref<480x128xf32, #tpu.memory_space<vmem>>, vector<32x32xf32>
    %c128 = arith.constant 128 : index
    %c0_126 = arith.constant 0 : index
    %335 = vector.load %arg6[%c128, %c0_126] : memref<480x128xf32, #tpu.memory_space<vmem>>, vector<32x64xf32>
    %c160_127 = arith.constant 160 : index
    %c0_128 = arith.constant 0 : index
    %336 = vector.load %arg6[%c160_127, %c0_128] : memref<480x128xf32, #tpu.memory_space<vmem>>, vector<64x32xf32>
    %c224 = arith.constant 224 : index
    %c0_129 = arith.constant 0 : index
    %337 = vector.load %arg6[%c224, %c0_129] : memref<480x128xf32, #tpu.memory_space<vmem>>, vector<1x128xf32>
    %c225 = arith.constant 225 : index
    %c0_130 = arith.constant 0 : index
    %338 = vector.load %arg6[%c225, %c0_130] : memref<480x128xf32, #tpu.memory_space<vmem>>, vector<1x32xf32>
    %c226 = arith.constant 226 : index
    %c0_131 = arith.constant 0 : index
    %339 = vector.load %arg6[%c226, %c0_131] : memref<480x128xf32, #tpu.memory_space<vmem>>, vector<1x128xf32>
    %c227 = arith.constant 227 : index
    %c0_132 = arith.constant 0 : index
    %340 = vector.load %arg6[%c227, %c0_132] : memref<480x128xf32, #tpu.memory_space<vmem>>, vector<1x32xf32>
    %c228 = arith.constant 228 : index
    %c0_133 = arith.constant 0 : index
    %341 = vector.load %arg6[%c228, %c0_133] : memref<480x128xf32, #tpu.memory_space<vmem>>, vector<1x64xf32>
    %c229 = arith.constant 229 : index
    %c0_134 = arith.constant 0 : index
    %342 = vector.load %arg6[%c229, %c0_134] : memref<480x128xf32, #tpu.memory_space<vmem>>, vector<1x32xf32>
    %c230 = arith.constant 230 : index
    %c0_135 = arith.constant 0 : index
    %343 = vector.load %arg6[%c230, %c0_135] : memref<480x128xf32, #tpu.memory_space<vmem>>, vector<1x32xf32>
    %c231 = arith.constant 231 : index
    %c0_136 = arith.constant 0 : index
    %344 = vector.load %arg6[%c231, %c0_136] : memref<480x128xf32, #tpu.memory_space<vmem>>, vector<1x32xf32>
    %c232_137 = arith.constant 232 : index
    %c0_138 = arith.constant 0 : index
    %345 = vector.load %arg6[%c232_137, %c0_138] : memref<480x128xf32, #tpu.memory_space<vmem>>, vector<1x32xf32>
    %c233 = arith.constant 233 : index
    %c0_139 = arith.constant 0 : index
    %346 = vector.load %arg6[%c233, %c0_139] : memref<480x128xf32, #tpu.memory_space<vmem>>, vector<1x32xf32>
    %c234 = arith.constant 234 : index
    %c0_140 = arith.constant 0 : index
    %347 = vector.load %arg6[%c234, %c0_140] : memref<480x128xf32, #tpu.memory_space<vmem>>, vector<1x32xf32>
    %c235 = arith.constant 235 : index
    %c0_141 = arith.constant 0 : index
    %348 = vector.load %arg6[%c235, %c0_141] : memref<480x128xf32, #tpu.memory_space<vmem>>, vector<1x32xf32>
    %cst_142 = arith.constant dense<0.000000e+00> : vector<8x128xf32>
    %349 = tpu.matmul %3, %331, %cst_142 {dimension_numbers = #tpu.dot_dimension_numbers<[1], [0], [0], [1], [0, 0, 1, 1], [], []>} : vector<8x32xf32>, vector<32x128xf32>, vector<8x128xf32> -> vector<8x128xf32>
    %350 = vector.broadcast %337 : vector<1x128xf32> to vector<8x128xf32>
    %351 = arith.addf %349, %350 : vector<8x128xf32>
    %352 = vector.extract_strided_slice %351 {offsets = [0, 0], sizes = [8, 32], strides = [1, 1]} : vector<8x128xf32> to vector<8x32xf32>
    %353 = vector.extract_strided_slice %351 {offsets = [0, 32], sizes = [8, 32], strides = [1, 1]} : vector<8x128xf32> to vector<8x32xf32>
    %354 = vector.extract_strided_slice %351 {offsets = [0, 64], sizes = [8, 32], strides = [1, 1]} : vector<8x128xf32> to vector<8x32xf32>
    %355 = vector.extract_strided_slice %352 {offsets = [0, 0], sizes = [8, 8], strides = [1, 1]} : vector<8x32xf32> to vector<8x8xf32>
    %356 = vector.extract_strided_slice %353 {offsets = [0, 0], sizes = [8, 8], strides = [1, 1]} : vector<8x32xf32> to vector<8x8xf32>
    %cst_143 = arith.constant dense<0.000000e+00> : vector<8x8xf32>
    %357 = tpu.matmul %355, %356, %cst_143 {dimension_numbers = #tpu.dot_dimension_numbers<[1], [1], [0], [0], [0, 0, 1, 0], [], []>} : vector<8x8xf32>, vector<8x8xf32>, vector<8x8xf32> -> vector<8x8xf32>
    %358 = arith.addf %357, %11 : vector<8x8xf32>
    %cst_144 = arith.constant dense<0xFF800000> : vector<8xf32>
    %359 = vector.multi_reduction <maximumf>, %358, %cst_144 [1] : vector<8x8xf32> to vector<8xf32>
    %360 = vector.shape_cast %359 : vector<8xf32> to vector<8x1xf32>
    %361 = vector.broadcast %360 : vector<8x1xf32> to vector<8x8xf32>
    %362 = arith.subf %358, %361 : vector<8x8xf32>
    %363 = math.exp %362 : vector<8x8xf32>
    %cst_145 = arith.constant dense<0.000000e+00> : vector<8xf32>
    %364 = vector.multi_reduction <add>, %363, %cst_145 [1] : vector<8x8xf32> to vector<8xf32>
    %365 = vector.shape_cast %364 : vector<8xf32> to vector<8x1xf32>
    %cst_146 = arith.constant 1.000000e+00 : f32
    %366 = vector.broadcast %cst_146 : f32 to vector<8x1xf32>
    %367 = arith.divf %366, %365 : vector<8x1xf32>
    %368 = vector.broadcast %367 : vector<8x1xf32> to vector<8x8xf32>
    %369 = arith.mulf %363, %368 : vector<8x8xf32>
    %370 = vector.extract_strided_slice %354 {offsets = [0, 0], sizes = [8, 8], strides = [1, 1]} : vector<8x32xf32> to vector<8x8xf32>
    %cst_147 = arith.constant dense<0.000000e+00> : vector<8x8xf32>
    %371 = tpu.matmul %369, %370, %cst_147 {dimension_numbers = #tpu.dot_dimension_numbers<[1], [0], [0], [1], [0, 0, 1, 1], [], []>} : vector<8x8xf32>, vector<8x8xf32>, vector<8x8xf32> -> vector<8x8xf32>
    %372 = vector.extract_strided_slice %332 {offsets = [0, 0], sizes = [8, 32], strides = [1, 1]} : vector<32x32xf32> to vector<8x32xf32>
    %cst_148 = arith.constant dense<0.000000e+00> : vector<8x32xf32>
    %373 = tpu.matmul %371, %372, %cst_148 {dimension_numbers = #tpu.dot_dimension_numbers<[1], [0], [0], [1], [0, 0, 1, 1], [], []>} : vector<8x8xf32>, vector<8x32xf32>, vector<8x32xf32> -> vector<8x32xf32>
    %374 = vector.extract_strided_slice %352 {offsets = [0, 8], sizes = [8, 8], strides = [1, 1]} : vector<8x32xf32> to vector<8x8xf32>
    %375 = vector.extract_strided_slice %353 {offsets = [0, 8], sizes = [8, 8], strides = [1, 1]} : vector<8x32xf32> to vector<8x8xf32>
    %cst_149 = arith.constant dense<0.000000e+00> : vector<8x8xf32>
    %376 = tpu.matmul %374, %375, %cst_149 {dimension_numbers = #tpu.dot_dimension_numbers<[1], [1], [0], [0], [0, 0, 1, 0], [], []>} : vector<8x8xf32>, vector<8x8xf32>, vector<8x8xf32> -> vector<8x8xf32>
    %377 = arith.addf %376, %11 : vector<8x8xf32>
    %cst_150 = arith.constant dense<0xFF800000> : vector<8xf32>
    %378 = vector.multi_reduction <maximumf>, %377, %cst_150 [1] : vector<8x8xf32> to vector<8xf32>
    %379 = vector.shape_cast %378 : vector<8xf32> to vector<8x1xf32>
    %380 = vector.broadcast %379 : vector<8x1xf32> to vector<8x8xf32>
    %381 = arith.subf %377, %380 : vector<8x8xf32>
    %382 = math.exp %381 : vector<8x8xf32>
    %cst_151 = arith.constant dense<0.000000e+00> : vector<8xf32>
    %383 = vector.multi_reduction <add>, %382, %cst_151 [1] : vector<8x8xf32> to vector<8xf32>
    %384 = vector.shape_cast %383 : vector<8xf32> to vector<8x1xf32>
    %cst_152 = arith.constant 1.000000e+00 : f32
    %385 = vector.broadcast %cst_152 : f32 to vector<8x1xf32>
    %386 = arith.divf %385, %384 : vector<8x1xf32>
    %387 = vector.broadcast %386 : vector<8x1xf32> to vector<8x8xf32>
    %388 = arith.mulf %382, %387 : vector<8x8xf32>
    %389 = vector.extract_strided_slice %354 {offsets = [0, 8], sizes = [8, 8], strides = [1, 1]} : vector<8x32xf32> to vector<8x8xf32>
    %cst_153 = arith.constant dense<0.000000e+00> : vector<8x8xf32>
    %390 = tpu.matmul %388, %389, %cst_153 {dimension_numbers = #tpu.dot_dimension_numbers<[1], [0], [0], [1], [0, 0, 1, 1], [], []>} : vector<8x8xf32>, vector<8x8xf32>, vector<8x8xf32> -> vector<8x8xf32>
    %391 = vector.extract_strided_slice %332 {offsets = [8, 0], sizes = [8, 32], strides = [1, 1]} : vector<32x32xf32> to vector<8x32xf32>
    %cst_154 = arith.constant dense<0.000000e+00> : vector<8x32xf32>
    %392 = tpu.matmul %390, %391, %cst_154 {dimension_numbers = #tpu.dot_dimension_numbers<[1], [0], [0], [1], [0, 0, 1, 1], [], []>} : vector<8x8xf32>, vector<8x32xf32>, vector<8x32xf32> -> vector<8x32xf32>
    %393 = arith.addf %373, %392 : vector<8x32xf32>
    %394 = vector.extract_strided_slice %352 {offsets = [0, 16], sizes = [8, 8], strides = [1, 1]} : vector<8x32xf32> to vector<8x8xf32>
    %395 = vector.extract_strided_slice %353 {offsets = [0, 16], sizes = [8, 8], strides = [1, 1]} : vector<8x32xf32> to vector<8x8xf32>
    %cst_155 = arith.constant dense<0.000000e+00> : vector<8x8xf32>
    %396 = tpu.matmul %394, %395, %cst_155 {dimension_numbers = #tpu.dot_dimension_numbers<[1], [1], [0], [0], [0, 0, 1, 0], [], []>} : vector<8x8xf32>, vector<8x8xf32>, vector<8x8xf32> -> vector<8x8xf32>
    %397 = arith.addf %396, %11 : vector<8x8xf32>
    %cst_156 = arith.constant dense<0xFF800000> : vector<8xf32>
    %398 = vector.multi_reduction <maximumf>, %397, %cst_156 [1] : vector<8x8xf32> to vector<8xf32>
    %399 = vector.shape_cast %398 : vector<8xf32> to vector<8x1xf32>
    %400 = vector.broadcast %399 : vector<8x1xf32> to vector<8x8xf32>
    %401 = arith.subf %397, %400 : vector<8x8xf32>
    %402 = math.exp %401 : vector<8x8xf32>
    %cst_157 = arith.constant dense<0.000000e+00> : vector<8xf32>
    %403 = vector.multi_reduction <add>, %402, %cst_157 [1] : vector<8x8xf32> to vector<8xf32>
    %404 = vector.shape_cast %403 : vector<8xf32> to vector<8x1xf32>
    %cst_158 = arith.constant 1.000000e+00 : f32
    %405 = vector.broadcast %cst_158 : f32 to vector<8x1xf32>
    %406 = arith.divf %405, %404 : vector<8x1xf32>
    %407 = vector.broadcast %406 : vector<8x1xf32> to vector<8x8xf32>
    %408 = arith.mulf %402, %407 : vector<8x8xf32>
    %409 = vector.extract_strided_slice %354 {offsets = [0, 16], sizes = [8, 8], strides = [1, 1]} : vector<8x32xf32> to vector<8x8xf32>
    %cst_159 = arith.constant dense<0.000000e+00> : vector<8x8xf32>
    %410 = tpu.matmul %408, %409, %cst_159 {dimension_numbers = #tpu.dot_dimension_numbers<[1], [0], [0], [1], [0, 0, 1, 1], [], []>} : vector<8x8xf32>, vector<8x8xf32>, vector<8x8xf32> -> vector<8x8xf32>
    %411 = vector.extract_strided_slice %332 {offsets = [16, 0], sizes = [8, 32], strides = [1, 1]} : vector<32x32xf32> to vector<8x32xf32>
    %cst_160 = arith.constant dense<0.000000e+00> : vector<8x32xf32>
    %412 = tpu.matmul %410, %411, %cst_160 {dimension_numbers = #tpu.dot_dimension_numbers<[1], [0], [0], [1], [0, 0, 1, 1], [], []>} : vector<8x8xf32>, vector<8x32xf32>, vector<8x32xf32> -> vector<8x32xf32>
    %413 = arith.addf %393, %412 : vector<8x32xf32>
    %414 = vector.extract_strided_slice %352 {offsets = [0, 24], sizes = [8, 8], strides = [1, 1]} : vector<8x32xf32> to vector<8x8xf32>
    %415 = vector.extract_strided_slice %353 {offsets = [0, 24], sizes = [8, 8], strides = [1, 1]} : vector<8x32xf32> to vector<8x8xf32>
    %cst_161 = arith.constant dense<0.000000e+00> : vector<8x8xf32>
    %416 = tpu.matmul %414, %415, %cst_161 {dimension_numbers = #tpu.dot_dimension_numbers<[1], [1], [0], [0], [0, 0, 1, 0], [], []>} : vector<8x8xf32>, vector<8x8xf32>, vector<8x8xf32> -> vector<8x8xf32>
    %417 = arith.addf %416, %11 : vector<8x8xf32>
    %cst_162 = arith.constant dense<0xFF800000> : vector<8xf32>
    %418 = vector.multi_reduction <maximumf>, %417, %cst_162 [1] : vector<8x8xf32> to vector<8xf32>
    %419 = vector.shape_cast %418 : vector<8xf32> to vector<8x1xf32>
    %420 = vector.broadcast %419 : vector<8x1xf32> to vector<8x8xf32>
    %421 = arith.subf %417, %420 : vector<8x8xf32>
    %422 = math.exp %421 : vector<8x8xf32>
    %cst_163 = arith.constant dense<0.000000e+00> : vector<8xf32>
    %423 = vector.multi_reduction <add>, %422, %cst_163 [1] : vector<8x8xf32> to vector<8xf32>
    %424 = vector.shape_cast %423 : vector<8xf32> to vector<8x1xf32>
    %cst_164 = arith.constant 1.000000e+00 : f32
    %425 = vector.broadcast %cst_164 : f32 to vector<8x1xf32>
    %426 = arith.divf %425, %424 : vector<8x1xf32>
    %427 = vector.broadcast %426 : vector<8x1xf32> to vector<8x8xf32>
    %428 = arith.mulf %422, %427 : vector<8x8xf32>
    %429 = vector.extract_strided_slice %354 {offsets = [0, 24], sizes = [8, 8], strides = [1, 1]} : vector<8x32xf32> to vector<8x8xf32>
    %cst_165 = arith.constant dense<0.000000e+00> : vector<8x8xf32>
    %430 = tpu.matmul %428, %429, %cst_165 {dimension_numbers = #tpu.dot_dimension_numbers<[1], [0], [0], [1], [0, 0, 1, 1], [], []>} : vector<8x8xf32>, vector<8x8xf32>, vector<8x8xf32> -> vector<8x8xf32>
    %431 = vector.extract_strided_slice %332 {offsets = [24, 0], sizes = [8, 32], strides = [1, 1]} : vector<32x32xf32> to vector<8x32xf32>
    %cst_166 = arith.constant dense<0.000000e+00> : vector<8x32xf32>
    %432 = tpu.matmul %430, %431, %cst_166 {dimension_numbers = #tpu.dot_dimension_numbers<[1], [0], [0], [1], [0, 0, 1, 1], [], []>} : vector<8x8xf32>, vector<8x32xf32>, vector<8x32xf32> -> vector<8x32xf32>
    %433 = arith.addf %413, %432 : vector<8x32xf32>
    %434 = vector.broadcast %338 : vector<1x32xf32> to vector<8x32xf32>
    %435 = arith.addf %433, %434 : vector<8x32xf32>
    %436 = arith.addf %3, %435 : vector<8x32xf32>
    %cst_167 = arith.constant dense<0.000000e+00> : vector<8xf32>
    %437 = vector.multi_reduction <add>, %436, %cst_167 [1] : vector<8x32xf32> to vector<8xf32>
    %438 = vector.shape_cast %437 : vector<8xf32> to vector<8x1xf32>
    %cst_168 = arith.constant 3.200000e+01 : f32
    %439 = vector.broadcast %cst_168 : f32 to vector<8x1xf32>
    %440 = arith.divf %438, %439 : vector<8x1xf32>
    %441 = vector.broadcast %440 : vector<8x1xf32> to vector<8x32xf32>
    %442 = arith.subf %436, %441 : vector<8x32xf32>
    %443 = arith.mulf %442, %442 : vector<8x32xf32>
    %cst_169 = arith.constant dense<0.000000e+00> : vector<8xf32>
    %444 = vector.multi_reduction <add>, %443, %cst_169 [1] : vector<8x32xf32> to vector<8xf32>
    %445 = vector.shape_cast %444 : vector<8xf32> to vector<8x1xf32>
    %cst_170 = arith.constant 0.0322580636 : f32
    %446 = vector.broadcast %cst_170 : f32 to vector<8x1xf32>
    %447 = arith.mulf %445, %446 : vector<8x1xf32>
    %448 = math.sqrt %447 : vector<8x1xf32>
    %cst_171 = arith.constant 9.99999997E-7 : f32
    %449 = vector.broadcast %cst_171 : f32 to vector<8x1xf32>
    %450 = arith.addf %448, %449 : vector<8x1xf32>
    %cst_172 = arith.constant 1.000000e+00 : f32
    %451 = vector.broadcast %cst_172 : f32 to vector<8x1xf32>
    %452 = arith.divf %451, %450 : vector<8x1xf32>
    %453 = vector.broadcast %440 : vector<8x1xf32> to vector<8x32xf32>
    %454 = arith.subf %436, %453 : vector<8x32xf32>
    %455 = vector.broadcast %343 : vector<1x32xf32> to vector<8x32xf32>
    %456 = arith.mulf %455, %454 : vector<8x32xf32>
    %457 = vector.broadcast %452 : vector<8x1xf32> to vector<8x32xf32>
    %458 = arith.mulf %456, %457 : vector<8x32xf32>
    %459 = vector.broadcast %344 : vector<1x32xf32> to vector<8x32xf32>
    %460 = arith.addf %458, %459 : vector<8x32xf32>
    %461 = vector.extract_strided_slice %333 {offsets = [0, 0], sizes = [32, 32], strides = [1, 1]} : vector<32x128xf32> to vector<32x32xf32>
    %cst_173 = arith.constant dense<0.000000e+00> : vector<8x32xf32>
    %462 = tpu.matmul %460, %461, %cst_173 {dimension_numbers = #tpu.dot_dimension_numbers<[1], [0], [0], [1], [0, 0, 1, 1], [], []>} : vector<8x32xf32>, vector<32x32xf32>, vector<8x32xf32> -> vector<8x32xf32>
    %463 = vector.extract_strided_slice %339 {offsets = [0, 0], sizes = [1, 32], strides = [1, 1]} : vector<1x128xf32> to vector<1x32xf32>
    %464 = vector.broadcast %463 : vector<1x32xf32> to vector<8x32xf32>
    %465 = arith.addf %462, %464 : vector<8x32xf32>
    %466 = vector.extract_strided_slice %333 {offsets = [0, 32], sizes = [32, 64], strides = [1, 1]} : vector<32x128xf32> to vector<32x64xf32>
    %cst_174 = arith.constant dense<0.000000e+00> : vector<16x64xf32>
    %467 = tpu.matmul %327, %466, %cst_174 {dimension_numbers = #tpu.dot_dimension_numbers<[1], [0], [0], [1], [0, 0, 1, 1], [], []>} : vector<16x32xf32>, vector<32x64xf32>, vector<16x64xf32> -> vector<16x64xf32>
    %468 = vector.extract_strided_slice %339 {offsets = [0, 32], sizes = [1, 64], strides = [1, 1]} : vector<1x128xf32> to vector<1x64xf32>
    %469 = vector.broadcast %468 : vector<1x64xf32> to vector<16x64xf32>
    %470 = arith.addf %467, %469 : vector<16x64xf32>
    %471 = vector.extract_strided_slice %470 {offsets = [0, 0], sizes = [16, 32], strides = [1, 1]} : vector<16x64xf32> to vector<16x32xf32>
    %472 = vector.extract_strided_slice %470 {offsets = [0, 32], sizes = [16, 32], strides = [1, 1]} : vector<16x64xf32> to vector<16x32xf32>
    %473 = vector.extract_strided_slice %465 {offsets = [0, 0], sizes = [8, 8], strides = [1, 1]} : vector<8x32xf32> to vector<8x8xf32>
    %474 = vector.extract_strided_slice %471 {offsets = [0, 0], sizes = [16, 8], strides = [1, 1]} : vector<16x32xf32> to vector<16x8xf32>
    %cst_175 = arith.constant dense<0.000000e+00> : vector<8x16xf32>
    %475 = tpu.matmul %473, %474, %cst_175 {dimension_numbers = #tpu.dot_dimension_numbers<[1], [1], [0], [0], [0, 0, 1, 0], [], []>} : vector<8x8xf32>, vector<16x8xf32>, vector<8x16xf32> -> vector<8x16xf32>
    %476 = arith.addf %475, %13 : vector<8x16xf32>
    %cst_176 = arith.constant dense<0xFF800000> : vector<8xf32>
    %477 = vector.multi_reduction <maximumf>, %476, %cst_176 [1] : vector<8x16xf32> to vector<8xf32>
    %478 = vector.shape_cast %477 : vector<8xf32> to vector<8x1xf32>
    %479 = vector.broadcast %478 : vector<8x1xf32> to vector<8x16xf32>
    %480 = arith.subf %476, %479 : vector<8x16xf32>
    %481 = math.exp %480 : vector<8x16xf32>
    %cst_177 = arith.constant dense<0.000000e+00> : vector<8xf32>
    %482 = vector.multi_reduction <add>, %481, %cst_177 [1] : vector<8x16xf32> to vector<8xf32>
    %483 = vector.shape_cast %482 : vector<8xf32> to vector<8x1xf32>
    %cst_178 = arith.constant 1.000000e+00 : f32
    %484 = vector.broadcast %cst_178 : f32 to vector<8x1xf32>
    %485 = arith.divf %484, %483 : vector<8x1xf32>
    %486 = vector.broadcast %485 : vector<8x1xf32> to vector<8x16xf32>
    %487 = arith.mulf %481, %486 : vector<8x16xf32>
    %488 = vector.extract_strided_slice %472 {offsets = [0, 0], sizes = [16, 8], strides = [1, 1]} : vector<16x32xf32> to vector<16x8xf32>
    %cst_179 = arith.constant dense<0.000000e+00> : vector<8x8xf32>
    %489 = tpu.matmul %487, %488, %cst_179 {dimension_numbers = #tpu.dot_dimension_numbers<[1], [0], [0], [1], [0, 0, 1, 1], [], []>} : vector<8x16xf32>, vector<16x8xf32>, vector<8x8xf32> -> vector<8x8xf32>
    %490 = vector.extract_strided_slice %334 {offsets = [0, 0], sizes = [8, 32], strides = [1, 1]} : vector<32x32xf32> to vector<8x32xf32>
    %cst_180 = arith.constant dense<0.000000e+00> : vector<8x32xf32>
    %491 = tpu.matmul %489, %490, %cst_180 {dimension_numbers = #tpu.dot_dimension_numbers<[1], [0], [0], [1], [0, 0, 1, 1], [], []>} : vector<8x8xf32>, vector<8x32xf32>, vector<8x32xf32> -> vector<8x32xf32>
    %492 = vector.extract_strided_slice %465 {offsets = [0, 8], sizes = [8, 8], strides = [1, 1]} : vector<8x32xf32> to vector<8x8xf32>
    %493 = vector.extract_strided_slice %471 {offsets = [0, 8], sizes = [16, 8], strides = [1, 1]} : vector<16x32xf32> to vector<16x8xf32>
    %cst_181 = arith.constant dense<0.000000e+00> : vector<8x16xf32>
    %494 = tpu.matmul %492, %493, %cst_181 {dimension_numbers = #tpu.dot_dimension_numbers<[1], [1], [0], [0], [0, 0, 1, 0], [], []>} : vector<8x8xf32>, vector<16x8xf32>, vector<8x16xf32> -> vector<8x16xf32>
    %495 = arith.addf %494, %13 : vector<8x16xf32>
    %cst_182 = arith.constant dense<0xFF800000> : vector<8xf32>
    %496 = vector.multi_reduction <maximumf>, %495, %cst_182 [1] : vector<8x16xf32> to vector<8xf32>
    %497 = vector.shape_cast %496 : vector<8xf32> to vector<8x1xf32>
    %498 = vector.broadcast %497 : vector<8x1xf32> to vector<8x16xf32>
    %499 = arith.subf %495, %498 : vector<8x16xf32>
    %500 = math.exp %499 : vector<8x16xf32>
    %cst_183 = arith.constant dense<0.000000e+00> : vector<8xf32>
    %501 = vector.multi_reduction <add>, %500, %cst_183 [1] : vector<8x16xf32> to vector<8xf32>
    %502 = vector.shape_cast %501 : vector<8xf32> to vector<8x1xf32>
    %cst_184 = arith.constant 1.000000e+00 : f32
    %503 = vector.broadcast %cst_184 : f32 to vector<8x1xf32>
    %504 = arith.divf %503, %502 : vector<8x1xf32>
    %505 = vector.broadcast %504 : vector<8x1xf32> to vector<8x16xf32>
    %506 = arith.mulf %500, %505 : vector<8x16xf32>
    %507 = vector.extract_strided_slice %472 {offsets = [0, 8], sizes = [16, 8], strides = [1, 1]} : vector<16x32xf32> to vector<16x8xf32>
    %cst_185 = arith.constant dense<0.000000e+00> : vector<8x8xf32>
    %508 = tpu.matmul %506, %507, %cst_185 {dimension_numbers = #tpu.dot_dimension_numbers<[1], [0], [0], [1], [0, 0, 1, 1], [], []>} : vector<8x16xf32>, vector<16x8xf32>, vector<8x8xf32> -> vector<8x8xf32>
    %509 = vector.extract_strided_slice %334 {offsets = [8, 0], sizes = [8, 32], strides = [1, 1]} : vector<32x32xf32> to vector<8x32xf32>
    %cst_186 = arith.constant dense<0.000000e+00> : vector<8x32xf32>
    %510 = tpu.matmul %508, %509, %cst_186 {dimension_numbers = #tpu.dot_dimension_numbers<[1], [0], [0], [1], [0, 0, 1, 1], [], []>} : vector<8x8xf32>, vector<8x32xf32>, vector<8x32xf32> -> vector<8x32xf32>
    %511 = arith.addf %491, %510 : vector<8x32xf32>
    %512 = vector.extract_strided_slice %465 {offsets = [0, 16], sizes = [8, 8], strides = [1, 1]} : vector<8x32xf32> to vector<8x8xf32>
    %513 = vector.extract_strided_slice %471 {offsets = [0, 16], sizes = [16, 8], strides = [1, 1]} : vector<16x32xf32> to vector<16x8xf32>
    %cst_187 = arith.constant dense<0.000000e+00> : vector<8x16xf32>
    %514 = tpu.matmul %512, %513, %cst_187 {dimension_numbers = #tpu.dot_dimension_numbers<[1], [1], [0], [0], [0, 0, 1, 0], [], []>} : vector<8x8xf32>, vector<16x8xf32>, vector<8x16xf32> -> vector<8x16xf32>
    %515 = arith.addf %514, %13 : vector<8x16xf32>
    %cst_188 = arith.constant dense<0xFF800000> : vector<8xf32>
    %516 = vector.multi_reduction <maximumf>, %515, %cst_188 [1] : vector<8x16xf32> to vector<8xf32>
    %517 = vector.shape_cast %516 : vector<8xf32> to vector<8x1xf32>
    %518 = vector.broadcast %517 : vector<8x1xf32> to vector<8x16xf32>
    %519 = arith.subf %515, %518 : vector<8x16xf32>
    %520 = math.exp %519 : vector<8x16xf32>
    %cst_189 = arith.constant dense<0.000000e+00> : vector<8xf32>
    %521 = vector.multi_reduction <add>, %520, %cst_189 [1] : vector<8x16xf32> to vector<8xf32>
    %522 = vector.shape_cast %521 : vector<8xf32> to vector<8x1xf32>
    %cst_190 = arith.constant 1.000000e+00 : f32
    %523 = vector.broadcast %cst_190 : f32 to vector<8x1xf32>
    %524 = arith.divf %523, %522 : vector<8x1xf32>
    %525 = vector.broadcast %524 : vector<8x1xf32> to vector<8x16xf32>
    %526 = arith.mulf %520, %525 : vector<8x16xf32>
    %527 = vector.extract_strided_slice %472 {offsets = [0, 16], sizes = [16, 8], strides = [1, 1]} : vector<16x32xf32> to vector<16x8xf32>
    %cst_191 = arith.constant dense<0.000000e+00> : vector<8x8xf32>
    %528 = tpu.matmul %526, %527, %cst_191 {dimension_numbers = #tpu.dot_dimension_numbers<[1], [0], [0], [1], [0, 0, 1, 1], [], []>} : vector<8x16xf32>, vector<16x8xf32>, vector<8x8xf32> -> vector<8x8xf32>
    %529 = vector.extract_strided_slice %334 {offsets = [16, 0], sizes = [8, 32], strides = [1, 1]} : vector<32x32xf32> to vector<8x32xf32>
    %cst_192 = arith.constant dense<0.000000e+00> : vector<8x32xf32>
    %530 = tpu.matmul %528, %529, %cst_192 {dimension_numbers = #tpu.dot_dimension_numbers<[1], [0], [0], [1], [0, 0, 1, 1], [], []>} : vector<8x8xf32>, vector<8x32xf32>, vector<8x32xf32> -> vector<8x32xf32>
    %531 = arith.addf %511, %530 : vector<8x32xf32>
    %532 = vector.extract_strided_slice %465 {offsets = [0, 24], sizes = [8, 8], strides = [1, 1]} : vector<8x32xf32> to vector<8x8xf32>
    %533 = vector.extract_strided_slice %471 {offsets = [0, 24], sizes = [16, 8], strides = [1, 1]} : vector<16x32xf32> to vector<16x8xf32>
    %cst_193 = arith.constant dense<0.000000e+00> : vector<8x16xf32>
    %534 = tpu.matmul %532, %533, %cst_193 {dimension_numbers = #tpu.dot_dimension_numbers<[1], [1], [0], [0], [0, 0, 1, 0], [], []>} : vector<8x8xf32>, vector<16x8xf32>, vector<8x16xf32> -> vector<8x16xf32>
    %535 = arith.addf %534, %13 : vector<8x16xf32>
    %cst_194 = arith.constant dense<0xFF800000> : vector<8xf32>
    %536 = vector.multi_reduction <maximumf>, %535, %cst_194 [1] : vector<8x16xf32> to vector<8xf32>
    %537 = vector.shape_cast %536 : vector<8xf32> to vector<8x1xf32>
    %538 = vector.broadcast %537 : vector<8x1xf32> to vector<8x16xf32>
    %539 = arith.subf %535, %538 : vector<8x16xf32>
    %540 = math.exp %539 : vector<8x16xf32>
    %cst_195 = arith.constant dense<0.000000e+00> : vector<8xf32>
    %541 = vector.multi_reduction <add>, %540, %cst_195 [1] : vector<8x16xf32> to vector<8xf32>
    %542 = vector.shape_cast %541 : vector<8xf32> to vector<8x1xf32>
    %cst_196 = arith.constant 1.000000e+00 : f32
    %543 = vector.broadcast %cst_196 : f32 to vector<8x1xf32>
    %544 = arith.divf %543, %542 : vector<8x1xf32>
    %545 = vector.broadcast %544 : vector<8x1xf32> to vector<8x16xf32>
    %546 = arith.mulf %540, %545 : vector<8x16xf32>
    %547 = vector.extract_strided_slice %472 {offsets = [0, 24], sizes = [16, 8], strides = [1, 1]} : vector<16x32xf32> to vector<16x8xf32>
    %cst_197 = arith.constant dense<0.000000e+00> : vector<8x8xf32>
    %548 = tpu.matmul %546, %547, %cst_197 {dimension_numbers = #tpu.dot_dimension_numbers<[1], [0], [0], [1], [0, 0, 1, 1], [], []>} : vector<8x16xf32>, vector<16x8xf32>, vector<8x8xf32> -> vector<8x8xf32>
    %549 = vector.extract_strided_slice %334 {offsets = [24, 0], sizes = [8, 32], strides = [1, 1]} : vector<32x32xf32> to vector<8x32xf32>
    %cst_198 = arith.constant dense<0.000000e+00> : vector<8x32xf32>
    %550 = tpu.matmul %548, %549, %cst_198 {dimension_numbers = #tpu.dot_dimension_numbers<[1], [0], [0], [1], [0, 0, 1, 1], [], []>} : vector<8x8xf32>, vector<8x32xf32>, vector<8x32xf32> -> vector<8x32xf32>
    %551 = arith.addf %531, %550 : vector<8x32xf32>
    %552 = vector.broadcast %340 : vector<1x32xf32> to vector<8x32xf32>
    %553 = arith.addf %551, %552 : vector<8x32xf32>
    %554 = arith.addf %460, %553 : vector<8x32xf32>
    %cst_199 = arith.constant dense<0.000000e+00> : vector<8xf32>
    %555 = vector.multi_reduction <add>, %554, %cst_199 [1] : vector<8x32xf32> to vector<8xf32>
    %556 = vector.shape_cast %555 : vector<8xf32> to vector<8x1xf32>
    %cst_200 = arith.constant 3.200000e+01 : f32
    %557 = vector.broadcast %cst_200 : f32 to vector<8x1xf32>
    %558 = arith.divf %556, %557 : vector<8x1xf32>
    %559 = vector.broadcast %558 : vector<8x1xf32> to vector<8x32xf32>
    %560 = arith.subf %554, %559 : vector<8x32xf32>
    %561 = arith.mulf %560, %560 : vector<8x32xf32>
    %cst_201 = arith.constant dense<0.000000e+00> : vector<8xf32>
    %562 = vector.multi_reduction <add>, %561, %cst_201 [1] : vector<8x32xf32> to vector<8xf32>
    %563 = vector.shape_cast %562 : vector<8xf32> to vector<8x1xf32>
    %cst_202 = arith.constant 0.0322580636 : f32
    %564 = vector.broadcast %cst_202 : f32 to vector<8x1xf32>
    %565 = arith.mulf %563, %564 : vector<8x1xf32>
    %566 = math.sqrt %565 : vector<8x1xf32>
    %cst_203 = arith.constant 9.99999997E-7 : f32
    %567 = vector.broadcast %cst_203 : f32 to vector<8x1xf32>
    %568 = arith.addf %566, %567 : vector<8x1xf32>
    %cst_204 = arith.constant 1.000000e+00 : f32
    %569 = vector.broadcast %cst_204 : f32 to vector<8x1xf32>
    %570 = arith.divf %569, %568 : vector<8x1xf32>
    %571 = vector.broadcast %558 : vector<8x1xf32> to vector<8x32xf32>
    %572 = arith.subf %554, %571 : vector<8x32xf32>
    %573 = vector.broadcast %345 : vector<1x32xf32> to vector<8x32xf32>
    %574 = arith.mulf %573, %572 : vector<8x32xf32>
    %575 = vector.broadcast %570 : vector<8x1xf32> to vector<8x32xf32>
    %576 = arith.mulf %574, %575 : vector<8x32xf32>
    %577 = vector.broadcast %346 : vector<1x32xf32> to vector<8x32xf32>
    %578 = arith.addf %576, %577 : vector<8x32xf32>
    %cst_205 = arith.constant dense<0.000000e+00> : vector<8x64xf32>
    %579 = tpu.matmul %578, %335, %cst_205 {dimension_numbers = #tpu.dot_dimension_numbers<[1], [0], [0], [1], [0, 0, 1, 1], [], []>} : vector<8x32xf32>, vector<32x64xf32>, vector<8x64xf32> -> vector<8x64xf32>
    %580 = vector.broadcast %341 : vector<1x64xf32> to vector<8x64xf32>
    %581 = arith.addf %579, %580 : vector<8x64xf32>
    %cst_206 = arith.constant 0.000000e+00 : f32
    %582 = vector.broadcast %cst_206 : f32 to vector<8x64xf32>
    %583 = arith.maximumf %581, %582 : vector<8x64xf32>
    %cst_207 = arith.constant dense<0.000000e+00> : vector<8x32xf32>
    %584 = tpu.matmul %583, %336, %cst_207 {dimension_numbers = #tpu.dot_dimension_numbers<[1], [0], [0], [1], [0, 0, 1, 1], [], []>} : vector<8x64xf32>, vector<64x32xf32>, vector<8x32xf32> -> vector<8x32xf32>
    %585 = vector.broadcast %342 : vector<1x32xf32> to vector<8x32xf32>
    %586 = arith.addf %584, %585 : vector<8x32xf32>
    %587 = arith.addf %578, %586 : vector<8x32xf32>
    %cst_208 = arith.constant dense<0.000000e+00> : vector<8xf32>
    %588 = vector.multi_reduction <add>, %587, %cst_208 [1] : vector<8x32xf32> to vector<8xf32>
    %589 = vector.shape_cast %588 : vector<8xf32> to vector<8x1xf32>
    %cst_209 = arith.constant 3.200000e+01 : f32
    %590 = vector.broadcast %cst_209 : f32 to vector<8x1xf32>
    %591 = arith.divf %589, %590 : vector<8x1xf32>
    %592 = vector.broadcast %591 : vector<8x1xf32> to vector<8x32xf32>
    %593 = arith.subf %587, %592 : vector<8x32xf32>
    %594 = arith.mulf %593, %593 : vector<8x32xf32>
    %cst_210 = arith.constant dense<0.000000e+00> : vector<8xf32>
    %595 = vector.multi_reduction <add>, %594, %cst_210 [1] : vector<8x32xf32> to vector<8xf32>
    %596 = vector.shape_cast %595 : vector<8xf32> to vector<8x1xf32>
    %cst_211 = arith.constant 0.0322580636 : f32
    %597 = vector.broadcast %cst_211 : f32 to vector<8x1xf32>
    %598 = arith.mulf %596, %597 : vector<8x1xf32>
    %599 = math.sqrt %598 : vector<8x1xf32>
    %cst_212 = arith.constant 9.99999997E-7 : f32
    %600 = vector.broadcast %cst_212 : f32 to vector<8x1xf32>
    %601 = arith.addf %599, %600 : vector<8x1xf32>
    %cst_213 = arith.constant 1.000000e+00 : f32
    %602 = vector.broadcast %cst_213 : f32 to vector<8x1xf32>
    %603 = arith.divf %602, %601 : vector<8x1xf32>
    %604 = vector.broadcast %591 : vector<8x1xf32> to vector<8x32xf32>
    %605 = arith.subf %587, %604 : vector<8x32xf32>
    %606 = vector.broadcast %347 : vector<1x32xf32> to vector<8x32xf32>
    %607 = arith.mulf %606, %605 : vector<8x32xf32>
    %608 = vector.broadcast %603 : vector<8x1xf32> to vector<8x32xf32>
    %609 = arith.mulf %607, %608 : vector<8x32xf32>
    %610 = vector.broadcast %348 : vector<1x32xf32> to vector<8x32xf32>
    %611 = arith.addf %609, %610 : vector<8x32xf32>
    %c240 = arith.constant 240 : index
    %c0_214 = arith.constant 0 : index
    %612 = vector.load %arg6[%c240, %c0_214] : memref<480x128xf32, #tpu.memory_space<vmem>>, vector<32x128xf32>
    %c272 = arith.constant 272 : index
    %c0_215 = arith.constant 0 : index
    %613 = vector.load %arg6[%c272, %c0_215] : memref<480x128xf32, #tpu.memory_space<vmem>>, vector<32x32xf32>
    %c304 = arith.constant 304 : index
    %c0_216 = arith.constant 0 : index
    %614 = vector.load %arg6[%c304, %c0_216] : memref<480x128xf32, #tpu.memory_space<vmem>>, vector<32x128xf32>
    %c336 = arith.constant 336 : index
    %c0_217 = arith.constant 0 : index
    %615 = vector.load %arg6[%c336, %c0_217] : memref<480x128xf32, #tpu.memory_space<vmem>>, vector<32x32xf32>
    %c368 = arith.constant 368 : index
    %c0_218 = arith.constant 0 : index
    %616 = vector.load %arg6[%c368, %c0_218] : memref<480x128xf32, #tpu.memory_space<vmem>>, vector<32x64xf32>
    %c400 = arith.constant 400 : index
    %c0_219 = arith.constant 0 : index
    %617 = vector.load %arg6[%c400, %c0_219] : memref<480x128xf32, #tpu.memory_space<vmem>>, vector<64x32xf32>
    %c464 = arith.constant 464 : index
    %c0_220 = arith.constant 0 : index
    %618 = vector.load %arg6[%c464, %c0_220] : memref<480x128xf32, #tpu.memory_space<vmem>>, vector<1x128xf32>
    %c465 = arith.constant 465 : index
    %c0_221 = arith.constant 0 : index
    %619 = vector.load %arg6[%c465, %c0_221] : memref<480x128xf32, #tpu.memory_space<vmem>>, vector<1x32xf32>
    %c466 = arith.constant 466 : index
    %c0_222 = arith.constant 0 : index
    %620 = vector.load %arg6[%c466, %c0_222] : memref<480x128xf32, #tpu.memory_space<vmem>>, vector<1x128xf32>
    %c467 = arith.constant 467 : index
    %c0_223 = arith.constant 0 : index
    %621 = vector.load %arg6[%c467, %c0_223] : memref<480x128xf32, #tpu.memory_space<vmem>>, vector<1x32xf32>
    %c468 = arith.constant 468 : index
    %c0_224 = arith.constant 0 : index
    %622 = vector.load %arg6[%c468, %c0_224] : memref<480x128xf32, #tpu.memory_space<vmem>>, vector<1x64xf32>
    %c469 = arith.constant 469 : index
    %c0_225 = arith.constant 0 : index
    %623 = vector.load %arg6[%c469, %c0_225] : memref<480x128xf32, #tpu.memory_space<vmem>>, vector<1x32xf32>
    %c470 = arith.constant 470 : index
    %c0_226 = arith.constant 0 : index
    %624 = vector.load %arg6[%c470, %c0_226] : memref<480x128xf32, #tpu.memory_space<vmem>>, vector<1x32xf32>
    %c471 = arith.constant 471 : index
    %c0_227 = arith.constant 0 : index
    %625 = vector.load %arg6[%c471, %c0_227] : memref<480x128xf32, #tpu.memory_space<vmem>>, vector<1x32xf32>
    %c472 = arith.constant 472 : index
    %c0_228 = arith.constant 0 : index
    %626 = vector.load %arg6[%c472, %c0_228] : memref<480x128xf32, #tpu.memory_space<vmem>>, vector<1x32xf32>
    %c473 = arith.constant 473 : index
    %c0_229 = arith.constant 0 : index
    %627 = vector.load %arg6[%c473, %c0_229] : memref<480x128xf32, #tpu.memory_space<vmem>>, vector<1x32xf32>
    %c474 = arith.constant 474 : index
    %c0_230 = arith.constant 0 : index
    %628 = vector.load %arg6[%c474, %c0_230] : memref<480x128xf32, #tpu.memory_space<vmem>>, vector<1x32xf32>
    %c475 = arith.constant 475 : index
    %c0_231 = arith.constant 0 : index
    %629 = vector.load %arg6[%c475, %c0_231] : memref<480x128xf32, #tpu.memory_space<vmem>>, vector<1x32xf32>
    %cst_232 = arith.constant dense<0.000000e+00> : vector<8x128xf32>
    %630 = tpu.matmul %611, %612, %cst_232 {dimension_numbers = #tpu.dot_dimension_numbers<[1], [0], [0], [1], [0, 0, 1, 1], [], []>} : vector<8x32xf32>, vector<32x128xf32>, vector<8x128xf32> -> vector<8x128xf32>
    %631 = vector.broadcast %618 : vector<1x128xf32> to vector<8x128xf32>
    %632 = arith.addf %630, %631 : vector<8x128xf32>
    %633 = vector.extract_strided_slice %632 {offsets = [0, 0], sizes = [8, 32], strides = [1, 1]} : vector<8x128xf32> to vector<8x32xf32>
    %634 = vector.extract_strided_slice %632 {offsets = [0, 32], sizes = [8, 32], strides = [1, 1]} : vector<8x128xf32> to vector<8x32xf32>
    %635 = vector.extract_strided_slice %632 {offsets = [0, 64], sizes = [8, 32], strides = [1, 1]} : vector<8x128xf32> to vector<8x32xf32>
    %636 = vector.extract_strided_slice %633 {offsets = [0, 0], sizes = [8, 8], strides = [1, 1]} : vector<8x32xf32> to vector<8x8xf32>
    %637 = vector.extract_strided_slice %634 {offsets = [0, 0], sizes = [8, 8], strides = [1, 1]} : vector<8x32xf32> to vector<8x8xf32>
    %cst_233 = arith.constant dense<0.000000e+00> : vector<8x8xf32>
    %638 = tpu.matmul %636, %637, %cst_233 {dimension_numbers = #tpu.dot_dimension_numbers<[1], [1], [0], [0], [0, 0, 1, 0], [], []>} : vector<8x8xf32>, vector<8x8xf32>, vector<8x8xf32> -> vector<8x8xf32>
    %639 = arith.addf %638, %11 : vector<8x8xf32>
    %cst_234 = arith.constant dense<0xFF800000> : vector<8xf32>
    %640 = vector.multi_reduction <maximumf>, %639, %cst_234 [1] : vector<8x8xf32> to vector<8xf32>
    %641 = vector.shape_cast %640 : vector<8xf32> to vector<8x1xf32>
    %642 = vector.broadcast %641 : vector<8x1xf32> to vector<8x8xf32>
    %643 = arith.subf %639, %642 : vector<8x8xf32>
    %644 = math.exp %643 : vector<8x8xf32>
    %cst_235 = arith.constant dense<0.000000e+00> : vector<8xf32>
    %645 = vector.multi_reduction <add>, %644, %cst_235 [1] : vector<8x8xf32> to vector<8xf32>
    %646 = vector.shape_cast %645 : vector<8xf32> to vector<8x1xf32>
    %cst_236 = arith.constant 1.000000e+00 : f32
    %647 = vector.broadcast %cst_236 : f32 to vector<8x1xf32>
    %648 = arith.divf %647, %646 : vector<8x1xf32>
    %649 = vector.broadcast %648 : vector<8x1xf32> to vector<8x8xf32>
    %650 = arith.mulf %644, %649 : vector<8x8xf32>
    %651 = vector.extract_strided_slice %635 {offsets = [0, 0], sizes = [8, 8], strides = [1, 1]} : vector<8x32xf32> to vector<8x8xf32>
    %cst_237 = arith.constant dense<0.000000e+00> : vector<8x8xf32>
    %652 = tpu.matmul %650, %651, %cst_237 {dimension_numbers = #tpu.dot_dimension_numbers<[1], [0], [0], [1], [0, 0, 1, 1], [], []>} : vector<8x8xf32>, vector<8x8xf32>, vector<8x8xf32> -> vector<8x8xf32>
    %653 = vector.extract_strided_slice %613 {offsets = [0, 0], sizes = [8, 32], strides = [1, 1]} : vector<32x32xf32> to vector<8x32xf32>
    %cst_238 = arith.constant dense<0.000000e+00> : vector<8x32xf32>
    %654 = tpu.matmul %652, %653, %cst_238 {dimension_numbers = #tpu.dot_dimension_numbers<[1], [0], [0], [1], [0, 0, 1, 1], [], []>} : vector<8x8xf32>, vector<8x32xf32>, vector<8x32xf32> -> vector<8x32xf32>
    %655 = vector.extract_strided_slice %633 {offsets = [0, 8], sizes = [8, 8], strides = [1, 1]} : vector<8x32xf32> to vector<8x8xf32>
    %656 = vector.extract_strided_slice %634 {offsets = [0, 8], sizes = [8, 8], strides = [1, 1]} : vector<8x32xf32> to vector<8x8xf32>
    %cst_239 = arith.constant dense<0.000000e+00> : vector<8x8xf32>
    %657 = tpu.matmul %655, %656, %cst_239 {dimension_numbers = #tpu.dot_dimension_numbers<[1], [1], [0], [0], [0, 0, 1, 0], [], []>} : vector<8x8xf32>, vector<8x8xf32>, vector<8x8xf32> -> vector<8x8xf32>
    %658 = arith.addf %657, %11 : vector<8x8xf32>
    %cst_240 = arith.constant dense<0xFF800000> : vector<8xf32>
    %659 = vector.multi_reduction <maximumf>, %658, %cst_240 [1] : vector<8x8xf32> to vector<8xf32>
    %660 = vector.shape_cast %659 : vector<8xf32> to vector<8x1xf32>
    %661 = vector.broadcast %660 : vector<8x1xf32> to vector<8x8xf32>
    %662 = arith.subf %658, %661 : vector<8x8xf32>
    %663 = math.exp %662 : vector<8x8xf32>
    %cst_241 = arith.constant dense<0.000000e+00> : vector<8xf32>
    %664 = vector.multi_reduction <add>, %663, %cst_241 [1] : vector<8x8xf32> to vector<8xf32>
    %665 = vector.shape_cast %664 : vector<8xf32> to vector<8x1xf32>
    %cst_242 = arith.constant 1.000000e+00 : f32
    %666 = vector.broadcast %cst_242 : f32 to vector<8x1xf32>
    %667 = arith.divf %666, %665 : vector<8x1xf32>
    %668 = vector.broadcast %667 : vector<8x1xf32> to vector<8x8xf32>
    %669 = arith.mulf %663, %668 : vector<8x8xf32>
    %670 = vector.extract_strided_slice %635 {offsets = [0, 8], sizes = [8, 8], strides = [1, 1]} : vector<8x32xf32> to vector<8x8xf32>
    %cst_243 = arith.constant dense<0.000000e+00> : vector<8x8xf32>
    %671 = tpu.matmul %669, %670, %cst_243 {dimension_numbers = #tpu.dot_dimension_numbers<[1], [0], [0], [1], [0, 0, 1, 1], [], []>} : vector<8x8xf32>, vector<8x8xf32>, vector<8x8xf32> -> vector<8x8xf32>
    %672 = vector.extract_strided_slice %613 {offsets = [8, 0], sizes = [8, 32], strides = [1, 1]} : vector<32x32xf32> to vector<8x32xf32>
    %cst_244 = arith.constant dense<0.000000e+00> : vector<8x32xf32>
    %673 = tpu.matmul %671, %672, %cst_244 {dimension_numbers = #tpu.dot_dimension_numbers<[1], [0], [0], [1], [0, 0, 1, 1], [], []>} : vector<8x8xf32>, vector<8x32xf32>, vector<8x32xf32> -> vector<8x32xf32>
    %674 = arith.addf %654, %673 : vector<8x32xf32>
    %675 = vector.extract_strided_slice %633 {offsets = [0, 16], sizes = [8, 8], strides = [1, 1]} : vector<8x32xf32> to vector<8x8xf32>
    %676 = vector.extract_strided_slice %634 {offsets = [0, 16], sizes = [8, 8], strides = [1, 1]} : vector<8x32xf32> to vector<8x8xf32>
    %cst_245 = arith.constant dense<0.000000e+00> : vector<8x8xf32>
    %677 = tpu.matmul %675, %676, %cst_245 {dimension_numbers = #tpu.dot_dimension_numbers<[1], [1], [0], [0], [0, 0, 1, 0], [], []>} : vector<8x8xf32>, vector<8x8xf32>, vector<8x8xf32> -> vector<8x8xf32>
    %678 = arith.addf %677, %11 : vector<8x8xf32>
    %cst_246 = arith.constant dense<0xFF800000> : vector<8xf32>
    %679 = vector.multi_reduction <maximumf>, %678, %cst_246 [1] : vector<8x8xf32> to vector<8xf32>
    %680 = vector.shape_cast %679 : vector<8xf32> to vector<8x1xf32>
    %681 = vector.broadcast %680 : vector<8x1xf32> to vector<8x8xf32>
    %682 = arith.subf %678, %681 : vector<8x8xf32>
    %683 = math.exp %682 : vector<8x8xf32>
    %cst_247 = arith.constant dense<0.000000e+00> : vector<8xf32>
    %684 = vector.multi_reduction <add>, %683, %cst_247 [1] : vector<8x8xf32> to vector<8xf32>
    %685 = vector.shape_cast %684 : vector<8xf32> to vector<8x1xf32>
    %cst_248 = arith.constant 1.000000e+00 : f32
    %686 = vector.broadcast %cst_248 : f32 to vector<8x1xf32>
    %687 = arith.divf %686, %685 : vector<8x1xf32>
    %688 = vector.broadcast %687 : vector<8x1xf32> to vector<8x8xf32>
    %689 = arith.mulf %683, %688 : vector<8x8xf32>
    %690 = vector.extract_strided_slice %635 {offsets = [0, 16], sizes = [8, 8], strides = [1, 1]} : vector<8x32xf32> to vector<8x8xf32>
    %cst_249 = arith.constant dense<0.000000e+00> : vector<8x8xf32>
    %691 = tpu.matmul %689, %690, %cst_249 {dimension_numbers = #tpu.dot_dimension_numbers<[1], [0], [0], [1], [0, 0, 1, 1], [], []>} : vector<8x8xf32>, vector<8x8xf32>, vector<8x8xf32> -> vector<8x8xf32>
    %692 = vector.extract_strided_slice %613 {offsets = [16, 0], sizes = [8, 32], strides = [1, 1]} : vector<32x32xf32> to vector<8x32xf32>
    %cst_250 = arith.constant dense<0.000000e+00> : vector<8x32xf32>
    %693 = tpu.matmul %691, %692, %cst_250 {dimension_numbers = #tpu.dot_dimension_numbers<[1], [0], [0], [1], [0, 0, 1, 1], [], []>} : vector<8x8xf32>, vector<8x32xf32>, vector<8x32xf32> -> vector<8x32xf32>
    %694 = arith.addf %674, %693 : vector<8x32xf32>
    %695 = vector.extract_strided_slice %633 {offsets = [0, 24], sizes = [8, 8], strides = [1, 1]} : vector<8x32xf32> to vector<8x8xf32>
    %696 = vector.extract_strided_slice %634 {offsets = [0, 24], sizes = [8, 8], strides = [1, 1]} : vector<8x32xf32> to vector<8x8xf32>
    %cst_251 = arith.constant dense<0.000000e+00> : vector<8x8xf32>
    %697 = tpu.matmul %695, %696, %cst_251 {dimension_numbers = #tpu.dot_dimension_numbers<[1], [1], [0], [0], [0, 0, 1, 0], [], []>} : vector<8x8xf32>, vector<8x8xf32>, vector<8x8xf32> -> vector<8x8xf32>
    %698 = arith.addf %697, %11 : vector<8x8xf32>
    %cst_252 = arith.constant dense<0xFF800000> : vector<8xf32>
    %699 = vector.multi_reduction <maximumf>, %698, %cst_252 [1] : vector<8x8xf32> to vector<8xf32>
    %700 = vector.shape_cast %699 : vector<8xf32> to vector<8x1xf32>
    %701 = vector.broadcast %700 : vector<8x1xf32> to vector<8x8xf32>
    %702 = arith.subf %698, %701 : vector<8x8xf32>
    %703 = math.exp %702 : vector<8x8xf32>
    %cst_253 = arith.constant dense<0.000000e+00> : vector<8xf32>
    %704 = vector.multi_reduction <add>, %703, %cst_253 [1] : vector<8x8xf32> to vector<8xf32>
    %705 = vector.shape_cast %704 : vector<8xf32> to vector<8x1xf32>
    %cst_254 = arith.constant 1.000000e+00 : f32
    %706 = vector.broadcast %cst_254 : f32 to vector<8x1xf32>
    %707 = arith.divf %706, %705 : vector<8x1xf32>
    %708 = vector.broadcast %707 : vector<8x1xf32> to vector<8x8xf32>
    %709 = arith.mulf %703, %708 : vector<8x8xf32>
    %710 = vector.extract_strided_slice %635 {offsets = [0, 24], sizes = [8, 8], strides = [1, 1]} : vector<8x32xf32> to vector<8x8xf32>
    %cst_255 = arith.constant dense<0.000000e+00> : vector<8x8xf32>
    %711 = tpu.matmul %709, %710, %cst_255 {dimension_numbers = #tpu.dot_dimension_numbers<[1], [0], [0], [1], [0, 0, 1, 1], [], []>} : vector<8x8xf32>, vector<8x8xf32>, vector<8x8xf32> -> vector<8x8xf32>
    %712 = vector.extract_strided_slice %613 {offsets = [24, 0], sizes = [8, 32], strides = [1, 1]} : vector<32x32xf32> to vector<8x32xf32>
    %cst_256 = arith.constant dense<0.000000e+00> : vector<8x32xf32>
    %713 = tpu.matmul %711, %712, %cst_256 {dimension_numbers = #tpu.dot_dimension_numbers<[1], [0], [0], [1], [0, 0, 1, 1], [], []>} : vector<8x8xf32>, vector<8x32xf32>, vector<8x32xf32> -> vector<8x32xf32>
    %714 = arith.addf %694, %713 : vector<8x32xf32>
    %715 = vector.broadcast %619 : vector<1x32xf32> to vector<8x32xf32>
    %716 = arith.addf %714, %715 : vector<8x32xf32>
    %717 = arith.addf %611, %716 : vector<8x32xf32>
    %cst_257 = arith.constant dense<0.000000e+00> : vector<8xf32>
    %718 = vector.multi_reduction <add>, %717, %cst_257 [1] : vector<8x32xf32> to vector<8xf32>
    %719 = vector.shape_cast %718 : vector<8xf32> to vector<8x1xf32>
    %cst_258 = arith.constant 3.200000e+01 : f32
    %720 = vector.broadcast %cst_258 : f32 to vector<8x1xf32>
    %721 = arith.divf %719, %720 : vector<8x1xf32>
    %722 = vector.broadcast %721 : vector<8x1xf32> to vector<8x32xf32>
    %723 = arith.subf %717, %722 : vector<8x32xf32>
    %724 = arith.mulf %723, %723 : vector<8x32xf32>
    %cst_259 = arith.constant dense<0.000000e+00> : vector<8xf32>
    %725 = vector.multi_reduction <add>, %724, %cst_259 [1] : vector<8x32xf32> to vector<8xf32>
    %726 = vector.shape_cast %725 : vector<8xf32> to vector<8x1xf32>
    %cst_260 = arith.constant 0.0322580636 : f32
    %727 = vector.broadcast %cst_260 : f32 to vector<8x1xf32>
    %728 = arith.mulf %726, %727 : vector<8x1xf32>
    %729 = math.sqrt %728 : vector<8x1xf32>
    %cst_261 = arith.constant 9.99999997E-7 : f32
    %730 = vector.broadcast %cst_261 : f32 to vector<8x1xf32>
    %731 = arith.addf %729, %730 : vector<8x1xf32>
    %cst_262 = arith.constant 1.000000e+00 : f32
    %732 = vector.broadcast %cst_262 : f32 to vector<8x1xf32>
    %733 = arith.divf %732, %731 : vector<8x1xf32>
    %734 = vector.broadcast %721 : vector<8x1xf32> to vector<8x32xf32>
    %735 = arith.subf %717, %734 : vector<8x32xf32>
    %736 = vector.broadcast %624 : vector<1x32xf32> to vector<8x32xf32>
    %737 = arith.mulf %736, %735 : vector<8x32xf32>
    %738 = vector.broadcast %733 : vector<8x1xf32> to vector<8x32xf32>
    %739 = arith.mulf %737, %738 : vector<8x32xf32>
    %740 = vector.broadcast %625 : vector<1x32xf32> to vector<8x32xf32>
    %741 = arith.addf %739, %740 : vector<8x32xf32>
    %742 = vector.extract_strided_slice %614 {offsets = [0, 0], sizes = [32, 32], strides = [1, 1]} : vector<32x128xf32> to vector<32x32xf32>
    %cst_263 = arith.constant dense<0.000000e+00> : vector<8x32xf32>
    %743 = tpu.matmul %741, %742, %cst_263 {dimension_numbers = #tpu.dot_dimension_numbers<[1], [0], [0], [1], [0, 0, 1, 1], [], []>} : vector<8x32xf32>, vector<32x32xf32>, vector<8x32xf32> -> vector<8x32xf32>
    %744 = vector.extract_strided_slice %620 {offsets = [0, 0], sizes = [1, 32], strides = [1, 1]} : vector<1x128xf32> to vector<1x32xf32>
    %745 = vector.broadcast %744 : vector<1x32xf32> to vector<8x32xf32>
    %746 = arith.addf %743, %745 : vector<8x32xf32>
    %747 = vector.extract_strided_slice %614 {offsets = [0, 32], sizes = [32, 64], strides = [1, 1]} : vector<32x128xf32> to vector<32x64xf32>
    %cst_264 = arith.constant dense<0.000000e+00> : vector<16x64xf32>
    %748 = tpu.matmul %327, %747, %cst_264 {dimension_numbers = #tpu.dot_dimension_numbers<[1], [0], [0], [1], [0, 0, 1, 1], [], []>} : vector<16x32xf32>, vector<32x64xf32>, vector<16x64xf32> -> vector<16x64xf32>
    %749 = vector.extract_strided_slice %620 {offsets = [0, 32], sizes = [1, 64], strides = [1, 1]} : vector<1x128xf32> to vector<1x64xf32>
    %750 = vector.broadcast %749 : vector<1x64xf32> to vector<16x64xf32>
    %751 = arith.addf %748, %750 : vector<16x64xf32>
    %752 = vector.extract_strided_slice %751 {offsets = [0, 0], sizes = [16, 32], strides = [1, 1]} : vector<16x64xf32> to vector<16x32xf32>
    %753 = vector.extract_strided_slice %751 {offsets = [0, 32], sizes = [16, 32], strides = [1, 1]} : vector<16x64xf32> to vector<16x32xf32>
    %754 = vector.extract_strided_slice %746 {offsets = [0, 0], sizes = [8, 8], strides = [1, 1]} : vector<8x32xf32> to vector<8x8xf32>
    %755 = vector.extract_strided_slice %752 {offsets = [0, 0], sizes = [16, 8], strides = [1, 1]} : vector<16x32xf32> to vector<16x8xf32>
    %cst_265 = arith.constant dense<0.000000e+00> : vector<8x16xf32>
    %756 = tpu.matmul %754, %755, %cst_265 {dimension_numbers = #tpu.dot_dimension_numbers<[1], [1], [0], [0], [0, 0, 1, 0], [], []>} : vector<8x8xf32>, vector<16x8xf32>, vector<8x16xf32> -> vector<8x16xf32>
    %757 = arith.addf %756, %13 : vector<8x16xf32>
    %cst_266 = arith.constant dense<0xFF800000> : vector<8xf32>
    %758 = vector.multi_reduction <maximumf>, %757, %cst_266 [1] : vector<8x16xf32> to vector<8xf32>
    %759 = vector.shape_cast %758 : vector<8xf32> to vector<8x1xf32>
    %760 = vector.broadcast %759 : vector<8x1xf32> to vector<8x16xf32>
    %761 = arith.subf %757, %760 : vector<8x16xf32>
    %762 = math.exp %761 : vector<8x16xf32>
    %cst_267 = arith.constant dense<0.000000e+00> : vector<8xf32>
    %763 = vector.multi_reduction <add>, %762, %cst_267 [1] : vector<8x16xf32> to vector<8xf32>
    %764 = vector.shape_cast %763 : vector<8xf32> to vector<8x1xf32>
    %cst_268 = arith.constant 1.000000e+00 : f32
    %765 = vector.broadcast %cst_268 : f32 to vector<8x1xf32>
    %766 = arith.divf %765, %764 : vector<8x1xf32>
    %767 = vector.broadcast %766 : vector<8x1xf32> to vector<8x16xf32>
    %768 = arith.mulf %762, %767 : vector<8x16xf32>
    %769 = vector.extract_strided_slice %753 {offsets = [0, 0], sizes = [16, 8], strides = [1, 1]} : vector<16x32xf32> to vector<16x8xf32>
    %cst_269 = arith.constant dense<0.000000e+00> : vector<8x8xf32>
    %770 = tpu.matmul %768, %769, %cst_269 {dimension_numbers = #tpu.dot_dimension_numbers<[1], [0], [0], [1], [0, 0, 1, 1], [], []>} : vector<8x16xf32>, vector<16x8xf32>, vector<8x8xf32> -> vector<8x8xf32>
    %771 = vector.extract_strided_slice %615 {offsets = [0, 0], sizes = [8, 32], strides = [1, 1]} : vector<32x32xf32> to vector<8x32xf32>
    %cst_270 = arith.constant dense<0.000000e+00> : vector<8x32xf32>
    %772 = tpu.matmul %770, %771, %cst_270 {dimension_numbers = #tpu.dot_dimension_numbers<[1], [0], [0], [1], [0, 0, 1, 1], [], []>} : vector<8x8xf32>, vector<8x32xf32>, vector<8x32xf32> -> vector<8x32xf32>
    %773 = vector.extract_strided_slice %746 {offsets = [0, 8], sizes = [8, 8], strides = [1, 1]} : vector<8x32xf32> to vector<8x8xf32>
    %774 = vector.extract_strided_slice %752 {offsets = [0, 8], sizes = [16, 8], strides = [1, 1]} : vector<16x32xf32> to vector<16x8xf32>
    %cst_271 = arith.constant dense<0.000000e+00> : vector<8x16xf32>
    %775 = tpu.matmul %773, %774, %cst_271 {dimension_numbers = #tpu.dot_dimension_numbers<[1], [1], [0], [0], [0, 0, 1, 0], [], []>} : vector<8x8xf32>, vector<16x8xf32>, vector<8x16xf32> -> vector<8x16xf32>
    %776 = arith.addf %775, %13 : vector<8x16xf32>
    %cst_272 = arith.constant dense<0xFF800000> : vector<8xf32>
    %777 = vector.multi_reduction <maximumf>, %776, %cst_272 [1] : vector<8x16xf32> to vector<8xf32>
    %778 = vector.shape_cast %777 : vector<8xf32> to vector<8x1xf32>
    %779 = vector.broadcast %778 : vector<8x1xf32> to vector<8x16xf32>
    %780 = arith.subf %776, %779 : vector<8x16xf32>
    %781 = math.exp %780 : vector<8x16xf32>
    %cst_273 = arith.constant dense<0.000000e+00> : vector<8xf32>
    %782 = vector.multi_reduction <add>, %781, %cst_273 [1] : vector<8x16xf32> to vector<8xf32>
    %783 = vector.shape_cast %782 : vector<8xf32> to vector<8x1xf32>
    %cst_274 = arith.constant 1.000000e+00 : f32
    %784 = vector.broadcast %cst_274 : f32 to vector<8x1xf32>
    %785 = arith.divf %784, %783 : vector<8x1xf32>
    %786 = vector.broadcast %785 : vector<8x1xf32> to vector<8x16xf32>
    %787 = arith.mulf %781, %786 : vector<8x16xf32>
    %788 = vector.extract_strided_slice %753 {offsets = [0, 8], sizes = [16, 8], strides = [1, 1]} : vector<16x32xf32> to vector<16x8xf32>
    %cst_275 = arith.constant dense<0.000000e+00> : vector<8x8xf32>
    %789 = tpu.matmul %787, %788, %cst_275 {dimension_numbers = #tpu.dot_dimension_numbers<[1], [0], [0], [1], [0, 0, 1, 1], [], []>} : vector<8x16xf32>, vector<16x8xf32>, vector<8x8xf32> -> vector<8x8xf32>
    %790 = vector.extract_strided_slice %615 {offsets = [8, 0], sizes = [8, 32], strides = [1, 1]} : vector<32x32xf32> to vector<8x32xf32>
    %cst_276 = arith.constant dense<0.000000e+00> : vector<8x32xf32>
    %791 = tpu.matmul %789, %790, %cst_276 {dimension_numbers = #tpu.dot_dimension_numbers<[1], [0], [0], [1], [0, 0, 1, 1], [], []>} : vector<8x8xf32>, vector<8x32xf32>, vector<8x32xf32> -> vector<8x32xf32>
    %792 = arith.addf %772, %791 : vector<8x32xf32>
    %793 = vector.extract_strided_slice %746 {offsets = [0, 16], sizes = [8, 8], strides = [1, 1]} : vector<8x32xf32> to vector<8x8xf32>
    %794 = vector.extract_strided_slice %752 {offsets = [0, 16], sizes = [16, 8], strides = [1, 1]} : vector<16x32xf32> to vector<16x8xf32>
    %cst_277 = arith.constant dense<0.000000e+00> : vector<8x16xf32>
    %795 = tpu.matmul %793, %794, %cst_277 {dimension_numbers = #tpu.dot_dimension_numbers<[1], [1], [0], [0], [0, 0, 1, 0], [], []>} : vector<8x8xf32>, vector<16x8xf32>, vector<8x16xf32> -> vector<8x16xf32>
    %796 = arith.addf %795, %13 : vector<8x16xf32>
    %cst_278 = arith.constant dense<0xFF800000> : vector<8xf32>
    %797 = vector.multi_reduction <maximumf>, %796, %cst_278 [1] : vector<8x16xf32> to vector<8xf32>
    %798 = vector.shape_cast %797 : vector<8xf32> to vector<8x1xf32>
    %799 = vector.broadcast %798 : vector<8x1xf32> to vector<8x16xf32>
    %800 = arith.subf %796, %799 : vector<8x16xf32>
    %801 = math.exp %800 : vector<8x16xf32>
    %cst_279 = arith.constant dense<0.000000e+00> : vector<8xf32>
    %802 = vector.multi_reduction <add>, %801, %cst_279 [1] : vector<8x16xf32> to vector<8xf32>
    %803 = vector.shape_cast %802 : vector<8xf32> to vector<8x1xf32>
    %cst_280 = arith.constant 1.000000e+00 : f32
    %804 = vector.broadcast %cst_280 : f32 to vector<8x1xf32>
    %805 = arith.divf %804, %803 : vector<8x1xf32>
    %806 = vector.broadcast %805 : vector<8x1xf32> to vector<8x16xf32>
    %807 = arith.mulf %801, %806 : vector<8x16xf32>
    %808 = vector.extract_strided_slice %753 {offsets = [0, 16], sizes = [16, 8], strides = [1, 1]} : vector<16x32xf32> to vector<16x8xf32>
    %cst_281 = arith.constant dense<0.000000e+00> : vector<8x8xf32>
    %809 = tpu.matmul %807, %808, %cst_281 {dimension_numbers = #tpu.dot_dimension_numbers<[1], [0], [0], [1], [0, 0, 1, 1], [], []>} : vector<8x16xf32>, vector<16x8xf32>, vector<8x8xf32> -> vector<8x8xf32>
    %810 = vector.extract_strided_slice %615 {offsets = [16, 0], sizes = [8, 32], strides = [1, 1]} : vector<32x32xf32> to vector<8x32xf32>
    %cst_282 = arith.constant dense<0.000000e+00> : vector<8x32xf32>
    %811 = tpu.matmul %809, %810, %cst_282 {dimension_numbers = #tpu.dot_dimension_numbers<[1], [0], [0], [1], [0, 0, 1, 1], [], []>} : vector<8x8xf32>, vector<8x32xf32>, vector<8x32xf32> -> vector<8x32xf32>
    %812 = arith.addf %792, %811 : vector<8x32xf32>
    %813 = vector.extract_strided_slice %746 {offsets = [0, 24], sizes = [8, 8], strides = [1, 1]} : vector<8x32xf32> to vector<8x8xf32>
    %814 = vector.extract_strided_slice %752 {offsets = [0, 24], sizes = [16, 8], strides = [1, 1]} : vector<16x32xf32> to vector<16x8xf32>
    %cst_283 = arith.constant dense<0.000000e+00> : vector<8x16xf32>
    %815 = tpu.matmul %813, %814, %cst_283 {dimension_numbers = #tpu.dot_dimension_numbers<[1], [1], [0], [0], [0, 0, 1, 0], [], []>} : vector<8x8xf32>, vector<16x8xf32>, vector<8x16xf32> -> vector<8x16xf32>
    %816 = arith.addf %815, %13 : vector<8x16xf32>
    %cst_284 = arith.constant dense<0xFF800000> : vector<8xf32>
    %817 = vector.multi_reduction <maximumf>, %816, %cst_284 [1] : vector<8x16xf32> to vector<8xf32>
    %818 = vector.shape_cast %817 : vector<8xf32> to vector<8x1xf32>
    %819 = vector.broadcast %818 : vector<8x1xf32> to vector<8x16xf32>
    %820 = arith.subf %816, %819 : vector<8x16xf32>
    %821 = math.exp %820 : vector<8x16xf32>
    %cst_285 = arith.constant dense<0.000000e+00> : vector<8xf32>
    %822 = vector.multi_reduction <add>, %821, %cst_285 [1] : vector<8x16xf32> to vector<8xf32>
    %823 = vector.shape_cast %822 : vector<8xf32> to vector<8x1xf32>
    %cst_286 = arith.constant 1.000000e+00 : f32
    %824 = vector.broadcast %cst_286 : f32 to vector<8x1xf32>
    %825 = arith.divf %824, %823 : vector<8x1xf32>
    %826 = vector.broadcast %825 : vector<8x1xf32> to vector<8x16xf32>
    %827 = arith.mulf %821, %826 : vector<8x16xf32>
    %828 = vector.extract_strided_slice %753 {offsets = [0, 24], sizes = [16, 8], strides = [1, 1]} : vector<16x32xf32> to vector<16x8xf32>
    %cst_287 = arith.constant dense<0.000000e+00> : vector<8x8xf32>
    %829 = tpu.matmul %827, %828, %cst_287 {dimension_numbers = #tpu.dot_dimension_numbers<[1], [0], [0], [1], [0, 0, 1, 1], [], []>} : vector<8x16xf32>, vector<16x8xf32>, vector<8x8xf32> -> vector<8x8xf32>
    %830 = vector.extract_strided_slice %615 {offsets = [24, 0], sizes = [8, 32], strides = [1, 1]} : vector<32x32xf32> to vector<8x32xf32>
    %cst_288 = arith.constant dense<0.000000e+00> : vector<8x32xf32>
    %831 = tpu.matmul %829, %830, %cst_288 {dimension_numbers = #tpu.dot_dimension_numbers<[1], [0], [0], [1], [0, 0, 1, 1], [], []>} : vector<8x8xf32>, vector<8x32xf32>, vector<8x32xf32> -> vector<8x32xf32>
    %832 = arith.addf %812, %831 : vector<8x32xf32>
    %833 = vector.broadcast %621 : vector<1x32xf32> to vector<8x32xf32>
    %834 = arith.addf %832, %833 : vector<8x32xf32>
    %835 = arith.addf %741, %834 : vector<8x32xf32>
    %cst_289 = arith.constant dense<0.000000e+00> : vector<8xf32>
    %836 = vector.multi_reduction <add>, %835, %cst_289 [1] : vector<8x32xf32> to vector<8xf32>
    %837 = vector.shape_cast %836 : vector<8xf32> to vector<8x1xf32>
    %cst_290 = arith.constant 3.200000e+01 : f32
    %838 = vector.broadcast %cst_290 : f32 to vector<8x1xf32>
    %839 = arith.divf %837, %838 : vector<8x1xf32>
    %840 = vector.broadcast %839 : vector<8x1xf32> to vector<8x32xf32>
    %841 = arith.subf %835, %840 : vector<8x32xf32>
    %842 = arith.mulf %841, %841 : vector<8x32xf32>
    %cst_291 = arith.constant dense<0.000000e+00> : vector<8xf32>
    %843 = vector.multi_reduction <add>, %842, %cst_291 [1] : vector<8x32xf32> to vector<8xf32>
    %844 = vector.shape_cast %843 : vector<8xf32> to vector<8x1xf32>
    %cst_292 = arith.constant 0.0322580636 : f32
    %845 = vector.broadcast %cst_292 : f32 to vector<8x1xf32>
    %846 = arith.mulf %844, %845 : vector<8x1xf32>
    %847 = math.sqrt %846 : vector<8x1xf32>
    %cst_293 = arith.constant 9.99999997E-7 : f32
    %848 = vector.broadcast %cst_293 : f32 to vector<8x1xf32>
    %849 = arith.addf %847, %848 : vector<8x1xf32>
    %cst_294 = arith.constant 1.000000e+00 : f32
    %850 = vector.broadcast %cst_294 : f32 to vector<8x1xf32>
    %851 = arith.divf %850, %849 : vector<8x1xf32>
    %852 = vector.broadcast %839 : vector<8x1xf32> to vector<8x32xf32>
    %853 = arith.subf %835, %852 : vector<8x32xf32>
    %854 = vector.broadcast %626 : vector<1x32xf32> to vector<8x32xf32>
    %855 = arith.mulf %854, %853 : vector<8x32xf32>
    %856 = vector.broadcast %851 : vector<8x1xf32> to vector<8x32xf32>
    %857 = arith.mulf %855, %856 : vector<8x32xf32>
    %858 = vector.broadcast %627 : vector<1x32xf32> to vector<8x32xf32>
    %859 = arith.addf %857, %858 : vector<8x32xf32>
    %cst_295 = arith.constant dense<0.000000e+00> : vector<8x64xf32>
    %860 = tpu.matmul %859, %616, %cst_295 {dimension_numbers = #tpu.dot_dimension_numbers<[1], [0], [0], [1], [0, 0, 1, 1], [], []>} : vector<8x32xf32>, vector<32x64xf32>, vector<8x64xf32> -> vector<8x64xf32>
    %861 = vector.broadcast %622 : vector<1x64xf32> to vector<8x64xf32>
    %862 = arith.addf %860, %861 : vector<8x64xf32>
    %cst_296 = arith.constant 0.000000e+00 : f32
    %863 = vector.broadcast %cst_296 : f32 to vector<8x64xf32>
    %864 = arith.maximumf %862, %863 : vector<8x64xf32>
    %cst_297 = arith.constant dense<0.000000e+00> : vector<8x32xf32>
    %865 = tpu.matmul %864, %617, %cst_297 {dimension_numbers = #tpu.dot_dimension_numbers<[1], [0], [0], [1], [0, 0, 1, 1], [], []>} : vector<8x64xf32>, vector<64x32xf32>, vector<8x32xf32> -> vector<8x32xf32>
    %866 = vector.broadcast %623 : vector<1x32xf32> to vector<8x32xf32>
    %867 = arith.addf %865, %866 : vector<8x32xf32>
    %868 = arith.addf %859, %867 : vector<8x32xf32>
    %cst_298 = arith.constant dense<0.000000e+00> : vector<8xf32>
    %869 = vector.multi_reduction <add>, %868, %cst_298 [1] : vector<8x32xf32> to vector<8xf32>
    %870 = vector.shape_cast %869 : vector<8xf32> to vector<8x1xf32>
    %cst_299 = arith.constant 3.200000e+01 : f32
    %871 = vector.broadcast %cst_299 : f32 to vector<8x1xf32>
    %872 = arith.divf %870, %871 : vector<8x1xf32>
    %873 = vector.broadcast %872 : vector<8x1xf32> to vector<8x32xf32>
    %874 = arith.subf %868, %873 : vector<8x32xf32>
    %875 = arith.mulf %874, %874 : vector<8x32xf32>
    %cst_300 = arith.constant dense<0.000000e+00> : vector<8xf32>
    %876 = vector.multi_reduction <add>, %875, %cst_300 [1] : vector<8x32xf32> to vector<8xf32>
    %877 = vector.shape_cast %876 : vector<8xf32> to vector<8x1xf32>
    %cst_301 = arith.constant 0.0322580636 : f32
    %878 = vector.broadcast %cst_301 : f32 to vector<8x1xf32>
    %879 = arith.mulf %877, %878 : vector<8x1xf32>
    %880 = math.sqrt %879 : vector<8x1xf32>
    %cst_302 = arith.constant 9.99999997E-7 : f32
    %881 = vector.broadcast %cst_302 : f32 to vector<8x1xf32>
    %882 = arith.addf %880, %881 : vector<8x1xf32>
    %cst_303 = arith.constant 1.000000e+00 : f32
    %883 = vector.broadcast %cst_303 : f32 to vector<8x1xf32>
    %884 = arith.divf %883, %882 : vector<8x1xf32>
    %885 = vector.broadcast %872 : vector<8x1xf32> to vector<8x32xf32>
    %886 = arith.subf %868, %885 : vector<8x32xf32>
    %887 = vector.broadcast %628 : vector<1x32xf32> to vector<8x32xf32>
    %888 = arith.mulf %887, %886 : vector<8x32xf32>
    %889 = vector.broadcast %884 : vector<8x1xf32> to vector<8x32xf32>
    %890 = arith.mulf %888, %889 : vector<8x32xf32>
    %891 = vector.broadcast %629 : vector<1x32xf32> to vector<8x32xf32>
    %892 = arith.addf %890, %891 : vector<8x32xf32>
    %c0_304 = arith.constant 0 : index
    %c0_305 = arith.constant 0 : index
    %c0_306 = arith.constant 0 : index
    %893 = vector.load %arg8[%c0_304, %c0_305, %c0_306] : memref<1x8x32xf32, #tpu.memory_space<vmem>>, vector<1x8x32xf32>
    %894 = vector.shape_cast %893 : vector<1x8x32xf32> to vector<8x32xf32>
    %895 = vector.shape_cast %892 : vector<8x32xf32> to vector<1x8x32xf32>
    tpu.vector_store %arg8[%c0_304, %c0_305, %c0_306], %895 {strides = array<i32>} : memref<1x8x32xf32, #tpu.memory_space<vmem>>, vector<1x8x32xf32>,
    return
  }
  func.func @transform_0(%arg0: i32) -> (i32, i32, i32) {
    %c0_i32 = arith.constant 0 : i32
    %c0_i32_0 = arith.constant 0 : i32
    %c0_i32_1 = arith.constant 0 : i32
    return %arg0, %c0_i32, %c0_i32_0 : i32, i32, i32
  }
  func.func @transform_1(%arg0: i32) -> (i32, i32, i32) {
    %c0_i32 = arith.constant 0 : i32
    %c0_i32_0 = arith.constant 0 : i32
    %c0_i32_1 = arith.constant 0 : i32
    return %arg0, %c0_i32, %c0_i32_0 : i32, i32, i32
  }
  func.func @transform_2(%arg0: i32) -> (i32, i32, i32) {
    %c0_i32 = arith.constant 0 : i32
    %c0_i32_0 = arith.constant 0 : i32
    %c0_i32_1 = arith.constant 0 : i32
    return %arg0, %c0_i32, %c0_i32_0 : i32, i32, i32
  }
  func.func @transform_3(%arg0: i32) -> (i32, i32, i32) {
    %c0_i32 = arith.constant 0 : i32
    %c0_i32_0 = arith.constant 0 : i32
    %c0_i32_1 = arith.constant 0 : i32
    return %arg0, %c0_i32, %c0_i32_0 : i32, i32, i32
  }
  func.func @transform_4(%arg0: i32) -> (i32, i32) {
    %c0_i32 = arith.constant 0 : i32
    %c0_i32_0 = arith.constant 0 : i32
    %c0_i32_1 = arith.constant 0 : i32
    return %c0_i32, %c0_i32_0 : i32, i32
  }
  func.func @transform_5(%arg0: i32) -> (i32, i32) {
    %c0_i32 = arith.constant 0 : i32
    %c0_i32_0 = arith.constant 0 : i32
    %c0_i32_1 = arith.constant 0 : i32
    return %c0_i32, %c0_i32_0 : i32, i32
  }
  func.func @transform_6(%arg0: i32) -> (i32, i32, i32) {
    %c0_i32 = arith.constant 0 : i32
    %c0_i32_0 = arith.constant 0 : i32
    %c0_i32_1 = arith.constant 0 : i32
    return %arg0, %c0_i32, %c0_i32_0 : i32, i32, i32
  }
  func.func @transform_7(%arg0: i32) -> (i32, i32, i32) {
    %c0_i32 = arith.constant 0 : i32
    %c0_i32_0 = arith.constant 0 : i32
    %c0_i32_1 = arith.constant 0 : i32
    return %arg0, %c0_i32, %c0_i32_0 : i32, i32, i32
  }
}

</mosaic_0001>

<llo_original>
// kernel: tpu_custom_call.1
$region0: #{tpu_custom_call.1}
  #allocation0 [shape = 'u32[]', space=smem, size = 0x4, offset = 0x4, fixed_abs, tag = 'smem constant byte address 0x4 - core index']
  #allocation1 [shape = 'u32[72,128]{1,0:T(1,128)}', space=vmem, size = 0x9000, scoped, tag = 'internal scratch']
  %s0 = inlined_call_operand.hbm [shape: f32[2,16,32], index: 0, kind: input, shape index: {}]
  %s1 = inlined_call_operand.hbm [shape: f32[2,8,32], index: 1, kind: input, shape index: {}]
  %s2 = inlined_call_operand.hbm [shape: f32[2,1,16], index: 2, kind: input, shape index: {}]
  %s3 = inlined_call_operand.vmem [shape: f32[2,1,8], index: 3, kind: input, shape index: {}]
  %s4 = inlined_call_operand.hbm [shape: f32[336,128], index: 4, kind: input, shape index: {}]
  %s5 = inlined_call_operand.hbm [shape: f32[480,128], index: 5, kind: input, shape index: {}]
  %s6 = inlined_call_operand.hbm [shape: f32[2,16,32], index: 6, kind: output, shape index: {0}]
  %s7 = inlined_call_operand.hbm [shape: f32[2,8,32], index: 7, kind: output, shape index: {1}]
  %8 = xla_tuple %s6, %s7
  %s9 = sld [smem:[#allocation0]]
  $region85: #{tpu_custom_call.1} parent=0
    _
  %s11 = ssub.s32 1, %s9
  %s12 = scalar_select 0, %s11, %s9
  $region1: #{tpu_custom_call.1} parent=0
    #allocation2 [shape = 'u8[16384]{0}', space=vmem, size = 0x4000, scoped, tag = 'input window, operand 0']
    #allocation3 [shape = 's32[2]{0}', space=sflag, size = 0x8, scoped, tag = 'scoped memory for tpu_custom_call.1']
    #allocation4 [shape = 's32[2]{0}', space=sflag, size = 0x8, scoped, tag = 'scoped memory for tpu_custom_call.1']
    #allocation5 [shape = 'u8[8192]{0}', space=vmem, size = 0x2000, scoped, tag = 'input window, operand 1']
    #allocation6 [shape = 's32[2]{0}', space=sflag, size = 0x8, scoped, tag = 'scoped memory for tpu_custom_call.1']
    #allocation7 [shape = 'u8[1024]{0}', space=vmem, size = 0x400, scoped, tag = 'input window, operand 2']
    #allocation8 [shape = 'u8[172032]{0}', space=vmem, size = 0x2a000, scoped, tag = 'input window, operand 4, single buffered']
    #allocation9 [shape = 's32[1]{0}', space=sflag, size = 0x4, scoped, tag = 'scoped memory for tpu_custom_call.1']
    #allocation10 [shape = 'u8[245760]{0}', space=vmem, size = 0x3c000, scoped, tag = 'input window, operand 5, single buffered']
    #allocation11 [shape = 'u8[16384]{0}', space=vmem, size = 0x4000, scoped, tag = 'output window, operand 0']
    #allocation12 [shape = 'u8[8192]{0}', space=vmem, size = 0x2000, scoped, tag = 'output window, operand 1']
    #allocation13 [shape = 's32[2]{0}', space=sflag, size = 0x8, scoped, tag = 'scoped memory for tpu_custom_call.1']
    %13 = vsyncpa [#allocation3], 0
    %s14 = scalar_lea.sflag [#allocation3], 1
    %15 = vsyncpa %s14, 0
    %16 = vsyncpa [#allocation6], 0
    %s17 = scalar_lea.sflag [#allocation6], 1
    %18 = vsyncpa %s17, 0
    %19 = vsyncpa [#allocation9], 0
    %20 = vsyncpa [#allocation4], 0
    %s21 = scalar_lea.sflag [#allocation4], 1
    %22 = vsyncpa %s21, 0
    %23 = vsyncpa [#allocation13], 0
    %s24 = scalar_lea.sflag [#allocation13], 1
    %25 = vsyncpa %s24, 0
    loop: start=0, step=1, limit=4
    $region2: #{tpu_custom_call.1} parent=1 // loop_pre_header
      _
    $region3: #{tpu_custom_call.1} parent=1 // loop_header
      %s27 = sphi 0, %s31
      %p28 = scmp.ge.s32.totalorder %s27, 4
      %s37 = sphi 0, %s39
      %s40 = sphi 0, %s37
      %s41 = sphi 0, %s40
      %s57 = sphi 0, %s41
      %s63 = sphi 0, %s65
      %s66 = sphi 0, %s63
      %s67 = sphi 0, %s66
      %s83 = sphi 0, %s67
      %s89 = sphi 0, %s91
      %s92 = sphi 0, %s89
      %s93 = sphi 0, %s92
      %s109 = sphi 0, %s93
      %s115 = sphi 0, %s117
      %s118 = sphi 0, %s115
      %s119 = sphi 0, %s118
      %s135 = sphi 0, %s119
      %s139 = sphi 0, %s139
      %s141 = sphi 0, %s139
      %s142 = sphi 0, %s141
      %s156 = sphi 0, %s142
      %s160 = sphi 0, %s160
      %s162 = sphi 0, %s160
      %s163 = sphi 0, %s162
      %s177 = sphi 0, %s163
      %s183 = sphi 0, %s185
      %s186 = sphi 0, %s183
      %s187 = sphi 0, %s186
      %s203 = sphi 0, %s187
      %s209 = sphi 0, %s211
      %s212 = sphi 0, %s209
      %s213 = sphi 0, %s212
      %s229 = sphi 0, %s213
    $region4: #{tpu_custom_call.1} parent=1 // loop_header_branch
      %30 = sbr.rel (%p28) target = $region8
    $region5: #{tpu_custom_call.1} parent=1 // loop_body
      %s32 = ssub.s32 %s27, 1
      %s33 = ssub.s32 %s27, 2
      %s34 = sadd.s32 %s27, 1
      %s35 = ssub.s32 %s27, %s34
      %p36 = scmp.eq.s32.totalorder %s35, 0
      %s38 = sadd.s32 %s37, 1
      %s39 = scalar_select %p36, %s37, %s38
      %p42 = pneg %p36
      %p43 = scmp.eq.s32.totalorder %s27, 1
      %p44 = por %p42, %p43
      %p45 = scmp.ne.s32.totalorder %s37, %s40
      %p46 = scmp.eq.s32.totalorder %s27, 0
      %p47 = por %p45, %p46
      %p48 = scmp.ne.s32.totalorder %s37, %s40
      %p49 = scmp.eq.s32.totalorder %s32, 1
      %p50 = por %p48, %p49
      %p51 = scmp.ne.s32.totalorder %s40, %s41
      %p52 = scmp.eq.s32.totalorder %s32, 0
      %p53 = por %p51, %p52
      %p54 = scmp.ne.s32.totalorder %s40, %s41
      %p55 = scmp.eq.s32.totalorder %s33, 1
      %p56 = por %p54, %p55
      %p58 = scmp.ne.s32.totalorder %s41, %s57
      %p59 = scmp.eq.s32.totalorder %s33, 0
      %p60 = por %p58, %p59
      %s61 = ssub.s32 %s27, %s34
      %p62 = scmp.eq.s32.totalorder %s61, 0
      %s64 = sadd.s32 %s63, 1
      %s65 = scalar_select %p62, %s63, %s64
      %p68 = pneg %p62
      %p69 = scmp.eq.s32.totalorder %s27, 1
      %p70 = por %p68, %p69
      %p71 = scmp.ne.s32.totalorder %s63, %s66
      %p72 = scmp.eq.s32.totalorder %s27, 0
      %p73 = por %p71, %p72
      %p74 = scmp.ne.s32.totalorder %s63, %s66
      %p75 = scmp.eq.s32.totalorder %s32, 1
      %p76 = por %p74, %p75
      %p77 = scmp.ne.s32.totalorder %s66, %s67
      %p78 = scmp.eq.s32.totalorder %s32, 0
      %p79 = por %p77, %p78
      %p80 = scmp.ne.s32.totalorder %s66, %s67
      %p81 = scmp.eq.s32.totalorder %s33, 1
      %p82 = por %p80, %p81
      %p84 = scmp.ne.s32.totalorder %s67, %s83
      %p85 = scmp.eq.s32.totalorder %s33, 0
      %p86 = por %p84, %p85
      %s87 = ssub.s32 %s27, %s34
      %p88 = scmp.eq.s32.totalorder %s87, 0
      %s90 = sadd.s32 %s89, 1
      %s91 = scalar_select %p88, %s89, %s90
      %p94 = pneg %p88
      %p95 = scmp.eq.s32.totalorder %s27, 1
      %p96 = por %p94, %p95
      %p97 = scmp.ne.s32.totalorder %s89, %s92
      %p98 = scmp.eq.s32.totalorder %s27, 0
      %p99 = por %p97, %p98
      %p100 = scmp.ne.s32.totalorder %s89, %s92
      %p101 = scmp.eq.s32.totalorder %s32, 1
      %p102 = por %p100, %p101
      %p103 = scmp.ne.s32.totalorder %s92, %s93
      %p104 = scmp.eq.s32.totalorder %s32, 0
      %p105 = por %p103, %p104
      %p106 = scmp.ne.s32.totalorder %s92, %s93
      %p107 = scmp.eq.s32.totalorder %s33, 1
      %p108 = por %p106, %p107
      %p110 = scmp.ne.s32.totalorder %s93, %s109
      %p111 = scmp.eq.s32.totalorder %s33, 0
      %p112 = por %p110, %p111
      %s113 = ssub.s32 %s27, %s34
      %p114 = scmp.eq.s32.totalorder %s113, 0
      %s116 = sadd.s32 %s115, 1
      %s117 = scalar_select %p114, %s115, %s116
      %p120 = pneg %p114
      %p121 = scmp.eq.s32.totalorder %s27, 1
      %p122 = por %p120, %p121
      %p123 = scmp.ne.s32.totalorder %s115, %s118
      %p124 = scmp.eq.s32.totalorder %s27, 0
      %p125 = por %p123, %p124
      %p126 = scmp.ne.s32.totalorder %s115, %s118
      %p127 = scmp.eq.s32.totalorder %s32, 1
      %p128 = por %p126, %p127
      %p129 = scmp.ne.s32.totalorder %s118, %s119
      %p130 = scmp.eq.s32.totalorder %s32, 0
      %p131 = por %p129, %p130
      %p132 = scmp.ne.s32.totalorder %s118, %s119
      %p133 = scmp.eq.s32.totalorder %s33, 1
      %p134 = por %p132, %p133
      %p136 = scmp.ne.s32.totalorder %s119, %s135
      %p137 = scmp.eq.s32.totalorder %s33, 0
      %p138 = por %p136, %p137
      %s140 = sadd.s32 %s139, 1
      %p143 = scmp.eq.s32.totalorder %s27, 1
      %p144 = scmp.ne.s32.totalorder %s139, %s141
      %p145 = scmp.eq.s32.totalorder %s27, 0
      %p146 = por %p144, %p145
      %p147 = scmp.ne.s32.totalorder %s139, %s141
      %p148 = scmp.eq.s32.totalorder %s32, 1
      %p149 = por %p147, %p148
      %p150 = scmp.ne.s32.totalorder %s141, %s142
      %p151 = scmp.eq.s32.totalorder %s32, 0
      %p152 = por %p150, %p151
      %p153 = scmp.ne.s32.totalorder %s141, %s142
      %p154 = scmp.eq.s32.totalorder %s33, 1
      %p155 = por %p153, %p154
      %p157 = scmp.ne.s32.totalorder %s142, %s156
      %p158 = scmp.eq.s32.totalorder %s33, 0
      %p159 = por %p157, %p158
      %s161 = sadd.s32 %s160, 1
      %p164 = scmp.eq.s32.totalorder %s27, 1
      %p165 = scmp.ne.s32.totalorder %s160, %s162
      %p166 = scmp.eq.s32.totalorder %s27, 0
      %p167 = por %p165, %p166
      %p168 = scmp.ne.s32.totalorder %s160, %s162
      %p169 = scmp.eq.s32.totalorder %s32, 1
      %p170 = por %p168, %p169
      %p171 = scmp.ne.s32.totalorder %s162, %s163
      %p172 = scmp.eq.s32.totalorder %s32, 0
      %p173 = por %p171, %p172
      %p174 = scmp.ne.s32.totalorder %s162, %s163
      %p175 = scmp.eq.s32.totalorder %s33, 1
      %p176 = por %p174, %p175
      %p178 = scmp.ne.s32.totalorder %s163, %s177
      %p179 = scmp.eq.s32.totalorder %s33, 0
      %p180 = por %p178, %p179
      %s181 = ssub.s32 %s27, %s34
      %p182 = scmp.eq.s32.totalorder %s181, 0
      %s184 = sadd.s32 %s183, 1
      %s185 = scalar_select %p182, %s183, %s184
      %p188 = pneg %p182
      %p189 = scmp.eq.s32.totalorder %s27, 1
      %p190 = por %p188, %p189
      %p191 = scmp.ne.s32.totalorder %s183, %s186
      %p192 = scmp.eq.s32.totalorder %s27, 0
      %p193 = por %p191, %p192
      %p194 = scmp.ne.s32.totalorder %s183, %s186
      %p195 = scmp.eq.s32.totalorder %s32, 1
      %p196 = por %p194, %p195
      %p197 = scmp.ne.s32.totalorder %s186, %s187
      %p198 = scmp.eq.s32.totalorder %s32, 0
      %p199 = por %p197, %p198
      %p200 = scmp.ne.s32.totalorder %s186, %s187
      %p201 = scmp.eq.s32.totalorder %s33, 1
      %p202 = por %p200, %p201
      %p204 = scmp.ne.s32.totalorder %s187, %s203
      %p205 = scmp.eq.s32.totalorder %s33, 0
      %p206 = por %p204, %p205
      %s207 = ssub.s32 %s27, %s34
      %p208 = scmp.eq.s32.totalorder %s207, 0
      %s210 = sadd.s32 %s209, 1
      %s211 = scalar_select %p208, %s209, %s210
      %p214 = pneg %p208
      %p215 = scmp.eq.s32.totalorder %s27, 1
      %p216 = por %p214, %p215
      %p217 = scmp.ne.s32.totalorder %s209, %s212
      %p218 = scmp.eq.s32.totalorder %s27, 0
      %p219 = por %p217, %p218
      %p220 = scmp.ne.s32.totalorder %s209, %s212
      %p221 = scmp.eq.s32.totalorder %s32, 1
      %p222 = por %p220, %p221
      %p223 = scmp.ne.s32.totalorder %s212, %s213
      %p224 = scmp.eq.s32.totalorder %s32, 0
      %p225 = por %p223, %p224
      %p226 = scmp.ne.s32.totalorder %s212, %s213
      %p227 = scmp.eq.s32.totalorder %s33, 1
      %p228 = por %p226, %p227
      %p230 = scmp.ne.s32.totalorder %s213, %s229
      %p231 = scmp.eq.s32.totalorder %s33, 0
      %p232 = por %p230, %p231
      %p233 = scmp.le.s32.totalorder 1, %s27
      %p234 = scmp.lt.s32.totalorder %s27, 3
      %p235 = pnand %p233, %p234
      %p236 = pneg %p235
      // Predicated region
      $region9: #{tpu_custom_call.1} parent=5 // pred_check
        _
      $region10: #{tpu_custom_call.1} parent=5 // pred_check_branch
        %238 = sbr.rel (%p235) target = $region12
      $region11: #{tpu_custom_call.1} parent=5 // pred_region
        %s239 = ssub.s32 %s27, 1
        // Predicated region
        $region13: #{tpu_custom_call.1} parent=11 // pred_check
          %p240 = pneg %p152
        $region14: #{tpu_custom_call.1} parent=11 // pred_check_branch
          %242 = sbr.rel (%p240) target = $region16
        $region15: #{tpu_custom_call.1} parent=11 // pred_region
          %244 = vsyncadd [#allocation9], 0
          %s245 = sshll.u32 %s4, 4
          %s246 = int_to_ptr.hbm [resolvable:$true] %s245
          %s247 = sshll.u32 [#allocation8], 4
          %s248 = int_to_ptr.vmem [resolvable:$true] %s247
          %253 = dma.hbm_to_vmem [thread:$0]  %s246, 5376, %s248, [#allocation9], 128, 128, 8
        $region16: #{tpu_custom_call.1} parent=11 // pred_fallthru
          _
        // Predicated region
        $region17: #{tpu_custom_call.1} parent=11 // pred_check
          %p254 = pneg %p173
        $region18: #{tpu_custom_call.1} parent=11 // pred_check_branch
          %256 = sbr.rel (%p254) target = $region20
        $region19: #{tpu_custom_call.1} parent=11 // pred_region
          %258 = vsyncadd [#allocation9], 0
          %s259 = sshll.u32 %s5, 4
          %s260 = int_to_ptr.hbm [resolvable:$true] %s259
          %s261 = sshll.u32 [#allocation10], 4
          %s262 = int_to_ptr.vmem [resolvable:$true] %s261
          %267 = dma.hbm_to_vmem [thread:$0]  %s260, 7680, %s262, [#allocation9], 128, 128, 8
        $region20: #{tpu_custom_call.1} parent=11 // pred_fallthru
          _
      $region12: #{tpu_custom_call.1} parent=5 // pred_fallthru
        _
      %p268 = scmp.lt.s32.totalorder %s27, 2
      // Predicated region
      $region21: #{tpu_custom_call.1} parent=5 // pred_check
        %p269 = pneg %p268
      $region22: #{tpu_custom_call.1} parent=5 // pred_check_branch
        %271 = sbr.rel (%p269) target = $region24
      $region23: #{tpu_custom_call.1} parent=5 // pred_region
        // Predicated region
        $region25: #{tpu_custom_call.1} parent=23 // pred_check
          %p272 = pneg %p47
        $region26: #{tpu_custom_call.1} parent=23 // pred_check_branch
          %274 = sbr.rel (%p272) target = $region28
        $region27: #{tpu_custom_call.1} parent=23 // pred_region
          %s275 = sand.u32 %s37, 1
          %s276 = scalar_lea.sflag [#allocation3], %s275
          %s277 = sand.u32 %s37, 1
          %s278 = smul.addr %s277, 16
          %s279 = scalar_lea.vmem [#allocation2], %s278
          %281 = vsyncadd %s276, 0
          %s282 = smul.addr %s27, 2
          %s283 = smul.addr %s282, 8
          %s284 = scalar_lea.hbm %s0, %s283
          %s285 = sshll.u32 %s284, 4
          %s286 = int_to_ptr.hbm [resolvable:$true] %s285
          %s287 = sshll.u32 %s279, 4
          %s288 = int_to_ptr.vmem [resolvable:$true] %s287
          %293 = dma.hbm_to_vmem [thread:$0]  %s286, 256, %s288, %s276, 128, 128, 8
        $region28: #{tpu_custom_call.1} parent=23 // pred_fallthru
          _
        // Predicated region
        $region29: #{tpu_custom_call.1} parent=23 // pred_check
          %p294 = pneg %p73
        $region30: #{tpu_custom_call.1} parent=23 // pred_check_branch
          %296 = sbr.rel (%p294) target = $region32
        $region31: #{tpu_custom_call.1} parent=23 // pred_region
          %s297 = sand.u32 %s27, 1
          %s298 = scalar_lea.sflag [#allocation6], %s297
          %s299 = sand.u32 %s63, 1
          %s300 = smul.addr %s299, 8
          %s301 = scalar_lea.vmem [#allocation5], %s300
          %303 = vsyncadd %s298, 0
          %s304 = smul.addr %s27, 8
          %s305 = scalar_lea.hbm %s1, %s304
          %s307 = sshll.u32 %s305, 4
          %s308 = int_to_ptr.hbm [resolvable:$true] %s307
          %s309 = sshll.u32 %s301, 4
          %s310 = int_to_ptr.vmem [resolvable:$true] %s309
          %312 = dma.hbm_to_vmem [thread:$0]  %s308, 128, %s310, %s298
        $region32: #{tpu_custom_call.1} parent=23 // pred_fallthru
          _
        // Predicated region
        $region33: #{tpu_custom_call.1} parent=23 // pred_check
          %p313 = pneg %p99
        $region34: #{tpu_custom_call.1} parent=23 // pred_check_branch
          %315 = sbr.rel (%p313) target = $region36
        $region35: #{tpu_custom_call.1} parent=23 // pred_region
          %s316 = sand.u32 %s27, 1
          %s317 = scalar_lea.sflag [#allocation6], %s316
          %s318 = sand.u32 %s89, 1
          %s319 = scalar_lea.vmem [#allocation7], %s318
          %321 = vsyncadd %s317, 0
          %s322 = scalar_lea.hbm %s2, %s27
          %s324 = sshll.u32 %s322, 4
          %s325 = int_to_ptr.hbm [resolvable:$true] %s324
          %s326 = sshll.u32 %s319, 4
          %s327 = int_to_ptr.vmem [resolvable:$true] %s326
          %329 = dma.hbm_to_vmem [thread:$0]  %s325, 16, %s327, %s317
        $region36: #{tpu_custom_call.1} parent=23 // pred_fallthru
          _
        // Predicated region
        $region37: #{tpu_custom_call.1} parent=23 // pred_check
          %p330 = pneg %p125
        $region38: #{tpu_custom_call.1} parent=23 // pred_check_branch
          %332 = sbr.rel (%p330) target = $region40
        $region39: #{tpu_custom_call.1} parent=23 // pred_region
          %p333 = scmp.lt.s32.totalorder %s27, 1
          %s334 = scalar_select %p333, %s27, 1
          %s335 = scalar_lea.vmem %s3, %s334
        $region40: #{tpu_custom_call.1} parent=23 // pred_fallthru
          _
      $region24: #{tpu_custom_call.1} parent=5 // pred_fallthru
        _
      %p336 = scmp.le.s32.totalorder 1, %s27
      %p337 = scmp.lt.s32.totalorder %s27, 3
      %p338 = pnand %p336, %p337
      %p339 = pneg %p338
      // Predicated region
      $region41: #{tpu_custom_call.1} parent=5 // pred_check
        _
      $region42: #{tpu_custom_call.1} parent=5 // pred_check_branch
        %341 = sbr.rel (%p338) target = $region44
      $region43: #{tpu_custom_call.1} parent=5 // pred_region
        %s342 = ssub.s32 %s27, 1
        %s343 = sand.u32 %s40, 1
        %s344 = scalar_lea.sflag [#allocation3], %s343
        %s345 = sand.u32 %s40, 1
        %s346 = smul.addr %s345, 16
        %s347 = scalar_lea.vmem [#allocation2], %s346
        // Predicated region
        $region45: #{tpu_custom_call.1} parent=43 // pred_check
          %p348 = pneg %p53
        $region46: #{tpu_custom_call.1} parent=43 // pred_check_branch
          %350 = sbr.rel (%p348) target = $region48
        $region47: #{tpu_custom_call.1} parent=43 // pred_region
          %352 = dma.done %s344, 256
        $region48: #{tpu_custom_call.1} parent=43 // pred_fallthru
          _
        %s353 = sand.u32 %s32, 1
        %s354 = scalar_lea.sflag [#allocation6], %s353
        %s355 = sand.u32 %s66, 1
        %s356 = smul.addr %s355, 8
        %s357 = scalar_lea.vmem [#allocation5], %s356
        // Predicated region
        $region49: #{tpu_custom_call.1} parent=43 // pred_check
          %p358 = pneg %p79
        $region50: #{tpu_custom_call.1} parent=43 // pred_check_branch
          %360 = sbr.rel (%p358) target = $region52
        $region51: #{tpu_custom_call.1} parent=43 // pred_region
          %362 = dma.done %s354, 128
        $region52: #{tpu_custom_call.1} parent=43 // pred_fallthru
          _
        %s363 = sand.u32 %s32, 1
        %s364 = scalar_lea.sflag [#allocation6], %s363
        %s365 = sand.u32 %s92, 1
        %s366 = scalar_lea.vmem [#allocation7], %s365
        // Predicated region
        $region53: #{tpu_custom_call.1} parent=43 // pred_check
          %p367 = pneg %p105
        $region54: #{tpu_custom_call.1} parent=43 // pred_check_branch
          %369 = sbr.rel (%p367) target = $region56
        $region55: #{tpu_custom_call.1} parent=43 // pred_region
          %371 = dma.done %s364, 16
        $region56: #{tpu_custom_call.1} parent=43 // pred_fallthru
          _
        // Predicated region
        $region57: #{tpu_custom_call.1} parent=43 // pred_check
          %p372 = pneg %p152
        $region58: #{tpu_custom_call.1} parent=43 // pred_check_branch
          %374 = sbr.rel (%p372) target = $region60
        $region59: #{tpu_custom_call.1} parent=43 // pred_region
          %376 = dma.done [#allocation9], 5376
        $region60: #{tpu_custom_call.1} parent=43 // pred_fallthru
          _
        // Predicated region
        $region61: #{tpu_custom_call.1} parent=43 // pred_check
          %p377 = pneg %p173
        $region62: #{tpu_custom_call.1} parent=43 // pred_check_branch
          %379 = sbr.rel (%p377) target = $region64
        $region63: #{tpu_custom_call.1} parent=43 // pred_region
          %381 = dma.done [#allocation9], 7680
        $region64: #{tpu_custom_call.1} parent=43 // pred_fallthru
          _
        %s382 = sand.u32 %s40, 1
        %s383 = scalar_lea.sflag [#allocation3], %s382
        %s384 = sand.u32 %s40, 1
        %s385 = smul.addr %s384, 16
        %s386 = scalar_lea.vmem [#allocation2], %s385
        %p387 = pneg %p53
        %p388 = pneg %p50
        %s389 = sand.u32 %s32, 1
        %s390 = scalar_lea.sflag [#allocation6], %s389
        %s391 = sand.u32 %s66, 1
        %s392 = smul.addr %s391, 8
        %s393 = scalar_lea.vmem [#allocation5], %s392
        %p394 = pneg %p79
        %p395 = pneg %p76
        %s396 = sand.u32 %s32, 1
        %s397 = scalar_lea.sflag [#allocation6], %s396
        %s398 = sand.u32 %s92, 1
        %s399 = scalar_lea.vmem [#allocation7], %s398
        %p400 = pneg %p105
        %p401 = pneg %p102
        %p402 = scmp.lt.s32.totalorder %s32, 1
        %s403 = scalar_select %p402, %s32, 1
        %s404 = scalar_lea.vmem %s3, %s403
        %p405 = pneg %p131
        %p406 = pneg %p128
        %p407 = pneg %p152
        %p408 = pneg %p149
        %p409 = pneg %p173
        %p410 = pneg %p170
        %p411 = pneg %p199
        %p412 = pneg %p196
        %s413 = sand.u32 %s186, 1
        %s414 = scalar_lea.sflag [#allocation4], %s413
        %s415 = sand.u32 %s186, 1
        %s416 = smul.addr %s415, 16
        %s417 = scalar_lea.vmem [#allocation11], %s416
        %p418 = pneg %p225
        %p419 = pneg %p222
        %s420 = sand.u32 %s212, 1
        %s421 = scalar_lea.sflag [#allocation13], %s420
        %s422 = sand.u32 %s212, 1
        %s423 = smul.addr %s422, 8
        %s424 = scalar_lea.vmem [#allocation12], %s423
        %p425 = scmp.lt.s32.totalorder %s32, 1
        %s426 = scalar_select %p425, %s32, 1
        %s427 = scalar_lea.vmem %s3, %s426
        %v428 = vld [vmem:[%s347] sm:$0xff]
        %v429 = vld [vmem:[%s347 + $0x8] sm:$0xff]
        %v430 = vld [vmem:[%s357] sm:$0xff]
        %v431 = vld [vmem:[%s366] sm:$0x1]
        %v432 = vld [vmem:[%s427] sm:$0x1]
        %v434 = vperm.slane %v431, 0
        %v437 = vperm.slane %v432, 0
        %v439 = vld [vmem:[#allocation8] sm:$0xff]
        %v440 = vld [vmem:[#allocation8 + $0x8] sm:$0xff]
        %v441 = vld [vmem:[#allocation8 + $0x10] sm:$0xff]
        %v442 = vld [vmem:[#allocation8 + $0x18] sm:$0xff]
        %v443 = vld [vmem:[#allocation8 + $0x20] sm:$0xff]
        %v444 = vld [vmem:[#allocation8 + $0x28] sm:$0xff]
        %v445 = vld [vmem:[#allocation8 + $0x30] sm:$0xff]
        %v446 = vld [vmem:[#allocation8 + $0x38] sm:$0xff]
        %v447 = vld [vmem:[#allocation8 + $0x40] sm:$0xff]
        %v448 = vld [vmem:[#allocation8 + $0x48] sm:$0xff]
        %v449 = vld [vmem:[#allocation8 + $0x50] sm:$0xff]
        %v450 = vld [vmem:[#allocation8 + $0x58] sm:$0xff]
        %v451 = vld [vmem:[#allocation8 + $0x60] sm:$0xff]
        %v452 = vld [vmem:[#allocation8 + $0x68] sm:$0xff]
        %v453 = vld [vmem:[#allocation8 + $0x70] sm:$0xff]
        %v454 = vld [vmem:[#allocation8 + $0x78] sm:$0xff]
        %v455 = vld [vmem:[#allocation8 + $0x80] sm:$0xff]
        %v456 = vld [vmem:[#allocation8 + $0x88] sm:$0xff]
        %v457 = vld [vmem:[#allocation8 + $0x90] sm:$0xff]
        %v458 = vld [vmem:[#allocation8 + $0x98] sm:$0xff]
        %v459 = vld [vmem:[#allocation8 + $0xa0] sm:$0x1]
        %v460 = vld [vmem:[#allocation8 + $0xa1] sm:$0x1]
        %v461 = vld [vmem:[#allocation8 + $0xa2] sm:$0x1]
        %v462 = vld [vmem:[#allocation8 + $0xa3] sm:$0x1]
        %v463 = vld [vmem:[#allocation8 + $0xa4] sm:$0x1]
        %v464 = vld [vmem:[#allocation8 + $0xa5] sm:$0x1]
        %v465 = vld [vmem:[#allocation8 + $0xa6] sm:$0x1]
        %v466 = vld [vmem:[#allocation8 + $0xa7] sm:$0x1]
        %v467 = vperm.slane %v459, 0
        %vm468 = vcmask 261120
        %v470 = vsel %vm468, %v428, 0
        %v473 = vsel %vm468, %v429, 0
        %475 = vmatpush.msra.mxu0 0.0
        %476 = vmatpush.msra.mxu0 0.0
        %477 = vmatpush.msra.mxu0 0.0
        %478 = vmatpush.msra.mxu0 0.0
        %479 = vmatpush.msra.mxu0 0.0
        %480 = vmatpush.msra.mxu0 0.0
        %481 = vmatpush.msra.mxu0 0.0
        %482 = vmatpush.msra.mxu0 0.0
        %483 = vmatpush.msra.mxu0 0.0
        %484 = vmatpush.msra.mxu0 0.0
        %485 = vmatpush.msra.mxu0 0.0
        %486 = vmatpush.msra.mxu0 0.0
        %487 = vmatpush.msra.mxu0 %v442
        %488 = vmatpush.msra.mxu0 %v441
        %489 = vmatpush.msra.mxu0 %v440
        %490 = vmatpush.msra.mxu0 %v439
        %491 = vmatmul.f32.gmra.mxu0 %v470
        %v492 = vpop.f32.mrf.mxu0
        %v493 = vadd.f32 %v467, %v492
        %494 = vmatmul.f32.gmra.mxu0 %v473
        %v495 = vpop.f32.mrf.mxu0
        %v496 = vadd.f32 %v467, %v495
        %497 = vdwg.mxu0
        %500 = vrot.lane.b32.xlu0 %v493, 96
        %v501 = vpop.permute.xlu0 %500
        %502 = vrot.lane.b32.xlu0 %v496, 96
        %v503 = vpop.permute.xlu0 %502
        %vm504 = vcmask 64512
        %v505 = vsel %vm504, %v493, 0
        %v507 = vsel %vm504, %v496, 0
        %v509 = vsel %vm504, %v501, 0
        %v511 = vsel %vm504, %v503, 0
        %513 = vmatpush.xpose.msra.mxu0 0.0
        %514 = vmatpush.xpose.msra.mxu0 0.0
        %515 = vmatpush.xpose.msra.mxu0 0.0
        %516 = vmatpush.xpose.msra.mxu0 0.0
        %517 = vmatpush.xpose.msra.mxu0 0.0
        %518 = vmatpush.xpose.msra.mxu0 0.0
        %519 = vmatpush.xpose.msra.mxu0 0.0
        %520 = vmatpush.xpose.msra.mxu0 0.0
        %521 = vmatpush.xpose.msra.mxu0 0.0
        %522 = vmatpush.xpose.msra.mxu0 0.0
        %523 = vmatpush.xpose.msra.mxu0 0.0
        %524 = vmatpush.xpose.msra.mxu0 0.0
        %525 = vmatpush.xpose.msra.mxu0 0.0
        %526 = vmatpush.xpose.msra.mxu0 0.0
        %527 = vmatpush.xpose.msra.mxu0 %v511
        %528 = vmatpush.xpose.msra.mxu0 %v509
        %529 = vmatmul.f32.gmra.mxu0 %v505
        %v530 = vpop.f32.mrf.mxu0
        %v531 = vadd.f32 %v434, %v530
        %532 = vmatmul.f32.gmra.mxu0 %v507
        %v533 = vpop.f32.mrf.mxu0
        %v534 = vadd.f32 %v434, %v533
        %535 = vdwg.mxu0
        %vm536 = vcmask 130048
        %v537 = vsel %vm536, %v531, -inf
        %538 = vmax.xlane.f32.xlu0 %v537
        %v539 = vpop.xlane.xlu0 %538
        %v540 = vsel %vm536, %v534, -inf
        %541 = vmax.xlane.f32.xlu0 %v540
        %v542 = vpop.xlane.xlu0 %541
        %v543 = vsub.f32 %v531, %v539
        %v544 = vsub.f32 %v534, %v542
        %v545 = vmul.f32 %v543, 1.442695
        %v546 = vpow.pop %v545
        %v547 = vmul.f32 %v544, 1.442695
        %v548 = vpow.pop %v547
        %v549 = vsel %vm536, %v546, 0.0
        %550 = vadd.xlane.f32.xlu0 %v549
        %v551 = vpop.xlane.xlu0 %550
        %v552 = vsel %vm536, %v548, 0.0
        %553 = vadd.xlane.f32.xlu0 %v552
        %v554 = vpop.xlane.xlu0 %553
        %v555 = vrcp.pop %v551
        %v556 = vmul.f32 %v551, %v555
        %v557 = vsub.f32 1.0, %v556
        %v558 = vmul.f32 %v555, %v557
        %v559 = vadd.f32 %v555, %v558
        %vm560 = vweird.f32 %v551
        %vm561 = vweird.f32 %v555
        %vm562 = vmor %vm560, %vm561
        %v563 = vsel %vm562, %v555, %v559
        %v564 = vand.u32 2147483647, %v551
        %vm565 = vcmp.eq.f32.partialorder %v564, 8.507059e+37
        %v566 = vand.u32 %v551, 2147483648
        %v567 = vor.u32 1.1754944e-38, %v566
        %v568 = vsel %vm565, %v567, %v563
        %v569 = vmul.f32 1.0, %v568
        %v570 = vrcp.pop %v554
        %v571 = vmul.f32 %v554, %v570
        %v572 = vsub.f32 1.0, %v571
        %v573 = vmul.f32 %v570, %v572
        %v574 = vadd.f32 %v570, %v573
        %vm575 = vweird.f32 %v554
        %vm576 = vweird.f32 %v570
        %vm577 = vmor %vm575, %vm576
        %v578 = vsel %vm577, %v570, %v574
        %v579 = vand.u32 2147483647, %v554
        %vm580 = vcmp.eq.f32.partialorder %v579, 8.507059e+37
        %v581 = vand.u32 %v554, 2147483648
        %v582 = vor.u32 1.1754944e-38, %v581
        %v583 = vsel %vm580, %v582, %v578
        %v584 = vmul.f32 1.0, %v583
        %v585 = vmul.f32 %v546, %v569
        %v586 = vmul.f32 %v548, %v584
        %587 = vrot.lane.b32.xlu0 %v493, 64
        %v588 = vpop.permute.xlu0 %587
        %589 = vrot.lane.b32.xlu0 %v496, 64
        %v590 = vpop.permute.xlu0 %589
        %v594 = vsel %vm536, %v585, 0
        %v597 = vsel %vm536, %v586, 0
        %599 = vmatpush.msra.mxu0 0.0
        %600 = vmatpush.msra.mxu0 0.0
        %601 = vmatpush.msra.mxu0 0.0
        %602 = vmatpush.msra.mxu0 0.0
        %603 = vmatpush.msra.mxu0 0.0
        %604 = vmatpush.msra.mxu0 0.0
        %605 = vmatpush.msra.mxu0 0.0
        %606 = vmatpush.msra.mxu0 0.0
        %607 = vmatpush.msra.mxu0 0.0
        %608 = vmatpush.msra.mxu0 0.0
        %609 = vmatpush.msra.mxu0 0.0
        %610 = vmatpush.msra.mxu0 0.0
        %611 = vmatpush.msra.mxu0 0.0
        %612 = vmatpush.msra.mxu0 0.0
        %613 = vmatpush.msra.mxu0 %v590
        %614 = vmatpush.msra.mxu0 %v588
        %615 = vmatmul.f32.gmra.mxu0 %v594
        %v616 = vpop.f32.mrf.mxu0
        %v617 = vadd.f32 0.0, %v616
        %618 = vmatmul.f32.gmra.mxu0 %v597
        %v619 = vpop.f32.mrf.mxu0
        %v620 = vadd.f32 0.0, %v619
        %621 = vdwg.mxu0
        %622 = vrot.lane.b32.xlu0 %v493, 120
        %v623 = vpop.permute.xlu0 %622
        %624 = vrot.lane.b32.xlu0 %v496, 120
        %v625 = vpop.permute.xlu0 %624
        %626 = vrot.lane.b32.xlu0 %v493, 88
        %v627 = vpop.permute.xlu0 %626
        %628 = vrot.lane.b32.xlu0 %v496, 88
        %v629 = vpop.permute.xlu0 %628
        %v630 = vsel %vm504, %v623, 0
        %v632 = vsel %vm504, %v625, 0
        %v634 = vsel %vm504, %v627, 0
        %v636 = vsel %vm504, %v629, 0
        %638 = vmatpush.xpose.msra.mxu0 0.0
        %639 = vmatpush.xpose.msra.mxu0 0.0
        %640 = vmatpush.xpose.msra.mxu0 0.0
        %641 = vmatpush.xpose.msra.mxu0 0.0
        %642 = vmatpush.xpose.msra.mxu0 0.0
        %643 = vmatpush.xpose.msra.mxu0 0.0
        %644 = vmatpush.xpose.msra.mxu0 0.0
        %645 = vmatpush.xpose.msra.mxu0 0.0
        %646 = vmatpush.xpose.msra.mxu0 0.0
        %647 = vmatpush.xpose.msra.mxu0 0.0
        %648 = vmatpush.xpose.msra.mxu0 0.0
        %649 = vmatpush.xpose.msra.mxu0 0.0
        %650 = vmatpush.xpose.msra.mxu0 0.0
        %651 = vmatpush.xpose.msra.mxu0 0.0
        %652 = vmatpush.xpose.msra.mxu0 %v636
        %653 = vmatpush.xpose.msra.mxu0 %v634
        %654 = vmatmul.f32.gmra.mxu0 %v630
        %v655 = vpop.f32.mrf.mxu0
        %v656 = vadd.f32 %v434, %v655
        %657 = vmatmul.f32.gmra.mxu0 %v632
        %v658 = vpop.f32.mrf.mxu0
        %v659 = vadd.f32 %v434, %v658
        %660 = vdwg.mxu0
        %v661 = vsel %vm536, %v656, -inf
        %662 = vmax.xlane.f32.xlu0 %v661
        %v663 = vpop.xlane.xlu0 %662
        %v664 = vsel %vm536, %v659, -inf
        %665 = vmax.xlane.f32.xlu0 %v664
        %v666 = vpop.xlane.xlu0 %665
        %v667 = vsub.f32 %v656, %v663
        %v668 = vsub.f32 %v659, %v666
        %v669 = vmul.f32 %v667, 1.442695
        %v670 = vpow.pop %v669
        %v671 = vmul.f32 %v668, 1.442695
        %v672 = vpow.pop %v671
        %v673 = vsel %vm536, %v670, 0.0
        %674 = vadd.xlane.f32.xlu0 %v673
        %v675 = vpop.xlane.xlu0 %674
        %v676 = vsel %vm536, %v672, 0.0
        %677 = vadd.xlane.f32.xlu0 %v676
        %v678 = vpop.xlane.xlu0 %677
        %v679 = vrcp.pop %v675
        %v680 = vmul.f32 %v675, %v679
        %v681 = vsub.f32 1.0, %v680
        %v682 = vmul.f32 %v679, %v681
        %v683 = vadd.f32 %v679, %v682
        %vm684 = vweird.f32 %v675
        %vm685 = vweird.f32 %v679
        %vm686 = vmor %vm684, %vm685
        %v687 = vsel %vm686, %v679, %v683
        %v688 = vand.u32 2147483647, %v675
        %vm689 = vcmp.eq.f32.partialorder %v688, 8.507059e+37
        %v690 = vand.u32 %v675, 2147483648
        %v691 = vor.u32 1.1754944e-38, %v690
        %v692 = vsel %vm689, %v691, %v687
        %v693 = vmul.f32 1.0, %v692
        %v694 = vrcp.pop %v678
        %v695 = vmul.f32 %v678, %v694
        %v696 = vsub.f32 1.0, %v695
        %v697 = vmul.f32 %v694, %v696
        %v698 = vadd.f32 %v694, %v697
        %vm699 = vweird.f32 %v678
        %vm700 = vweird.f32 %v694
        %vm701 = vmor %vm699, %vm700
        %v702 = vsel %vm701, %v694, %v698
        %v703 = vand.u32 2147483647, %v678
        %vm704 = vcmp.eq.f32.partialorder %v703, 8.507059e+37
        %v705 = vand.u32 %v678, 2147483648
        %v706 = vor.u32 1.1754944e-38, %v705
        %v707 = vsel %vm704, %v706, %v702
        %v708 = vmul.f32 1.0, %v707
        %v709 = vmul.f32 %v670, %v693
        %v710 = vmul.f32 %v672, %v708
        %711 = vrot.lane.b32.xlu0 %v493, 56
        %v712 = vpop.permute.xlu0 %711
        %713 = vrot.lane.b32.xlu0 %v496, 56
        %v714 = vpop.permute.xlu0 %713
        %v718 = vsel %vm536, %v709, 0
        %v721 = vsel %vm536, %v710, 0
        %723 = vmatpush.msra.mxu0 0.0
        %724 = vmatpush.msra.mxu0 0.0
        %725 = vmatpush.msra.mxu0 0.0
        %726 = vmatpush.msra.mxu0 0.0
        %727 = vmatpush.msra.mxu0 0.0
        %728 = vmatpush.msra.mxu0 0.0
        %729 = vmatpush.msra.mxu0 0.0
        %730 = vmatpush.msra.mxu0 0.0
        %731 = vmatpush.msra.mxu0 0.0
        %732 = vmatpush.msra.mxu0 0.0
        %733 = vmatpush.msra.mxu0 0.0
        %734 = vmatpush.msra.mxu0 0.0
        %735 = vmatpush.msra.mxu0 0.0
        %736 = vmatpush.msra.mxu0 0.0
        %737 = vmatpush.msra.mxu0 %v714
        %738 = vmatpush.msra.mxu0 %v712
        %739 = vmatmul.f32.gmra.mxu0 %v718
        %v740 = vpop.f32.mrf.mxu0
        %v741 = vadd.f32 0.0, %v740
        %742 = vmatmul.f32.gmra.mxu0 %v721
        %v743 = vpop.f32.mrf.mxu0
        %v744 = vadd.f32 0.0, %v743
        %745 = vdwg.mxu0
        %v747 = vsel %vm504, %v741, 0
        %v750 = vsel %vm504, %v744, 0
        %752 = vmatpush.msra.mxu0 0.0
        %753 = vmatpush.msra.mxu0 0.0
        %754 = vmatpush.msra.mxu0 0.0
        %755 = vmatpush.msra.mxu0 0.0
        %756 = vmatpush.msra.mxu0 0.0
        %757 = vmatpush.msra.mxu0 0.0
        %758 = vmatpush.msra.mxu0 0.0
        %759 = vmatpush.msra.mxu0 0.0
        %760 = vmatpush.msra.mxu0 0.0
        %761 = vmatpush.msra.mxu0 0.0
        %762 = vmatpush.msra.mxu0 0.0
        %763 = vmatpush.msra.mxu0 0.0
        %764 = vmatpush.msra.mxu0 0.0
        %765 = vmatpush.msra.mxu0 0.0
        %766 = vmatpush.msra.mxu0 0.0
        %767 = vmatpush.msra.mxu0 %v444
        %768 = vmatmul.f32.gmra.mxu0 %v747
        %v769 = vpop.f32.mrf.mxu0
        %v770 = vadd.f32 0.0, %v769
        %771 = vmatmul.f32.gmra.mxu0 %v750
        %v772 = vpop.f32.mrf.mxu0
        %v773 = vadd.f32 0.0, %v772
        %774 = vdwg.mxu0
        %v776 = vsel %vm504, %v617, 0
        %v779 = vsel %vm504, %v620, 0
        %781 = vmatpush.msra.mxu0 0.0
        %782 = vmatpush.msra.mxu0 0.0
        %783 = vmatpush.msra.mxu0 0.0
        %784 = vmatpush.msra.mxu0 0.0
        %785 = vmatpush.msra.mxu0 0.0
        %786 = vmatpush.msra.mxu0 0.0
        %787 = vmatpush.msra.mxu0 0.0
        %788 = vmatpush.msra.mxu0 0.0
        %789 = vmatpush.msra.mxu0 0.0
        %790 = vmatpush.msra.mxu0 0.0
        %791 = vmatpush.msra.mxu0 0.0
        %792 = vmatpush.msra.mxu0 0.0
        %793 = vmatpush.msra.mxu0 0.0
        %794 = vmatpush.msra.mxu0 0.0
        %795 = vmatpush.msra.mxu0 0.0
        %796 = vmatpush.msra.mxu0 %v443
        %797 = vmatmul.f32.gmra.mxu0 %v776
        %v798 = vpop.f32.mrf.mxu0
        %v799 = vadd.f32 %v770, %v798
        %800 = vmatmul.f32.gmra.mxu0 %v779
        %v801 = vpop.f32.mrf.mxu0
        %v802 = vadd.f32 %v773, %v801
        %803 = vdwg.mxu0
        %804 = vrot.lane.b32.xlu0 %v493, 112
        %v805 = vpop.permute.xlu0 %804
        %806 = vrot.lane.b32.xlu0 %v496, 112
        %v807 = vpop.permute.xlu0 %806
        %808 = vrot.lane.b32.xlu0 %v493, 80
        %v809 = vpop.permute.xlu0 %808
        %810 = vrot.lane.b32.xlu0 %v496, 80
        %v811 = vpop.permute.xlu0 %810
        %v812 = vsel %vm504, %v805, 0
        %v814 = vsel %vm504, %v807, 0
        %v816 = vsel %vm504, %v809, 0
        %v818 = vsel %vm504, %v811, 0
        %820 = vmatpush.xpose.msra.mxu0 0.0
        %821 = vmatpush.xpose.msra.mxu0 0.0
        %822 = vmatpush.xpose.msra.mxu0 0.0
        %823 = vmatpush.xpose.msra.mxu0 0.0
        %824 = vmatpush.xpose.msra.mxu0 0.0
        %825 = vmatpush.xpose.msra.mxu0 0.0
        %826 = vmatpush.xpose.msra.mxu0 0.0
        %827 = vmatpush.xpose.msra.mxu0 0.0
        %828 = vmatpush.xpose.msra.mxu0 0.0
        %829 = vmatpush.xpose.msra.mxu0 0.0
        %830 = vmatpush.xpose.msra.mxu0 0.0
        %831 = vmatpush.xpose.msra.mxu0 0.0
        %832 = vmatpush.xpose.msra.mxu0 0.0
        %833 = vmatpush.xpose.msra.mxu0 0.0
        %834 = vmatpush.xpose.msra.mxu0 %v818
        %835 = vmatpush.xpose.msra.mxu0 %v816
        %836 = vmatmul.f32.gmra.mxu0 %v812
        %v837 = vpop.f32.mrf.mxu0
        %v838 = vadd.f32 %v434, %v837
        %839 = vmatmul.f32.gmra.mxu0 %v814
        %v840 = vpop.f32.mrf.mxu0
        %v841 = vadd.f32 %v434, %v840
        %842 = vdwg.mxu0
        %v843 = vsel %vm536, %v838, -inf
        %844 = vmax.xlane.f32.xlu0 %v843
        %v845 = vpop.xlane.xlu0 %844
        %v846 = vsel %vm536, %v841, -inf
        %847 = vmax.xlane.f32.xlu0 %v846
        %v848 = vpop.xlane.xlu0 %847
        %v849 = vsub.f32 %v838, %v845
        %v850 = vsub.f32 %v841, %v848
        %v851 = vmul.f32 %v849, 1.442695
        %v852 = vpow.pop %v851
        %v853 = vmul.f32 %v850, 1.442695
        %v854 = vpow.pop %v853
        %v855 = vsel %vm536, %v852, 0.0
        %856 = vadd.xlane.f32.xlu0 %v855
        %v857 = vpop.xlane.xlu0 %856
        %v858 = vsel %vm536, %v854, 0.0
        %859 = vadd.xlane.f32.xlu0 %v858
        %v860 = vpop.xlane.xlu0 %859
        %v861 = vrcp.pop %v857
        %v862 = vmul.f32 %v857, %v861
        %v863 = vsub.f32 1.0, %v862
        %v864 = vmul.f32 %v861, %v863
        %v865 = vadd.f32 %v861, %v864
        %vm866 = vweird.f32 %v857
        %vm867 = vweird.f32 %v861
        %vm868 = vmor %vm866, %vm867
        %v869 = vsel %vm868, %v861, %v865
        %v870 = vand.u32 2147483647, %v857
        %vm871 = vcmp.eq.f32.partialorder %v870, 8.507059e+37
        %v872 = vand.u32 %v857, 2147483648
        %v873 = vor.u32 1.1754944e-38, %v872
        %v874 = vsel %vm871, %v873, %v869
        %v875 = vmul.f32 1.0, %v874
        %v876 = vrcp.pop %v860
        %v877 = vmul.f32 %v860, %v876
        %v878 = vsub.f32 1.0, %v877
        %v879 = vmul.f32 %v876, %v878
        %v880 = vadd.f32 %v876, %v879
        %vm881 = vweird.f32 %v860
        %vm882 = vweird.f32 %v876
        %vm883 = vmor %vm881, %vm882
        %v884 = vsel %vm883, %v876, %v880
        %v885 = vand.u32 2147483647, %v860
        %vm886 = vcmp.eq.f32.partialorder %v885, 8.507059e+37
        %v887 = vand.u32 %v860, 2147483648
        %v888 = vor.u32 1.1754944e-38, %v887
        %v889 = vsel %vm886, %v888, %v884
        %v890 = vmul.f32 1.0, %v889
        %v891 = vmul.f32 %v852, %v875
        %v892 = vmul.f32 %v854, %v890
        %893 = vrot.lane.b32.xlu0 %v493, 48
        %v894 = vpop.permute.xlu0 %893
        %895 = vrot.lane.b32.xlu0 %v496, 48
        %v896 = vpop.permute.xlu0 %895
        %v900 = vsel %vm536, %v891, 0
        %v903 = vsel %vm536, %v892, 0
        %905 = vmatpush.msra.mxu0 0.0
        %906 = vmatpush.msra.mxu0 0.0
        %907 = vmatpush.msra.mxu0 0.0
        %908 = vmatpush.msra.mxu0 0.0
        %909 = vmatpush.msra.mxu0 0.0
        %910 = vmatpush.msra.mxu0 0.0
        %911 = vmatpush.msra.mxu0 0.0
        %912 = vmatpush.msra.mxu0 0.0
        %913 = vmatpush.msra.mxu0 0.0
        %914 = vmatpush.msra.mxu0 0.0
        %915 = vmatpush.msra.mxu0 0.0
        %916 = vmatpush.msra.mxu0 0.0
        %917 = vmatpush.msra.mxu0 0.0
        %918 = vmatpush.msra.mxu0 0.0
        %919 = vmatpush.msra.mxu0 %v896
        %920 = vmatpush.msra.mxu0 %v894
        %921 = vmatmul.f32.gmra.mxu0 %v900
        %v922 = vpop.f32.mrf.mxu0
        %v923 = vadd.f32 0.0, %v922
        %924 = vmatmul.f32.gmra.mxu0 %v903
        %v925 = vpop.f32.mrf.mxu0
        %v926 = vadd.f32 0.0, %v925
        %927 = vdwg.mxu0
        %v929 = vsel %vm504, %v923, 0
        %v932 = vsel %vm504, %v926, 0
        %934 = vmatpush.msra.mxu0 0.0
        %935 = vmatpush.msra.mxu0 0.0
        %936 = vmatpush.msra.mxu0 0.0
        %937 = vmatpush.msra.mxu0 0.0
        %938 = vmatpush.msra.mxu0 0.0
        %939 = vmatpush.msra.mxu0 0.0
        %940 = vmatpush.msra.mxu0 0.0
        %941 = vmatpush.msra.mxu0 0.0
        %942 = vmatpush.msra.mxu0 0.0
        %943 = vmatpush.msra.mxu0 0.0
        %944 = vmatpush.msra.mxu0 0.0
        %945 = vmatpush.msra.mxu0 0.0
        %946 = vmatpush.msra.mxu0 0.0
        %947 = vmatpush.msra.mxu0 0.0
        %948 = vmatpush.msra.mxu0 0.0
        %949 = vmatpush.msra.mxu0 %v445
        %950 = vmatmul.f32.gmra.mxu0 %v929
        %v951 = vpop.f32.mrf.mxu0
        %v952 = vadd.f32 0.0, %v951
        %953 = vmatmul.f32.gmra.mxu0 %v932
        %v954 = vpop.f32.mrf.mxu0
        %v955 = vadd.f32 0.0, %v954
        %956 = vdwg.mxu0
        %v957 = vadd.f32 %v799, %v952
        %v958 = vadd.f32 %v802, %v955
        %959 = vrot.lane.b32.xlu0 %v493, 104
        %v960 = vpop.permute.xlu0 %959
        %961 = vrot.lane.b32.xlu0 %v496, 104
        %v962 = vpop.permute.xlu0 %961
        %963 = vrot.lane.b32.xlu0 %v493, 72
        %v964 = vpop.permute.xlu0 %963
        %965 = vrot.lane.b32.xlu0 %v496, 72
        %v966 = vpop.permute.xlu0 %965
        %v967 = vsel %vm504, %v960, 0
        %v969 = vsel %vm504, %v962, 0
        %v971 = vsel %vm504, %v964, 0
        %v973 = vsel %vm504, %v966, 0
        %975 = vmatpush.xpose.msra.mxu0 0.0
        %976 = vmatpush.xpose.msra.mxu0 0.0
        %977 = vmatpush.xpose.msra.mxu0 0.0
        %978 = vmatpush.xpose.msra.mxu0 0.0
        %979 = vmatpush.xpose.msra.mxu0 0.0
        %980 = vmatpush.xpose.msra.mxu0 0.0
        %981 = vmatpush.xpose.msra.mxu0 0.0
        %982 = vmatpush.xpose.msra.mxu0 0.0
        %983 = vmatpush.xpose.msra.mxu0 0.0
        %984 = vmatpush.xpose.msra.mxu0 0.0
        %985 = vmatpush.xpose.msra.mxu0 0.0
        %986 = vmatpush.xpose.msra.mxu0 0.0
        %987 = vmatpush.xpose.msra.mxu0 0.0
        %988 = vmatpush.xpose.msra.mxu0 0.0
        %989 = vmatpush.xpose.msra.mxu0 %v973
        %990 = vmatpush.xpose.msra.mxu0 %v971
        %991 = vmatmul.f32.gmra.mxu0 %v967
        %v992 = vpop.f32.mrf.mxu0
        %v993 = vadd.f32 %v434, %v992
        %994 = vmatmul.f32.gmra.mxu0 %v969
        %v995 = vpop.f32.mrf.mxu0
        %v996 = vadd.f32 %v434, %v995
        %997 = vdwg.mxu0
        %v998 = vsel %vm536, %v993, -inf
        %999 = vmax.xlane.f32.xlu0 %v998
        %v1000 = vpop.xlane.xlu0 %999
        %v1001 = vsel %vm536, %v996, -inf
        %1002 = vmax.xlane.f32.xlu0 %v1001
        %v1003 = vpop.xlane.xlu0 %1002
        %v1004 = vsub.f32 %v993, %v1000
        %v1005 = vsub.f32 %v996, %v1003
        %v1006 = vmul.f32 %v1004, 1.442695
        %v1007 = vpow.pop %v1006
        %v1008 = vmul.f32 %v1005, 1.442695
        %v1009 = vpow.pop %v1008
        %v1010 = vsel %vm536, %v1007, 0.0
        %1011 = vadd.xlane.f32.xlu0 %v1010
        %v1012 = vpop.xlane.xlu0 %1011
        %v1013 = vsel %vm536, %v1009, 0.0
        %1014 = vadd.xlane.f32.xlu0 %v1013
        %v1015 = vpop.xlane.xlu0 %1014
        %v1016 = vrcp.pop %v1012
        %v1017 = vmul.f32 %v1012, %v1016
        %v1018 = vsub.f32 1.0, %v1017
        %v1019 = vmul.f32 %v1016, %v1018
        %v1020 = vadd.f32 %v1016, %v1019
        %vm1021 = vweird.f32 %v1012
        %vm1022 = vweird.f32 %v1016
        %vm1023 = vmor %vm1021, %vm1022
        %v1024 = vsel %vm1023, %v1016, %v1020
        %v1025 = vand.u32 2147483647, %v1012
        %vm1026 = vcmp.eq.f32.partialorder %v1025, 8.507059e+37
        %v1027 = vand.u32 %v1012, 2147483648
        %v1028 = vor.u32 1.1754944e-38, %v1027
        %v1029 = vsel %vm1026, %v1028, %v1024
        %v1030 = vmul.f32 1.0, %v1029
        %v1031 = vrcp.pop %v1015
        %v1032 = vmul.f32 %v1015, %v1031
        %v1033 = vsub.f32 1.0, %v1032
        %v1034 = vmul.f32 %v1031, %v1033
        %v1035 = vadd.f32 %v1031, %v1034
        %vm1036 = vweird.f32 %v1015
        %vm1037 = vweird.f32 %v1031
        %vm1038 = vmor %vm1036, %vm1037
        %v1039 = vsel %vm1038, %v1031, %v1035
        %v1040 = vand.u32 2147483647, %v1015
        %vm1041 = vcmp.eq.f32.partialorder %v1040, 8.507059e+37
        %v1042 = vand.u32 %v1015, 2147483648
        %v1043 = vor.u32 1.1754944e-38, %v1042
        %v1044 = vsel %vm1041, %v1043, %v1039
        %v1045 = vmul.f32 1.0, %v1044
        %v1046 = vmul.f32 %v1007, %v1030
        %v1047 = vmul.f32 %v1009, %v1045
        %1048 = vrot.lane.b32.xlu0 %v493, 40
        %v1049 = vpop.permute.xlu0 %1048
        %1050 = vrot.lane.b32.xlu0 %v496, 40
        %v1051 = vpop.permute.xlu0 %1050
        %v1055 = vsel %vm536, %v1046, 0
        %v1058 = vsel %vm536, %v1047, 0
        %1060 = vmatpush.msra.mxu0 0.0
        %1061 = vmatpush.msra.mxu0 0.0
        %1062 = vmatpush.msra.mxu0 0.0
        %1063 = vmatpush.msra.mxu0 0.0
        %1064 = vmatpush.msra.mxu0 0.0
        %1065 = vmatpush.msra.mxu0 0.0
        %1066 = vmatpush.msra.mxu0 0.0
        %1067 = vmatpush.msra.mxu0 0.0
        %1068 = vmatpush.msra.mxu0 0.0
        %1069 = vmatpush.msra.mxu0 0.0
        %1070 = vmatpush.msra.mxu0 0.0
        %1071 = vmatpush.msra.mxu0 0.0
        %1072 = vmatpush.msra.mxu0 0.0
        %1073 = vmatpush.msra.mxu0 0.0
        %1074 = vmatpush.msra.mxu0 %v1051
        %1075 = vmatpush.msra.mxu0 %v1049
        %1076 = vmatmul.f32.gmra.mxu0 %v1055
        %v1077 = vpop.f32.mrf.mxu0
        %v1078 = vadd.f32 0.0, %v1077
        %1079 = vmatmul.f32.gmra.mxu0 %v1058
        %v1080 = vpop.f32.mrf.mxu0
        %v1081 = vadd.f32 0.0, %v1080
        %1082 = vdwg.mxu0
        %v1084 = vsel %vm504, %v1078, 0
        %v1087 = vsel %vm504, %v1081, 0
        %1089 = vmatpush.msra.mxu0 0.0
        %1090 = vmatpush.msra.mxu0 0.0
        %1091 = vmatpush.msra.mxu0 0.0
        %1092 = vmatpush.msra.mxu0 0.0
        %1093 = vmatpush.msra.mxu0 0.0
        %1094 = vmatpush.msra.mxu0 0.0
        %1095 = vmatpush.msra.mxu0 0.0
        %1096 = vmatpush.msra.mxu0 0.0
        %1097 = vmatpush.msra.mxu0 0.0
        %1098 = vmatpush.msra.mxu0 0.0
        %1099 = vmatpush.msra.mxu0 0.0
        %1100 = vmatpush.msra.mxu0 0.0
        %1101 = vmatpush.msra.mxu0 0.0
        %1102 = vmatpush.msra.mxu0 0.0
        %1103 = vmatpush.msra.mxu0 0.0
        %1104 = vmatpush.msra.mxu0 %v446
        %1105 = vmatmul.f32.gmra.mxu0 %v1084
        %v1106 = vpop.f32.mrf.mxu0
        %v1107 = vadd.f32 0.0, %v1106
        %1108 = vmatmul.f32.gmra.mxu0 %v1087
        %v1109 = vpop.f32.mrf.mxu0
        %v1110 = vadd.f32 0.0, %v1109
        %1111 = vdwg.mxu0
        %v1112 = vadd.f32 %v957, %v1107
        %v1113 = vadd.f32 %v958, %v1110
        %v1114 = vperm.slane %v460, 0
        %v1115 = vadd.f32 %v1112, %v1114
        %v1116 = vadd.f32 %v1113, %v1114
        %v1117 = vadd.f32 %v428, %v1115
        %v1118 = vadd.f32 %v429, %v1116
        %v1119 = vsel %vm468, %v1117, 0.0
        %1120 = vadd.xlane.f32.xlu0 %v1119
        %v1121 = vpop.xlane.xlu0 %1120
        %v1122 = vsel %vm468, %v1118, 0.0
        %1123 = vadd.xlane.f32.xlu0 %v1122
        %v1124 = vpop.xlane.xlu0 %1123
        %v1125 = vrcp.pop 32.0
        %v1126 = vmul.f32 32.0, %v1125
        %v1127 = vsub.f32 1.0, %v1126
        %v1128 = vmul.f32 %v1125, %v1127
        %v1129 = vadd.f32 %v1125, %v1128
        %vm1130 = vweird.f32 %v1125
        %v1131 = vsel %vm1130, %v1125, %v1129
        %v1132 = vmul.f32 %v1121, %v1131
        %v1133 = vmul.f32 %v1124, %v1131
        %v1134 = vsub.f32 %v1117, %v1132
        %v1135 = vsub.f32 %v1118, %v1133
        %v1136 = vmul.f32 %v1134, %v1134
        %v1137 = vmul.f32 %v1135, %v1135
        %v1138 = vsel %vm468, %v1136, 0.0
        %1139 = vadd.xlane.f32.xlu0 %v1138
        %v1140 = vpop.xlane.xlu0 %1139
        %v1141 = vsel %vm468, %v1137, 0.0
        %1142 = vadd.xlane.f32.xlu0 %v1141
        %v1143 = vpop.xlane.xlu0 %1142
        %v1144 = vmul.f32 %v1140, 0.032258064
        %v1145 = vmul.f32 %v1143, 0.032258064
        %v1146 = vrsqrt.pop %v1144
        %v1147 = vmul.f32 %v1146, %v1144
        %v1148 = vmul.f32 %v1147, %v1146
        %v1149 = vmul.f32 0.5, %v1148
        %v1150 = vsub.f32 1.5, %v1149
        %v1151 = vmul.f32 %v1146, %v1150
        %v1152 = vmul.f32 %v1144, %v1151
        %vm1153 = vcmp.eq.f32.partialorder %v1144, inf
        %v1154 = vsel %vm1153, %v1144, %v1152
        %vm1155 = vcmp.eq.f32.partialorder %v1144, 0.0
        %v1156 = vand.u32 %v1144, 2147483648
        %v1157 = vsel %vm1155, %v1156, %v1154
        %v1158 = vrsqrt.pop %v1145
        %v1159 = vmul.f32 %v1158, %v1145
        %v1160 = vmul.f32 %v1159, %v1158
        %v1161 = vmul.f32 0.5, %v1160
        %v1162 = vsub.f32 1.5, %v1161
        %v1163 = vmul.f32 %v1158, %v1162
        %v1164 = vmul.f32 %v1145, %v1163
        %vm1165 = vcmp.eq.f32.partialorder %v1145, inf
        %v1166 = vsel %vm1165, %v1145, %v1164
        %vm1167 = vcmp.eq.f32.partialorder %v1145, 0.0
        %v1168 = vand.u32 %v1145, 2147483648
        %v1169 = vsel %vm1167, %v1168, %v1166
        %v1170 = vadd.f32 %v1157, 1e-06
        %v1171 = vadd.f32 %v1169, 1e-06
        %v1172 = vrcp.pop %v1170
        %v1173 = vmul.f32 %v1170, %v1172
        %v1174 = vsub.f32 1.0, %v1173
        %v1175 = vmul.f32 %v1172, %v1174
        %v1176 = vadd.f32 %v1172, %v1175
        %vm1177 = vweird.f32 %v1170
        %vm1178 = vweird.f32 %v1172
        %vm1179 = vmor %vm1177, %vm1178
        %v1180 = vsel %vm1179, %v1172, %v1176
        %v1181 = vand.u32 2147483647, %v1170
        %vm1182 = vcmp.eq.f32.partialorder %v1181, 8.507059e+37
        %v1183 = vand.u32 %v1170, 2147483648
        %v1184 = vor.u32 1.1754944e-38, %v1183
        %v1185 = vsel %vm1182, %v1184, %v1180
        %v1186 = vmul.f32 1.0, %v1185
        %v1187 = vrcp.pop %v1171
        %v1188 = vmul.f32 %v1171, %v1187
        %v1189 = vsub.f32 1.0, %v1188
        %v1190 = vmul.f32 %v1187, %v1189
        %v1191 = vadd.f32 %v1187, %v1190
        %vm1192 = vweird.f32 %v1171
        %vm1193 = vweird.f32 %v1187
        %vm1194 = vmor %vm1192, %vm1193
        %v1195 = vsel %vm1194, %v1187, %v1191
        %v1196 = vand.u32 2147483647, %v1171
        %vm1197 = vcmp.eq.f32.partialorder %v1196, 8.507059e+37
        %v1198 = vand.u32 %v1171, 2147483648
        %v1199 = vor.u32 1.1754944e-38, %v1198
        %v1200 = vsel %vm1197, %v1199, %v1195
        %v1201 = vmul.f32 1.0, %v1200
        %v1202 = vperm.slane %v463, 0
        %v1203 = vmul.f32 %v1202, %v1134
        %v1204 = vmul.f32 %v1202, %v1135
        %v1205 = vmul.f32 %v1203, %v1186
        %v1206 = vmul.f32 %v1204, %v1201
        %v1207 = vperm.slane %v464, 0
        %v1208 = vadd.f32 %v1205, %v1207
        %v1209 = vadd.f32 %v1206, %v1207
        %v1210 = vperm.slane %v461, 0
        %v1212 = vsel %vm468, %v1208, 0
        %v1215 = vsel %vm468, %v1209, 0
        %1217 = vmatpush.msra.mxu0 0.0
        %1218 = vmatpush.msra.mxu0 0.0
        %1219 = vmatpush.msra.mxu0 0.0
        %1220 = vmatpush.msra.mxu0 0.0
        %1221 = vmatpush.msra.mxu0 0.0
        %1222 = vmatpush.msra.mxu0 0.0
        %1223 = vmatpush.msra.mxu0 0.0
        %1224 = vmatpush.msra.mxu0 0.0
        %1225 = vmatpush.msra.mxu0 0.0
        %1226 = vmatpush.msra.mxu0 0.0
        %1227 = vmatpush.msra.mxu0 0.0
        %1228 = vmatpush.msra.mxu0 0.0
        %1229 = vmatpush.msra.mxu0 %v450
        %1230 = vmatpush.msra.mxu0 %v449
        %1231 = vmatpush.msra.mxu0 %v448
        %1232 = vmatpush.msra.mxu0 %v447
        %1233 = vmatmul.f32.gmra.mxu0 %v1212
        %v1234 = vpop.f32.mrf.mxu0
        %v1235 = vadd.f32 %v1210, %v1234
        %1236 = vmatmul.f32.gmra.mxu0 %v1215
        %v1237 = vpop.f32.mrf.mxu0
        %v1238 = vadd.f32 %v1210, %v1237
        %1239 = vdwg.mxu0
        %v1240 = vmax.f32 %v1235, 0.0
        %v1241 = vmax.f32 %v1238, 0.0
        %v1242 = vperm.slane %v462, 0
        %vm1243 = vcmask 523264
        %v1245 = vsel %vm1243, %v1240, 0
        %v1248 = vsel %vm1243, %v1241, 0
        %1250 = vmatpush.msra.mxu0 0.0
        %1251 = vmatpush.msra.mxu0 0.0
        %1252 = vmatpush.msra.mxu0 0.0
        %1253 = vmatpush.msra.mxu0 0.0
        %1254 = vmatpush.msra.mxu0 0.0
        %1255 = vmatpush.msra.mxu0 0.0
        %1256 = vmatpush.msra.mxu0 0.0
        %1257 = vmatpush.msra.mxu0 0.0
        %1258 = vmatpush.msra.mxu0 %v458
        %1259 = vmatpush.msra.mxu0 %v457
        %1260 = vmatpush.msra.mxu0 %v456
        %1261 = vmatpush.msra.mxu0 %v455
        %1262 = vmatpush.msra.mxu0 %v454
        %1263 = vmatpush.msra.mxu0 %v453
        %1264 = vmatpush.msra.mxu0 %v452
        %1265 = vmatpush.msra.mxu0 %v451
        %1266 = vmatmul.f32.gmra.mxu0 %v1245
        %v1267 = vpop.f32.mrf.mxu0
        %v1268 = vadd.f32 %v1242, %v1267
        %1269 = vmatmul.f32.gmra.mxu0 %v1248
        %v1270 = vpop.f32.mrf.mxu0
        %v1271 = vadd.f32 %v1242, %v1270
        %1272 = vdwg.mxu0
        %v1273 = vadd.f32 %v1208, %v1268
        %v1274 = vadd.f32 %v1209, %v1271
        %v1275 = vsel %vm468, %v1273, 0.0
        %1276 = vadd.xlane.f32.xlu0 %v1275
        %v1277 = vpop.xlane.xlu0 %1276
        %v1278 = vsel %vm468, %v1274, 0.0
        %1279 = vadd.xlane.f32.xlu0 %v1278
        %v1280 = vpop.xlane.xlu0 %1279
        %v1281 = vmul.f32 %v1277, %v1131
        %v1282 = vmul.f32 %v1280, %v1131
        %v1283 = vsub.f32 %v1273, %v1281
        %v1284 = vsub.f32 %v1274, %v1282
        %v1285 = vmul.f32 %v1283, %v1283
        %v1286 = vmul.f32 %v1284, %v1284
        %v1287 = vsel %vm468, %v1285, 0.0
        %1288 = vadd.xlane.f32.xlu0 %v1287
        %v1289 = vpop.xlane.xlu0 %1288
        %v1290 = vsel %vm468, %v1286, 0.0
        %1291 = vadd.xlane.f32.xlu0 %v1290
        %v1292 = vpop.xlane.xlu0 %1291
        %v1293 = vmul.f32 %v1289, 0.032258064
        %v1294 = vmul.f32 %v1292, 0.032258064
        %v1295 = vrsqrt.pop %v1293
        %v1296 = vmul.f32 %v1295, %v1293
        %v1297 = vmul.f32 %v1296, %v1295
        %v1298 = vmul.f32 0.5, %v1297
        %v1299 = vsub.f32 1.5, %v1298
        %v1300 = vmul.f32 %v1295, %v1299
        %v1301 = vmul.f32 %v1293, %v1300
        %vm1302 = vcmp.eq.f32.partialorder %v1293, inf
        %v1303 = vsel %vm1302, %v1293, %v1301
        %vm1304 = vcmp.eq.f32.partialorder %v1293, 0.0
        %v1305 = vand.u32 %v1293, 2147483648
        %v1306 = vsel %vm1304, %v1305, %v1303
        %v1307 = vrsqrt.pop %v1294
        %v1308 = vmul.f32 %v1307, %v1294
        %v1309 = vmul.f32 %v1308, %v1307
        %v1310 = vmul.f32 0.5, %v1309
        %v1311 = vsub.f32 1.5, %v1310
        %v1312 = vmul.f32 %v1307, %v1311
        %v1313 = vmul.f32 %v1294, %v1312
        %vm1314 = vcmp.eq.f32.partialorder %v1294, inf
        %v1315 = vsel %vm1314, %v1294, %v1313
        %vm1316 = vcmp.eq.f32.partialorder %v1294, 0.0
        %v1317 = vand.u32 %v1294, 2147483648
        %v1318 = vsel %vm1316, %v1317, %v1315
        %v1319 = vadd.f32 %v1306, 1e-06
        %v1320 = vadd.f32 %v1318, 1e-06
        %v1321 = vrcp.pop %v1319
        %v1322 = vmul.f32 %v1319, %v1321
        %v1323 = vsub.f32 1.0, %v1322
        %v1324 = vmul.f32 %v1321, %v1323
        %v1325 = vadd.f32 %v1321, %v1324
        %vm1326 = vweird.f32 %v1319
        %vm1327 = vweird.f32 %v1321
        %vm1328 = vmor %vm1326, %vm1327
        %v1329 = vsel %vm1328, %v1321, %v1325
        %v1330 = vand.u32 2147483647, %v1319
        %vm1331 = vcmp.eq.f32.partialorder %v1330, 8.507059e+37
        %v1332 = vand.u32 %v1319, 2147483648
        %v1333 = vor.u32 1.1754944e-38, %v1332
        %v1334 = vsel %vm1331, %v1333, %v1329
        %v1335 = vmul.f32 1.0, %v1334
        %v1336 = vrcp.pop %v1320
        %v1337 = vmul.f32 %v1320, %v1336
        %v1338 = vsub.f32 1.0, %v1337
        %v1339 = vmul.f32 %v1336, %v1338
        %v1340 = vadd.f32 %v1336, %v1339
        %vm1341 = vweird.f32 %v1320
        %vm1342 = vweird.f32 %v1336
        %vm1343 = vmor %vm1341, %vm1342
        %v1344 = vsel %vm1343, %v1336, %v1340
        %v1345 = vand.u32 2147483647, %v1320
        %vm1346 = vcmp.eq.f32.partialorder %v1345, 8.507059e+37
        %v1347 = vand.u32 %v1320, 2147483648
        %v1348 = vor.u32 1.1754944e-38, %v1347
        %v1349 = vsel %vm1346, %v1348, %v1344
        %v1350 = vmul.f32 1.0, %v1349
        %v1351 = vperm.slane %v465, 0
        %v1352 = vmul.f32 %v1351, %v1283
        %v1353 = vmul.f32 %v1351, %v1284
        %v1354 = vmul.f32 %v1352, %v1335
        %v1355 = vmul.f32 %v1353, %v1350
        %v1356 = vperm.slane %v466, 0
        %v1357 = vadd.f32 %v1354, %v1356
        %v1358 = vadd.f32 %v1355, %v1356
        %v1359 = vld [vmem:[#allocation8 + $0xa8] sm:$0xff]
        %v1360 = vld [vmem:[#allocation8 + $0xb0] sm:$0xff]
        %v1361 = vld [vmem:[#allocation8 + $0xb8] sm:$0xff]
        %v1362 = vld [vmem:[#allocation8 + $0xc0] sm:$0xff]
        %v1363 = vld [vmem:[#allocation8 + $0xc8] sm:$0xff]
        %v1364 = vld [vmem:[#allocation8 + $0xd0] sm:$0xff]
        %v1365 = vld [vmem:[#allocation8 + $0xd8] sm:$0xff]
        %v1366 = vld [vmem:[#allocation8 + $0xe0] sm:$0xff]
        %v1367 = vld [vmem:[#allocation8 + $0xe8] sm:$0xff]
        %v1368 = vld [vmem:[#allocation8 + $0xf0] sm:$0xff]
        %v1369 = vld [vmem:[#allocation8 + $0xf8] sm:$0xff]
        %v1370 = vld [vmem:[#allocation8 + $0x100] sm:$0xff]
        %v1371 = vld [vmem:[#allocation8 + $0x108] sm:$0xff]
        %v1372 = vld [vmem:[#allocation8 + $0x110] sm:$0xff]
        %v1373 = vld [vmem:[#allocation8 + $0x118] sm:$0xff]
        %v1374 = vld [vmem:[#allocation8 + $0x120] sm:$0xff]
        %v1375 = vld [vmem:[#allocation8 + $0x128] sm:$0xff]
        %v1376 = vld [vmem:[#allocation8 + $0x130] sm:$0xff]
        %v1377 = vld [vmem:[#allocation8 + $0x138] sm:$0xff]
        %v1378 = vld [vmem:[#allocation8 + $0x140] sm:$0xff]
        %v1379 = vld [vmem:[#allocation8 + $0x148] sm:$0x1]
        %v1380 = vld [vmem:[#allocation8 + $0x149] sm:$0x1]
        %v1381 = vld [vmem:[#allocation8 + $0x14a] sm:$0x1]
        %v1382 = vld [vmem:[#allocation8 + $0x14b] sm:$0x1]
        %v1383 = vld [vmem:[#allocation8 + $0x14c] sm:$0x1]
        %v1384 = vld [vmem:[#allocation8 + $0x14d] sm:$0x1]
        %v1385 = vld [vmem:[#allocation8 + $0x14e] sm:$0x1]
        %v1386 = vld [vmem:[#allocation8 + $0x14f] sm:$0x1]
        %v1387 = vperm.slane %v1379, 0
        %v1389 = vsel %vm468, %v1357, 0
        %v1392 = vsel %vm468, %v1358, 0
        %1394 = vmatpush.msra.mxu0 0.0
        %1395 = vmatpush.msra.mxu0 0.0
        %1396 = vmatpush.msra.mxu0 0.0
        %1397 = vmatpush.msra.mxu0 0.0
        %1398 = vmatpush.msra.mxu0 0.0
        %1399 = vmatpush.msra.mxu0 0.0
        %1400 = vmatpush.msra.mxu0 0.0
        %1401 = vmatpush.msra.mxu0 0.0
        %1402 = vmatpush.msra.mxu0 0.0
        %1403 = vmatpush.msra.mxu0 0.0
        %1404 = vmatpush.msra.mxu0 0.0
        %1405 = vmatpush.msra.mxu0 0.0
        %1406 = vmatpush.msra.mxu0 %v1362
        %1407 = vmatpush.msra.mxu0 %v1361
        %1408 = vmatpush.msra.mxu0 %v1360
        %1409 = vmatpush.msra.mxu0 %v1359
        %1410 = vmatmul.f32.gmra.mxu0 %v1389
        %v1411 = vpop.f32.mrf.mxu0
        %v1412 = vadd.f32 %v1387, %v1411
        %1413 = vmatmul.f32.gmra.mxu0 %v1392
        %v1414 = vpop.f32.mrf.mxu0
        %v1415 = vadd.f32 %v1387, %v1414
        %1416 = vdwg.mxu0
        %1419 = vrot.lane.b32.xlu0 %v1412, 96
        %v1420 = vpop.permute.xlu0 %1419
        %1421 = vrot.lane.b32.xlu0 %v1415, 96
        %v1422 = vpop.permute.xlu0 %1421
        %v1423 = vsel %vm504, %v1412, 0
        %v1425 = vsel %vm504, %v1415, 0
        %v1427 = vsel %vm504, %v1420, 0
        %v1429 = vsel %vm504, %v1422, 0
        %1431 = vmatpush.xpose.msra.mxu0 0.0
        %1432 = vmatpush.xpose.msra.mxu0 0.0
        %1433 = vmatpush.xpose.msra.mxu0 0.0
        %1434 = vmatpush.xpose.msra.mxu0 0.0
        %1435 = vmatpush.xpose.msra.mxu0 0.0
        %1436 = vmatpush.xpose.msra.mxu0 0.0
        %1437 = vmatpush.xpose.msra.mxu0 0.0
        %1438 = vmatpush.xpose.msra.mxu0 0.0
        %1439 = vmatpush.xpose.msra.mxu0 0.0
        %1440 = vmatpush.xpose.msra.mxu0 0.0
        %1441 = vmatpush.xpose.msra.mxu0 0.0
        %1442 = vmatpush.xpose.msra.mxu0 0.0
        %1443 = vmatpush.xpose.msra.mxu0 0.0
        %1444 = vmatpush.xpose.msra.mxu0 0.0
        %1445 = vmatpush.xpose.msra.mxu0 %v1429
        %1446 = vmatpush.xpose.msra.mxu0 %v1427
        %1447 = vmatmul.f32.gmra.mxu0 %v1423
        %v1448 = vpop.f32.mrf.mxu0
        %v1449 = vadd.f32 %v434, %v1448
        %1450 = vmatmul.f32.gmra.mxu0 %v1425
        %v1451 = vpop.f32.mrf.mxu0
        %v1452 = vadd.f32 %v434, %v1451
        %1453 = vdwg.mxu0
        %v1454 = vsel %vm536, %v1449, -inf
        %1455 = vmax.xlane.f32.xlu0 %v1454
        %v1456 = vpop.xlane.xlu0 %1455
        %v1457 = vsel %vm536, %v1452, -inf
        %1458 = vmax.xlane.f32.xlu0 %v1457
        %v1459 = vpop.xlane.xlu0 %1458
        %v1460 = vsub.f32 %v1449, %v1456
        %v1461 = vsub.f32 %v1452, %v1459
        %v1462 = vmul.f32 %v1460, 1.442695
        %v1463 = vpow.pop %v1462
        %v1464 = vmul.f32 %v1461, 1.442695
        %v1465 = vpow.pop %v1464
        %v1466 = vsel %vm536, %v1463, 0.0
        %1467 = vadd.xlane.f32.xlu0 %v1466
        %v1468 = vpop.xlane.xlu0 %1467
        %v1469 = vsel %vm536, %v1465, 0.0
        %1470 = vadd.xlane.f32.xlu0 %v1469
        %v1471 = vpop.xlane.xlu0 %1470
        %v1472 = vrcp.pop %v1468
        %v1473 = vmul.f32 %v1468, %v1472
        %v1474 = vsub.f32 1.0, %v1473
        %v1475 = vmul.f32 %v1472, %v1474
        %v1476 = vadd.f32 %v1472, %v1475
        %vm1477 = vweird.f32 %v1468
        %vm1478 = vweird.f32 %v1472
        %vm1479 = vmor %vm1477, %vm1478
        %v1480 = vsel %vm1479, %v1472, %v1476
        %v1481 = vand.u32 2147483647, %v1468
        %vm1482 = vcmp.eq.f32.partialorder %v1481, 8.507059e+37
        %v1483 = vand.u32 %v1468, 2147483648
        %v1484 = vor.u32 1.1754944e-38, %v1483
        %v1485 = vsel %vm1482, %v1484, %v1480
        %v1486 = vmul.f32 1.0, %v1485
        %v1487 = vrcp.pop %v1471
        %v1488 = vmul.f32 %v1471, %v1487
        %v1489 = vsub.f32 1.0, %v1488
        %v1490 = vmul.f32 %v1487, %v1489
        %v1491 = vadd.f32 %v1487, %v1490
        %vm1492 = vweird.f32 %v1471
        %vm1493 = vweird.f32 %v1487
        %vm1494 = vmor %vm1492, %vm1493
        %v1495 = vsel %vm1494, %v1487, %v1491
        %v1496 = vand.u32 2147483647, %v1471
        %vm1497 = vcmp.eq.f32.partialorder %v1496, 8.507059e+37
        %v1498 = vand.u32 %v1471, 2147483648
        %v1499 = vor.u32 1.1754944e-38, %v1498
        %v1500 = vsel %vm1497, %v1499, %v1495
        %v1501 = vmul.f32 1.0, %v1500
        %v1502 = vmul.f32 %v1463, %v1486
        %v1503 = vmul.f32 %v1465, %v1501
        %1504 = vrot.lane.b32.xlu0 %v1412, 64
        %v1505 = vpop.permute.xlu0 %1504
        %1506 = vrot.lane.b32.xlu0 %v1415, 64
        %v1507 = vpop.permute.xlu0 %1506
        %v1511 = vsel %vm536, %v1502, 0
        %v1514 = vsel %vm536, %v1503, 0
        %1516 = vmatpush.msra.mxu0 0.0
        %1517 = vmatpush.msra.mxu0 0.0
        %1518 = vmatpush.msra.mxu0 0.0
        %1519 = vmatpush.msra.mxu0 0.0
        %1520 = vmatpush.msra.mxu0 0.0
        %1521 = vmatpush.msra.mxu0 0.0
        %1522 = vmatpush.msra.mxu0 0.0
        %1523 = vmatpush.msra.mxu0 0.0
        %1524 = vmatpush.msra.mxu0 0.0
        %1525 = vmatpush.msra.mxu0 0.0
        %1526 = vmatpush.msra.mxu0 0.0
        %1527 = vmatpush.msra.mxu0 0.0
        %1528 = vmatpush.msra.mxu0 0.0
        %1529 = vmatpush.msra.mxu0 0.0
        %1530 = vmatpush.msra.mxu0 %v1507
        %1531 = vmatpush.msra.mxu0 %v1505
        %1532 = vmatmul.f32.gmra.mxu0 %v1511
        %v1533 = vpop.f32.mrf.mxu0
        %v1534 = vadd.f32 0.0, %v1533
        %1535 = vmatmul.f32.gmra.mxu0 %v1514
        %v1536 = vpop.f32.mrf.mxu0
        %v1537 = vadd.f32 0.0, %v1536
        %1538 = vdwg.mxu0
        %1539 = vrot.lane.b32.xlu0 %v1412, 120
        %v1540 = vpop.permute.xlu0 %1539
        %1541 = vrot.lane.b32.xlu0 %v1415, 120
        %v1542 = vpop.permute.xlu0 %1541
        %1543 = vrot.lane.b32.xlu0 %v1412, 88
        %v1544 = vpop.permute.xlu0 %1543
        %1545 = vrot.lane.b32.xlu0 %v1415, 88
        %v1546 = vpop.permute.xlu0 %1545
        %v1547 = vsel %vm504, %v1540, 0
        %v1549 = vsel %vm504, %v1542, 0
        %v1551 = vsel %vm504, %v1544, 0
        %v1553 = vsel %vm504, %v1546, 0
        %1555 = vmatpush.xpose.msra.mxu0 0.0
        %1556 = vmatpush.xpose.msra.mxu0 0.0
        %1557 = vmatpush.xpose.msra.mxu0 0.0
        %1558 = vmatpush.xpose.msra.mxu0 0.0
        %1559 = vmatpush.xpose.msra.mxu0 0.0
        %1560 = vmatpush.xpose.msra.mxu0 0.0
        %1561 = vmatpush.xpose.msra.mxu0 0.0
        %1562 = vmatpush.xpose.msra.mxu0 0.0
        %1563 = vmatpush.xpose.msra.mxu0 0.0
        %1564 = vmatpush.xpose.msra.mxu0 0.0
        %1565 = vmatpush.xpose.msra.mxu0 0.0
        %1566 = vmatpush.xpose.msra.mxu0 0.0
        %1567 = vmatpush.xpose.msra.mxu0 0.0
        %1568 = vmatpush.xpose.msra.mxu0 0.0
        %1569 = vmatpush.xpose.msra.mxu0 %v1553
        %1570 = vmatpush.xpose.msra.mxu0 %v1551
        %1571 = vmatmul.f32.gmra.mxu0 %v1547
        %v1572 = vpop.f32.mrf.mxu0
        %v1573 = vadd.f32 %v434, %v1572
        %1574 = vmatmul.f32.gmra.mxu0 %v1549
        %v1575 = vpop.f32.mrf.mxu0
        %v1576 = vadd.f32 %v434, %v1575
        %1577 = vdwg.mxu0
        %v1578 = vsel %vm536, %v1573, -inf
        %1579 = vmax.xlane.f32.xlu0 %v1578
        %v1580 = vpop.xlane.xlu0 %1579
        %v1581 = vsel %vm536, %v1576, -inf
        %1582 = vmax.xlane.f32.xlu0 %v1581
        %v1583 = vpop.xlane.xlu0 %1582
        %v1584 = vsub.f32 %v1573, %v1580
        %v1585 = vsub.f32 %v1576, %v1583
        %v1586 = vmul.f32 %v1584, 1.442695
        %v1587 = vpow.pop %v1586
        %v1588 = vmul.f32 %v1585, 1.442695
        %v1589 = vpow.pop %v1588
        %v1590 = vsel %vm536, %v1587, 0.0
        %1591 = vadd.xlane.f32.xlu0 %v1590
        %v1592 = vpop.xlane.xlu0 %1591
        %v1593 = vsel %vm536, %v1589, 0.0
        %1594 = vadd.xlane.f32.xlu0 %v1593
        %v1595 = vpop.xlane.xlu0 %1594
        %v1596 = vrcp.pop %v1592
        %v1597 = vmul.f32 %v1592, %v1596
        %v1598 = vsub.f32 1.0, %v1597
        %v1599 = vmul.f32 %v1596, %v1598
        %v1600 = vadd.f32 %v1596, %v1599
        %vm1601 = vweird.f32 %v1592
        %vm1602 = vweird.f32 %v1596
        %vm1603 = vmor %vm1601, %vm1602
        %v1604 = vsel %vm1603, %v1596, %v1600
        %v1605 = vand.u32 2147483647, %v1592
        %vm1606 = vcmp.eq.f32.partialorder %v1605, 8.507059e+37
        %v1607 = vand.u32 %v1592, 2147483648
        %v1608 = vor.u32 1.1754944e-38, %v1607
        %v1609 = vsel %vm1606, %v1608, %v1604
        %v1610 = vmul.f32 1.0, %v1609
        %v1611 = vrcp.pop %v1595
        %v1612 = vmul.f32 %v1595, %v1611
        %v1613 = vsub.f32 1.0, %v1612
        %v1614 = vmul.f32 %v1611, %v1613
        %v1615 = vadd.f32 %v1611, %v1614
        %vm1616 = vweird.f32 %v1595
        %vm1617 = vweird.f32 %v1611
        %vm1618 = vmor %vm1616, %vm1617
        %v1619 = vsel %vm1618, %v1611, %v1615
        %v1620 = vand.u32 2147483647, %v1595
        %vm1621 = vcmp.eq.f32.partialorder %v1620, 8.507059e+37
        %v1622 = vand.u32 %v1595, 2147483648
        %v1623 = vor.u32 1.1754944e-38, %v1622
        %v1624 = vsel %vm1621, %v1623, %v1619
        %v1625 = vmul.f32 1.0, %v1624
        %v1626 = vmul.f32 %v1587, %v1610
        %v1627 = vmul.f32 %v1589, %v1625
        %1628 = vrot.lane.b32.xlu0 %v1412, 56
        %v1629 = vpop.permute.xlu0 %1628
        %1630 = vrot.lane.b32.xlu0 %v1415, 56
        %v1631 = vpop.permute.xlu0 %1630
        %v1635 = vsel %vm536, %v1626, 0
        %v1638 = vsel %vm536, %v1627, 0
        %1640 = vmatpush.msra.mxu0 0.0
        %1641 = vmatpush.msra.mxu0 0.0
        %1642 = vmatpush.msra.mxu0 0.0
        %1643 = vmatpush.msra.mxu0 0.0
        %1644 = vmatpush.msra.mxu0 0.0
        %1645 = vmatpush.msra.mxu0 0.0
        %1646 = vmatpush.msra.mxu0 0.0
        %1647 = vmatpush.msra.mxu0 0.0
        %1648 = vmatpush.msra.mxu0 0.0
        %1649 = vmatpush.msra.mxu0 0.0
        %1650 = vmatpush.msra.mxu0 0.0
        %1651 = vmatpush.msra.mxu0 0.0
        %1652 = vmatpush.msra.mxu0 0.0
        %1653 = vmatpush.msra.mxu0 0.0
        %1654 = vmatpush.msra.mxu0 %v1631
        %1655 = vmatpush.msra.mxu0 %v1629
        %1656 = vmatmul.f32.gmra.mxu0 %v1635
        %v1657 = vpop.f32.mrf.mxu0
        %v1658 = vadd.f32 0.0, %v1657
        %1659 = vmatmul.f32.gmra.mxu0 %v1638
        %v1660 = vpop.f32.mrf.mxu0
        %v1661 = vadd.f32 0.0, %v1660
        %1662 = vdwg.mxu0
        %v1664 = vsel %vm504, %v1658, 0
        %v1667 = vsel %vm504, %v1661, 0
        %1669 = vmatpush.msra.mxu0 0.0
        %1670 = vmatpush.msra.mxu0 0.0
        %1671 = vmatpush.msra.mxu0 0.0
        %1672 = vmatpush.msra.mxu0 0.0
        %1673 = vmatpush.msra.mxu0 0.0
        %1674 = vmatpush.msra.mxu0 0.0
        %1675 = vmatpush.msra.mxu0 0.0
        %1676 = vmatpush.msra.mxu0 0.0
        %1677 = vmatpush.msra.mxu0 0.0
        %1678 = vmatpush.msra.mxu0 0.0
        %1679 = vmatpush.msra.mxu0 0.0
        %1680 = vmatpush.msra.mxu0 0.0
        %1681 = vmatpush.msra.mxu0 0.0
        %1682 = vmatpush.msra.mxu0 0.0
        %1683 = vmatpush.msra.mxu0 0.0
        %1684 = vmatpush.msra.mxu0 %v1364
        %1685 = vmatmul.f32.gmra.mxu0 %v1664
        %v1686 = vpop.f32.mrf.mxu0
        %v1687 = vadd.f32 0.0, %v1686
        %1688 = vmatmul.f32.gmra.mxu0 %v1667
        %v1689 = vpop.f32.mrf.mxu0
        %v1690 = vadd.f32 0.0, %v1689
        %1691 = vdwg.mxu0
        %v1693 = vsel %vm504, %v1534, 0
        %v1696 = vsel %vm504, %v1537, 0
        %1698 = vmatpush.msra.mxu0 0.0
        %1699 = vmatpush.msra.mxu0 0.0
        %1700 = vmatpush.msra.mxu0 0.0
        %1701 = vmatpush.msra.mxu0 0.0
        %1702 = vmatpush.msra.mxu0 0.0
        %1703 = vmatpush.msra.mxu0 0.0
        %1704 = vmatpush.msra.mxu0 0.0
        %1705 = vmatpush.msra.mxu0 0.0
        %1706 = vmatpush.msra.mxu0 0.0
        %1707 = vmatpush.msra.mxu0 0.0
        %1708 = vmatpush.msra.mxu0 0.0
        %1709 = vmatpush.msra.mxu0 0.0
        %1710 = vmatpush.msra.mxu0 0.0
        %1711 = vmatpush.msra.mxu0 0.0
        %1712 = vmatpush.msra.mxu0 0.0
        %1713 = vmatpush.msra.mxu0 %v1363
        %1714 = vmatmul.f32.gmra.mxu0 %v1693
        %v1715 = vpop.f32.mrf.mxu0
        %v1716 = vadd.f32 %v1687, %v1715
        %1717 = vmatmul.f32.gmra.mxu0 %v1696
        %v1718 = vpop.f32.mrf.mxu0
        %v1719 = vadd.f32 %v1690, %v1718
        %1720 = vdwg.mxu0
        %1721 = vrot.lane.b32.xlu0 %v1412, 112
        %v1722 = vpop.permute.xlu0 %1721
        %1723 = vrot.lane.b32.xlu0 %v1415, 112
        %v1724 = vpop.permute.xlu0 %1723
        %1725 = vrot.lane.b32.xlu0 %v1412, 80
        %v1726 = vpop.permute.xlu0 %1725
        %1727 = vrot.lane.b32.xlu0 %v1415, 80
        %v1728 = vpop.permute.xlu0 %1727
        %v1729 = vsel %vm504, %v1722, 0
        %v1731 = vsel %vm504, %v1724, 0
        %v1733 = vsel %vm504, %v1726, 0
        %v1735 = vsel %vm504, %v1728, 0
        %1737 = vmatpush.xpose.msra.mxu0 0.0
        %1738 = vmatpush.xpose.msra.mxu0 0.0
        %1739 = vmatpush.xpose.msra.mxu0 0.0
        %1740 = vmatpush.xpose.msra.mxu0 0.0
        %1741 = vmatpush.xpose.msra.mxu0 0.0
        %1742 = vmatpush.xpose.msra.mxu0 0.0
        %1743 = vmatpush.xpose.msra.mxu0 0.0
        %1744 = vmatpush.xpose.msra.mxu0 0.0
        %1745 = vmatpush.xpose.msra.mxu0 0.0
        %1746 = vmatpush.xpose.msra.mxu0 0.0
        %1747 = vmatpush.xpose.msra.mxu0 0.0
        %1748 = vmatpush.xpose.msra.mxu0 0.0
        %1749 = vmatpush.xpose.msra.mxu0 0.0
        %1750 = vmatpush.xpose.msra.mxu0 0.0
        %1751 = vmatpush.xpose.msra.mxu0 %v1735
        %1752 = vmatpush.xpose.msra.mxu0 %v1733
        %1753 = vmatmul.f32.gmra.mxu0 %v1729
        %v1754 = vpop.f32.mrf.mxu0
        %v1755 = vadd.f32 %v434, %v1754
        %1756 = vmatmul.f32.gmra.mxu0 %v1731
        %v1757 = vpop.f32.mrf.mxu0
        %v1758 = vadd.f32 %v434, %v1757
        %1759 = vdwg.mxu0
        %v1760 = vsel %vm536, %v1755, -inf
        %1761 = vmax.xlane.f32.xlu0 %v1760
        %v1762 = vpop.xlane.xlu0 %1761
        %v1763 = vsel %vm536, %v1758, -inf
        %1764 = vmax.xlane.f32.xlu0 %v1763
        %v1765 = vpop.xlane.xlu0 %1764
        %v1766 = vsub.f32 %v1755, %v1762
        %v1767 = vsub.f32 %v1758, %v1765
        %v1768 = vmul.f32 %v1766, 1.442695
        %v1769 = vpow.pop %v1768
        %v1770 = vmul.f32 %v1767, 1.442695
        %v1771 = vpow.pop %v1770
        %v1772 = vsel %vm536, %v1769, 0.0
        %1773 = vadd.xlane.f32.xlu0 %v1772
        %v1774 = vpop.xlane.xlu0 %1773
        %v1775 = vsel %vm536, %v1771, 0.0
        %1776 = vadd.xlane.f32.xlu0 %v1775
        %v1777 = vpop.xlane.xlu0 %1776
        %v1778 = vrcp.pop %v1774
        %v1779 = vmul.f32 %v1774, %v1778
        %v1780 = vsub.f32 1.0, %v1779
        %v1781 = vmul.f32 %v1778, %v1780
        %v1782 = vadd.f32 %v1778, %v1781
        %vm1783 = vweird.f32 %v1774
        %vm1784 = vweird.f32 %v1778
        %vm1785 = vmor %vm1783, %vm1784
        %v1786 = vsel %vm1785, %v1778, %v1782
        %v1787 = vand.u32 2147483647, %v1774
        %vm1788 = vcmp.eq.f32.partialorder %v1787, 8.507059e+37
        %v1789 = vand.u32 %v1774, 2147483648
        %v1790 = vor.u32 1.1754944e-38, %v1789
        %v1791 = vsel %vm1788, %v1790, %v1786
        %v1792 = vmul.f32 1.0, %v1791
        %v1793 = vrcp.pop %v1777
        %v1794 = vmul.f32 %v1777, %v1793
        %v1795 = vsub.f32 1.0, %v1794
        %v1796 = vmul.f32 %v1793, %v1795
        %v1797 = vadd.f32 %v1793, %v1796
        %vm1798 = vweird.f32 %v1777
        %vm1799 = vweird.f32 %v1793
        %vm1800 = vmor %vm1798, %vm1799
        %v1801 = vsel %vm1800, %v1793, %v1797
        %v1802 = vand.u32 2147483647, %v1777
        %vm1803 = vcmp.eq.f32.partialorder %v1802, 8.507059e+37
        %v1804 = vand.u32 %v1777, 2147483648
        %v1805 = vor.u32 1.1754944e-38, %v1804
        %v1806 = vsel %vm1803, %v1805, %v1801
        %v1807 = vmul.f32 1.0, %v1806
        %v1808 = vmul.f32 %v1769, %v1792
        %v1809 = vmul.f32 %v1771, %v1807
        %1810 = vrot.lane.b32.xlu0 %v1412, 48
        %v1811 = vpop.permute.xlu0 %1810
        %1812 = vrot.lane.b32.xlu0 %v1415, 48
        %v1813 = vpop.permute.xlu0 %1812
        %v1817 = vsel %vm536, %v1808, 0
        %v1820 = vsel %vm536, %v1809, 0
        %1822 = vmatpush.msra.mxu0 0.0
        %1823 = vmatpush.msra.mxu0 0.0
        %1824 = vmatpush.msra.mxu0 0.0
        %1825 = vmatpush.msra.mxu0 0.0
        %1826 = vmatpush.msra.mxu0 0.0
        %1827 = vmatpush.msra.mxu0 0.0
        %1828 = vmatpush.msra.mxu0 0.0
        %1829 = vmatpush.msra.mxu0 0.0
        %1830 = vmatpush.msra.mxu0 0.0
        %1831 = vmatpush.msra.mxu0 0.0
        %1832 = vmatpush.msra.mxu0 0.0
        %1833 = vmatpush.msra.mxu0 0.0
        %1834 = vmatpush.msra.mxu0 0.0
        %1835 = vmatpush.msra.mxu0 0.0
        %1836 = vmatpush.msra.mxu0 %v1813
        %1837 = vmatpush.msra.mxu0 %v1811
        %1838 = vmatmul.f32.gmra.mxu0 %v1817
        %v1839 = vpop.f32.mrf.mxu0
        %v1840 = vadd.f32 0.0, %v1839
        %1841 = vmatmul.f32.gmra.mxu0 %v1820
        %v1842 = vpop.f32.mrf.mxu0
        %v1843 = vadd.f32 0.0, %v1842
        %1844 = vdwg.mxu0
        %v1846 = vsel %vm504, %v1840, 0
        %v1849 = vsel %vm504, %v1843, 0
        %1851 = vmatpush.msra.mxu0 0.0
        %1852 = vmatpush.msra.mxu0 0.0
        %1853 = vmatpush.msra.mxu0 0.0
        %1854 = vmatpush.msra.mxu0 0.0
        %1855 = vmatpush.msra.mxu0 0.0
        %1856 = vmatpush.msra.mxu0 0.0
        %1857 = vmatpush.msra.mxu0 0.0
        %1858 = vmatpush.msra.mxu0 0.0
        %1859 = vmatpush.msra.mxu0 0.0
        %1860 = vmatpush.msra.mxu0 0.0
        %1861 = vmatpush.msra.mxu0 0.0
        %1862 = vmatpush.msra.mxu0 0.0
        %1863 = vmatpush.msra.mxu0 0.0
        %1864 = vmatpush.msra.mxu0 0.0
        %1865 = vmatpush.msra.mxu0 0.0
        %1866 = vmatpush.msra.mxu0 %v1365
        %1867 = vmatmul.f32.gmra.mxu0 %v1846
        %v1868 = vpop.f32.mrf.mxu0
        %v1869 = vadd.f32 0.0, %v1868
        %1870 = vmatmul.f32.gmra.mxu0 %v1849
        %v1871 = vpop.f32.mrf.mxu0
        %v1872 = vadd.f32 0.0, %v1871
        %1873 = vdwg.mxu0
        %v1874 = vadd.f32 %v1716, %v1869
        %v1875 = vadd.f32 %v1719, %v1872
        %1876 = vrot.lane.b32.xlu0 %v1412, 104
        %v1877 = vpop.permute.xlu0 %1876
        %1878 = vrot.lane.b32.xlu0 %v1415, 104
        %v1879 = vpop.permute.xlu0 %1878
        %1880 = vrot.lane.b32.xlu0 %v1412, 72
        %v1881 = vpop.permute.xlu0 %1880
        %1882 = vrot.lane.b32.xlu0 %v1415, 72
        %v1883 = vpop.permute.xlu0 %1882
        %v1884 = vsel %vm504, %v1877, 0
        %v1886 = vsel %vm504, %v1879, 0
        %v1888 = vsel %vm504, %v1881, 0
        %v1890 = vsel %vm504, %v1883, 0
        %1892 = vmatpush.xpose.msra.mxu0 0.0
        %1893 = vmatpush.xpose.msra.mxu0 0.0
        %1894 = vmatpush.xpose.msra.mxu0 0.0
        %1895 = vmatpush.xpose.msra.mxu0 0.0
        %1896 = vmatpush.xpose.msra.mxu0 0.0
        %1897 = vmatpush.xpose.msra.mxu0 0.0
        %1898 = vmatpush.xpose.msra.mxu0 0.0
        %1899 = vmatpush.xpose.msra.mxu0 0.0
        %1900 = vmatpush.xpose.msra.mxu0 0.0
        %1901 = vmatpush.xpose.msra.mxu0 0.0
        %1902 = vmatpush.xpose.msra.mxu0 0.0
        %1903 = vmatpush.xpose.msra.mxu0 0.0
        %1904 = vmatpush.xpose.msra.mxu0 0.0
        %1905 = vmatpush.xpose.msra.mxu0 0.0
        %1906 = vmatpush.xpose.msra.mxu0 %v1890
        %1907 = vmatpush.xpose.msra.mxu0 %v1888
        %1908 = vmatmul.f32.gmra.mxu0 %v1884
        %v1909 = vpop.f32.mrf.mxu0
        %v1910 = vadd.f32 %v434, %v1909
        %1911 = vmatmul.f32.gmra.mxu0 %v1886
        %v1912 = vpop.f32.mrf.mxu0
        %v1913 = vadd.f32 %v434, %v1912
        %1914 = vdwg.mxu0
        %v1915 = vsel %vm536, %v1910, -inf
        %1916 = vmax.xlane.f32.xlu0 %v1915
        %v1917 = vpop.xlane.xlu0 %1916
        %v1918 = vsel %vm536, %v1913, -inf
        %1919 = vmax.xlane.f32.xlu0 %v1918
        %v1920 = vpop.xlane.xlu0 %1919
        %v1921 = vsub.f32 %v1910, %v1917
        %v1922 = vsub.f32 %v1913, %v1920
        %v1923 = vmul.f32 %v1921, 1.442695
        %v1924 = vpow.pop %v1923
        %v1925 = vmul.f32 %v1922, 1.442695
        %v1926 = vpow.pop %v1925
        %v1927 = vsel %vm536, %v1924, 0.0
        %1928 = vadd.xlane.f32.xlu0 %v1927
        %v1929 = vpop.xlane.xlu0 %1928
        %v1930 = vsel %vm536, %v1926, 0.0
        %1931 = vadd.xlane.f32.xlu0 %v1930
        %v1932 = vpop.xlane.xlu0 %1931
        %v1933 = vrcp.pop %v1929
        %v1934 = vmul.f32 %v1929, %v1933
        %v1935 = vsub.f32 1.0, %v1934
        %v1936 = vmul.f32 %v1933, %v1935
        %v1937 = vadd.f32 %v1933, %v1936
        %vm1938 = vweird.f32 %v1929
        %vm1939 = vweird.f32 %v1933
        %vm1940 = vmor %vm1938, %vm1939
        %v1941 = vsel %vm1940, %v1933, %v1937
        %v1942 = vand.u32 2147483647, %v1929
        %vm1943 = vcmp.eq.f32.partialorder %v1942, 8.507059e+37
        %v1944 = vand.u32 %v1929, 2147483648
        %v1945 = vor.u32 1.1754944e-38, %v1944
        %v1946 = vsel %vm1943, %v1945, %v1941
        %v1947 = vmul.f32 1.0, %v1946
        %v1948 = vrcp.pop %v1932
        %v1949 = vmul.f32 %v1932, %v1948
        %v1950 = vsub.f32 1.0, %v1949
        %v1951 = vmul.f32 %v1948, %v1950
        %v1952 = vadd.f32 %v1948, %v1951
        %vm1953 = vweird.f32 %v1932
        %vm1954 = vweird.f32 %v1948
        %vm1955 = vmor %vm1953, %vm1954
        %v1956 = vsel %vm1955, %v1948, %v1952
        %v1957 = vand.u32 2147483647, %v1932
        %vm1958 = vcmp.eq.f32.partialorder %v1957, 8.507059e+37
        %v1959 = vand.u32 %v1932, 2147483648
        %v1960 = vor.u32 1.1754944e-38, %v1959
        %v1961 = vsel %vm1958, %v1960, %v1956
        %v1962 = vmul.f32 1.0, %v1961
        %v1963 = vmul.f32 %v1924, %v1947
        %v1964 = vmul.f32 %v1926, %v1962
        %1965 = vrot.lane.b32.xlu0 %v1412, 40
        %v1966 = vpop.permute.xlu0 %1965
        %1967 = vrot.lane.b32.xlu0 %v1415, 40
        %v1968 = vpop.permute.xlu0 %1967
        %v1972 = vsel %vm536, %v1963, 0
        %v1975 = vsel %vm536, %v1964, 0
        %1977 = vmatpush.msra.mxu0 0.0
        %1978 = vmatpush.msra.mxu0 0.0
        %1979 = vmatpush.msra.mxu0 0.0
        %1980 = vmatpush.msra.mxu0 0.0
        %1981 = vmatpush.msra.mxu0 0.0
        %1982 = vmatpush.msra.mxu0 0.0
        %1983 = vmatpush.msra.mxu0 0.0
        %1984 = vmatpush.msra.mxu0 0.0
        %1985 = vmatpush.msra.mxu0 0.0
        %1986 = vmatpush.msra.mxu0 0.0
        %1987 = vmatpush.msra.mxu0 0.0
        %1988 = vmatpush.msra.mxu0 0.0
        %1989 = vmatpush.msra.mxu0 0.0
        %1990 = vmatpush.msra.mxu0 0.0
        %1991 = vmatpush.msra.mxu0 %v1968
        %1992 = vmatpush.msra.mxu0 %v1966
        %1993 = vmatmul.f32.gmra.mxu0 %v1972
        %v1994 = vpop.f32.mrf.mxu0
        %v1995 = vadd.f32 0.0, %v1994
        %1996 = vmatmul.f32.gmra.mxu0 %v1975
        %v1997 = vpop.f32.mrf.mxu0
        %v1998 = vadd.f32 0.0, %v1997
        %1999 = vdwg.mxu0
        %v2001 = vsel %vm504, %v1995, 0
        %v2004 = vsel %vm504, %v1998, 0
        %2006 = vmatpush.msra.mxu0 0.0
        %2007 = vmatpush.msra.mxu0 0.0
        %2008 = vmatpush.msra.mxu0 0.0
        %2009 = vmatpush.msra.mxu0 0.0
        %2010 = vmatpush.msra.mxu0 0.0
        %2011 = vmatpush.msra.mxu0 0.0
        %2012 = vmatpush.msra.mxu0 0.0
        %2013 = vmatpush.msra.mxu0 0.0
        %2014 = vmatpush.msra.mxu0 0.0
        %2015 = vmatpush.msra.mxu0 0.0
        %2016 = vmatpush.msra.mxu0 0.0
        %2017 = vmatpush.msra.mxu0 0.0
        %2018 = vmatpush.msra.mxu0 0.0
        %2019 = vmatpush.msra.mxu0 0.0
        %2020 = vmatpush.msra.mxu0 0.0
        %2021 = vmatpush.msra.mxu0 %v1366
        %2022 = vmatmul.f32.gmra.mxu0 %v2001
        %v2023 = vpop.f32.mrf.mxu0
        %v2024 = vadd.f32 0.0, %v2023
        %2025 = vmatmul.f32.gmra.mxu0 %v2004
        %v2026 = vpop.f32.mrf.mxu0
        %v2027 = vadd.f32 0.0, %v2026
        %2028 = vdwg.mxu0
        %v2029 = vadd.f32 %v1874, %v2024
        %v2030 = vadd.f32 %v1875, %v2027
        %v2031 = vperm.slane %v1380, 0
        %v2032 = vadd.f32 %v2029, %v2031
        %v2033 = vadd.f32 %v2030, %v2031
        %v2034 = vadd.f32 %v1357, %v2032
        %v2035 = vadd.f32 %v1358, %v2033
        %v2036 = vsel %vm468, %v2034, 0.0
        %2037 = vadd.xlane.f32.xlu0 %v2036
        %v2038 = vpop.xlane.xlu0 %2037
        %v2039 = vsel %vm468, %v2035, 0.0
        %2040 = vadd.xlane.f32.xlu0 %v2039
        %v2041 = vpop.xlane.xlu0 %2040
        %v2042 = vmul.f32 %v2038, %v1131
        %v2043 = vmul.f32 %v2041, %v1131
        %v2044 = vsub.f32 %v2034, %v2042
        %v2045 = vsub.f32 %v2035, %v2043
        %v2046 = vmul.f32 %v2044, %v2044
        %v2047 = vmul.f32 %v2045, %v2045
        %v2048 = vsel %vm468, %v2046, 0.0
        %2049 = vadd.xlane.f32.xlu0 %v2048
        %v2050 = vpop.xlane.xlu0 %2049
        %v2051 = vsel %vm468, %v2047, 0.0
        %2052 = vadd.xlane.f32.xlu0 %v2051
        %v2053 = vpop.xlane.xlu0 %2052
        %v2054 = vmul.f32 %v2050, 0.032258064
        %v2055 = vmul.f32 %v2053, 0.032258064
        %v2056 = vrsqrt.pop %v2054
        %v2057 = vmul.f32 %v2056, %v2054
        %v2058 = vmul.f32 %v2057, %v2056
        %v2059 = vmul.f32 0.5, %v2058
        %v2060 = vsub.f32 1.5, %v2059
        %v2061 = vmul.f32 %v2056, %v2060
        %v2062 = vmul.f32 %v2054, %v2061
        %vm2063 = vcmp.eq.f32.partialorder %v2054, inf
        %v2064 = vsel %vm2063, %v2054, %v2062
        %vm2065 = vcmp.eq.f32.partialorder %v2054, 0.0
        %v2066 = vand.u32 %v2054, 2147483648
        %v2067 = vsel %vm2065, %v2066, %v2064
        %v2068 = vrsqrt.pop %v2055
        %v2069 = vmul.f32 %v2068, %v2055
        %v2070 = vmul.f32 %v2069, %v2068
        %v2071 = vmul.f32 0.5, %v2070
        %v2072 = vsub.f32 1.5, %v2071
        %v2073 = vmul.f32 %v2068, %v2072
        %v2074 = vmul.f32 %v2055, %v2073
        %vm2075 = vcmp.eq.f32.partialorder %v2055, inf
        %v2076 = vsel %vm2075, %v2055, %v2074
        %vm2077 = vcmp.eq.f32.partialorder %v2055, 0.0
        %v2078 = vand.u32 %v2055, 2147483648
        %v2079 = vsel %vm2077, %v2078, %v2076
        %v2080 = vadd.f32 %v2067, 1e-06
        %v2081 = vadd.f32 %v2079, 1e-06
        %v2082 = vrcp.pop %v2080
        %v2083 = vmul.f32 %v2080, %v2082
        %v2084 = vsub.f32 1.0, %v2083
        %v2085 = vmul.f32 %v2082, %v2084
        %v2086 = vadd.f32 %v2082, %v2085
        %vm2087 = vweird.f32 %v2080
        %vm2088 = vweird.f32 %v2082
        %vm2089 = vmor %vm2087, %vm2088
        %v2090 = vsel %vm2089, %v2082, %v2086
        %v2091 = vand.u32 2147483647, %v2080
        %vm2092 = vcmp.eq.f32.partialorder %v2091, 8.507059e+37
        %v2093 = vand.u32 %v2080, 2147483648
        %v2094 = vor.u32 1.1754944e-38, %v2093
        %v2095 = vsel %vm2092, %v2094, %v2090
        %v2096 = vmul.f32 1.0, %v2095
        %v2097 = vrcp.pop %v2081
        %v2098 = vmul.f32 %v2081, %v2097
        %v2099 = vsub.f32 1.0, %v2098
        %v2100 = vmul.f32 %v2097, %v2099
        %v2101 = vadd.f32 %v2097, %v2100
        %vm2102 = vweird.f32 %v2081
        %vm2103 = vweird.f32 %v2097
        %vm2104 = vmor %vm2102, %vm2103
        %v2105 = vsel %vm2104, %v2097, %v2101
        %v2106 = vand.u32 2147483647, %v2081
        %vm2107 = vcmp.eq.f32.partialorder %v2106, 8.507059e+37
        %v2108 = vand.u32 %v2081, 2147483648
        %v2109 = vor.u32 1.1754944e-38, %v2108
        %v2110 = vsel %vm2107, %v2109, %v2105
        %v2111 = vmul.f32 1.0, %v2110
        %v2112 = vperm.slane %v1383, 0
        %v2113 = vmul.f32 %v2112, %v2044
        %v2114 = vmul.f32 %v2112, %v2045
        %v2115 = vmul.f32 %v2113, %v2096
        %v2116 = vmul.f32 %v2114, %v2111
        %v2117 = vperm.slane %v1384, 0
        %v2118 = vadd.f32 %v2115, %v2117
        %v2119 = vadd.f32 %v2116, %v2117
        %v2120 = vperm.slane %v1381, 0
        %v2122 = vsel %vm468, %v2118, 0
        %v2125 = vsel %vm468, %v2119, 0
        %2127 = vmatpush.msra.mxu0 0.0
        %2128 = vmatpush.msra.mxu0 0.0
        %2129 = vmatpush.msra.mxu0 0.0
        %2130 = vmatpush.msra.mxu0 0.0
        %2131 = vmatpush.msra.mxu0 0.0
        %2132 = vmatpush.msra.mxu0 0.0
        %2133 = vmatpush.msra.mxu0 0.0
        %2134 = vmatpush.msra.mxu0 0.0
        %2135 = vmatpush.msra.mxu0 0.0
        %2136 = vmatpush.msra.mxu0 0.0
        %2137 = vmatpush.msra.mxu0 0.0
        %2138 = vmatpush.msra.mxu0 0.0
        %2139 = vmatpush.msra.mxu0 %v1370
        %2140 = vmatpush.msra.mxu0 %v1369
        %2141 = vmatpush.msra.mxu0 %v1368
        %2142 = vmatpush.msra.mxu0 %v1367
        %2143 = vmatmul.f32.gmra.mxu0 %v2122
        %v2144 = vpop.f32.mrf.mxu0
        %v2145 = vadd.f32 %v2120, %v2144
        %2146 = vmatmul.f32.gmra.mxu0 %v2125
        %v2147 = vpop.f32.mrf.mxu0
        %v2148 = vadd.f32 %v2120, %v2147
        %2149 = vdwg.mxu0
        %v2150 = vmax.f32 %v2145, 0.0
        %v2151 = vmax.f32 %v2148, 0.0
        %v2152 = vperm.slane %v1382, 0
        %v2154 = vsel %vm1243, %v2150, 0
        %v2157 = vsel %vm1243, %v2151, 0
        %2159 = vmatpush.msra.mxu0 0.0
        %2160 = vmatpush.msra.mxu0 0.0
        %2161 = vmatpush.msra.mxu0 0.0
        %2162 = vmatpush.msra.mxu0 0.0
        %2163 = vmatpush.msra.mxu0 0.0
        %2164 = vmatpush.msra.mxu0 0.0
        %2165 = vmatpush.msra.mxu0 0.0
        %2166 = vmatpush.msra.mxu0 0.0
        %2167 = vmatpush.msra.mxu0 %v1378
        %2168 = vmatpush.msra.mxu0 %v1377
        %2169 = vmatpush.msra.mxu0 %v1376
        %2170 = vmatpush.msra.mxu0 %v1375
        %2171 = vmatpush.msra.mxu0 %v1374
        %2172 = vmatpush.msra.mxu0 %v1373
        %2173 = vmatpush.msra.mxu0 %v1372
        %2174 = vmatpush.msra.mxu0 %v1371
        %2175 = vmatmul.f32.gmra.mxu0 %v2154
        %v2176 = vpop.f32.mrf.mxu0
        %v2177 = vadd.f32 %v2152, %v2176
        %2178 = vmatmul.f32.gmra.mxu0 %v2157
        %v2179 = vpop.f32.mrf.mxu0
        %v2180 = vadd.f32 %v2152, %v2179
        %2181 = vdwg.mxu0
        %v2182 = vadd.f32 %v2118, %v2177
        %v2183 = vadd.f32 %v2119, %v2180
        %v2184 = vsel %vm468, %v2182, 0.0
        %2185 = vadd.xlane.f32.xlu0 %v2184
        %v2186 = vpop.xlane.xlu0 %2185
        %v2187 = vsel %vm468, %v2183, 0.0
        %2188 = vadd.xlane.f32.xlu0 %v2187
        %v2189 = vpop.xlane.xlu0 %2188
        %v2190 = vmul.f32 %v2186, %v1131
        %v2191 = vmul.f32 %v2189, %v1131
        %v2192 = vsub.f32 %v2182, %v2190
        %v2193 = vsub.f32 %v2183, %v2191
        %v2194 = vmul.f32 %v2192, %v2192
        %v2195 = vmul.f32 %v2193, %v2193
        %v2196 = vsel %vm468, %v2194, 0.0
        %2197 = vadd.xlane.f32.xlu0 %v2196
        %v2198 = vpop.xlane.xlu0 %2197
        %v2199 = vsel %vm468, %v2195, 0.0
        %2200 = vadd.xlane.f32.xlu0 %v2199
        %v2201 = vpop.xlane.xlu0 %2200
        %v2202 = vmul.f32 %v2198, 0.032258064
        %v2203 = vmul.f32 %v2201, 0.032258064
        %v2204 = vrsqrt.pop %v2202
        %v2205 = vmul.f32 %v2204, %v2202
        %v2206 = vmul.f32 %v2205, %v2204
        %v2207 = vmul.f32 0.5, %v2206
        %v2208 = vsub.f32 1.5, %v2207
        %v2209 = vmul.f32 %v2204, %v2208
        %v2210 = vmul.f32 %v2202, %v2209
        %vm2211 = vcmp.eq.f32.partialorder %v2202, inf
        %v2212 = vsel %vm2211, %v2202, %v2210
        %vm2213 = vcmp.eq.f32.partialorder %v2202, 0.0
        %v2214 = vand.u32 %v2202, 2147483648
        %v2215 = vsel %vm2213, %v2214, %v2212
        %v2216 = vrsqrt.pop %v2203
        %v2217 = vmul.f32 %v2216, %v2203
        %v2218 = vmul.f32 %v2217, %v2216
        %v2219 = vmul.f32 0.5, %v2218
        %v2220 = vsub.f32 1.5, %v2219
        %v2221 = vmul.f32 %v2216, %v2220
        %v2222 = vmul.f32 %v2203, %v2221
        %vm2223 = vcmp.eq.f32.partialorder %v2203, inf
        %v2224 = vsel %vm2223, %v2203, %v2222
        %vm2225 = vcmp.eq.f32.partialorder %v2203, 0.0
        %v2226 = vand.u32 %v2203, 2147483648
        %v2227 = vsel %vm2225, %v2226, %v2224
        %v2228 = vadd.f32 %v2215, 1e-06
        %v2229 = vadd.f32 %v2227, 1e-06
        %v2230 = vrcp.pop %v2228
        %v2231 = vmul.f32 %v2228, %v2230
        %v2232 = vsub.f32 1.0, %v2231
        %v2233 = vmul.f32 %v2230, %v2232
        %v2234 = vadd.f32 %v2230, %v2233
        %vm2235 = vweird.f32 %v2228
        %vm2236 = vweird.f32 %v2230
        %vm2237 = vmor %vm2235, %vm2236
        %v2238 = vsel %vm2237, %v2230, %v2234
        %v2239 = vand.u32 2147483647, %v2228
        %vm2240 = vcmp.eq.f32.partialorder %v2239, 8.507059e+37
        %v2241 = vand.u32 %v2228, 2147483648
        %v2242 = vor.u32 1.1754944e-38, %v2241
        %v2243 = vsel %vm2240, %v2242, %v2238
        %v2244 = vmul.f32 1.0, %v2243
        %v2245 = vrcp.pop %v2229
        %v2246 = vmul.f32 %v2229, %v2245
        %v2247 = vsub.f32 1.0, %v2246
        %v2248 = vmul.f32 %v2245, %v2247
        %v2249 = vadd.f32 %v2245, %v2248
        %vm2250 = vweird.f32 %v2229
        %vm2251 = vweird.f32 %v2245
        %vm2252 = vmor %vm2250, %vm2251
        %v2253 = vsel %vm2252, %v2245, %v2249
        %v2254 = vand.u32 2147483647, %v2229
        %vm2255 = vcmp.eq.f32.partialorder %v2254, 8.507059e+37
        %v2256 = vand.u32 %v2229, 2147483648
        %v2257 = vor.u32 1.1754944e-38, %v2256
        %v2258 = vsel %vm2255, %v2257, %v2253
        %v2259 = vmul.f32 1.0, %v2258
        %v2260 = vperm.slane %v1385, 0
        %v2261 = vmul.f32 %v2260, %v2192
        %v2262 = vmul.f32 %v2260, %v2193
        %v2263 = vmul.f32 %v2261, %v2244
        %v2264 = vmul.f32 %v2262, %v2259
        %v2265 = vperm.slane %v1386, 0
        %v2266 = vadd.f32 %v2263, %v2265
        %v2267 = vadd.f32 %v2264, %v2265
        %2268 = vst.msk [vmem:[%s417] sm:$0xff] %vm468, %v2266
        %2269 = vst.msk [vmem:[%s417 + $0x8] sm:$0xff] %vm468, %v2267
        %v2270 = vld [vmem:[#allocation10] sm:$0xff]
        %v2271 = vld [vmem:[#allocation10 + $0x8] sm:$0xff]
        %v2272 = vld [vmem:[#allocation10 + $0x10] sm:$0xff]
        %v2273 = vld [vmem:[#allocation10 + $0x18] sm:$0xff]
        %v2274 = vld [vmem:[#allocation10 + $0x20] sm:$0xff]
        %v2275 = vld [vmem:[#allocation10 + $0x28] sm:$0xff]
        %v2276 = vld [vmem:[#allocation10 + $0x30] sm:$0xff]
        %v2277 = vld [vmem:[#allocation10 + $0x38] sm:$0xff]
        %v2278 = vld [vmem:[#allocation10 + $0x40] sm:$0xff]
        %v2279 = vld [vmem:[#allocation10 + $0x48] sm:$0xff]
        %v2280 = vld [vmem:[#allocation10 + $0x50] sm:$0xff]
        %v2281 = vld [vmem:[#allocation10 + $0x58] sm:$0xff]
        %v2282 = vld [vmem:[#allocation10 + $0x60] sm:$0xff]
        %v2283 = vld [vmem:[#allocation10 + $0x68] sm:$0xff]
        %v2284 = vld [vmem:[#allocation10 + $0x70] sm:$0xff]
        %v2285 = vld [vmem:[#allocation10 + $0x78] sm:$0xff]
        %v2286 = vld [vmem:[#allocation10 + $0x80] sm:$0xff]
        %v2287 = vld [vmem:[#allocation10 + $0x88] sm:$0xff]
        %v2288 = vld [vmem:[#allocation10 + $0x90] sm:$0xff]
        %v2289 = vld [vmem:[#allocation10 + $0x98] sm:$0xff]
        %v2290 = vld [vmem:[#allocation10 + $0xa0] sm:$0xff]
        %v2291 = vld [vmem:[#allocation10 + $0xa8] sm:$0xff]
        %v2292 = vld [vmem:[#allocation10 + $0xb0] sm:$0xff]
        %v2293 = vld [vmem:[#allocation10 + $0xb8] sm:$0xff]
        %v2294 = vld [vmem:[#allocation10 + $0xc0] sm:$0xff]
        %v2295 = vld [vmem:[#allocation10 + $0xc8] sm:$0xff]
        %v2296 = vld [vmem:[#allocation10 + $0xd0] sm:$0xff]
        %v2297 = vld [vmem:[#allocation10 + $0xd8] sm:$0xff]
        %v2298 = vld [vmem:[#allocation10 + $0xe0] sm:$0x1]
        %v2299 = vld [vmem:[#allocation10 + $0xe1] sm:$0x1]
        %v2300 = vld [vmem:[#allocation10 + $0xe2] sm:$0x1]
        %v2301 = vld [vmem:[#allocation10 + $0xe3] sm:$0x1]
        %v2302 = vld [vmem:[#allocation10 + $0xe4] sm:$0x1]
        %v2303 = vld [vmem:[#allocation10 + $0xe5] sm:$0x1]
        %v2304 = vld [vmem:[#allocation10 + $0xe6] sm:$0x1]
        %v2305 = vld [vmem:[#allocation10 + $0xe7] sm:$0x1]
        %v2306 = vld [vmem:[#allocation10 + $0xe8] sm:$0x1]
        %v2307 = vld [vmem:[#allocation10 + $0xe9] sm:$0x1]
        %v2308 = vld [vmem:[#allocation10 + $0xea] sm:$0x1]
        %v2309 = vld [vmem:[#allocation10 + $0xeb] sm:$0x1]
        %v2310 = vperm.slane %v2298, 0
        %v2312 = vsel %vm468, %v430, 0
        %2314 = vmatpush.msra.mxu0 0.0
        %2315 = vmatpush.msra.mxu0 0.0
        %2316 = vmatpush.msra.mxu0 0.0
        %2317 = vmatpush.msra.mxu0 0.0
        %2318 = vmatpush.msra.mxu0 0.0
        %2319 = vmatpush.msra.mxu0 0.0
        %2320 = vmatpush.msra.mxu0 0.0
        %2321 = vmatpush.msra.mxu0 0.0
        %2322 = vmatpush.msra.mxu0 0.0
        %2323 = vmatpush.msra.mxu0 0.0
        %2324 = vmatpush.msra.mxu0 0.0
        %2325 = vmatpush.msra.mxu0 0.0
        %2326 = vmatpush.msra.mxu0 %v2273
        %2327 = vmatpush.msra.mxu0 %v2272
        %2328 = vmatpush.msra.mxu0 %v2271
        %2329 = vmatpush.msra.mxu0 %v2270
        %2330 = vmatmul.f32.gmra.mxu0 %v2312
        %v2331 = vpop.f32.mrf.mxu0
        %v2332 = vadd.f32 %v2310, %v2331
        %2333 = vdwg.mxu0
        %2335 = vrot.lane.b32.xlu0 %v2332, 96
        %v2336 = vpop.permute.xlu0 %2335
        %v2337 = vsel %vm504, %v2332, 0
        %v2339 = vsel %vm504, %v2336, 0
        %2341 = vmatpush.xpose.msra.mxu0 0.0
        %2342 = vmatpush.xpose.msra.mxu0 0.0
        %2343 = vmatpush.xpose.msra.mxu0 0.0
        %2344 = vmatpush.xpose.msra.mxu0 0.0
        %2345 = vmatpush.xpose.msra.mxu0 0.0
        %2346 = vmatpush.xpose.msra.mxu0 0.0
        %2347 = vmatpush.xpose.msra.mxu0 0.0
        %2348 = vmatpush.xpose.msra.mxu0 0.0
        %2349 = vmatpush.xpose.msra.mxu0 0.0
        %2350 = vmatpush.xpose.msra.mxu0 0.0
        %2351 = vmatpush.xpose.msra.mxu0 0.0
        %2352 = vmatpush.xpose.msra.mxu0 0.0
        %2353 = vmatpush.xpose.msra.mxu0 0.0
        %2354 = vmatpush.xpose.msra.mxu0 0.0
        %2355 = vmatpush.xpose.msra.mxu0 0.0
        %2356 = vmatpush.xpose.msra.mxu0 %v2339
        %2357 = vmatmul.f32.gmra.mxu0 %v2337
        %v2358 = vpop.f32.mrf.mxu0
        %v2359 = vadd.f32 %v437, %v2358
        %2360 = vdwg.mxu0
        %v2361 = vsel %vm504, %v2359, -inf
        %2362 = vmax.xlane.f32.xlu0 %v2361
        %v2363 = vpop.xlane.xlu0 %2362
        %v2364 = vsub.f32 %v2359, %v2363
        %v2365 = vmul.f32 %v2364, 1.442695
        %v2366 = vpow.pop %v2365
        %v2367 = vsel %vm504, %v2366, 0.0
        %2368 = vadd.xlane.f32.xlu0 %v2367
        %v2369 = vpop.xlane.xlu0 %2368
        %v2370 = vrcp.pop %v2369
        %v2371 = vmul.f32 %v2369, %v2370
        %v2372 = vsub.f32 1.0, %v2371
        %v2373 = vmul.f32 %v2370, %v2372
        %v2374 = vadd.f32 %v2370, %v2373
        %vm2375 = vweird.f32 %v2369
        %vm2376 = vweird.f32 %v2370
        %vm2377 = vmor %vm2375, %vm2376
        %v2378 = vsel %vm2377, %v2370, %v2374
        %v2379 = vand.u32 2147483647, %v2369
        %vm2380 = vcmp.eq.f32.partialorder %v2379, 8.507059e+37
        %v2381 = vand.u32 %v2369, 2147483648
        %v2382 = vor.u32 1.1754944e-38, %v2381
        %v2383 = vsel %vm2380, %v2382, %v2378
        %v2384 = vmul.f32 1.0, %v2383
        %v2385 = vmul.f32 %v2366, %v2384
        %2386 = vrot.lane.b32.xlu0 %v2332, 64
        %v2387 = vpop.permute.xlu0 %2386
        %v2390 = vsel %vm504, %v2385, 0
        %2392 = vmatpush.msra.mxu0 0.0
        %2393 = vmatpush.msra.mxu0 0.0
        %2394 = vmatpush.msra.mxu0 0.0
        %2395 = vmatpush.msra.mxu0 0.0
        %2396 = vmatpush.msra.mxu0 0.0
        %2397 = vmatpush.msra.mxu0 0.0
        %2398 = vmatpush.msra.mxu0 0.0
        %2399 = vmatpush.msra.mxu0 0.0
        %2400 = vmatpush.msra.mxu0 0.0
        %2401 = vmatpush.msra.mxu0 0.0
        %2402 = vmatpush.msra.mxu0 0.0
        %2403 = vmatpush.msra.mxu0 0.0
        %2404 = vmatpush.msra.mxu0 0.0
        %2405 = vmatpush.msra.mxu0 0.0
        %2406 = vmatpush.msra.mxu0 0.0
        %2407 = vmatpush.msra.mxu0 %v2387
        %2408 = vmatmul.f32.gmra.mxu0 %v2390
        %v2409 = vpop.f32.mrf.mxu0
        %v2410 = vadd.f32 0.0, %v2409
        %2411 = vdwg.mxu0
        %2412 = vrot.lane.b32.xlu0 %v2332, 120
        %v2413 = vpop.permute.xlu0 %2412
        %2414 = vrot.lane.b32.xlu0 %v2332, 88
        %v2415 = vpop.permute.xlu0 %2414
        %v2416 = vsel %vm504, %v2413, 0
        %v2418 = vsel %vm504, %v2415, 0
        %2420 = vmatpush.xpose.msra.mxu0 0.0
        %2421 = vmatpush.xpose.msra.mxu0 0.0
        %2422 = vmatpush.xpose.msra.mxu0 0.0
        %2423 = vmatpush.xpose.msra.mxu0 0.0
        %2424 = vmatpush.xpose.msra.mxu0 0.0
        %2425 = vmatpush.xpose.msra.mxu0 0.0
        %2426 = vmatpush.xpose.msra.mxu0 0.0
        %2427 = vmatpush.xpose.msra.mxu0 0.0
        %2428 = vmatpush.xpose.msra.mxu0 0.0
        %2429 = vmatpush.xpose.msra.mxu0 0.0
        %2430 = vmatpush.xpose.msra.mxu0 0.0
        %2431 = vmatpush.xpose.msra.mxu0 0.0
        %2432 = vmatpush.xpose.msra.mxu0 0.0
        %2433 = vmatpush.xpose.msra.mxu0 0.0
        %2434 = vmatpush.xpose.msra.mxu0 0.0
        %2435 = vmatpush.xpose.msra.mxu0 %v2418
        %2436 = vmatmul.f32.gmra.mxu0 %v2416
        %v2437 = vpop.f32.mrf.mxu0
        %v2438 = vadd.f32 %v437, %v2437
        %2439 = vdwg.mxu0
        %v2440 = vsel %vm504, %v2438, -inf
        %2441 = vmax.xlane.f32.xlu0 %v2440
        %v2442 = vpop.xlane.xlu0 %2441
        %v2443 = vsub.f32 %v2438, %v2442
        %v2444 = vmul.f32 %v2443, 1.442695
        %v2445 = vpow.pop %v2444
        %v2446 = vsel %vm504, %v2445, 0.0
        %2447 = vadd.xlane.f32.xlu0 %v2446
        %v2448 = vpop.xlane.xlu0 %2447
        %v2449 = vrcp.pop %v2448
        %v2450 = vmul.f32 %v2448, %v2449
        %v2451 = vsub.f32 1.0, %v2450
        %v2452 = vmul.f32 %v2449, %v2451
        %v2453 = vadd.f32 %v2449, %v2452
        %vm2454 = vweird.f32 %v2448
        %vm2455 = vweird.f32 %v2449
        %vm2456 = vmor %vm2454, %vm2455
        %v2457 = vsel %vm2456, %v2449, %v2453
        %v2458 = vand.u32 2147483647, %v2448
        %vm2459 = vcmp.eq.f32.partialorder %v2458, 8.507059e+37
        %v2460 = vand.u32 %v2448, 2147483648
        %v2461 = vor.u32 1.1754944e-38, %v2460
        %v2462 = vsel %vm2459, %v2461, %v2457
        %v2463 = vmul.f32 1.0, %v2462
        %v2464 = vmul.f32 %v2445, %v2463
        %2465 = vrot.lane.b32.xlu0 %v2332, 56
        %v2466 = vpop.permute.xlu0 %2465
        %v2469 = vsel %vm504, %v2464, 0
        %2471 = vmatpush.msra.mxu0 0.0
        %2472 = vmatpush.msra.mxu0 0.0
        %2473 = vmatpush.msra.mxu0 0.0
        %2474 = vmatpush.msra.mxu0 0.0
        %2475 = vmatpush.msra.mxu0 0.0
        %2476 = vmatpush.msra.mxu0 0.0
        %2477 = vmatpush.msra.mxu0 0.0
        %2478 = vmatpush.msra.mxu0 0.0
        %2479 = vmatpush.msra.mxu0 0.0
        %2480 = vmatpush.msra.mxu0 0.0
        %2481 = vmatpush.msra.mxu0 0.0
        %2482 = vmatpush.msra.mxu0 0.0
        %2483 = vmatpush.msra.mxu0 0.0
        %2484 = vmatpush.msra.mxu0 0.0
        %2485 = vmatpush.msra.mxu0 0.0
        %2486 = vmatpush.msra.mxu0 %v2466
        %2487 = vmatmul.f32.gmra.mxu0 %v2469
        %v2488 = vpop.f32.mrf.mxu0
        %v2489 = vadd.f32 0.0, %v2488
        %2490 = vdwg.mxu0
        %v2492 = vsel %vm504, %v2489, 0
        %2494 = vmatpush.msra.mxu0 0.0
        %2495 = vmatpush.msra.mxu0 0.0
        %2496 = vmatpush.msra.mxu0 0.0
        %2497 = vmatpush.msra.mxu0 0.0
        %2498 = vmatpush.msra.mxu0 0.0
        %2499 = vmatpush.msra.mxu0 0.0
        %2500 = vmatpush.msra.mxu0 0.0
        %2501 = vmatpush.msra.mxu0 0.0
        %2502 = vmatpush.msra.mxu0 0.0
        %2503 = vmatpush.msra.mxu0 0.0
        %2504 = vmatpush.msra.mxu0 0.0
        %2505 = vmatpush.msra.mxu0 0.0
        %2506 = vmatpush.msra.mxu0 0.0
        %2507 = vmatpush.msra.mxu0 0.0
        %2508 = vmatpush.msra.mxu0 0.0
        %2509 = vmatpush.msra.mxu0 %v2275
        %2510 = vmatmul.f32.gmra.mxu0 %v2492
        %v2511 = vpop.f32.mrf.mxu0
        %v2512 = vadd.f32 0.0, %v2511
        %2513 = vdwg.mxu0
        %v2515 = vsel %vm504, %v2410, 0
        %2517 = vmatpush.msra.mxu0 0.0
        %2518 = vmatpush.msra.mxu0 0.0
        %2519 = vmatpush.msra.mxu0 0.0
        %2520 = vmatpush.msra.mxu0 0.0
        %2521 = vmatpush.msra.mxu0 0.0
        %2522 = vmatpush.msra.mxu0 0.0
        %2523 = vmatpush.msra.mxu0 0.0
        %2524 = vmatpush.msra.mxu0 0.0
        %2525 = vmatpush.msra.mxu0 0.0
        %2526 = vmatpush.msra.mxu0 0.0
        %2527 = vmatpush.msra.mxu0 0.0
        %2528 = vmatpush.msra.mxu0 0.0
        %2529 = vmatpush.msra.mxu0 0.0
        %2530 = vmatpush.msra.mxu0 0.0
        %2531 = vmatpush.msra.mxu0 0.0
        %2532 = vmatpush.msra.mxu0 %v2274
        %2533 = vmatmul.f32.gmra.mxu0 %v2515
        %v2534 = vpop.f32.mrf.mxu0
        %v2535 = vadd.f32 %v2512, %v2534
        %2536 = vdwg.mxu0
        %2537 = vrot.lane.b32.xlu0 %v2332, 112
        %v2538 = vpop.permute.xlu0 %2537
        %2539 = vrot.lane.b32.xlu0 %v2332, 80
        %v2540 = vpop.permute.xlu0 %2539
        %v2541 = vsel %vm504, %v2538, 0
        %v2543 = vsel %vm504, %v2540, 0
        %2545 = vmatpush.xpose.msra.mxu0 0.0
        %2546 = vmatpush.xpose.msra.mxu0 0.0
        %2547 = vmatpush.xpose.msra.mxu0 0.0
        %2548 = vmatpush.xpose.msra.mxu0 0.0
        %2549 = vmatpush.xpose.msra.mxu0 0.0
        %2550 = vmatpush.xpose.msra.mxu0 0.0
        %2551 = vmatpush.xpose.msra.mxu0 0.0
        %2552 = vmatpush.xpose.msra.mxu0 0.0
        %2553 = vmatpush.xpose.msra.mxu0 0.0
        %2554 = vmatpush.xpose.msra.mxu0 0.0
        %2555 = vmatpush.xpose.msra.mxu0 0.0
        %2556 = vmatpush.xpose.msra.mxu0 0.0
        %2557 = vmatpush.xpose.msra.mxu0 0.0
        %2558 = vmatpush.xpose.msra.mxu0 0.0
        %2559 = vmatpush.xpose.msra.mxu0 0.0
        %2560 = vmatpush.xpose.msra.mxu0 %v2543
        %2561 = vmatmul.f32.gmra.mxu0 %v2541
        %v2562 = vpop.f32.mrf.mxu0
        %v2563 = vadd.f32 %v437, %v2562
        %2564 = vdwg.mxu0
        %v2565 = vsel %vm504, %v2563, -inf
        %2566 = vmax.xlane.f32.xlu0 %v2565
        %v2567 = vpop.xlane.xlu0 %2566
        %v2568 = vsub.f32 %v2563, %v2567
        %v2569 = vmul.f32 %v2568, 1.442695
        %v2570 = vpow.pop %v2569
        %v2571 = vsel %vm504, %v2570, 0.0
        %2572 = vadd.xlane.f32.xlu0 %v2571
        %v2573 = vpop.xlane.xlu0 %2572
        %v2574 = vrcp.pop %v2573
        %v2575 = vmul.f32 %v2573, %v2574
        %v2576 = vsub.f32 1.0, %v2575
        %v2577 = vmul.f32 %v2574, %v2576
        %v2578 = vadd.f32 %v2574, %v2577
        %vm2579 = vweird.f32 %v2573
        %vm2580 = vweird.f32 %v2574
        %vm2581 = vmor %vm2579, %vm2580
        %v2582 = vsel %vm2581, %v2574, %v2578
        %v2583 = vand.u32 2147483647, %v2573
        %vm2584 = vcmp.eq.f32.partialorder %v2583, 8.507059e+37
        %v2585 = vand.u32 %v2573, 2147483648
        %v2586 = vor.u32 1.1754944e-38, %v2585
        %v2587 = vsel %vm2584, %v2586, %v2582
        %v2588 = vmul.f32 1.0, %v2587
        %v2589 = vmul.f32 %v2570, %v2588
        %2590 = vrot.lane.b32.xlu0 %v2332, 48
        %v2591 = vpop.permute.xlu0 %2590
        %v2594 = vsel %vm504, %v2589, 0
        %2596 = vmatpush.msra.mxu0 0.0
        %2597 = vmatpush.msra.mxu0 0.0
        %2598 = vmatpush.msra.mxu0 0.0
        %2599 = vmatpush.msra.mxu0 0.0
        %2600 = vmatpush.msra.mxu0 0.0
        %2601 = vmatpush.msra.mxu0 0.0
        %2602 = vmatpush.msra.mxu0 0.0
        %2603 = vmatpush.msra.mxu0 0.0
        %2604 = vmatpush.msra.mxu0 0.0
        %2605 = vmatpush.msra.mxu0 0.0
        %2606 = vmatpush.msra.mxu0 0.0
        %2607 = vmatpush.msra.mxu0 0.0
        %2608 = vmatpush.msra.mxu0 0.0
        %2609 = vmatpush.msra.mxu0 0.0
        %2610 = vmatpush.msra.mxu0 0.0
        %2611 = vmatpush.msra.mxu0 %v2591
        %2612 = vmatmul.f32.gmra.mxu0 %v2594
        %v2613 = vpop.f32.mrf.mxu0
        %v2614 = vadd.f32 0.0, %v2613
        %2615 = vdwg.mxu0
        %v2617 = vsel %vm504, %v2614, 0
        %2619 = vmatpush.msra.mxu0 0.0
        %2620 = vmatpush.msra.mxu0 0.0
        %2621 = vmatpush.msra.mxu0 0.0
        %2622 = vmatpush.msra.mxu0 0.0
        %2623 = vmatpush.msra.mxu0 0.0
        %2624 = vmatpush.msra.mxu0 0.0
        %2625 = vmatpush.msra.mxu0 0.0
        %2626 = vmatpush.msra.mxu0 0.0
        %2627 = vmatpush.msra.mxu0 0.0
        %2628 = vmatpush.msra.mxu0 0.0
        %2629 = vmatpush.msra.mxu0 0.0
        %2630 = vmatpush.msra.mxu0 0.0
        %2631 = vmatpush.msra.mxu0 0.0
        %2632 = vmatpush.msra.mxu0 0.0
        %2633 = vmatpush.msra.mxu0 0.0
        %2634 = vmatpush.msra.mxu0 %v2276
        %2635 = vmatmul.f32.gmra.mxu0 %v2617
        %v2636 = vpop.f32.mrf.mxu0
        %v2637 = vadd.f32 0.0, %v2636
        %2638 = vdwg.mxu0
        %v2639 = vadd.f32 %v2535, %v2637
        %2640 = vrot.lane.b32.xlu0 %v2332, 104
        %v2641 = vpop.permute.xlu0 %2640
        %2642 = vrot.lane.b32.xlu0 %v2332, 72
        %v2643 = vpop.permute.xlu0 %2642
        %v2644 = vsel %vm504, %v2641, 0
        %v2646 = vsel %vm504, %v2643, 0
        %2648 = vmatpush.xpose.msra.mxu0 0.0
        %2649 = vmatpush.xpose.msra.mxu0 0.0
        %2650 = vmatpush.xpose.msra.mxu0 0.0
        %2651 = vmatpush.xpose.msra.mxu0 0.0
        %2652 = vmatpush.xpose.msra.mxu0 0.0
        %2653 = vmatpush.xpose.msra.mxu0 0.0
        %2654 = vmatpush.xpose.msra.mxu0 0.0
        %2655 = vmatpush.xpose.msra.mxu0 0.0
        %2656 = vmatpush.xpose.msra.mxu0 0.0
        %2657 = vmatpush.xpose.msra.mxu0 0.0
        %2658 = vmatpush.xpose.msra.mxu0 0.0
        %2659 = vmatpush.xpose.msra.mxu0 0.0
        %2660 = vmatpush.xpose.msra.mxu0 0.0
        %2661 = vmatpush.xpose.msra.mxu0 0.0
        %2662 = vmatpush.xpose.msra.mxu0 0.0
        %2663 = vmatpush.xpose.msra.mxu0 %v2646
        %2664 = vmatmul.f32.gmra.mxu0 %v2644
        %v2665 = vpop.f32.mrf.mxu0
        %v2666 = vadd.f32 %v437, %v2665
        %2667 = vdwg.mxu0
        %v2668 = vsel %vm504, %v2666, -inf
        %2669 = vmax.xlane.f32.xlu0 %v2668
        %v2670 = vpop.xlane.xlu0 %2669
        %v2671 = vsub.f32 %v2666, %v2670
        %v2672 = vmul.f32 %v2671, 1.442695
        %v2673 = vpow.pop %v2672
        %v2674 = vsel %vm504, %v2673, 0.0
        %2675 = vadd.xlane.f32.xlu0 %v2674
        %v2676 = vpop.xlane.xlu0 %2675
        %v2677 = vrcp.pop %v2676
        %v2678 = vmul.f32 %v2676, %v2677
        %v2679 = vsub.f32 1.0, %v2678
        %v2680 = vmul.f32 %v2677, %v2679
        %v2681 = vadd.f32 %v2677, %v2680
        %vm2682 = vweird.f32 %v2676
        %vm2683 = vweird.f32 %v2677
        %vm2684 = vmor %vm2682, %vm2683
        %v2685 = vsel %vm2684, %v2677, %v2681
        %v2686 = vand.u32 2147483647, %v2676
        %vm2687 = vcmp.eq.f32.partialorder %v2686, 8.507059e+37
        %v2688 = vand.u32 %v2676, 2147483648
        %v2689 = vor.u32 1.1754944e-38, %v2688
        %v2690 = vsel %vm2687, %v2689, %v2685
        %v2691 = vmul.f32 1.0, %v2690
        %v2692 = vmul.f32 %v2673, %v2691
        %2693 = vrot.lane.b32.xlu0 %v2332, 40
        %v2694 = vpop.permute.xlu0 %2693
        %v2697 = vsel %vm504, %v2692, 0
        %2699 = vmatpush.msra.mxu0 0.0
        %2700 = vmatpush.msra.mxu0 0.0
        %2701 = vmatpush.msra.mxu0 0.0
        %2702 = vmatpush.msra.mxu0 0.0
        %2703 = vmatpush.msra.mxu0 0.0
        %2704 = vmatpush.msra.mxu0 0.0
        %2705 = vmatpush.msra.mxu0 0.0
        %2706 = vmatpush.msra.mxu0 0.0
        %2707 = vmatpush.msra.mxu0 0.0
        %2708 = vmatpush.msra.mxu0 0.0
        %2709 = vmatpush.msra.mxu0 0.0
        %2710 = vmatpush.msra.mxu0 0.0
        %2711 = vmatpush.msra.mxu0 0.0
        %2712 = vmatpush.msra.mxu0 0.0
        %2713 = vmatpush.msra.mxu0 0.0
        %2714 = vmatpush.msra.mxu0 %v2694
        %2715 = vmatmul.f32.gmra.mxu0 %v2697
        %v2716 = vpop.f32.mrf.mxu0
        %v2717 = vadd.f32 0.0, %v2716
        %2718 = vdwg.mxu0
        %v2720 = vsel %vm504, %v2717, 0
        %2722 = vmatpush.msra.mxu0 0.0
        %2723 = vmatpush.msra.mxu0 0.0
        %2724 = vmatpush.msra.mxu0 0.0
        %2725 = vmatpush.msra.mxu0 0.0
        %2726 = vmatpush.msra.mxu0 0.0
        %2727 = vmatpush.msra.mxu0 0.0
        %2728 = vmatpush.msra.mxu0 0.0
        %2729 = vmatpush.msra.mxu0 0.0
        %2730 = vmatpush.msra.mxu0 0.0
        %2731 = vmatpush.msra.mxu0 0.0
        %2732 = vmatpush.msra.mxu0 0.0
        %2733 = vmatpush.msra.mxu0 0.0
        %2734 = vmatpush.msra.mxu0 0.0
        %2735 = vmatpush.msra.mxu0 0.0
        %2736 = vmatpush.msra.mxu0 0.0
        %2737 = vmatpush.msra.mxu0 %v2277
        %2738 = vmatmul.f32.gmra.mxu0 %v2720
        %v2739 = vpop.f32.mrf.mxu0
        %v2740 = vadd.f32 0.0, %v2739
        %2741 = vdwg.mxu0
        %v2742 = vadd.f32 %v2639, %v2740
        %v2743 = vperm.slane %v2299, 0
        %v2744 = vadd.f32 %v2742, %v2743
        %v2745 = vadd.f32 %v430, %v2744
        %v2746 = vsel %vm468, %v2745, 0.0
        %2747 = vadd.xlane.f32.xlu0 %v2746
        %v2748 = vpop.xlane.xlu0 %2747
        %v2749 = vmul.f32 %v2748, %v1131
        %v2750 = vsub.f32 %v2745, %v2749
        %v2751 = vmul.f32 %v2750, %v2750
        %v2752 = vsel %vm468, %v2751, 0.0
        %2753 = vadd.xlane.f32.xlu0 %v2752
        %v2754 = vpop.xlane.xlu0 %2753
        %v2755 = vmul.f32 %v2754, 0.032258064
        %v2756 = vrsqrt.pop %v2755
        %v2757 = vmul.f32 %v2756, %v2755
        %v2758 = vmul.f32 %v2757, %v2756
        %v2759 = vmul.f32 0.5, %v2758
        %v2760 = vsub.f32 1.5, %v2759
        %v2761 = vmul.f32 %v2756, %v2760
        %v2762 = vmul.f32 %v2755, %v2761
        %vm2763 = vcmp.eq.f32.partialorder %v2755, inf
        %v2764 = vsel %vm2763, %v2755, %v2762
        %vm2765 = vcmp.eq.f32.partialorder %v2755, 0.0
        %v2766 = vand.u32 %v2755, 2147483648
        %v2767 = vsel %vm2765, %v2766, %v2764
        %v2768 = vadd.f32 %v2767, 1e-06
        %v2769 = vrcp.pop %v2768
        %v2770 = vmul.f32 %v2768, %v2769
        %v2771 = vsub.f32 1.0, %v2770
        %v2772 = vmul.f32 %v2769, %v2771
        %v2773 = vadd.f32 %v2769, %v2772
        %vm2774 = vweird.f32 %v2768
        %vm2775 = vweird.f32 %v2769
        %vm2776 = vmor %vm2774, %vm2775
        %v2777 = vsel %vm2776, %v2769, %v2773
        %v2778 = vand.u32 2147483647, %v2768
        %vm2779 = vcmp.eq.f32.partialorder %v2778, 8.507059e+37
        %v2780 = vand.u32 %v2768, 2147483648
        %v2781 = vor.u32 1.1754944e-38, %v2780
        %v2782 = vsel %vm2779, %v2781, %v2777
        %v2783 = vmul.f32 1.0, %v2782
        %v2784 = vperm.slane %v2304, 0
        %v2785 = vmul.f32 %v2784, %v2750
        %v2786 = vmul.f32 %v2785, %v2783
        %v2787 = vperm.slane %v2305, 0
        %v2788 = vadd.f32 %v2786, %v2787
        %v2789 = vperm.slane %v2300, 0
        %v2791 = vsel %vm468, %v2788, 0
        %2793 = vmatpush.msra.mxu0 0.0
        %2794 = vmatpush.msra.mxu0 0.0
        %2795 = vmatpush.msra.mxu0 0.0
        %2796 = vmatpush.msra.mxu0 0.0
        %2797 = vmatpush.msra.mxu0 0.0
        %2798 = vmatpush.msra.mxu0 0.0
        %2799 = vmatpush.msra.mxu0 0.0
        %2800 = vmatpush.msra.mxu0 0.0
        %2801 = vmatpush.msra.mxu0 0.0
        %2802 = vmatpush.msra.mxu0 0.0
        %2803 = vmatpush.msra.mxu0 0.0
        %2804 = vmatpush.msra.mxu0 0.0
        %2805 = vmatpush.msra.mxu0 %v2281
        %2806 = vmatpush.msra.mxu0 %v2280
        %2807 = vmatpush.msra.mxu0 %v2279
        %2808 = vmatpush.msra.mxu0 %v2278
        %2809 = vmatmul.f32.gmra.mxu0 %v2791
        %v2810 = vpop.f32.mrf.mxu0
        %v2811 = vadd.f32 %v2789, %v2810
        %2812 = vdwg.mxu0
        %2817 = vrot.lane.b32.xlu0 %v2278, 96
        %v2818 = vpop.permute.xlu0 %2817
        %2819 = vrot.lane.b32.xlu0 %v2279, 96
        %v2820 = vpop.permute.xlu0 %2819
        %2821 = vrot.lane.b32.xlu0 %v2280, 96
        %v2822 = vpop.permute.xlu0 %2821
        %2823 = vrot.lane.b32.xlu0 %v2281, 96
        %v2824 = vpop.permute.xlu0 %2823
        %2830 = vrot.lane.b32.xlu0 %v2789, 96
        %v2831 = vpop.permute.xlu0 %2830
        %v2834 = vsel %vm468, %v2266, 0
        %v2837 = vsel %vm468, %v2267, 0
        %2839 = vmatpush.msra.mxu0 0.0
        %2840 = vmatpush.msra.mxu0 0.0
        %2841 = vmatpush.msra.mxu0 0.0
        %2842 = vmatpush.msra.mxu0 0.0
        %2843 = vmatpush.msra.mxu0 0.0
        %2844 = vmatpush.msra.mxu0 0.0
        %2845 = vmatpush.msra.mxu0 0.0
        %2846 = vmatpush.msra.mxu0 0.0
        %2847 = vmatpush.msra.mxu0 0.0
        %2848 = vmatpush.msra.mxu0 0.0
        %2849 = vmatpush.msra.mxu0 0.0
        %2850 = vmatpush.msra.mxu0 0.0
        %2851 = vmatpush.msra.mxu0 %v2824
        %2852 = vmatpush.msra.mxu0 %v2822
        %2853 = vmatpush.msra.mxu0 %v2820
        %2854 = vmatpush.msra.mxu0 %v2818
        %2855 = vmatmul.f32.gmra.mxu0 %v2834
        %v2856 = vpop.f32.mrf.mxu0
        %v2857 = vadd.f32 %v2831, %v2856
        %2858 = vmatmul.f32.gmra.mxu0 %v2837
        %v2859 = vpop.f32.mrf.mxu0
        %v2860 = vadd.f32 %v2831, %v2859
        %2861 = vdwg.mxu0
        %v2863 = vsel %vm504, %v2811, 0
        %v2866 = vsel %vm504, %v2857, 0
        %v2869 = vsel %vm504, %v2860, 0
        %2871 = vmatpush.xpose.msra.mxu0 0.0
        %2872 = vmatpush.xpose.msra.mxu0 0.0
        %2873 = vmatpush.xpose.msra.mxu0 0.0
        %2874 = vmatpush.xpose.msra.mxu0 0.0
        %2875 = vmatpush.xpose.msra.mxu0 0.0
        %2876 = vmatpush.xpose.msra.mxu0 0.0
        %2877 = vmatpush.xpose.msra.mxu0 0.0
        %2878 = vmatpush.xpose.msra.mxu0 0.0
        %2879 = vmatpush.xpose.msra.mxu0 0.0
        %2880 = vmatpush.xpose.msra.mxu0 0.0
        %2881 = vmatpush.xpose.msra.mxu0 0.0
        %2882 = vmatpush.xpose.msra.mxu0 0.0
        %2883 = vmatpush.xpose.msra.mxu0 0.0
        %2884 = vmatpush.xpose.msra.mxu0 0.0
        %2885 = vmatpush.xpose.msra.mxu0 %v2869
        %2886 = vmatpush.xpose.msra.mxu0 %v2866
        %2887 = vmatmul.f32.gmra.mxu0 %v2863
        %v2888 = vpop.f32.mrf.mxu0
        %v2889 = vadd.f32 %v434, %v2888
        %2890 = vdwg.mxu0
        %v2891 = vsel %vm536, %v2889, -inf
        %2892 = vmax.xlane.f32.xlu0 %v2891
        %v2893 = vpop.xlane.xlu0 %2892
        %v2894 = vsub.f32 %v2889, %v2893
        %v2895 = vmul.f32 %v2894, 1.442695
        %v2896 = vpow.pop %v2895
        %v2897 = vsel %vm536, %v2896, 0.0
        %2898 = vadd.xlane.f32.xlu0 %v2897
        %v2899 = vpop.xlane.xlu0 %2898
        %v2900 = vrcp.pop %v2899
        %v2901 = vmul.f32 %v2899, %v2900
        %v2902 = vsub.f32 1.0, %v2901
        %v2903 = vmul.f32 %v2900, %v2902
        %v2904 = vadd.f32 %v2900, %v2903
        %vm2905 = vweird.f32 %v2899
        %vm2906 = vweird.f32 %v2900
        %vm2907 = vmor %vm2905, %vm2906
        %v2908 = vsel %vm2907, %v2900, %v2904
        %v2909 = vand.u32 2147483647, %v2899
        %vm2910 = vcmp.eq.f32.partialorder %v2909, 8.507059e+37
        %v2911 = vand.u32 %v2899, 2147483648
        %v2912 = vor.u32 1.1754944e-38, %v2911
        %v2913 = vsel %vm2910, %v2912, %v2908
        %v2914 = vmul.f32 1.0, %v2913
        %v2915 = vmul.f32 %v2896, %v2914
        %2916 = vrot.lane.b32.xlu0 %v2857, 96
        %v2917 = vpop.permute.xlu0 %2916
        %2918 = vrot.lane.b32.xlu0 %v2860, 96
        %v2919 = vpop.permute.xlu0 %2918
        %v2923 = vsel %vm536, %v2915, 0
        %2925 = vmatpush.msra.mxu0 0.0
        %2926 = vmatpush.msra.mxu0 0.0
        %2927 = vmatpush.msra.mxu0 0.0
        %2928 = vmatpush.msra.mxu0 0.0
        %2929 = vmatpush.msra.mxu0 0.0
        %2930 = vmatpush.msra.mxu0 0.0
        %2931 = vmatpush.msra.mxu0 0.0
        %2932 = vmatpush.msra.mxu0 0.0
        %2933 = vmatpush.msra.mxu0 0.0
        %2934 = vmatpush.msra.mxu0 0.0
        %2935 = vmatpush.msra.mxu0 0.0
        %2936 = vmatpush.msra.mxu0 0.0
        %2937 = vmatpush.msra.mxu0 0.0
        %2938 = vmatpush.msra.mxu0 0.0
        %2939 = vmatpush.msra.mxu0 %v2919
        %2940 = vmatpush.msra.mxu0 %v2917
        %2941 = vmatmul.f32.gmra.mxu0 %v2923
        %v2942 = vpop.f32.mrf.mxu0
        %v2943 = vadd.f32 0.0, %v2942
        %2944 = vdwg.mxu0
        %2945 = vrot.lane.b32.xlu0 %v2811, 120
        %v2946 = vpop.permute.xlu0 %2945
        %2947 = vrot.lane.b32.xlu0 %v2857, 120
        %v2948 = vpop.permute.xlu0 %2947
        %2949 = vrot.lane.b32.xlu0 %v2860, 120
        %v2950 = vpop.permute.xlu0 %2949
        %v2951 = vsel %vm504, %v2946, 0
        %v2953 = vsel %vm504, %v2948, 0
        %v2955 = vsel %vm504, %v2950, 0
        %2957 = vmatpush.xpose.msra.mxu0 0.0
        %2958 = vmatpush.xpose.msra.mxu0 0.0
        %2959 = vmatpush.xpose.msra.mxu0 0.0
        %2960 = vmatpush.xpose.msra.mxu0 0.0
        %2961 = vmatpush.xpose.msra.mxu0 0.0
        %2962 = vmatpush.xpose.msra.mxu0 0.0
        %2963 = vmatpush.xpose.msra.mxu0 0.0
        %2964 = vmatpush.xpose.msra.mxu0 0.0
        %2965 = vmatpush.xpose.msra.mxu0 0.0
        %2966 = vmatpush.xpose.msra.mxu0 0.0
        %2967 = vmatpush.xpose.msra.mxu0 0.0
        %2968 = vmatpush.xpose.msra.mxu0 0.0
        %2969 = vmatpush.xpose.msra.mxu0 0.0
        %2970 = vmatpush.xpose.msra.mxu0 0.0
        %2971 = vmatpush.xpose.msra.mxu0 %v2955
        %2972 = vmatpush.xpose.msra.mxu0 %v2953
        %2973 = vmatmul.f32.gmra.mxu0 %v2951
        %v2974 = vpop.f32.mrf.mxu0
        %v2975 = vadd.f32 %v434, %v2974
        %2976 = vdwg.mxu0
        %v2977 = vsel %vm536, %v2975, -inf
        %2978 = vmax.xlane.f32.xlu0 %v2977
        %v2979 = vpop.xlane.xlu0 %2978
        %v2980 = vsub.f32 %v2975, %v2979
        %v2981 = vmul.f32 %v2980, 1.442695
        %v2982 = vpow.pop %v2981
        %v2983 = vsel %vm536, %v2982, 0.0
        %2984 = vadd.xlane.f32.xlu0 %v2983
        %v2985 = vpop.xlane.xlu0 %2984
        %v2986 = vrcp.pop %v2985
        %v2987 = vmul.f32 %v2985, %v2986
        %v2988 = vsub.f32 1.0, %v2987
        %v2989 = vmul.f32 %v2986, %v2988
        %v2990 = vadd.f32 %v2986, %v2989
        %vm2991 = vweird.f32 %v2985
        %vm2992 = vweird.f32 %v2986
        %vm2993 = vmor %vm2991, %vm2992
        %v2994 = vsel %vm2993, %v2986, %v2990
        %v2995 = vand.u32 2147483647, %v2985
        %vm2996 = vcmp.eq.f32.partialorder %v2995, 8.507059e+37
        %v2997 = vand.u32 %v2985, 2147483648
        %v2998 = vor.u32 1.1754944e-38, %v2997
        %v2999 = vsel %vm2996, %v2998, %v2994
        %v3000 = vmul.f32 1.0, %v2999
        %v3001 = vmul.f32 %v2982, %v3000
        %3002 = vrot.lane.b32.xlu0 %v2857, 88
        %v3003 = vpop.permute.xlu0 %3002
        %3004 = vrot.lane.b32.xlu0 %v2860, 88
        %v3005 = vpop.permute.xlu0 %3004
        %v3009 = vsel %vm536, %v3001, 0
        %3011 = vmatpush.msra.mxu0 0.0
        %3012 = vmatpush.msra.mxu0 0.0
        %3013 = vmatpush.msra.mxu0 0.0
        %3014 = vmatpush.msra.mxu0 0.0
        %3015 = vmatpush.msra.mxu0 0.0
        %3016 = vmatpush.msra.mxu0 0.0
        %3017 = vmatpush.msra.mxu0 0.0
        %3018 = vmatpush.msra.mxu0 0.0
        %3019 = vmatpush.msra.mxu0 0.0
        %3020 = vmatpush.msra.mxu0 0.0
        %3021 = vmatpush.msra.mxu0 0.0
        %3022 = vmatpush.msra.mxu0 0.0
        %3023 = vmatpush.msra.mxu0 0.0
        %3024 = vmatpush.msra.mxu0 0.0
        %3025 = vmatpush.msra.mxu0 %v3005
        %3026 = vmatpush.msra.mxu0 %v3003
        %3027 = vmatmul.f32.gmra.mxu0 %v3009
        %v3028 = vpop.f32.mrf.mxu0
        %v3029 = vadd.f32 0.0, %v3028
        %3030 = vdwg.mxu0
        %v3032 = vsel %vm504, %v3029, 0
        %3034 = vmatpush.msra.mxu0 0.0
        %3035 = vmatpush.msra.mxu0 0.0
        %3036 = vmatpush.msra.mxu0 0.0
        %3037 = vmatpush.msra.mxu0 0.0
        %3038 = vmatpush.msra.mxu0 0.0
        %3039 = vmatpush.msra.mxu0 0.0
        %3040 = vmatpush.msra.mxu0 0.0
        %3041 = vmatpush.msra.mxu0 0.0
        %3042 = vmatpush.msra.mxu0 0.0
        %3043 = vmatpush.msra.mxu0 0.0
        %3044 = vmatpush.msra.mxu0 0.0
        %3045 = vmatpush.msra.mxu0 0.0
        %3046 = vmatpush.msra.mxu0 0.0
        %3047 = vmatpush.msra.mxu0 0.0
        %3048 = vmatpush.msra.mxu0 0.0
        %3049 = vmatpush.msra.mxu0 %v2283
        %3050 = vmatmul.f32.gmra.mxu0 %v3032
        %v3051 = vpop.f32.mrf.mxu0
        %v3052 = vadd.f32 0.0, %v3051
        %3053 = vdwg.mxu0
        %v3055 = vsel %vm504, %v2943, 0
        %3057 = vmatpush.msra.mxu0 0.0
        %3058 = vmatpush.msra.mxu0 0.0
        %3059 = vmatpush.msra.mxu0 0.0
        %3060 = vmatpush.msra.mxu0 0.0
        %3061 = vmatpush.msra.mxu0 0.0
        %3062 = vmatpush.msra.mxu0 0.0
        %3063 = vmatpush.msra.mxu0 0.0
        %3064 = vmatpush.msra.mxu0 0.0
        %3065 = vmatpush.msra.mxu0 0.0
        %3066 = vmatpush.msra.mxu0 0.0
        %3067 = vmatpush.msra.mxu0 0.0
        %3068 = vmatpush.msra.mxu0 0.0
        %3069 = vmatpush.msra.mxu0 0.0
        %3070 = vmatpush.msra.mxu0 0.0
        %3071 = vmatpush.msra.mxu0 0.0
        %3072 = vmatpush.msra.mxu0 %v2282
        %3073 = vmatmul.f32.gmra.mxu0 %v3055
        %v3074 = vpop.f32.mrf.mxu0
        %v3075 = vadd.f32 %v3052, %v3074
        %3076 = vdwg.mxu0
        %3077 = vrot.lane.b32.xlu0 %v2811, 112
        %v3078 = vpop.permute.xlu0 %3077
        %3079 = vrot.lane.b32.xlu0 %v2857, 112
        %v3080 = vpop.permute.xlu0 %3079
        %3081 = vrot.lane.b32.xlu0 %v2860, 112
        %v3082 = vpop.permute.xlu0 %3081
        %v3083 = vsel %vm504, %v3078, 0
        %v3085 = vsel %vm504, %v3080, 0
        %v3087 = vsel %vm504, %v3082, 0
        %3089 = vmatpush.xpose.msra.mxu0 0.0
        %3090 = vmatpush.xpose.msra.mxu0 0.0
        %3091 = vmatpush.xpose.msra.mxu0 0.0
        %3092 = vmatpush.xpose.msra.mxu0 0.0
        %3093 = vmatpush.xpose.msra.mxu0 0.0
        %3094 = vmatpush.xpose.msra.mxu0 0.0
        %3095 = vmatpush.xpose.msra.mxu0 0.0
        %3096 = vmatpush.xpose.msra.mxu0 0.0
        %3097 = vmatpush.xpose.msra.mxu0 0.0
        %3098 = vmatpush.xpose.msra.mxu0 0.0
        %3099 = vmatpush.xpose.msra.mxu0 0.0
        %3100 = vmatpush.xpose.msra.mxu0 0.0
        %3101 = vmatpush.xpose.msra.mxu0 0.0
        %3102 = vmatpush.xpose.msra.mxu0 0.0
        %3103 = vmatpush.xpose.msra.mxu0 %v3087
        %3104 = vmatpush.xpose.msra.mxu0 %v3085
        %3105 = vmatmul.f32.gmra.mxu0 %v3083
        %v3106 = vpop.f32.mrf.mxu0
        %v3107 = vadd.f32 %v434, %v3106
        %3108 = vdwg.mxu0
        %v3109 = vsel %vm536, %v3107, -inf
        %3110 = vmax.xlane.f32.xlu0 %v3109
        %v3111 = vpop.xlane.xlu0 %3110
        %v3112 = vsub.f32 %v3107, %v3111
        %v3113 = vmul.f32 %v3112, 1.442695
        %v3114 = vpow.pop %v3113
        %v3115 = vsel %vm536, %v3114, 0.0
        %3116 = vadd.xlane.f32.xlu0 %v3115
        %v3117 = vpop.xlane.xlu0 %3116
        %v3118 = vrcp.pop %v3117
        %v3119 = vmul.f32 %v3117, %v3118
        %v3120 = vsub.f32 1.0, %v3119
        %v3121 = vmul.f32 %v3118, %v3120
        %v3122 = vadd.f32 %v3118, %v3121
        %vm3123 = vweird.f32 %v3117
        %vm3124 = vweird.f32 %v3118
        %vm3125 = vmor %vm3123, %vm3124
        %v3126 = vsel %vm3125, %v3118, %v3122
        %v3127 = vand.u32 2147483647, %v3117
        %vm3128 = vcmp.eq.f32.partialorder %v3127, 8.507059e+37
        %v3129 = vand.u32 %v3117, 2147483648
        %v3130 = vor.u32 1.1754944e-38, %v3129
        %v3131 = vsel %vm3128, %v3130, %v3126
        %v3132 = vmul.f32 1.0, %v3131
        %v3133 = vmul.f32 %v3114, %v3132
        %3134 = vrot.lane.b32.xlu0 %v2857, 80
        %v3135 = vpop.permute.xlu0 %3134
        %3136 = vrot.lane.b32.xlu0 %v2860, 80
        %v3137 = vpop.permute.xlu0 %3136
        %v3141 = vsel %vm536, %v3133, 0
        %3143 = vmatpush.msra.mxu0 0.0
        %3144 = vmatpush.msra.mxu0 0.0
        %3145 = vmatpush.msra.mxu0 0.0
        %3146 = vmatpush.msra.mxu0 0.0
        %3147 = vmatpush.msra.mxu0 0.0
        %3148 = vmatpush.msra.mxu0 0.0
        %3149 = vmatpush.msra.mxu0 0.0
        %3150 = vmatpush.msra.mxu0 0.0
        %3151 = vmatpush.msra.mxu0 0.0
        %3152 = vmatpush.msra.mxu0 0.0
        %3153 = vmatpush.msra.mxu0 0.0
        %3154 = vmatpush.msra.mxu0 0.0
        %3155 = vmatpush.msra.mxu0 0.0
        %3156 = vmatpush.msra.mxu0 0.0
        %3157 = vmatpush.msra.mxu0 %v3137
        %3158 = vmatpush.msra.mxu0 %v3135
        %3159 = vmatmul.f32.gmra.mxu0 %v3141
        %v3160 = vpop.f32.mrf.mxu0
        %v3161 = vadd.f32 0.0, %v3160
        %3162 = vdwg.mxu0
        %v3164 = vsel %vm504, %v3161, 0
        %3166 = vmatpush.msra.mxu0 0.0
        %3167 = vmatpush.msra.mxu0 0.0
        %3168 = vmatpush.msra.mxu0 0.0
        %3169 = vmatpush.msra.mxu0 0.0
        %3170 = vmatpush.msra.mxu0 0.0
        %3171 = vmatpush.msra.mxu0 0.0
        %3172 = vmatpush.msra.mxu0 0.0
        %3173 = vmatpush.msra.mxu0 0.0
        %3174 = vmatpush.msra.mxu0 0.0
        %3175 = vmatpush.msra.mxu0 0.0
        %3176 = vmatpush.msra.mxu0 0.0
        %3177 = vmatpush.msra.mxu0 0.0
        %3178 = vmatpush.msra.mxu0 0.0
        %3179 = vmatpush.msra.mxu0 0.0
        %3180 = vmatpush.msra.mxu0 0.0
        %3181 = vmatpush.msra.mxu0 %v2284
        %3182 = vmatmul.f32.gmra.mxu0 %v3164
        %v3183 = vpop.f32.mrf.mxu0
        %v3184 = vadd.f32 0.0, %v3183
        %3185 = vdwg.mxu0
        %v3186 = vadd.f32 %v3075, %v3184
        %3187 = vrot.lane.b32.xlu0 %v2811, 104
        %v3188 = vpop.permute.xlu0 %3187
        %3189 = vrot.lane.b32.xlu0 %v2857, 104
        %v3190 = vpop.permute.xlu0 %3189
        %3191 = vrot.lane.b32.xlu0 %v2860, 104
        %v3192 = vpop.permute.xlu0 %3191
        %v3193 = vsel %vm504, %v3188, 0
        %v3195 = vsel %vm504, %v3190, 0
        %v3197 = vsel %vm504, %v3192, 0
        %3199 = vmatpush.xpose.msra.mxu0 0.0
        %3200 = vmatpush.xpose.msra.mxu0 0.0
        %3201 = vmatpush.xpose.msra.mxu0 0.0
        %3202 = vmatpush.xpose.msra.mxu0 0.0
        %3203 = vmatpush.xpose.msra.mxu0 0.0
        %3204 = vmatpush.xpose.msra.mxu0 0.0
        %3205 = vmatpush.xpose.msra.mxu0 0.0
        %3206 = vmatpush.xpose.msra.mxu0 0.0
        %3207 = vmatpush.xpose.msra.mxu0 0.0
        %3208 = vmatpush.xpose.msra.mxu0 0.0
        %3209 = vmatpush.xpose.msra.mxu0 0.0
        %3210 = vmatpush.xpose.msra.mxu0 0.0
        %3211 = vmatpush.xpose.msra.mxu0 0.0
        %3212 = vmatpush.xpose.msra.mxu0 0.0
        %3213 = vmatpush.xpose.msra.mxu0 %v3197
        %3214 = vmatpush.xpose.msra.mxu0 %v3195
        %3215 = vmatmul.f32.gmra.mxu0 %v3193
        %v3216 = vpop.f32.mrf.mxu0
        %v3217 = vadd.f32 %v434, %v3216
        %3218 = vdwg.mxu0
        %v3219 = vsel %vm536, %v3217, -inf
        %3220 = vmax.xlane.f32.xlu0 %v3219
        %v3221 = vpop.xlane.xlu0 %3220
        %v3222 = vsub.f32 %v3217, %v3221
        %v3223 = vmul.f32 %v3222, 1.442695
        %v3224 = vpow.pop %v3223
        %v3225 = vsel %vm536, %v3224, 0.0
        %3226 = vadd.xlane.f32.xlu0 %v3225
        %v3227 = vpop.xlane.xlu0 %3226
        %v3228 = vrcp.pop %v3227
        %v3229 = vmul.f32 %v3227, %v3228
        %v3230 = vsub.f32 1.0, %v3229
        %v3231 = vmul.f32 %v3228, %v3230
        %v3232 = vadd.f32 %v3228, %v3231
        %vm3233 = vweird.f32 %v3227
        %vm3234 = vweird.f32 %v3228
        %vm3235 = vmor %vm3233, %vm3234
        %v3236 = vsel %vm3235, %v3228, %v3232
        %v3237 = vand.u32 2147483647, %v3227
        %vm3238 = vcmp.eq.f32.partialorder %v3237, 8.507059e+37
        %v3239 = vand.u32 %v3227, 2147483648
        %v3240 = vor.u32 1.1754944e-38, %v3239
        %v3241 = vsel %vm3238, %v3240, %v3236
        %v3242 = vmul.f32 1.0, %v3241
        %v3243 = vmul.f32 %v3224, %v3242
        %3244 = vrot.lane.b32.xlu0 %v2857, 72
        %v3245 = vpop.permute.xlu0 %3244
        %3246 = vrot.lane.b32.xlu0 %v2860, 72
        %v3247 = vpop.permute.xlu0 %3246
        %v3251 = vsel %vm536, %v3243, 0
        %3253 = vmatpush.msra.mxu0 0.0
        %3254 = vmatpush.msra.mxu0 0.0
        %3255 = vmatpush.msra.mxu0 0.0
        %3256 = vmatpush.msra.mxu0 0.0
        %3257 = vmatpush.msra.mxu0 0.0
        %3258 = vmatpush.msra.mxu0 0.0
        %3259 = vmatpush.msra.mxu0 0.0
        %3260 = vmatpush.msra.mxu0 0.0
        %3261 = vmatpush.msra.mxu0 0.0
        %3262 = vmatpush.msra.mxu0 0.0
        %3263 = vmatpush.msra.mxu0 0.0
        %3264 = vmatpush.msra.mxu0 0.0
        %3265 = vmatpush.msra.mxu0 0.0
        %3266 = vmatpush.msra.mxu0 0.0
        %3267 = vmatpush.msra.mxu0 %v3247
        %3268 = vmatpush.msra.mxu0 %v3245
        %3269 = vmatmul.f32.gmra.mxu0 %v3251
        %v3270 = vpop.f32.mrf.mxu0
        %v3271 = vadd.f32 0.0, %v3270
        %3272 = vdwg.mxu0
        %v3274 = vsel %vm504, %v3271, 0
        %3276 = vmatpush.msra.mxu0 0.0
        %3277 = vmatpush.msra.mxu0 0.0
        %3278 = vmatpush.msra.mxu0 0.0
        %3279 = vmatpush.msra.mxu0 0.0
        %3280 = vmatpush.msra.mxu0 0.0
        %3281 = vmatpush.msra.mxu0 0.0
        %3282 = vmatpush.msra.mxu0 0.0
        %3283 = vmatpush.msra.mxu0 0.0
        %3284 = vmatpush.msra.mxu0 0.0
        %3285 = vmatpush.msra.mxu0 0.0
        %3286 = vmatpush.msra.mxu0 0.0
        %3287 = vmatpush.msra.mxu0 0.0
        %3288 = vmatpush.msra.mxu0 0.0
        %3289 = vmatpush.msra.mxu0 0.0
        %3290 = vmatpush.msra.mxu0 0.0
        %3291 = vmatpush.msra.mxu0 %v2285
        %3292 = vmatmul.f32.gmra.mxu0 %v3274
        %v3293 = vpop.f32.mrf.mxu0
        %v3294 = vadd.f32 0.0, %v3293
        %3295 = vdwg.mxu0
        %v3296 = vadd.f32 %v3186, %v3294
        %v3297 = vperm.slane %v2301, 0
        %v3298 = vadd.f32 %v3296, %v3297
        %v3299 = vadd.f32 %v2788, %v3298
        %v3300 = vsel %vm468, %v3299, 0.0
        %3301 = vadd.xlane.f32.xlu0 %v3300
        %v3302 = vpop.xlane.xlu0 %3301
        %v3303 = vmul.f32 %v3302, %v1131
        %v3304 = vsub.f32 %v3299, %v3303
        %v3305 = vmul.f32 %v3304, %v3304
        %v3306 = vsel %vm468, %v3305, 0.0
        %3307 = vadd.xlane.f32.xlu0 %v3306
        %v3308 = vpop.xlane.xlu0 %3307
        %v3309 = vmul.f32 %v3308, 0.032258064
        %v3310 = vrsqrt.pop %v3309
        %v3311 = vmul.f32 %v3310, %v3309
        %v3312 = vmul.f32 %v3311, %v3310
        %v3313 = vmul.f32 0.5, %v3312
        %v3314 = vsub.f32 1.5, %v3313
        %v3315 = vmul.f32 %v3310, %v3314
        %v3316 = vmul.f32 %v3309, %v3315
        %vm3317 = vcmp.eq.f32.partialorder %v3309, inf
        %v3318 = vsel %vm3317, %v3309, %v3316
        %vm3319 = vcmp.eq.f32.partialorder %v3309, 0.0
        %v3320 = vand.u32 %v3309, 2147483648
        %v3321 = vsel %vm3319, %v3320, %v3318
        %v3322 = vadd.f32 %v3321, 1e-06
        %v3323 = vrcp.pop %v3322
        %v3324 = vmul.f32 %v3322, %v3323
        %v3325 = vsub.f32 1.0, %v3324
        %v3326 = vmul.f32 %v3323, %v3325
        %v3327 = vadd.f32 %v3323, %v3326
        %vm3328 = vweird.f32 %v3322
        %vm3329 = vweird.f32 %v3323
        %vm3330 = vmor %vm3328, %vm3329
        %v3331 = vsel %vm3330, %v3323, %v3327
        %v3332 = vand.u32 2147483647, %v3322
        %vm3333 = vcmp.eq.f32.partialorder %v3332, 8.507059e+37
        %v3334 = vand.u32 %v3322, 2147483648
        %v3335 = vor.u32 1.1754944e-38, %v3334
        %v3336 = vsel %vm3333, %v3335, %v3331
        %v3337 = vmul.f32 1.0, %v3336
        %v3338 = vperm.slane %v2306, 0
        %v3339 = vmul.f32 %v3338, %v3304
        %v3340 = vmul.f32 %v3339, %v3337
        %v3341 = vperm.slane %v2307, 0
        %v3342 = vadd.f32 %v3340, %v3341
        %v3343 = vperm.slane %v2302, 0
        %v3345 = vsel %vm468, %v3342, 0
        %3347 = vmatpush.msra.mxu0 0.0
        %3348 = vmatpush.msra.mxu0 0.0
        %3349 = vmatpush.msra.mxu0 0.0
        %3350 = vmatpush.msra.mxu0 0.0
        %3351 = vmatpush.msra.mxu0 0.0
        %3352 = vmatpush.msra.mxu0 0.0
        %3353 = vmatpush.msra.mxu0 0.0
        %3354 = vmatpush.msra.mxu0 0.0
        %3355 = vmatpush.msra.mxu0 0.0
        %3356 = vmatpush.msra.mxu0 0.0
        %3357 = vmatpush.msra.mxu0 0.0
        %3358 = vmatpush.msra.mxu0 0.0
        %3359 = vmatpush.msra.mxu0 %v2289
        %3360 = vmatpush.msra.mxu0 %v2288
        %3361 = vmatpush.msra.mxu0 %v2287
        %3362 = vmatpush.msra.mxu0 %v2286
        %3363 = vmatmul.f32.gmra.mxu0 %v3345
        %v3364 = vpop.f32.mrf.mxu0
        %v3365 = vadd.f32 %v3343, %v3364
        %3366 = vdwg.mxu0
        %v3367 = vmax.f32 %v3365, 0.0
        %v3368 = vperm.slane %v2303, 0
        %v3370 = vsel %vm1243, %v3367, 0
        %3372 = vmatpush.msra.mxu0 0.0
        %3373 = vmatpush.msra.mxu0 0.0
        %3374 = vmatpush.msra.mxu0 0.0
        %3375 = vmatpush.msra.mxu0 0.0
        %3376 = vmatpush.msra.mxu0 0.0
        %3377 = vmatpush.msra.mxu0 0.0
        %3378 = vmatpush.msra.mxu0 0.0
        %3379 = vmatpush.msra.mxu0 0.0
        %3380 = vmatpush.msra.mxu0 %v2297
        %3381 = vmatpush.msra.mxu0 %v2296
        %3382 = vmatpush.msra.mxu0 %v2295
        %3383 = vmatpush.msra.mxu0 %v2294
        %3384 = vmatpush.msra.mxu0 %v2293
        %3385 = vmatpush.msra.mxu0 %v2292
        %3386 = vmatpush.msra.mxu0 %v2291
        %3387 = vmatpush.msra.mxu0 %v2290
        %3388 = vmatmul.f32.gmra.mxu0 %v3370
        %v3389 = vpop.f32.mrf.mxu0
        %v3390 = vadd.f32 %v3368, %v3389
        %3391 = vdwg.mxu0
        %v3392 = vadd.f32 %v3342, %v3390
        %v3393 = vsel %vm468, %v3392, 0.0
        %3394 = vadd.xlane.f32.xlu0 %v3393
        %v3395 = vpop.xlane.xlu0 %3394
        %v3396 = vmul.f32 %v3395, %v1131
        %v3397 = vsub.f32 %v3392, %v3396
        %v3398 = vmul.f32 %v3397, %v3397
        %v3399 = vsel %vm468, %v3398, 0.0
        %3400 = vadd.xlane.f32.xlu0 %v3399
        %v3401 = vpop.xlane.xlu0 %3400
        %v3402 = vmul.f32 %v3401, 0.032258064
        %v3403 = vrsqrt.pop %v3402
        %v3404 = vmul.f32 %v3403, %v3402
        %v3405 = vmul.f32 %v3404, %v3403
        %v3406 = vmul.f32 0.5, %v3405
        %v3407 = vsub.f32 1.5, %v3406
        %v3408 = vmul.f32 %v3403, %v3407
        %v3409 = vmul.f32 %v3402, %v3408
        %vm3410 = vcmp.eq.f32.partialorder %v3402, inf
        %v3411 = vsel %vm3410, %v3402, %v3409
        %vm3412 = vcmp.eq.f32.partialorder %v3402, 0.0
        %v3413 = vand.u32 %v3402, 2147483648
        %v3414 = vsel %vm3412, %v3413, %v3411
        %v3415 = vadd.f32 %v3414, 1e-06
        %v3416 = vrcp.pop %v3415
        %v3417 = vmul.f32 %v3415, %v3416
        %v3418 = vsub.f32 1.0, %v3417
        %v3419 = vmul.f32 %v3416, %v3418
        %v3420 = vadd.f32 %v3416, %v3419
        %vm3421 = vweird.f32 %v3415
        %vm3422 = vweird.f32 %v3416
        %vm3423 = vmor %vm3421, %vm3422
        %v3424 = vsel %vm3423, %v3416, %v3420
        %v3425 = vand.u32 2147483647, %v3415
        %vm3426 = vcmp.eq.f32.partialorder %v3425, 8.507059e+37
        %v3427 = vand.u32 %v3415, 2147483648
        %v3428 = vor.u32 1.1754944e-38, %v3427
        %v3429 = vsel %vm3426, %v3428, %v3424
        %v3430 = vmul.f32 1.0, %v3429
        %v3431 = vperm.slane %v2308, 0
        %v3432 = vmul.f32 %v3431, %v3397
        %v3433 = vmul.f32 %v3432, %v3430
        %v3434 = vperm.slane %v2309, 0
        %v3435 = vadd.f32 %v3433, %v3434
        %v3436 = vld [vmem:[#allocation10 + $0xf0] sm:$0xff]
        %v3437 = vld [vmem:[#allocation10 + $0xf8] sm:$0xff]
        %v3438 = vld [vmem:[#allocation10 + $0x100] sm:$0xff]
        %v3439 = vld [vmem:[#allocation10 + $0x108] sm:$0xff]
        %v3440 = vld [vmem:[#allocation10 + $0x110] sm:$0xff]
        %v3441 = vld [vmem:[#allocation10 + $0x118] sm:$0xff]
        %v3442 = vld [vmem:[#allocation10 + $0x120] sm:$0xff]
        %v3443 = vld [vmem:[#allocation10 + $0x128] sm:$0xff]
        %v3444 = vld [vmem:[#allocation10 + $0x130] sm:$0xff]
        %v3445 = vld [vmem:[#allocation10 + $0x138] sm:$0xff]
        %v3446 = vld [vmem:[#allocation10 + $0x140] sm:$0xff]
        %v3447 = vld [vmem:[#allocation10 + $0x148] sm:$0xff]
        %v3448 = vld [vmem:[#allocation10 + $0x150] sm:$0xff]
        %v3449 = vld [vmem:[#allocation10 + $0x158] sm:$0xff]
        %v3450 = vld [vmem:[#allocation10 + $0x160] sm:$0xff]
        %v3451 = vld [vmem:[#allocation10 + $0x168] sm:$0xff]
        %v3452 = vld [vmem:[#allocation10 + $0x170] sm:$0xff]
        %v3453 = vld [vmem:[#allocation10 + $0x178] sm:$0xff]
        %v3454 = vld [vmem:[#allocation10 + $0x180] sm:$0xff]
        %v3455 = vld [vmem:[#allocation10 + $0x188] sm:$0xff]
        %v3456 = vld [vmem:[#allocation10 + $0x190] sm:$0xff]
        %v3457 = vld [vmem:[#allocation10 + $0x198] sm:$0xff]
        %v3458 = vld [vmem:[#allocation10 + $0x1a0] sm:$0xff]
        %v3459 = vld [vmem:[#allocation10 + $0x1a8] sm:$0xff]
        %v3460 = vld [vmem:[#allocation10 + $0x1b0] sm:$0xff]
        %v3461 = vld [vmem:[#allocation10 + $0x1b8] sm:$0xff]
        %v3462 = vld [vmem:[#allocation10 + $0x1c0] sm:$0xff]
        %v3463 = vld [vmem:[#allocation10 + $0x1c8] sm:$0xff]
        %v3464 = vld [vmem:[#allocation10 + $0x1d0] sm:$0x1]
        %v3465 = vld [vmem:[#allocation10 + $0x1d1] sm:$0x1]
        %v3466 = vld [vmem:[#allocation10 + $0x1d2] sm:$0x1]
        %v3467 = vld [vmem:[#allocation10 + $0x1d3] sm:$0x1]
        %v3468 = vld [vmem:[#allocation10 + $0x1d4] sm:$0x1]
        %v3469 = vld [vmem:[#allocation10 + $0x1d5] sm:$0x1]
        %v3470 = vld [vmem:[#allocation10 + $0x1d6] sm:$0x1]
        %v3471 = vld [vmem:[#allocation10 + $0x1d7] sm:$0x1]
        %v3472 = vld [vmem:[#allocation10 + $0x1d8] sm:$0x1]
        %v3473 = vld [vmem:[#allocation10 + $0x1d9] sm:$0x1]
        %v3474 = vld [vmem:[#allocation10 + $0x1da] sm:$0x1]
        %v3475 = vld [vmem:[#allocation10 + $0x1db] sm:$0x1]
        %v3476 = vperm.slane %v3464, 0
        %v3478 = vsel %vm468, %v3435, 0
        %3480 = vmatpush.msra.mxu0 0.0
        %3481 = vmatpush.msra.mxu0 0.0
        %3482 = vmatpush.msra.mxu0 0.0
        %3483 = vmatpush.msra.mxu0 0.0
        %3484 = vmatpush.msra.mxu0 0.0
        %3485 = vmatpush.msra.mxu0 0.0
        %3486 = vmatpush.msra.mxu0 0.0
        %3487 = vmatpush.msra.mxu0 0.0
        %3488 = vmatpush.msra.mxu0 0.0
        %3489 = vmatpush.msra.mxu0 0.0
        %3490 = vmatpush.msra.mxu0 0.0
        %3491 = vmatpush.msra.mxu0 0.0
        %3492 = vmatpush.msra.mxu0 %v3439
        %3493 = vmatpush.msra.mxu0 %v3438
        %3494 = vmatpush.msra.mxu0 %v3437
        %3495 = vmatpush.msra.mxu0 %v3436
        %3496 = vmatmul.f32.gmra.mxu0 %v3478
        %v3497 = vpop.f32.mrf.mxu0
        %v3498 = vadd.f32 %v3476, %v3497
        %3499 = vdwg.mxu0
        %3501 = vrot.lane.b32.xlu0 %v3498, 96
        %v3502 = vpop.permute.xlu0 %3501
        %v3503 = vsel %vm504, %v3498, 0
        %v3505 = vsel %vm504, %v3502, 0
        %3507 = vmatpush.xpose.msra.mxu0 0.0
        %3508 = vmatpush.xpose.msra.mxu0 0.0
        %3509 = vmatpush.xpose.msra.mxu0 0.0
        %3510 = vmatpush.xpose.msra.mxu0 0.0
        %3511 = vmatpush.xpose.msra.mxu0 0.0
        %3512 = vmatpush.xpose.msra.mxu0 0.0
        %3513 = vmatpush.xpose.msra.mxu0 0.0
        %3514 = vmatpush.xpose.msra.mxu0 0.0
        %3515 = vmatpush.xpose.msra.mxu0 0.0
        %3516 = vmatpush.xpose.msra.mxu0 0.0
        %3517 = vmatpush.xpose.msra.mxu0 0.0
        %3518 = vmatpush.xpose.msra.mxu0 0.0
        %3519 = vmatpush.xpose.msra.mxu0 0.0
        %3520 = vmatpush.xpose.msra.mxu0 0.0
        %3521 = vmatpush.xpose.msra.mxu0 0.0
        %3522 = vmatpush.xpose.msra.mxu0 %v3505
        %3523 = vmatmul.f32.gmra.mxu0 %v3503
        %v3524 = vpop.f32.mrf.mxu0
        %v3525 = vadd.f32 %v437, %v3524
        %3526 = vdwg.mxu0
        %v3527 = vsel %vm504, %v3525, -inf
        %3528 = vmax.xlane.f32.xlu0 %v3527
        %v3529 = vpop.xlane.xlu0 %3528
        %v3530 = vsub.f32 %v3525, %v3529
        %v3531 = vmul.f32 %v3530, 1.442695
        %v3532 = vpow.pop %v3531
        %v3533 = vsel %vm504, %v3532, 0.0
        %3534 = vadd.xlane.f32.xlu0 %v3533
        %v3535 = vpop.xlane.xlu0 %3534
        %v3536 = vrcp.pop %v3535
        %v3537 = vmul.f32 %v3535, %v3536
        %v3538 = vsub.f32 1.0, %v3537
        %v3539 = vmul.f32 %v3536, %v3538
        %v3540 = vadd.f32 %v3536, %v3539
        %vm3541 = vweird.f32 %v3535
        %vm3542 = vweird.f32 %v3536
        %vm3543 = vmor %vm3541, %vm3542
        %v3544 = vsel %vm3543, %v3536, %v3540
        %v3545 = vand.u32 2147483647, %v3535
        %vm3546 = vcmp.eq.f32.partialorder %v3545, 8.507059e+37
        %v3547 = vand.u32 %v3535, 2147483648
        %v3548 = vor.u32 1.1754944e-38, %v3547
        %v3549 = vsel %vm3546, %v3548, %v3544
        %v3550 = vmul.f32 1.0, %v3549
        %v3551 = vmul.f32 %v3532, %v3550
        %3552 = vrot.lane.b32.xlu0 %v3498, 64
        %v3553 = vpop.permute.xlu0 %3552
        %v3556 = vsel %vm504, %v3551, 0
        %3558 = vmatpush.msra.mxu0 0.0
        %3559 = vmatpush.msra.mxu0 0.0
        %3560 = vmatpush.msra.mxu0 0.0
        %3561 = vmatpush.msra.mxu0 0.0
        %3562 = vmatpush.msra.mxu0 0.0
        %3563 = vmatpush.msra.mxu0 0.0
        %3564 = vmatpush.msra.mxu0 0.0
        %3565 = vmatpush.msra.mxu0 0.0
        %3566 = vmatpush.msra.mxu0 0.0
        %3567 = vmatpush.msra.mxu0 0.0
        %3568 = vmatpush.msra.mxu0 0.0
        %3569 = vmatpush.msra.mxu0 0.0
        %3570 = vmatpush.msra.mxu0 0.0
        %3571 = vmatpush.msra.mxu0 0.0
        %3572 = vmatpush.msra.mxu0 0.0
        %3573 = vmatpush.msra.mxu0 %v3553
        %3574 = vmatmul.f32.gmra.mxu0 %v3556
        %v3575 = vpop.f32.mrf.mxu0
        %v3576 = vadd.f32 0.0, %v3575
        %3577 = vdwg.mxu0
        %3578 = vrot.lane.b32.xlu0 %v3498, 120
        %v3579 = vpop.permute.xlu0 %3578
        %3580 = vrot.lane.b32.xlu0 %v3498, 88
        %v3581 = vpop.permute.xlu0 %3580
        %v3582 = vsel %vm504, %v3579, 0
        %v3584 = vsel %vm504, %v3581, 0
        %3586 = vmatpush.xpose.msra.mxu0 0.0
        %3587 = vmatpush.xpose.msra.mxu0 0.0
        %3588 = vmatpush.xpose.msra.mxu0 0.0
        %3589 = vmatpush.xpose.msra.mxu0 0.0
        %3590 = vmatpush.xpose.msra.mxu0 0.0
        %3591 = vmatpush.xpose.msra.mxu0 0.0
        %3592 = vmatpush.xpose.msra.mxu0 0.0
        %3593 = vmatpush.xpose.msra.mxu0 0.0
        %3594 = vmatpush.xpose.msra.mxu0 0.0
        %3595 = vmatpush.xpose.msra.mxu0 0.0
        %3596 = vmatpush.xpose.msra.mxu0 0.0
        %3597 = vmatpush.xpose.msra.mxu0 0.0
        %3598 = vmatpush.xpose.msra.mxu0 0.0
        %3599 = vmatpush.xpose.msra.mxu0 0.0
        %3600 = vmatpush.xpose.msra.mxu0 0.0
        %3601 = vmatpush.xpose.msra.mxu0 %v3584
        %3602 = vmatmul.f32.gmra.mxu0 %v3582
        %v3603 = vpop.f32.mrf.mxu0
        %v3604 = vadd.f32 %v437, %v3603
        %3605 = vdwg.mxu0
        %v3606 = vsel %vm504, %v3604, -inf
        %3607 = vmax.xlane.f32.xlu0 %v3606
        %v3608 = vpop.xlane.xlu0 %3607
        %v3609 = vsub.f32 %v3604, %v3608
        %v3610 = vmul.f32 %v3609, 1.442695
        %v3611 = vpow.pop %v3610
        %v3612 = vsel %vm504, %v3611, 0.0
        %3613 = vadd.xlane.f32.xlu0 %v3612
        %v3614 = vpop.xlane.xlu0 %3613
        %v3615 = vrcp.pop %v3614
        %v3616 = vmul.f32 %v3614, %v3615
        %v3617 = vsub.f32 1.0, %v3616
        %v3618 = vmul.f32 %v3615, %v3617
        %v3619 = vadd.f32 %v3615, %v3618
        %vm3620 = vweird.f32 %v3614
        %vm3621 = vweird.f32 %v3615
        %vm3622 = vmor %vm3620, %vm3621
        %v3623 = vsel %vm3622, %v3615, %v3619
        %v3624 = vand.u32 2147483647, %v3614
        %vm3625 = vcmp.eq.f32.partialorder %v3624, 8.507059e+37
        %v3626 = vand.u32 %v3614, 2147483648
        %v3627 = vor.u32 1.1754944e-38, %v3626
        %v3628 = vsel %vm3625, %v3627, %v3623
        %v3629 = vmul.f32 1.0, %v3628
        %v3630 = vmul.f32 %v3611, %v3629
        %3631 = vrot.lane.b32.xlu0 %v3498, 56
        %v3632 = vpop.permute.xlu0 %3631
        %v3635 = vsel %vm504, %v3630, 0
        %3637 = vmatpush.msra.mxu0 0.0
        %3638 = vmatpush.msra.mxu0 0.0
        %3639 = vmatpush.msra.mxu0 0.0
        %3640 = vmatpush.msra.mxu0 0.0
        %3641 = vmatpush.msra.mxu0 0.0
        %3642 = vmatpush.msra.mxu0 0.0
        %3643 = vmatpush.msra.mxu0 0.0
        %3644 = vmatpush.msra.mxu0 0.0
        %3645 = vmatpush.msra.mxu0 0.0
        %3646 = vmatpush.msra.mxu0 0.0
        %3647 = vmatpush.msra.mxu0 0.0
        %3648 = vmatpush.msra.mxu0 0.0
        %3649 = vmatpush.msra.mxu0 0.0
        %3650 = vmatpush.msra.mxu0 0.0
        %3651 = vmatpush.msra.mxu0 0.0
        %3652 = vmatpush.msra.mxu0 %v3632
        %3653 = vmatmul.f32.gmra.mxu0 %v3635
        %v3654 = vpop.f32.mrf.mxu0
        %v3655 = vadd.f32 0.0, %v3654
        %3656 = vdwg.mxu0
        %v3658 = vsel %vm504, %v3655, 0
        %3660 = vmatpush.msra.mxu0 0.0
        %3661 = vmatpush.msra.mxu0 0.0
        %3662 = vmatpush.msra.mxu0 0.0
        %3663 = vmatpush.msra.mxu0 0.0
        %3664 = vmatpush.msra.mxu0 0.0
        %3665 = vmatpush.msra.mxu0 0.0
        %3666 = vmatpush.msra.mxu0 0.0
        %3667 = vmatpush.msra.mxu0 0.0
        %3668 = vmatpush.msra.mxu0 0.0
        %3669 = vmatpush.msra.mxu0 0.0
        %3670 = vmatpush.msra.mxu0 0.0
        %3671 = vmatpush.msra.mxu0 0.0
        %3672 = vmatpush.msra.mxu0 0.0
        %3673 = vmatpush.msra.mxu0 0.0
        %3674 = vmatpush.msra.mxu0 0.0
        %3675 = vmatpush.msra.mxu0 %v3441
        %3676 = vmatmul.f32.gmra.mxu0 %v3658
        %v3677 = vpop.f32.mrf.mxu0
        %v3678 = vadd.f32 0.0, %v3677
        %3679 = vdwg.mxu0
        %v3681 = vsel %vm504, %v3576, 0
        %3683 = vmatpush.msra.mxu0 0.0
        %3684 = vmatpush.msra.mxu0 0.0
        %3685 = vmatpush.msra.mxu0 0.0
        %3686 = vmatpush.msra.mxu0 0.0
        %3687 = vmatpush.msra.mxu0 0.0
        %3688 = vmatpush.msra.mxu0 0.0
        %3689 = vmatpush.msra.mxu0 0.0
        %3690 = vmatpush.msra.mxu0 0.0
        %3691 = vmatpush.msra.mxu0 0.0
        %3692 = vmatpush.msra.mxu0 0.0
        %3693 = vmatpush.msra.mxu0 0.0
        %3694 = vmatpush.msra.mxu0 0.0
        %3695 = vmatpush.msra.mxu0 0.0
        %3696 = vmatpush.msra.mxu0 0.0
        %3697 = vmatpush.msra.mxu0 0.0
        %3698 = vmatpush.msra.mxu0 %v3440
        %3699 = vmatmul.f32.gmra.mxu0 %v3681
        %v3700 = vpop.f32.mrf.mxu0
        %v3701 = vadd.f32 %v3678, %v3700
        %3702 = vdwg.mxu0
        %3703 = vrot.lane.b32.xlu0 %v3498, 112
        %v3704 = vpop.permute.xlu0 %3703
        %3705 = vrot.lane.b32.xlu0 %v3498, 80
        %v3706 = vpop.permute.xlu0 %3705
        %v3707 = vsel %vm504, %v3704, 0
        %v3709 = vsel %vm504, %v3706, 0
        %3711 = vmatpush.xpose.msra.mxu0 0.0
        %3712 = vmatpush.xpose.msra.mxu0 0.0
        %3713 = vmatpush.xpose.msra.mxu0 0.0
        %3714 = vmatpush.xpose.msra.mxu0 0.0
        %3715 = vmatpush.xpose.msra.mxu0 0.0
        %3716 = vmatpush.xpose.msra.mxu0 0.0
        %3717 = vmatpush.xpose.msra.mxu0 0.0
        %3718 = vmatpush.xpose.msra.mxu0 0.0
        %3719 = vmatpush.xpose.msra.mxu0 0.0
        %3720 = vmatpush.xpose.msra.mxu0 0.0
        %3721 = vmatpush.xpose.msra.mxu0 0.0
        %3722 = vmatpush.xpose.msra.mxu0 0.0
        %3723 = vmatpush.xpose.msra.mxu0 0.0
        %3724 = vmatpush.xpose.msra.mxu0 0.0
        %3725 = vmatpush.xpose.msra.mxu0 0.0
        %3726 = vmatpush.xpose.msra.mxu0 %v3709
        %3727 = vmatmul.f32.gmra.mxu0 %v3707
        %v3728 = vpop.f32.mrf.mxu0
        %v3729 = vadd.f32 %v437, %v3728
        %3730 = vdwg.mxu0
        %v3731 = vsel %vm504, %v3729, -inf
        %3732 = vmax.xlane.f32.xlu0 %v3731
        %v3733 = vpop.xlane.xlu0 %3732
        %v3734 = vsub.f32 %v3729, %v3733
        %v3735 = vmul.f32 %v3734, 1.442695
        %v3736 = vpow.pop %v3735
        %v3737 = vsel %vm504, %v3736, 0.0
        %3738 = vadd.xlane.f32.xlu0 %v3737
        %v3739 = vpop.xlane.xlu0 %3738
        %v3740 = vrcp.pop %v3739
        %v3741 = vmul.f32 %v3739, %v3740
        %v3742 = vsub.f32 1.0, %v3741
        %v3743 = vmul.f32 %v3740, %v3742
        %v3744 = vadd.f32 %v3740, %v3743
        %vm3745 = vweird.f32 %v3739
        %vm3746 = vweird.f32 %v3740
        %vm3747 = vmor %vm3745, %vm3746
        %v3748 = vsel %vm3747, %v3740, %v3744
        %v3749 = vand.u32 2147483647, %v3739
        %vm3750 = vcmp.eq.f32.partialorder %v3749, 8.507059e+37
        %v3751 = vand.u32 %v3739, 2147483648
        %v3752 = vor.u32 1.1754944e-38, %v3751
        %v3753 = vsel %vm3750, %v3752, %v3748
        %v3754 = vmul.f32 1.0, %v3753
        %v3755 = vmul.f32 %v3736, %v3754
        %3756 = vrot.lane.b32.xlu0 %v3498, 48
        %v3757 = vpop.permute.xlu0 %3756
        %v3760 = vsel %vm504, %v3755, 0
        %3762 = vmatpush.msra.mxu0 0.0
        %3763 = vmatpush.msra.mxu0 0.0
        %3764 = vmatpush.msra.mxu0 0.0
        %3765 = vmatpush.msra.mxu0 0.0
        %3766 = vmatpush.msra.mxu0 0.0
        %3767 = vmatpush.msra.mxu0 0.0
        %3768 = vmatpush.msra.mxu0 0.0
        %3769 = vmatpush.msra.mxu0 0.0
        %3770 = vmatpush.msra.mxu0 0.0
        %3771 = vmatpush.msra.mxu0 0.0
        %3772 = vmatpush.msra.mxu0 0.0
        %3773 = vmatpush.msra.mxu0 0.0
        %3774 = vmatpush.msra.mxu0 0.0
        %3775 = vmatpush.msra.mxu0 0.0
        %3776 = vmatpush.msra.mxu0 0.0
        %3777 = vmatpush.msra.mxu0 %v3757
        %3778 = vmatmul.f32.gmra.mxu0 %v3760
        %v3779 = vpop.f32.mrf.mxu0
        %v3780 = vadd.f32 0.0, %v3779
        %3781 = vdwg.mxu0
        %v3783 = vsel %vm504, %v3780, 0
        %3785 = vmatpush.msra.mxu0 0.0
        %3786 = vmatpush.msra.mxu0 0.0
        %3787 = vmatpush.msra.mxu0 0.0
        %3788 = vmatpush.msra.mxu0 0.0
        %3789 = vmatpush.msra.mxu0 0.0
        %3790 = vmatpush.msra.mxu0 0.0
        %3791 = vmatpush.msra.mxu0 0.0
        %3792 = vmatpush.msra.mxu0 0.0
        %3793 = vmatpush.msra.mxu0 0.0
        %3794 = vmatpush.msra.mxu0 0.0
        %3795 = vmatpush.msra.mxu0 0.0
        %3796 = vmatpush.msra.mxu0 0.0
        %3797 = vmatpush.msra.mxu0 0.0
        %3798 = vmatpush.msra.mxu0 0.0
        %3799 = vmatpush.msra.mxu0 0.0
        %3800 = vmatpush.msra.mxu0 %v3442
        %3801 = vmatmul.f32.gmra.mxu0 %v3783
        %v3802 = vpop.f32.mrf.mxu0
        %v3803 = vadd.f32 0.0, %v3802
        %3804 = vdwg.mxu0
        %v3805 = vadd.f32 %v3701, %v3803
        %3806 = vrot.lane.b32.xlu0 %v3498, 104
        %v3807 = vpop.permute.xlu0 %3806
        %3808 = vrot.lane.b32.xlu0 %v3498, 72
        %v3809 = vpop.permute.xlu0 %3808
        %v3810 = vsel %vm504, %v3807, 0
        %v3812 = vsel %vm504, %v3809, 0
        %3814 = vmatpush.xpose.msra.mxu0 0.0
        %3815 = vmatpush.xpose.msra.mxu0 0.0
        %3816 = vmatpush.xpose.msra.mxu0 0.0
        %3817 = vmatpush.xpose.msra.mxu0 0.0
        %3818 = vmatpush.xpose.msra.mxu0 0.0
        %3819 = vmatpush.xpose.msra.mxu0 0.0
        %3820 = vmatpush.xpose.msra.mxu0 0.0
        %3821 = vmatpush.xpose.msra.mxu0 0.0
        %3822 = vmatpush.xpose.msra.mxu0 0.0
        %3823 = vmatpush.xpose.msra.mxu0 0.0
        %3824 = vmatpush.xpose.msra.mxu0 0.0
        %3825 = vmatpush.xpose.msra.mxu0 0.0
        %3826 = vmatpush.xpose.msra.mxu0 0.0
        %3827 = vmatpush.xpose.msra.mxu0 0.0
        %3828 = vmatpush.xpose.msra.mxu0 0.0
        %3829 = vmatpush.xpose.msra.mxu0 %v3812
        %3830 = vmatmul.f32.gmra.mxu0 %v3810
        %v3831 = vpop.f32.mrf.mxu0
        %v3832 = vadd.f32 %v437, %v3831
        %3833 = vdwg.mxu0
        %v3834 = vsel %vm504, %v3832, -inf
        %3835 = vmax.xlane.f32.xlu0 %v3834
        %v3836 = vpop.xlane.xlu0 %3835
        %v3837 = vsub.f32 %v3832, %v3836
        %v3838 = vmul.f32 %v3837, 1.442695
        %v3839 = vpow.pop %v3838
        %v3840 = vsel %vm504, %v3839, 0.0
        %3841 = vadd.xlane.f32.xlu0 %v3840
        %v3842 = vpop.xlane.xlu0 %3841
        %v3843 = vrcp.pop %v3842
        %v3844 = vmul.f32 %v3842, %v3843
        %v3845 = vsub.f32 1.0, %v3844
        %v3846 = vmul.f32 %v3843, %v3845
        %v3847 = vadd.f32 %v3843, %v3846
        %vm3848 = vweird.f32 %v3842
        %vm3849 = vweird.f32 %v3843
        %vm3850 = vmor %vm3848, %vm3849
        %v3851 = vsel %vm3850, %v3843, %v3847
        %v3852 = vand.u32 2147483647, %v3842
        %vm3853 = vcmp.eq.f32.partialorder %v3852, 8.507059e+37
        %v3854 = vand.u32 %v3842, 2147483648
        %v3855 = vor.u32 1.1754944e-38, %v3854
        %v3856 = vsel %vm3853, %v3855, %v3851
        %v3857 = vmul.f32 1.0, %v3856
        %v3858 = vmul.f32 %v3839, %v3857
        %3859 = vrot.lane.b32.xlu0 %v3498, 40
        %v3860 = vpop.permute.xlu0 %3859
        %v3863 = vsel %vm504, %v3858, 0
        %3865 = vmatpush.msra.mxu0 0.0
        %3866 = vmatpush.msra.mxu0 0.0
        %3867 = vmatpush.msra.mxu0 0.0
        %3868 = vmatpush.msra.mxu0 0.0
        %3869 = vmatpush.msra.mxu0 0.0
        %3870 = vmatpush.msra.mxu0 0.0
        %3871 = vmatpush.msra.mxu0 0.0
        %3872 = vmatpush.msra.mxu0 0.0
        %3873 = vmatpush.msra.mxu0 0.0
        %3874 = vmatpush.msra.mxu0 0.0
        %3875 = vmatpush.msra.mxu0 0.0
        %3876 = vmatpush.msra.mxu0 0.0
        %3877 = vmatpush.msra.mxu0 0.0
        %3878 = vmatpush.msra.mxu0 0.0
        %3879 = vmatpush.msra.mxu0 0.0
        %3880 = vmatpush.msra.mxu0 %v3860
        %3881 = vmatmul.f32.gmra.mxu0 %v3863
        %v3882 = vpop.f32.mrf.mxu0
        %v3883 = vadd.f32 0.0, %v3882
        %3884 = vdwg.mxu0
        %v3886 = vsel %vm504, %v3883, 0
        %3888 = vmatpush.msra.mxu0 0.0
        %3889 = vmatpush.msra.mxu0 0.0
        %3890 = vmatpush.msra.mxu0 0.0
        %3891 = vmatpush.msra.mxu0 0.0
        %3892 = vmatpush.msra.mxu0 0.0
        %3893 = vmatpush.msra.mxu0 0.0
        %3894 = vmatpush.msra.mxu0 0.0
        %3895 = vmatpush.msra.mxu0 0.0
        %3896 = vmatpush.msra.mxu0 0.0
        %3897 = vmatpush.msra.mxu0 0.0
        %3898 = vmatpush.msra.mxu0 0.0
        %3899 = vmatpush.msra.mxu0 0.0
        %3900 = vmatpush.msra.mxu0 0.0
        %3901 = vmatpush.msra.mxu0 0.0
        %3902 = vmatpush.msra.mxu0 0.0
        %3903 = vmatpush.msra.mxu0 %v3443
        %3904 = vmatmul.f32.gmra.mxu0 %v3886
        %v3905 = vpop.f32.mrf.mxu0
        %v3906 = vadd.f32 0.0, %v3905
        %3907 = vdwg.mxu0
        %v3908 = vadd.f32 %v3805, %v3906
        %v3909 = vperm.slane %v3465, 0
        %v3910 = vadd.f32 %v3908, %v3909
        %v3911 = vadd.f32 %v3435, %v3910
        %v3912 = vsel %vm468, %v3911, 0.0
        %3913 = vadd.xlane.f32.xlu0 %v3912
        %v3914 = vpop.xlane.xlu0 %3913
        %v3915 = vmul.f32 %v3914, %v1131
        %v3916 = vsub.f32 %v3911, %v3915
        %v3917 = vmul.f32 %v3916, %v3916
        %v3918 = vsel %vm468, %v3917, 0.0
        %3919 = vadd.xlane.f32.xlu0 %v3918
        %v3920 = vpop.xlane.xlu0 %3919
        %v3921 = vmul.f32 %v3920, 0.032258064
        %v3922 = vrsqrt.pop %v3921
        %v3923 = vmul.f32 %v3922, %v3921
        %v3924 = vmul.f32 %v3923, %v3922
        %v3925 = vmul.f32 0.5, %v3924
        %v3926 = vsub.f32 1.5, %v3925
        %v3927 = vmul.f32 %v3922, %v3926
        %v3928 = vmul.f32 %v3921, %v3927
        %vm3929 = vcmp.eq.f32.partialorder %v3921, inf
        %v3930 = vsel %vm3929, %v3921, %v3928
        %vm3931 = vcmp.eq.f32.partialorder %v3921, 0.0
        %v3932 = vand.u32 %v3921, 2147483648
        %v3933 = vsel %vm3931, %v3932, %v3930
        %v3934 = vadd.f32 %v3933, 1e-06
        %v3935 = vrcp.pop %v3934
        %v3936 = vmul.f32 %v3934, %v3935
        %v3937 = vsub.f32 1.0, %v3936
        %v3938 = vmul.f32 %v3935, %v3937
        %v3939 = vadd.f32 %v3935, %v3938
        %vm3940 = vweird.f32 %v3934
        %vm3941 = vweird.f32 %v3935
        %vm3942 = vmor %vm3940, %vm3941
        %v3943 = vsel %vm3942, %v3935, %v3939
        %v3944 = vand.u32 2147483647, %v3934
        %vm3945 = vcmp.eq.f32.partialorder %v3944, 8.507059e+37
        %v3946 = vand.u32 %v3934, 2147483648
        %v3947 = vor.u32 1.1754944e-38, %v3946
        %v3948 = vsel %vm3945, %v3947, %v3943
        %v3949 = vmul.f32 1.0, %v3948
        %v3950 = vperm.slane %v3470, 0
        %v3951 = vmul.f32 %v3950, %v3916
        %v3952 = vmul.f32 %v3951, %v3949
        %v3953 = vperm.slane %v3471, 0
        %v3954 = vadd.f32 %v3952, %v3953
        %v3955 = vperm.slane %v3466, 0
        %v3957 = vsel %vm468, %v3954, 0
        %3959 = vmatpush.msra.mxu0 0.0
        %3960 = vmatpush.msra.mxu0 0.0
        %3961 = vmatpush.msra.mxu0 0.0
        %3962 = vmatpush.msra.mxu0 0.0
        %3963 = vmatpush.msra.mxu0 0.0
        %3964 = vmatpush.msra.mxu0 0.0
        %3965 = vmatpush.msra.mxu0 0.0
        %3966 = vmatpush.msra.mxu0 0.0
        %3967 = vmatpush.msra.mxu0 0.0
        %3968 = vmatpush.msra.mxu0 0.0
        %3969 = vmatpush.msra.mxu0 0.0
        %3970 = vmatpush.msra.mxu0 0.0
        %3971 = vmatpush.msra.mxu0 %v3447
        %3972 = vmatpush.msra.mxu0 %v3446
        %3973 = vmatpush.msra.mxu0 %v3445
        %3974 = vmatpush.msra.mxu0 %v3444
        %3975 = vmatmul.f32.gmra.mxu0 %v3957
        %v3976 = vpop.f32.mrf.mxu0
        %v3977 = vadd.f32 %v3955, %v3976
        %3978 = vdwg.mxu0
        %3983 = vrot.lane.b32.xlu0 %v3444, 96
        %v3984 = vpop.permute.xlu0 %3983
        %3985 = vrot.lane.b32.xlu0 %v3445, 96
        %v3986 = vpop.permute.xlu0 %3985
        %3987 = vrot.lane.b32.xlu0 %v3446, 96
        %v3988 = vpop.permute.xlu0 %3987
        %3989 = vrot.lane.b32.xlu0 %v3447, 96
        %v3990 = vpop.permute.xlu0 %3989
        %3996 = vrot.lane.b32.xlu0 %v3955, 96
        %v3997 = vpop.permute.xlu0 %3996
        %3999 = vmatpush.msra.mxu0 0.0
        %4000 = vmatpush.msra.mxu0 0.0
        %4001 = vmatpush.msra.mxu0 0.0
        %4002 = vmatpush.msra.mxu0 0.0
        %4003 = vmatpush.msra.mxu0 0.0
        %4004 = vmatpush.msra.mxu0 0.0
        %4005 = vmatpush.msra.mxu0 0.0
        %4006 = vmatpush.msra.mxu0 0.0
        %4007 = vmatpush.msra.mxu0 0.0
        %4008 = vmatpush.msra.mxu0 0.0
        %4009 = vmatpush.msra.mxu0 0.0
        %4010 = vmatpush.msra.mxu0 0.0
        %4011 = vmatpush.msra.mxu0 %v3990
        %4012 = vmatpush.msra.mxu0 %v3988
        %4013 = vmatpush.msra.mxu0 %v3986
        %4014 = vmatpush.msra.mxu0 %v3984
        %4015 = vmatmul.f32.gmra.mxu0 %v2834
        %v4016 = vpop.f32.mrf.mxu0
        %v4017 = vadd.f32 %v3997, %v4016
        %4018 = vmatmul.f32.gmra.mxu0 %v2837
        %v4019 = vpop.f32.mrf.mxu0
        %v4020 = vadd.f32 %v3997, %v4019
        %4021 = vdwg.mxu0
        %v4023 = vsel %vm504, %v3977, 0
        %v4026 = vsel %vm504, %v4017, 0
        %v4029 = vsel %vm504, %v4020, 0
        %4031 = vmatpush.xpose.msra.mxu0 0.0
        %4032 = vmatpush.xpose.msra.mxu0 0.0
        %4033 = vmatpush.xpose.msra.mxu0 0.0
        %4034 = vmatpush.xpose.msra.mxu0 0.0
        %4035 = vmatpush.xpose.msra.mxu0 0.0
        %4036 = vmatpush.xpose.msra.mxu0 0.0
        %4037 = vmatpush.xpose.msra.mxu0 0.0
        %4038 = vmatpush.xpose.msra.mxu0 0.0
        %4039 = vmatpush.xpose.msra.mxu0 0.0
        %4040 = vmatpush.xpose.msra.mxu0 0.0
        %4041 = vmatpush.xpose.msra.mxu0 0.0
        %4042 = vmatpush.xpose.msra.mxu0 0.0
        %4043 = vmatpush.xpose.msra.mxu0 0.0
        %4044 = vmatpush.xpose.msra.mxu0 0.0
        %4045 = vmatpush.xpose.msra.mxu0 %v4029
        %4046 = vmatpush.xpose.msra.mxu0 %v4026
        %4047 = vmatmul.f32.gmra.mxu0 %v4023
        %v4048 = vpop.f32.mrf.mxu0
        %v4049 = vadd.f32 %v434, %v4048
        %4050 = vdwg.mxu0
        %v4051 = vsel %vm536, %v4049, -inf
        %4052 = vmax.xlane.f32.xlu0 %v4051
        %v4053 = vpop.xlane.xlu0 %4052
        %v4054 = vsub.f32 %v4049, %v4053
        %v4055 = vmul.f32 %v4054, 1.442695
        %v4056 = vpow.pop %v4055
        %v4057 = vsel %vm536, %v4056, 0.0
        %4058 = vadd.xlane.f32.xlu0 %v4057
        %v4059 = vpop.xlane.xlu0 %4058
        %v4060 = vrcp.pop %v4059
        %v4061 = vmul.f32 %v4059, %v4060
        %v4062 = vsub.f32 1.0, %v4061
        %v4063 = vmul.f32 %v4060, %v4062
        %v4064 = vadd.f32 %v4060, %v4063
        %vm4065 = vweird.f32 %v4059
        %vm4066 = vweird.f32 %v4060
        %vm4067 = vmor %vm4065, %vm4066
        %v4068 = vsel %vm4067, %v4060, %v4064
        %v4069 = vand.u32 2147483647, %v4059
        %vm4070 = vcmp.eq.f32.partialorder %v4069, 8.507059e+37
        %v4071 = vand.u32 %v4059, 2147483648
        %v4072 = vor.u32 1.1754944e-38, %v4071
        %v4073 = vsel %vm4070, %v4072, %v4068
        %v4074 = vmul.f32 1.0, %v4073
        %v4075 = vmul.f32 %v4056, %v4074
        %4076 = vrot.lane.b32.xlu0 %v4017, 96
        %v4077 = vpop.permute.xlu0 %4076
        %4078 = vrot.lane.b32.xlu0 %v4020, 96
        %v4079 = vpop.permute.xlu0 %4078
        %v4083 = vsel %vm536, %v4075, 0
        %4085 = vmatpush.msra.mxu0 0.0
        %4086 = vmatpush.msra.mxu0 0.0
        %4087 = vmatpush.msra.mxu0 0.0
        %4088 = vmatpush.msra.mxu0 0.0
        %4089 = vmatpush.msra.mxu0 0.0
        %4090 = vmatpush.msra.mxu0 0.0
        %4091 = vmatpush.msra.mxu0 0.0
        %4092 = vmatpush.msra.mxu0 0.0
        %4093 = vmatpush.msra.mxu0 0.0
        %4094 = vmatpush.msra.mxu0 0.0
        %4095 = vmatpush.msra.mxu0 0.0
        %4096 = vmatpush.msra.mxu0 0.0
        %4097 = vmatpush.msra.mxu0 0.0
        %4098 = vmatpush.msra.mxu0 0.0
        %4099 = vmatpush.msra.mxu0 %v4079
        %4100 = vmatpush.msra.mxu0 %v4077
        %4101 = vmatmul.f32.gmra.mxu0 %v4083
        %v4102 = vpop.f32.mrf.mxu0
        %v4103 = vadd.f32 0.0, %v4102
        %4104 = vdwg.mxu0
        %4105 = vrot.lane.b32.xlu0 %v3977, 120
        %v4106 = vpop.permute.xlu0 %4105
        %4107 = vrot.lane.b32.xlu0 %v4017, 120
        %v4108 = vpop.permute.xlu0 %4107
        %4109 = vrot.lane.b32.xlu0 %v4020, 120
        %v4110 = vpop.permute.xlu0 %4109
        %v4111 = vsel %vm504, %v4106, 0
        %v4113 = vsel %vm504, %v4108, 0
        %v4115 = vsel %vm504, %v4110, 0
        %4117 = vmatpush.xpose.msra.mxu0 0.0
        %4118 = vmatpush.xpose.msra.mxu0 0.0
        %4119 = vmatpush.xpose.msra.mxu0 0.0
        %4120 = vmatpush.xpose.msra.mxu0 0.0
        %4121 = vmatpush.xpose.msra.mxu0 0.0
        %4122 = vmatpush.xpose.msra.mxu0 0.0
        %4123 = vmatpush.xpose.msra.mxu0 0.0
        %4124 = vmatpush.xpose.msra.mxu0 0.0
        %4125 = vmatpush.xpose.msra.mxu0 0.0
        %4126 = vmatpush.xpose.msra.mxu0 0.0
        %4127 = vmatpush.xpose.msra.mxu0 0.0
        %4128 = vmatpush.xpose.msra.mxu0 0.0
        %4129 = vmatpush.xpose.msra.mxu0 0.0
        %4130 = vmatpush.xpose.msra.mxu0 0.0
        %4131 = vmatpush.xpose.msra.mxu0 %v4115
        %4132 = vmatpush.xpose.msra.mxu0 %v4113
        %4133 = vmatmul.f32.gmra.mxu0 %v4111
        %v4134 = vpop.f32.mrf.mxu0
        %v4135 = vadd.f32 %v434, %v4134
        %4136 = vdwg.mxu0
        %v4137 = vsel %vm536, %v4135, -inf
        %4138 = vmax.xlane.f32.xlu0 %v4137
        %v4139 = vpop.xlane.xlu0 %4138
        %v4140 = vsub.f32 %v4135, %v4139
        %v4141 = vmul.f32 %v4140, 1.442695
        %v4142 = vpow.pop %v4141
        %v4143 = vsel %vm536, %v4142, 0.0
        %4144 = vadd.xlane.f32.xlu0 %v4143
        %v4145 = vpop.xlane.xlu0 %4144
        %v4146 = vrcp.pop %v4145
        %v4147 = vmul.f32 %v4145, %v4146
        %v4148 = vsub.f32 1.0, %v4147
        %v4149 = vmul.f32 %v4146, %v4148
        %v4150 = vadd.f32 %v4146, %v4149
        %vm4151 = vweird.f32 %v4145
        %vm4152 = vweird.f32 %v4146
        %vm4153 = vmor %vm4151, %vm4152
        %v4154 = vsel %vm4153, %v4146, %v4150
        %v4155 = vand.u32 2147483647, %v4145
        %vm4156 = vcmp.eq.f32.partialorder %v4155, 8.507059e+37
        %v4157 = vand.u32 %v4145, 2147483648
        %v4158 = vor.u32 1.1754944e-38, %v4157
        %v4159 = vsel %vm4156, %v4158, %v4154
        %v4160 = vmul.f32 1.0, %v4159
        %v4161 = vmul.f32 %v4142, %v4160
        %4162 = vrot.lane.b32.xlu0 %v4017, 88
        %v4163 = vpop.permute.xlu0 %4162
        %4164 = vrot.lane.b32.xlu0 %v4020, 88
        %v4165 = vpop.permute.xlu0 %4164
        %v4169 = vsel %vm536, %v4161, 0
        %4171 = vmatpush.msra.mxu0 0.0
        %4172 = vmatpush.msra.mxu0 0.0
        %4173 = vmatpush.msra.mxu0 0.0
        %4174 = vmatpush.msra.mxu0 0.0
        %4175 = vmatpush.msra.mxu0 0.0
        %4176 = vmatpush.msra.mxu0 0.0
        %4177 = vmatpush.msra.mxu0 0.0
        %4178 = vmatpush.msra.mxu0 0.0
        %4179 = vmatpush.msra.mxu0 0.0
        %4180 = vmatpush.msra.mxu0 0.0
        %4181 = vmatpush.msra.mxu0 0.0
        %4182 = vmatpush.msra.mxu0 0.0
        %4183 = vmatpush.msra.mxu0 0.0
        %4184 = vmatpush.msra.mxu0 0.0
        %4185 = vmatpush.msra.mxu0 %v4165
        %4186 = vmatpush.msra.mxu0 %v4163
        %4187 = vmatmul.f32.gmra.mxu0 %v4169
        %v4188 = vpop.f32.mrf.mxu0
        %v4189 = vadd.f32 0.0, %v4188
        %4190 = vdwg.mxu0
        %v4192 = vsel %vm504, %v4189, 0
        %4194 = vmatpush.msra.mxu0 0.0
        %4195 = vmatpush.msra.mxu0 0.0
        %4196 = vmatpush.msra.mxu0 0.0
        %4197 = vmatpush.msra.mxu0 0.0
        %4198 = vmatpush.msra.mxu0 0.0
        %4199 = vmatpush.msra.mxu0 0.0
        %4200 = vmatpush.msra.mxu0 0.0
        %4201 = vmatpush.msra.mxu0 0.0
        %4202 = vmatpush.msra.mxu0 0.0
        %4203 = vmatpush.msra.mxu0 0.0
        %4204 = vmatpush.msra.mxu0 0.0
        %4205 = vmatpush.msra.mxu0 0.0
        %4206 = vmatpush.msra.mxu0 0.0
        %4207 = vmatpush.msra.mxu0 0.0
        %4208 = vmatpush.msra.mxu0 0.0
        %4209 = vmatpush.msra.mxu0 %v3449
        %4210 = vmatmul.f32.gmra.mxu0 %v4192
        %v4211 = vpop.f32.mrf.mxu0
        %v4212 = vadd.f32 0.0, %v4211
        %4213 = vdwg.mxu0
        %v4215 = vsel %vm504, %v4103, 0
        %4217 = vmatpush.msra.mxu0 0.0
        %4218 = vmatpush.msra.mxu0 0.0
        %4219 = vmatpush.msra.mxu0 0.0
        %4220 = vmatpush.msra.mxu0 0.0
        %4221 = vmatpush.msra.mxu0 0.0
        %4222 = vmatpush.msra.mxu0 0.0
        %4223 = vmatpush.msra.mxu0 0.0
        %4224 = vmatpush.msra.mxu0 0.0
        %4225 = vmatpush.msra.mxu0 0.0
        %4226 = vmatpush.msra.mxu0 0.0
        %4227 = vmatpush.msra.mxu0 0.0
        %4228 = vmatpush.msra.mxu0 0.0
        %4229 = vmatpush.msra.mxu0 0.0
        %4230 = vmatpush.msra.mxu0 0.0
        %4231 = vmatpush.msra.mxu0 0.0
        %4232 = vmatpush.msra.mxu0 %v3448
        %4233 = vmatmul.f32.gmra.mxu0 %v4215
        %v4234 = vpop.f32.mrf.mxu0
        %v4235 = vadd.f32 %v4212, %v4234
        %4236 = vdwg.mxu0
        %4237 = vrot.lane.b32.xlu0 %v3977, 112
        %v4238 = vpop.permute.xlu0 %4237
        %4239 = vrot.lane.b32.xlu0 %v4017, 112
        %v4240 = vpop.permute.xlu0 %4239
        %4241 = vrot.lane.b32.xlu0 %v4020, 112
        %v4242 = vpop.permute.xlu0 %4241
        %v4243 = vsel %vm504, %v4238, 0
        %v4245 = vsel %vm504, %v4240, 0
        %v4247 = vsel %vm504, %v4242, 0
        %4249 = vmatpush.xpose.msra.mxu0 0.0
        %4250 = vmatpush.xpose.msra.mxu0 0.0
        %4251 = vmatpush.xpose.msra.mxu0 0.0
        %4252 = vmatpush.xpose.msra.mxu0 0.0
        %4253 = vmatpush.xpose.msra.mxu0 0.0
        %4254 = vmatpush.xpose.msra.mxu0 0.0
        %4255 = vmatpush.xpose.msra.mxu0 0.0
        %4256 = vmatpush.xpose.msra.mxu0 0.0
        %4257 = vmatpush.xpose.msra.mxu0 0.0
        %4258 = vmatpush.xpose.msra.mxu0 0.0
        %4259 = vmatpush.xpose.msra.mxu0 0.0
        %4260 = vmatpush.xpose.msra.mxu0 0.0
        %4261 = vmatpush.xpose.msra.mxu0 0.0
        %4262 = vmatpush.xpose.msra.mxu0 0.0
        %4263 = vmatpush.xpose.msra.mxu0 %v4247
        %4264 = vmatpush.xpose.msra.mxu0 %v4245
        %4265 = vmatmul.f32.gmra.mxu0 %v4243
        %v4266 = vpop.f32.mrf.mxu0
        %v4267 = vadd.f32 %v434, %v4266
        %4268 = vdwg.mxu0
        %v4269 = vsel %vm536, %v4267, -inf
        %4270 = vmax.xlane.f32.xlu0 %v4269
        %v4271 = vpop.xlane.xlu0 %4270
        %v4272 = vsub.f32 %v4267, %v4271
        %v4273 = vmul.f32 %v4272, 1.442695
        %v4274 = vpow.pop %v4273
        %v4275 = vsel %vm536, %v4274, 0.0
        %4276 = vadd.xlane.f32.xlu0 %v4275
        %v4277 = vpop.xlane.xlu0 %4276
        %v4278 = vrcp.pop %v4277
        %v4279 = vmul.f32 %v4277, %v4278
        %v4280 = vsub.f32 1.0, %v4279
        %v4281 = vmul.f32 %v4278, %v4280
        %v4282 = vadd.f32 %v4278, %v4281
        %vm4283 = vweird.f32 %v4277
        %vm4284 = vweird.f32 %v4278
        %vm4285 = vmor %vm4283, %vm4284
        %v4286 = vsel %vm4285, %v4278, %v4282
        %v4287 = vand.u32 2147483647, %v4277
        %vm4288 = vcmp.eq.f32.partialorder %v4287, 8.507059e+37
        %v4289 = vand.u32 %v4277, 2147483648
        %v4290 = vor.u32 1.1754944e-38, %v4289
        %v4291 = vsel %vm4288, %v4290, %v4286
        %v4292 = vmul.f32 1.0, %v4291
        %v4293 = vmul.f32 %v4274, %v4292
        %4294 = vrot.lane.b32.xlu0 %v4017, 80
        %v4295 = vpop.permute.xlu0 %4294
        %4296 = vrot.lane.b32.xlu0 %v4020, 80
        %v4297 = vpop.permute.xlu0 %4296
        %v4301 = vsel %vm536, %v4293, 0
        %4303 = vmatpush.msra.mxu0 0.0
        %4304 = vmatpush.msra.mxu0 0.0
        %4305 = vmatpush.msra.mxu0 0.0
        %4306 = vmatpush.msra.mxu0 0.0
        %4307 = vmatpush.msra.mxu0 0.0
        %4308 = vmatpush.msra.mxu0 0.0
        %4309 = vmatpush.msra.mxu0 0.0
        %4310 = vmatpush.msra.mxu0 0.0
        %4311 = vmatpush.msra.mxu0 0.0
        %4312 = vmatpush.msra.mxu0 0.0
        %4313 = vmatpush.msra.mxu0 0.0
        %4314 = vmatpush.msra.mxu0 0.0
        %4315 = vmatpush.msra.mxu0 0.0
        %4316 = vmatpush.msra.mxu0 0.0
        %4317 = vmatpush.msra.mxu0 %v4297
        %4318 = vmatpush.msra.mxu0 %v4295
        %4319 = vmatmul.f32.gmra.mxu0 %v4301
        %v4320 = vpop.f32.mrf.mxu0
        %v4321 = vadd.f32 0.0, %v4320
        %4322 = vdwg.mxu0
        %v4324 = vsel %vm504, %v4321, 0
        %4326 = vmatpush.msra.mxu0 0.0
        %4327 = vmatpush.msra.mxu0 0.0
        %4328 = vmatpush.msra.mxu0 0.0
        %4329 = vmatpush.msra.mxu0 0.0
        %4330 = vmatpush.msra.mxu0 0.0
        %4331 = vmatpush.msra.mxu0 0.0
        %4332 = vmatpush.msra.mxu0 0.0
        %4333 = vmatpush.msra.mxu0 0.0
        %4334 = vmatpush.msra.mxu0 0.0
        %4335 = vmatpush.msra.mxu0 0.0
        %4336 = vmatpush.msra.mxu0 0.0
        %4337 = vmatpush.msra.mxu0 0.0
        %4338 = vmatpush.msra.mxu0 0.0
        %4339 = vmatpush.msra.mxu0 0.0
        %4340 = vmatpush.msra.mxu0 0.0
        %4341 = vmatpush.msra.mxu0 %v3450
        %4342 = vmatmul.f32.gmra.mxu0 %v4324
        %v4343 = vpop.f32.mrf.mxu0
        %v4344 = vadd.f32 0.0, %v4343
        %4345 = vdwg.mxu0
        %v4346 = vadd.f32 %v4235, %v4344
        %4347 = vrot.lane.b32.xlu0 %v3977, 104
        %v4348 = vpop.permute.xlu0 %4347
        %4349 = vrot.lane.b32.xlu0 %v4017, 104
        %v4350 = vpop.permute.xlu0 %4349
        %4351 = vrot.lane.b32.xlu0 %v4020, 104
        %v4352 = vpop.permute.xlu0 %4351
        %v4353 = vsel %vm504, %v4348, 0
        %v4355 = vsel %vm504, %v4350, 0
        %v4357 = vsel %vm504, %v4352, 0
        %4359 = vmatpush.xpose.msra.mxu0 0.0
        %4360 = vmatpush.xpose.msra.mxu0 0.0
        %4361 = vmatpush.xpose.msra.mxu0 0.0
        %4362 = vmatpush.xpose.msra.mxu0 0.0
        %4363 = vmatpush.xpose.msra.mxu0 0.0
        %4364 = vmatpush.xpose.msra.mxu0 0.0
        %4365 = vmatpush.xpose.msra.mxu0 0.0
        %4366 = vmatpush.xpose.msra.mxu0 0.0
        %4367 = vmatpush.xpose.msra.mxu0 0.0
        %4368 = vmatpush.xpose.msra.mxu0 0.0
        %4369 = vmatpush.xpose.msra.mxu0 0.0
        %4370 = vmatpush.xpose.msra.mxu0 0.0
        %4371 = vmatpush.xpose.msra.mxu0 0.0
        %4372 = vmatpush.xpose.msra.mxu0 0.0
        %4373 = vmatpush.xpose.msra.mxu0 %v4357
        %4374 = vmatpush.xpose.msra.mxu0 %v4355
        %4375 = vmatmul.f32.gmra.mxu0 %v4353
        %v4376 = vpop.f32.mrf.mxu0
        %v4377 = vadd.f32 %v434, %v4376
        %4378 = vdwg.mxu0
        %v4379 = vsel %vm536, %v4377, -inf
        %4380 = vmax.xlane.f32.xlu0 %v4379
        %v4381 = vpop.xlane.xlu0 %4380
        %v4382 = vsub.f32 %v4377, %v4381
        %v4383 = vmul.f32 %v4382, 1.442695
        %v4384 = vpow.pop %v4383
        %v4385 = vsel %vm536, %v4384, 0.0
        %4386 = vadd.xlane.f32.xlu0 %v4385
        %v4387 = vpop.xlane.xlu0 %4386
        %v4388 = vrcp.pop %v4387
        %v4389 = vmul.f32 %v4387, %v4388
        %v4390 = vsub.f32 1.0, %v4389
        %v4391 = vmul.f32 %v4388, %v4390
        %v4392 = vadd.f32 %v4388, %v4391
        %vm4393 = vweird.f32 %v4387
        %vm4394 = vweird.f32 %v4388
        %vm4395 = vmor %vm4393, %vm4394
        %v4396 = vsel %vm4395, %v4388, %v4392
        %v4397 = vand.u32 2147483647, %v4387
        %vm4398 = vcmp.eq.f32.partialorder %v4397, 8.507059e+37
        %v4399 = vand.u32 %v4387, 2147483648
        %v4400 = vor.u32 1.1754944e-38, %v4399
        %v4401 = vsel %vm4398, %v4400, %v4396
        %v4402 = vmul.f32 1.0, %v4401
        %v4403 = vmul.f32 %v4384, %v4402
        %4404 = vrot.lane.b32.xlu0 %v4017, 72
        %v4405 = vpop.permute.xlu0 %4404
        %4406 = vrot.lane.b32.xlu0 %v4020, 72
        %v4407 = vpop.permute.xlu0 %4406
        %v4411 = vsel %vm536, %v4403, 0
        %4413 = vmatpush.msra.mxu0 0.0
        %4414 = vmatpush.msra.mxu0 0.0
        %4415 = vmatpush.msra.mxu0 0.0
        %4416 = vmatpush.msra.mxu0 0.0
        %4417 = vmatpush.msra.mxu0 0.0
        %4418 = vmatpush.msra.mxu0 0.0
        %4419 = vmatpush.msra.mxu0 0.0
        %4420 = vmatpush.msra.mxu0 0.0
        %4421 = vmatpush.msra.mxu0 0.0
        %4422 = vmatpush.msra.mxu0 0.0
        %4423 = vmatpush.msra.mxu0 0.0
        %4424 = vmatpush.msra.mxu0 0.0
        %4425 = vmatpush.msra.mxu0 0.0
        %4426 = vmatpush.msra.mxu0 0.0
        %4427 = vmatpush.msra.mxu0 %v4407
        %4428 = vmatpush.msra.mxu0 %v4405
        %4429 = vmatmul.f32.gmra.mxu0 %v4411
        %v4430 = vpop.f32.mrf.mxu0
        %v4431 = vadd.f32 0.0, %v4430
        %4432 = vdwg.mxu0
        %v4434 = vsel %vm504, %v4431, 0
        %4436 = vmatpush.msra.mxu0 0.0
        %4437 = vmatpush.msra.mxu0 0.0
        %4438 = vmatpush.msra.mxu0 0.0
        %4439 = vmatpush.msra.mxu0 0.0
        %4440 = vmatpush.msra.mxu0 0.0
        %4441 = vmatpush.msra.mxu0 0.0
        %4442 = vmatpush.msra.mxu0 0.0
        %4443 = vmatpush.msra.mxu0 0.0
        %4444 = vmatpush.msra.mxu0 0.0
        %4445 = vmatpush.msra.mxu0 0.0
        %4446 = vmatpush.msra.mxu0 0.0
        %4447 = vmatpush.msra.mxu0 0.0
        %4448 = vmatpush.msra.mxu0 0.0
        %4449 = vmatpush.msra.mxu0 0.0
        %4450 = vmatpush.msra.mxu0 0.0
        %4451 = vmatpush.msra.mxu0 %v3451
        %4452 = vmatmul.f32.gmra.mxu0 %v4434
        %v4453 = vpop.f32.mrf.mxu0
        %v4454 = vadd.f32 0.0, %v4453
        %4455 = vdwg.mxu0
        %v4456 = vadd.f32 %v4346, %v4454
        %v4457 = vperm.slane %v3467, 0
        %v4458 = vadd.f32 %v4456, %v4457
        %v4459 = vadd.f32 %v3954, %v4458
        %v4460 = vsel %vm468, %v4459, 0.0
        %4461 = vadd.xlane.f32.xlu0 %v4460
        %v4462 = vpop.xlane.xlu0 %4461
        %v4463 = vmul.f32 %v4462, %v1131
        %v4464 = vsub.f32 %v4459, %v4463
        %v4465 = vmul.f32 %v4464, %v4464
        %v4466 = vsel %vm468, %v4465, 0.0
        %4467 = vadd.xlane.f32.xlu0 %v4466
        %v4468 = vpop.xlane.xlu0 %4467
        %v4469 = vmul.f32 %v4468, 0.032258064
        %v4470 = vrsqrt.pop %v4469
        %v4471 = vmul.f32 %v4470, %v4469
        %v4472 = vmul.f32 %v4471, %v4470
        %v4473 = vmul.f32 0.5, %v4472
        %v4474 = vsub.f32 1.5, %v4473
        %v4475 = vmul.f32 %v4470, %v4474
        %v4476 = vmul.f32 %v4469, %v4475
        %vm4477 = vcmp.eq.f32.partialorder %v4469, inf
        %v4478 = vsel %vm4477, %v4469, %v4476
        %vm4479 = vcmp.eq.f32.partialorder %v4469, 0.0
        %v4480 = vand.u32 %v4469, 2147483648
        %v4481 = vsel %vm4479, %v4480, %v4478
        %v4482 = vadd.f32 %v4481, 1e-06
        %v4483 = vrcp.pop %v4482
        %v4484 = vmul.f32 %v4482, %v4483
        %v4485 = vsub.f32 1.0, %v4484
        %v4486 = vmul.f32 %v4483, %v4485
        %v4487 = vadd.f32 %v4483, %v4486
        %vm4488 = vweird.f32 %v4482
        %vm4489 = vweird.f32 %v4483
        %vm4490 = vmor %vm4488, %vm4489
        %v4491 = vsel %vm4490, %v4483, %v4487
        %v4492 = vand.u32 2147483647, %v4482
        %vm4493 = vcmp.eq.f32.partialorder %v4492, 8.507059e+37
        %v4494 = vand.u32 %v4482, 2147483648
        %v4495 = vor.u32 1.1754944e-38, %v4494
        %v4496 = vsel %vm4493, %v4495, %v4491
        %v4497 = vmul.f32 1.0, %v4496
        %v4498 = vperm.slane %v3472, 0
        %v4499 = vmul.f32 %v4498, %v4464
        %v4500 = vmul.f32 %v4499, %v4497
        %v4501 = vperm.slane %v3473, 0
        %v4502 = vadd.f32 %v4500, %v4501
        %v4503 = vperm.slane %v3468, 0
        %v4505 = vsel %vm468, %v4502, 0
        %4507 = vmatpush.msra.mxu0 0.0
        %4508 = vmatpush.msra.mxu0 0.0
        %4509 = vmatpush.msra.mxu0 0.0
        %4510 = vmatpush.msra.mxu0 0.0
        %4511 = vmatpush.msra.mxu0 0.0
        %4512 = vmatpush.msra.mxu0 0.0
        %4513 = vmatpush.msra.mxu0 0.0
        %4514 = vmatpush.msra.mxu0 0.0
        %4515 = vmatpush.msra.mxu0 0.0
        %4516 = vmatpush.msra.mxu0 0.0
        %4517 = vmatpush.msra.mxu0 0.0
        %4518 = vmatpush.msra.mxu0 0.0
        %4519 = vmatpush.msra.mxu0 %v3455
        %4520 = vmatpush.msra.mxu0 %v3454
        %4521 = vmatpush.msra.mxu0 %v3453
        %4522 = vmatpush.msra.mxu0 %v3452
        %4523 = vmatmul.f32.gmra.mxu0 %v4505
        %v4524 = vpop.f32.mrf.mxu0
        %v4525 = vadd.f32 %v4503, %v4524
        %4526 = vdwg.mxu0
        %v4527 = vmax.f32 %v4525, 0.0
        %v4528 = vperm.slane %v3469, 0
        %v4530 = vsel %vm1243, %v4527, 0
        %4532 = vmatpush.msra.mxu0 0.0
        %4533 = vmatpush.msra.mxu0 0.0
        %4534 = vmatpush.msra.mxu0 0.0
        %4535 = vmatpush.msra.mxu0 0.0
        %4536 = vmatpush.msra.mxu0 0.0
        %4537 = vmatpush.msra.mxu0 0.0
        %4538 = vmatpush.msra.mxu0 0.0
        %4539 = vmatpush.msra.mxu0 0.0
        %4540 = vmatpush.msra.mxu0 %v3463
        %4541 = vmatpush.msra.mxu0 %v3462
        %4542 = vmatpush.msra.mxu0 %v3461
        %4543 = vmatpush.msra.mxu0 %v3460
        %4544 = vmatpush.msra.mxu0 %v3459
        %4545 = vmatpush.msra.mxu0 %v3458
        %4546 = vmatpush.msra.mxu0 %v3457
        %4547 = vmatpush.msra.mxu0 %v3456
        %4548 = vmatmul.f32.gmra.mxu0 %v4530
        %v4549 = vpop.f32.mrf.mxu0
        %v4550 = vadd.f32 %v4528, %v4549
        %4551 = vdwg.mxu0
        %v4552 = vadd.f32 %v4502, %v4550
        %v4553 = vsel %vm468, %v4552, 0.0
        %4554 = vadd.xlane.f32.xlu0 %v4553
        %v4555 = vpop.xlane.xlu0 %4554
        %v4556 = vmul.f32 %v4555, %v1131
        %v4557 = vsub.f32 %v4552, %v4556
        %v4558 = vmul.f32 %v4557, %v4557
        %v4559 = vsel %vm468, %v4558, 0.0
        %4560 = vadd.xlane.f32.xlu0 %v4559
        %v4561 = vpop.xlane.xlu0 %4560
        %v4562 = vmul.f32 %v4561, 0.032258064
        %v4563 = vrsqrt.pop %v4562
        %v4564 = vmul.f32 %v4563, %v4562
        %v4565 = vmul.f32 %v4564, %v4563
        %v4566 = vmul.f32 0.5, %v4565
        %v4567 = vsub.f32 1.5, %v4566
        %v4568 = vmul.f32 %v4563, %v4567
        %v4569 = vmul.f32 %v4562, %v4568
        %vm4570 = vcmp.eq.f32.partialorder %v4562, inf
        %v4571 = vsel %vm4570, %v4562, %v4569
        %vm4572 = vcmp.eq.f32.partialorder %v4562, 0.0
        %v4573 = vand.u32 %v4562, 2147483648
        %v4574 = vsel %vm4572, %v4573, %v4571
        %v4575 = vadd.f32 %v4574, 1e-06
        %v4576 = vrcp.pop %v4575
        %v4577 = vmul.f32 %v4575, %v4576
        %v4578 = vsub.f32 1.0, %v4577
        %v4579 = vmul.f32 %v4576, %v4578
        %v4580 = vadd.f32 %v4576, %v4579
        %vm4581 = vweird.f32 %v4575
        %vm4582 = vweird.f32 %v4576
        %vm4583 = vmor %vm4581, %vm4582
        %v4584 = vsel %vm4583, %v4576, %v4580
        %v4585 = vand.u32 2147483647, %v4575
        %vm4586 = vcmp.eq.f32.partialorder %v4585, 8.507059e+37
        %v4587 = vand.u32 %v4575, 2147483648
        %v4588 = vor.u32 1.1754944e-38, %v4587
        %v4589 = vsel %vm4586, %v4588, %v4584
        %v4590 = vmul.f32 1.0, %v4589
        %v4591 = vperm.slane %v3474, 0
        %v4592 = vmul.f32 %v4591, %v4557
        %v4593 = vmul.f32 %v4592, %v4590
        %v4594 = vperm.slane %v3475, 0
        %v4595 = vadd.f32 %v4593, %v4594
        %4596 = vst.msk [vmem:[%s424] sm:$0xff] %vm468, %v4595
        %s4597 = sand.u32 %s186, 1
        %s4598 = scalar_lea.sflag [#allocation4], %s4597
        %s4599 = sand.u32 %s186, 1
        %s4600 = smul.addr %s4599, 16
        %s4601 = scalar_lea.vmem [#allocation11], %s4600
        %s4602 = sand.u32 %s212, 1
        %s4603 = scalar_lea.sflag [#allocation13], %s4602
        %s4604 = sand.u32 %s212, 1
        %s4605 = smul.addr %s4604, 8
        %s4606 = scalar_lea.vmem [#allocation12], %s4605
        // Predicated region
        $region65: #{tpu_custom_call.1} parent=43 // pred_check
          %p4607 = pneg %p196
        $region66: #{tpu_custom_call.1} parent=43 // pred_check_branch
          %4609 = sbr.rel (%p4607) target = $region68
        $region67: #{tpu_custom_call.1} parent=43 // pred_region
          %4611 = vsyncadd %s4598, 0
          %s4612 = smul.addr %s32, 2
          %s4613 = smul.addr %s4612, 8
          %s4614 = scalar_lea.hbm %s6, %s4613
          %s4615 = sshll.u32 %s4601, 4
          %s4616 = int_to_ptr.vmem [resolvable:$true] %s4615
          %s4617 = sshll.u32 %s4614, 4
          %s4618 = int_to_ptr.hbm [resolvable:$true] %s4617
          %4623 = dma.vmem_to_hbm [thread:$0]  %s4616, 256, %s4618, %s4598, 128, 128, 8
        $region68: #{tpu_custom_call.1} parent=43 // pred_fallthru
          _
        // Predicated region
        $region69: #{tpu_custom_call.1} parent=43 // pred_check
          %p4624 = pneg %p222
        $region70: #{tpu_custom_call.1} parent=43 // pred_check_branch
          %4626 = sbr.rel (%p4624) target = $region72
        $region71: #{tpu_custom_call.1} parent=43 // pred_region
          %4628 = vsyncadd %s4603, 0
          %s4629 = smul.addr %s32, 8
          %s4630 = scalar_lea.hbm %s7, %s4629
          %s4632 = sshll.u32 %s4606, 4
          %s4633 = int_to_ptr.vmem [resolvable:$true] %s4632
          %s4634 = sshll.u32 %s4630, 4
          %s4635 = int_to_ptr.hbm [resolvable:$true] %s4634
          %4637 = dma.vmem_to_hbm [thread:$0]  %s4633, 128, %s4635, %s4603
        $region72: #{tpu_custom_call.1} parent=43 // pred_fallthru
          _
      $region44: #{tpu_custom_call.1} parent=5 // pred_fallthru
        _
      %p4638 = scmp.le.s32.totalorder 2, %s27
      // Predicated region
      $region73: #{tpu_custom_call.1} parent=5 // pred_check
        %p4639 = pneg %p4638
      $region74: #{tpu_custom_call.1} parent=5 // pred_check_branch
        %4641 = sbr.rel (%p4639) target = $region76
      $region75: #{tpu_custom_call.1} parent=5 // pred_region
        %s4642 = ssub.s32 %s27, 2
        // Predicated region
        $region77: #{tpu_custom_call.1} parent=75 // pred_check
          %p4643 = pneg %p202
        $region78: #{tpu_custom_call.1} parent=75 // pred_check_branch
          %4645 = sbr.rel (%p4643) target = $region80
        $region79: #{tpu_custom_call.1} parent=75 // pred_region
          %s4646 = sand.u32 %s187, 1
          %s4647 = scalar_lea.sflag [#allocation4], %s4646
          %s4648 = sand.u32 %s187, 1
          %s4649 = smul.addr %s4648, 16
          %s4650 = scalar_lea.vmem [#allocation11], %s4649
          %4652 = dma.done %s4647, 256
        $region80: #{tpu_custom_call.1} parent=75 // pred_fallthru
          _
        // Predicated region
        $region81: #{tpu_custom_call.1} parent=75 // pred_check
          %p4653 = pneg %p228
        $region82: #{tpu_custom_call.1} parent=75 // pred_check_branch
          %4655 = sbr.rel (%p4653) target = $region84
        $region83: #{tpu_custom_call.1} parent=75 // pred_region
          %s4656 = sand.u32 %s213, 1
          %s4657 = scalar_lea.sflag [#allocation13], %s4656
          %s4658 = sand.u32 %s213, 1
          %s4659 = smul.addr %s4658, 8
          %s4660 = scalar_lea.vmem [#allocation12], %s4659
          %4662 = dma.done %s4657, 128
        $region84: #{tpu_custom_call.1} parent=75 // pred_fallthru
          _
      $region76: #{tpu_custom_call.1} parent=5 // pred_fallthru
        _
    $region6: #{tpu_custom_call.1} parent=1 // loop_footer
      %s31 = sadd.s32 1, %s27
    $region7: #{tpu_custom_call.1} parent=1 // loop_footer_branch
      %26 = sbr.rel target = $region3
    $region8: #{tpu_custom_call.1} parent=1 // loop_exit
      _
    %4663 = vsyncpa [#allocation3], 1
    %s4664 = scalar_lea.sflag [#allocation3], 1
    %4665 = vsyncpa %s4664, 1
    %4666 = vsyncpa [#allocation6], 1
    %s4667 = scalar_lea.sflag [#allocation6], 1
    %4668 = vsyncpa %s4667, 1
    %4669 = vsyncpa [#allocation9], 1
    %4670 = vsyncpa [#allocation4], 1
    %s4671 = scalar_lea.sflag [#allocation4], 1
    %4672 = vsyncpa %s4671, 1
    %4673 = vsyncpa [#allocation13], 1
    %s4674 = scalar_lea.sflag [#allocation13], 1
    %4675 = vsyncpa %s4674, 1

</llo_original>
